<compile_context>
chip_gen: v5e
topology: v5e:2x2
jax: 0.10.0
libtpu: 0.0.40
codegen_flags: <defaults>
</compile_context>

<pallas_src>
import functools

import numpy as np

import jax
import jax.numpy as jnp
from jax.experimental import pallas as pl
from jax.experimental.pallas import tpu as pltpu

_VMEM_LIMIT_BYTES = 48 * 1024 * 1024   # < physical VMEM on v5e/v6e (128 MiB) and v7x (64 MiB)


# --------------------------------------------------------------------------- #
# Geometry / layout helpers
# --------------------------------------------------------------------------- #
def _rup8(n):
    return ((n + 7) // 8) * 8


def _geom(H, W):
    """Padded-plane geometry: Hp, Wp, flattened length L, guard width G, 3x3 tap offsets."""
    Hp, Wp = H + 2, W + 2
    L = Hp * Wp
    G = ((Wp + 1 + 127) // 128) * 128            # >= max |tap offset|, 128-lane aligned
    offs = tuple((dy - 1) * Wp + (dx - 1) for dy in range(3) for dx in range(3))
    return Hp, Wp, L, G, offs


def _flatten_pad_guard(x, c_p, G):
    """[N, C, H, W] -> [N, c_p, G + (H+2)*(W+2) + G] bf16.

    Per plane: 1-pixel zero ring (the conv's padding=1), flattened row-major onto
    the lane dim, plus G guard zeros each side so every tap-shifted slice stays in
    bounds.  Channels are zero-padded to c_p (multiple of 8).
    """
    N, C, H, W = x.shape
    xp = jnp.pad(x, ((0, 0), (0, c_p - C), (1, 1), (1, 1)))
    xp = xp.reshape(N, c_p, (H + 2) * (W + 2))
    xp = jnp.pad(xp, ((0, 0), (0, 0), (G, G)))
    return xp.astype(jnp.bfloat16)


def _interior_mask(H, W):
    """[1, L] bf16: 1 at interior pixels, 0 on the 1-pixel padding ring."""
    Hp, Wp = H + 2, W + 2
    m = jnp.zeros((Hp, Wp), jnp.float32).at[1:H + 1, 1:W + 1].set(1.0)
    return m.reshape(1, Hp * Wp).astype(jnp.bfloat16)


def _avg_pool2(x):
    """2x2 average pool over the trailing two dims."""
    *lead, H, W = x.shape
    return x.reshape(*lead, H // 2, 2, W // 2, 2).mean(axis=(-3, -1))


def pixel_unshuffle(x):
    """torch.nn.PixelUnshuffle(2) on [B, T, C, H, W]."""
    B, T, C, H, W = x.shape
    x = x.reshape(B, T, C, H // 2, 2, W // 2, 2)
    x = jnp.transpose(x, (0, 1, 2, 4, 6, 3, 5))
    return x.reshape(B, T, C * 4, H // 2, W // 2)


# --------------------------------------------------------------------------- #
# Pallas kernels
# --------------------------------------------------------------------------- #
def _dblock_kernel(x_ref, wa_ref, ba_ref, wb_ref, bo_ref, mask_ref,
                   o_ref, hg_ref, patch_ref, *, offs, G, L, cin_p, cout_p):
    """Fused DGMR DBlock (pre-pool sum) for one (batch, timestep) plane.

    x_ref   : [cin_p, L + 2G]            bf16  guarded flattened padded plane
    wa_ref  : [cout_p, 9*cin_p]          bf16  first 3x3 conv, tap-major K
    ba_ref  : [cout_p, 1]                f32
    wb_ref  : [cout_p, 9*cout_p + cin_p] bf16  second 3x3 conv ++ 1x1 residual
    bo_ref  : [cout_p, 1]                f32   folded b1 + b3b
    mask_ref: [1, L]                     bf16  interior mask
    o_ref   : [cout_p, L]                bf16  pre-pool sum (ring positions garbage)
    hg_ref  : [cout_p, L + 2G]           bf16  scratch: masked relu(conv3a) + guards
    patch_ref: [max(9*cin_p, 9*cout_p+cin_p), L] bf16 scratch: shared im2col buffer
    """
    f32, bf16 = jnp.float32, jnp.bfloat16

    # --- conv3x3 #1 on relu(x): ReLU fused into the aligned im2col build, then one
    #     K = 9*cin_p MXU matmul (no 9-dot f32 accumulation chain).
    for t, off in enumerate(offs):
        patch_ref[t * cin_p:(t + 1) * cin_p, :] = jnp.maximum(
            x_ref[:, G + off:G + off + L], 0)
    s = jnp.dot(wa_ref[...], patch_ref[0:9 * cin_p, :], preferred_element_type=f32)
    # bias + ReLU; zero the ring (mask, applied after the bf16 cast) so it acts as
    # the second conv's zero padding.
    h = jnp.maximum(s + ba_ref[...], 0.0).astype(bf16) * mask_ref[...]

    # --- stage h with zero guards (halo for conv #2); only the guards are zeroed.
    hg_ref[:, 0:G] = jnp.zeros((cout_p, G), bf16)
    hg_ref[:, G + L:2 * G + L] = jnp.zeros((cout_p, G), bf16)
    hg_ref[:, G:G + L] = h

    # --- conv3x3 #2 + fused 1x1 residual: ONE matmul with K = 9*cout_p + cin_p.
    for t, off in enumerate(offs):
        patch_ref[t * cout_p:(t + 1) * cout_p, :] = hg_ref[:, G + off:G + off + L]
    patch_ref[9 * cout_p:9 * cout_p + cin_p, :] = x_ref[:, G:G + L]
    out = jnp.dot(wb_ref[...], patch_ref[0:9 * cout_p + cin_p, :],
                  preferred_element_type=f32)

    # bo = b1 + b3b (folded at parameter construction).  bf16 writeback.
    o_ref[...] = (out + bo_ref[...]).astype(o_ref.dtype)


def _mix_kernel(x_ref, w_ref, b_ref, o_ref, patch_ref, *, offs, G, L, cin_p):
    """Mixing layer: 3x3 conv + bias + ReLU on one guarded flattened plane."""
    for t, off in enumerate(offs):
        patch_ref[t * cin_p:(t + 1) * cin_p, :] = x_ref[:, G + off:G + off + L]
    s = jnp.dot(w_ref[...], patch_ref[...], preferred_element_type=jnp.float32)
    o_ref[...] = jnp.maximum(s + b_ref[...], 0.0)


# --------------------------------------------------------------------------- #
# Pallas-backed module pieces
# --------------------------------------------------------------------------- #
def dblock_apply(x, p):
    """DBlock on [N=(b t), C, H, W] (shared weights over T) -> [N, cout_p, H/2, W/2] bf16."""
    N, Cx, H, W = x.shape
    Hp, Wp, L, G, offs = _geom(H, W)
    cout_p = p["wa"].shape[0]
    cin_p = p["wa"].shape[1] // 9
    assert p["wb"].shape[1] == 9 * cout_p + cin_p and Cx <= cin_p

    xf = _flatten_pad_guard(x, cin_p, G)                  # [N, cin_p, L+2G] bf16
    mask = _interior_mask(H, W)                           # [1, L] bf16
    patch_rows = max(9 * cin_p, 9 * cout_p + cin_p)

    out = pl.pallas_call(
        functools.partial(_dblock_kernel, offs=offs, G=G, L=L,
                          cin_p=cin_p, cout_p=cout_p),
        out_shape=jax.ShapeDtypeStruct((N, cout_p, L), jnp.bfloat16),
        grid=(N,),
        in_specs=[
            pl.BlockSpec((None, cin_p, L + 2 * G), lambda n: (n, 0, 0)),
            pl.BlockSpec((cout_p, 9 * cin_p), lambda n: (0, 0)),
            pl.BlockSpec((cout_p, 1), lambda n: (0, 0)),
            pl.BlockSpec((cout_p, 9 * cout_p + cin_p), lambda n: (0, 0)),
            pl.BlockSpec((cout_p, 1), lambda n: (0, 0)),
            pl.BlockSpec((1, L), lambda n: (0, 0)),
        ],
        out_specs=pl.BlockSpec((None, cout_p, L), lambda n: (n, 0, 0)),
        scratch_shapes=[
            pltpu.VMEM((cout_p, L + 2 * G), jnp.bfloat16),     # zero-guarded h
            pltpu.VMEM((patch_rows, L), jnp.bfloat16),         # shared im2col buffer
        ],
        compiler_params=pltpu.CompilerParams(
            dimension_semantics=("parallel",),
            vmem_limit_bytes=_VMEM_LIMIT_BYTES),
    )(xf, p["wa"], p["ba"], p["wb"], p["bo"], mask)

    # Crop the ring (BEFORE pooling: ring holds garbage) and 2x2 average pool.
    out = out.reshape(N, cout_p, Hp, Wp)[:, :, 1:H + 1, 1:W + 1]
    return _avg_pool2(out)                                 # [N, cout_p, H/2, W/2] bf16


def mixing_apply(s, p, B, T):
    """'b t c h w -> b (c t) h w' rearrange + fused 3x3 conv + ReLU -> NCHW f32."""
    N, Cp, H, W = s.shape
    Hp, Wp, L, G, offs = _geom(H, W)
    cout = p["w"].shape[0]
    cmix_p = p["w"].shape[1] // 9
    assert cmix_p == Cp * T and N == B * T

    # Channel-major / time-minor stacking (padded dblock channels land at the end
    # where the mixing weight columns are zero).
    x = s.reshape(B, T, Cp, H, W).transpose(0, 2, 1, 3, 4).reshape(B, Cp * T, H, W)
    xf = _flatten_pad_guard(x, cmix_p, G)                  # [B, cmix_p, L+2G] bf16

    out = pl.pallas_call(
        functools.partial(_mix_kernel, offs=offs, G=G, L=L, cin_p=cmix_p),
        out_shape=jax.ShapeDtypeStruct((B, cout, L), jnp.float32),
        grid=(B,),
        in_specs=[
            pl.BlockSpec((None, cmix_p, L + 2 * G), lambda b: (b, 0, 0)),
            pl.BlockSpec((cout, 9 * cmix_p), lambda b: (0, 0)),
            pl.BlockSpec((cout, 1), lambda b: (0, 0)),
        ],
        out_specs=pl.BlockSpec((None, cout, L), lambda b: (b, 0, 0)),
        scratch_shapes=[pltpu.VMEM((9 * cmix_p, L), jnp.bfloat16)],
        compiler_params=pltpu.CompilerParams(
            dimension_semantics=("parallel",),
            vmem_limit_bytes=_VMEM_LIMIT_BYTES),
    )(xf, p["w"], p["b"])

    return out.reshape(B, cout, Hp, Wp)[:, :, 1:H + 1, 1:W + 1]   # NCHW f32


def context_conditioning_stack(x, params):
    """x: [B, T, C, H, W] f32 -> 4 NCHW feature maps (scale_1 .. scale_4)."""
    B, T, C, H, W = x.shape
    x = pixel_unshuffle(x)                                 # [B, T, 4C, H/2, W/2]
    x = x.reshape(B * T, 4 * C, H // 2, W // 2)            # (b t) folded into the grid axis
    s1 = dblock_apply(x, params["d1"])
    s2 = dblock_apply(s1, params["d2"])
    s3 = dblock_apply(s2, params["d3"])
    s4 = dblock_apply(s3, params["d4"])
    return (mixing_apply(s1, params["m1"], B, T),
            mixing_apply(s2, params["m2"], B, T),
            mixing_apply(s3, params["m3"], B, T),
            mixing_apply(s4, params["m4"], B, T))


# --------------------------------------------------------------------------- #
# Deterministic parameter construction (synthetic weights; spectral norm applied
# at construction time, mirroring torch spectral_norm)
# --------------------------------------------------------------------------- #
def _spectral_normalize(w, iters=15):
    cout = w.shape[0]
    wm = w.reshape(cout, -1)
    u = jnp.ones((cout,), jnp.float32) / jnp.sqrt(float(cout))
    v = None
    for _ in range(iters):
        v = wm.T @ u
        v = v / (jnp.linalg.norm(v) + 1e-12)
        u = wm @ v
        u = u / (jnp.linalg.norm(u) + 1e-12)
    sigma = u @ (wm @ v)
    return w / sigma


def _conv_weight(key, cin, cout, K):
    kw, kb = jax.random.split(key)
    bound = 1.0 / float(cin * K * K) ** 0.5
    w = jax.random.uniform(kw, (cout, cin, K, K), jnp.float32, -bound, bound)
    w = _spectral_normalize(w)
    b = jax.random.uniform(kb, (cout,), jnp.float32, -bound, bound)
    return w, b


def _flat3x3(w, cin_p, cout_p):
    """[O, C, 3, 3] f32 -> [cout_p, 9*cin_p] bf16 with tap-major K rows (dy, dx, c)."""
    O, C, _, _ = w.shape
    w = jnp.transpose(w, (0, 2, 3, 1))                     # [O, 3, 3, C]
    w = jnp.pad(w, ((0, cout_p - O), (0, 0), (0, 0), (0, cin_p - C)))
    return w.reshape(cout_p, 9 * cin_p).astype(jnp.bfloat16)


def make_dblock_params(key, cin, cout):
    cin_p, cout_p = _rup8(cin), _rup8(cout)
    k1, k2, k3 = jax.random.split(key, 3)
    w1, b1 = _conv_weight(k1, cin, cout, 1)
    wa, ba = _conv_weight(k2, cin, cout, 3)
    wb, bb = _conv_weight(k3, cout, cout, 3)
    w1p = jnp.pad(w1[:, :, 0, 0],
                  ((0, cout_p - cout), (0, cin_p - cin))).astype(jnp.bfloat16)
    packed = {
        "wa": _flat3x3(wa, cin_p, cout_p),
        "ba": jnp.pad(ba, (0, cout_p - cout)).reshape(cout_p, 1),
        # second 3x3 conv ++ 1x1 residual, folded into a single matmul weight
        "wb": jnp.concatenate([_flat3x3(wb, cout_p, cout_p), w1p], axis=1),
        # b1 + b3b folded into a single bias
        "bo": jnp.pad(b1 + bb, (0, cout_p - cout)).reshape(cout_p, 1),
    }
    raw = {"w1": w1, "b1": b1, "wa": wa, "ba": ba, "wb": wb, "bb": bb}
    return packed, raw


def make_mix_params(key, cin, cout, cin_pad):
    w, b = _conv_weight(key, cin, cout, 3)
    packed = {"w": _flat3x3(w, cin_pad, cout), "b": b.reshape(cout, 1)}
    raw = {"w": w, "b": b}
    return packed, raw


def make_params(key, ic, oc, t):
    ks = jax.random.split(key, 8)
    c_in = 4 * ic
    c1 = oc // 4 * ic // t
    c2 = oc // 2 * ic // t
    c3 = oc * ic // t
    c4 = oc * 2 * ic // t

    packed, raw = {}, {}
    for name, k, ci, co in (("d1", ks[0], c_in, c1), ("d2", ks[1], c1, c2),
                            ("d3", ks[2], c2, c3), ("d4", ks[3], c3, c4)):
        packed[name], raw[name] = make_dblock_params(k, ci, co)

    for name, k, cd, co in (("m1", ks[4], c1, oc // 8 * ic),
                            ("m2", ks[5], c2, oc // 4 * ic),
                            ("m3", ks[6], c3, oc // 2 * ic),
                            ("m4", ks[7], c4, oc * ic)):
        packed[name], raw[name] = make_mix_params(k, cd * t, co, _rup8(cd) * t)
    return packed, raw


# --------------------------------------------------------------------------- #
# Pure-JAX (XLA, f32) reference for correctness checking
# --------------------------------------------------------------------------- #
def _conv2d_ref(x, w, b, pad):
    y = jax.lax.conv_general_dilated(
        x, w, window_strides=(1, 1), padding=((pad, pad), (pad, pad)),
        dimension_numbers=("NCHW", "OIHW", "NCHW"))
    return y + b.reshape(1, -1, 1, 1)


def _dblock_ref(x, p):
    x1 = _avg_pool2(_conv2d_ref(x, p["w1"], p["b1"], 0))
    h = jax.nn.relu(x)
    h = jax.nn.relu(_conv2d_ref(h, p["wa"], p["ba"], 1))
    h = _avg_pool2(_conv2d_ref(h, p["wb"], p["bb"], 1))
    return x1 + h


def reference_stack(x, raw):
    x = pixel_unshuffle(x)
    B, T = x.shape[0], x.shape[1]
    scales = {k: [] for k in ("d1", "d2", "d3", "d4")}
    for t in range(T):
        s = x[:, t]
        for name in ("d1", "d2", "d3", "d4"):
            s = _dblock_ref(s, raw[name])
            scales[name].append(s)
    outs = []
    for dname, mname in (("d1", "m1"), ("d2", "m2"), ("d3", "m3"), ("d4", "m4")):
        st = jnp.stack(scales[dname], axis=1)                       # [B, T, C, h, w]
        st = jnp.transpose(st, (0, 2, 1, 3, 4))
        st = st.reshape(B, -1, st.shape[-2], st.shape[-1])          # '(c t)'
        outs.append(jax.nn.relu(_conv2d_ref(st, raw[mname]["w"], raw[mname]["b"], 1)))
    return tuple(outs)


# --------------------------------------------------------------------------- #
if __name__ == "__main__":
    # Small config consistent with the module's channel arithmetic:
    #   input_channels=1, output_channels=32, num_context_steps=4, 64x64 frames.
    IC, OC, T = 1, 32, 4
    B, H, W = 2, 64, 64

    key = jax.random.PRNGKey(0)
    kx, kp = jax.random.split(key)
    x = jax.random.normal(kx, (B, T, IC, H, W), jnp.float32)
    params, raw = make_params(kp, IC, OC, T)

    fwd = jax.jit(context_conditioning_stack)
    outs = jax.block_until_ready(fwd(x, params))

    refs = reference_stack(x, raw)

    expected = [
        (B, OC // 8 * IC, H // 4, W // 4),
        (B, OC // 4 * IC, H // 8, W // 8),
        (B, OC // 2 * IC, H // 16, W // 16),
        (B, OC * IC, H // 32, W // 32),
    ]
    for o, r, e in zip(outs, refs, expected):
        assert o.shape == e, (o.shape, e)
        o_np = np.asarray(o, dtype=np.float32)
        r_np = np.asarray(r, dtype=np.float32)
        assert np.all(np.isfinite(o_np))
        assert np.all(o_np >= 0.0)                      # final ReLU
        err = float(np.max(np.abs(o_np - r_np)))
        scale = float(np.max(np.abs(r_np)))
        assert err <= 0.08 * scale + 0.02, (err, scale)  # bf16 activations/weights

    print("KERNEL_OK")
</pallas_src>

<mosaic_0001>
module attributes {stable_mosaic.version = 11 : i64} {
  func.func @_dblock_kernel(%arg0: i32, %arg1: memref<1x8x1412xbf16, #tpu.memory_space<vmem>>, %arg2: memref<8x72xbf16, #tpu.memory_space<vmem>>, %arg3: memref<8x1xf32, #tpu.memory_space<vmem>>, %arg4: memref<8x80xbf16, #tpu.memory_space<vmem>>, %arg5: memref<8x1xf32, #tpu.memory_space<vmem>>, %arg6: memref<1x1156xbf16, #tpu.memory_space<vmem>>, %arg7: memref<1x8x1156xbf16, #tpu.memory_space<vmem>>, %arg8: memref<8x1412xbf16, #tpu.memory_space<vmem>>, %arg9: memref<80x1156xbf16, #tpu.memory_space<vmem>>) attributes {dimension_semantics = [#tpu.dimension_semantics<parallel>], iteration_bounds = array<i64: 8>, scalar_prefetch = 0 : i64, scratch_operands = 2 : i64, tpu.core_type = #tpu.core_type<tc>, window_params = [{transform_indices = @transform_0, window_bounds = array<i64: 1, 8, 1412>}, {pipeline_mode = #tpu.pipeline_mode<synchronous>, transform_indices = @transform_1, window_bounds = array<i64: 8, 72>}, {pipeline_mode = #tpu.pipeline_mode<synchronous>, transform_indices = @transform_2, window_bounds = array<i64: 8, 1>}, {pipeline_mode = #tpu.pipeline_mode<synchronous>, transform_indices = @transform_3, window_bounds = array<i64: 8, 80>}, {pipeline_mode = #tpu.pipeline_mode<synchronous>, transform_indices = @transform_4, window_bounds = array<i64: 8, 1>}, {pipeline_mode = #tpu.pipeline_mode<synchronous>, transform_indices = @transform_5, window_bounds = array<i64: 1, 1156>}, {transform_indices = @transform_6, window_bounds = array<i64: 1, 8, 1156>}]} {
    %c0 = arith.constant 0 : index
    %c0_0 = arith.constant 0 : index
    %c93 = arith.constant 93 : index
    %0 = vector.load %arg1[%c0, %c0_0, %c93] : memref<1x8x1412xbf16, #tpu.memory_space<vmem>>, vector<1x8x1156xbf16>
    %1 = vector.shape_cast %0 : vector<1x8x1156xbf16> to vector<8x1156xbf16>
    %cst = arith.constant 0.000000e+00 : bf16
    %2 = vector.broadcast %cst : bf16 to vector<8x1156xbf16>
    %3 = arith.maximumf %1, %2 : vector<8x1156xbf16>
    %c0_1 = arith.constant 0 : index
    %c0_2 = arith.constant 0 : index
    %4 = vector.load %arg9[%c0_1, %c0_2] : memref<80x1156xbf16, #tpu.memory_space<vmem>>, vector<8x1156xbf16>
    tpu.vector_store %arg9[%c0_1, %c0_2], %3 {strides = array<i32>} : memref<80x1156xbf16, #tpu.memory_space<vmem>>, vector<8x1156xbf16>,
    %c0_3 = arith.constant 0 : index
    %c0_4 = arith.constant 0 : index
    %c94 = arith.constant 94 : index
    %5 = vector.load %arg1[%c0_3, %c0_4, %c94] : memref<1x8x1412xbf16, #tpu.memory_space<vmem>>, vector<1x8x1156xbf16>
    %6 = vector.shape_cast %5 : vector<1x8x1156xbf16> to vector<8x1156xbf16>
    %cst_5 = arith.constant 0.000000e+00 : bf16
    %7 = vector.broadcast %cst_5 : bf16 to vector<8x1156xbf16>
    %8 = arith.maximumf %6, %7 : vector<8x1156xbf16>
    %c8 = arith.constant 8 : index
    %c0_6 = arith.constant 0 : index
    %9 = vector.load %arg9[%c8, %c0_6] : memref<80x1156xbf16, #tpu.memory_space<vmem>>, vector<8x1156xbf16>
    tpu.vector_store %arg9[%c8, %c0_6], %8 {strides = array<i32>} : memref<80x1156xbf16, #tpu.memory_space<vmem>>, vector<8x1156xbf16>,
    %c0_7 = arith.constant 0 : index
    %c0_8 = arith.constant 0 : index
    %c95 = arith.constant 95 : index
    %10 = vector.load %arg1[%c0_7, %c0_8, %c95] : memref<1x8x1412xbf16, #tpu.memory_space<vmem>>, vector<1x8x1156xbf16>
    %11 = vector.shape_cast %10 : vector<1x8x1156xbf16> to vector<8x1156xbf16>
    %cst_9 = arith.constant 0.000000e+00 : bf16
    %12 = vector.broadcast %cst_9 : bf16 to vector<8x1156xbf16>
    %13 = arith.maximumf %11, %12 : vector<8x1156xbf16>
    %c16 = arith.constant 16 : index
    %c0_10 = arith.constant 0 : index
    %14 = vector.load %arg9[%c16, %c0_10] : memref<80x1156xbf16, #tpu.memory_space<vmem>>, vector<8x1156xbf16>
    tpu.vector_store %arg9[%c16, %c0_10], %13 {strides = array<i32>} : memref<80x1156xbf16, #tpu.memory_space<vmem>>, vector<8x1156xbf16>,
    %c0_11 = arith.constant 0 : index
    %c0_12 = arith.constant 0 : index
    %c127 = arith.constant 127 : index
    %15 = vector.load %arg1[%c0_11, %c0_12, %c127] : memref<1x8x1412xbf16, #tpu.memory_space<vmem>>, vector<1x8x1156xbf16>
    %16 = vector.shape_cast %15 : vector<1x8x1156xbf16> to vector<8x1156xbf16>
    %cst_13 = arith.constant 0.000000e+00 : bf16
    %17 = vector.broadcast %cst_13 : bf16 to vector<8x1156xbf16>
    %18 = arith.maximumf %16, %17 : vector<8x1156xbf16>
    %c24 = arith.constant 24 : index
    %c0_14 = arith.constant 0 : index
    %19 = vector.load %arg9[%c24, %c0_14] : memref<80x1156xbf16, #tpu.memory_space<vmem>>, vector<8x1156xbf16>
    tpu.vector_store %arg9[%c24, %c0_14], %18 {strides = array<i32>} : memref<80x1156xbf16, #tpu.memory_space<vmem>>, vector<8x1156xbf16>,
    %c0_15 = arith.constant 0 : index
    %c0_16 = arith.constant 0 : index
    %c128 = arith.constant 128 : index
    %20 = vector.load %arg1[%c0_15, %c0_16, %c128] : memref<1x8x1412xbf16, #tpu.memory_space<vmem>>, vector<1x8x1156xbf16>
    %21 = vector.shape_cast %20 : vector<1x8x1156xbf16> to vector<8x1156xbf16>
    %cst_17 = arith.constant 0.000000e+00 : bf16
    %22 = vector.broadcast %cst_17 : bf16 to vector<8x1156xbf16>
    %23 = arith.maximumf %21, %22 : vector<8x1156xbf16>
    %c32 = arith.constant 32 : index
    %c0_18 = arith.constant 0 : index
    %24 = vector.load %arg9[%c32, %c0_18] : memref<80x1156xbf16, #tpu.memory_space<vmem>>, vector<8x1156xbf16>
    tpu.vector_store %arg9[%c32, %c0_18], %23 {strides = array<i32>} : memref<80x1156xbf16, #tpu.memory_space<vmem>>, vector<8x1156xbf16>,
    %c0_19 = arith.constant 0 : index
    %c0_20 = arith.constant 0 : index
    %c129 = arith.constant 129 : index
    %25 = vector.load %arg1[%c0_19, %c0_20, %c129] : memref<1x8x1412xbf16, #tpu.memory_space<vmem>>, vector<1x8x1156xbf16>
    %26 = vector.shape_cast %25 : vector<1x8x1156xbf16> to vector<8x1156xbf16>
    %cst_21 = arith.constant 0.000000e+00 : bf16
    %27 = vector.broadcast %cst_21 : bf16 to vector<8x1156xbf16>
    %28 = arith.maximumf %26, %27 : vector<8x1156xbf16>
    %c40 = arith.constant 40 : index
    %c0_22 = arith.constant 0 : index
    %29 = vector.load %arg9[%c40, %c0_22] : memref<80x1156xbf16, #tpu.memory_space<vmem>>, vector<8x1156xbf16>
    tpu.vector_store %arg9[%c40, %c0_22], %28 {strides = array<i32>} : memref<80x1156xbf16, #tpu.memory_space<vmem>>, vector<8x1156xbf16>,
    %c0_23 = arith.constant 0 : index
    %c0_24 = arith.constant 0 : index
    %c161 = arith.constant 161 : index
    %30 = vector.load %arg1[%c0_23, %c0_24, %c161] : memref<1x8x1412xbf16, #tpu.memory_space<vmem>>, vector<1x8x1156xbf16>
    %31 = vector.shape_cast %30 : vector<1x8x1156xbf16> to vector<8x1156xbf16>
    %cst_25 = arith.constant 0.000000e+00 : bf16
    %32 = vector.broadcast %cst_25 : bf16 to vector<8x1156xbf16>
    %33 = arith.maximumf %31, %32 : vector<8x1156xbf16>
    %c48 = arith.constant 48 : index
    %c0_26 = arith.constant 0 : index
    %34 = vector.load %arg9[%c48, %c0_26] : memref<80x1156xbf16, #tpu.memory_space<vmem>>, vector<8x1156xbf16>
    tpu.vector_store %arg9[%c48, %c0_26], %33 {strides = array<i32>} : memref<80x1156xbf16, #tpu.memory_space<vmem>>, vector<8x1156xbf16>,
    %c0_27 = arith.constant 0 : index
    %c0_28 = arith.constant 0 : index
    %c162 = arith.constant 162 : index
    %35 = vector.load %arg1[%c0_27, %c0_28, %c162] : memref<1x8x1412xbf16, #tpu.memory_space<vmem>>, vector<1x8x1156xbf16>
    %36 = vector.shape_cast %35 : vector<1x8x1156xbf16> to vector<8x1156xbf16>
    %cst_29 = arith.constant 0.000000e+00 : bf16
    %37 = vector.broadcast %cst_29 : bf16 to vector<8x1156xbf16>
    %38 = arith.maximumf %36, %37 : vector<8x1156xbf16>
    %c56 = arith.constant 56 : index
    %c0_30 = arith.constant 0 : index
    %39 = vector.load %arg9[%c56, %c0_30] : memref<80x1156xbf16, #tpu.memory_space<vmem>>, vector<8x1156xbf16>
    tpu.vector_store %arg9[%c56, %c0_30], %38 {strides = array<i32>} : memref<80x1156xbf16, #tpu.memory_space<vmem>>, vector<8x1156xbf16>,
    %c0_31 = arith.constant 0 : index
    %c0_32 = arith.constant 0 : index
    %c163 = arith.constant 163 : index
    %40 = vector.load %arg1[%c0_31, %c0_32, %c163] : memref<1x8x1412xbf16, #tpu.memory_space<vmem>>, vector<1x8x1156xbf16>
    %41 = vector.shape_cast %40 : vector<1x8x1156xbf16> to vector<8x1156xbf16>
    %cst_33 = arith.constant 0.000000e+00 : bf16
    %42 = vector.broadcast %cst_33 : bf16 to vector<8x1156xbf16>
    %43 = arith.maximumf %41, %42 : vector<8x1156xbf16>
    %c64 = arith.constant 64 : index
    %c0_34 = arith.constant 0 : index
    %44 = vector.load %arg9[%c64, %c0_34] : memref<80x1156xbf16, #tpu.memory_space<vmem>>, vector<8x1156xbf16>
    tpu.vector_store %arg9[%c64, %c0_34], %43 {strides = array<i32>} : memref<80x1156xbf16, #tpu.memory_space<vmem>>, vector<8x1156xbf16>,
    %c0_35 = arith.constant 0 : index
    %c0_36 = arith.constant 0 : index
    %45 = vector.load %arg2[%c0_35, %c0_36] : memref<8x72xbf16, #tpu.memory_space<vmem>>, vector<8x72xbf16>
    %c0_37 = arith.constant 0 : index
    %c0_38 = arith.constant 0 : index
    %46 = vector.load %arg9[%c0_37, %c0_38] : memref<80x1156xbf16, #tpu.memory_space<vmem>>, vector<72x1156xbf16>
    %cst_39 = arith.constant dense<0.000000e+00> : vector<8x1156xf32>
    %47 = tpu.matmul %45, %46, %cst_39 {dimension_numbers = #tpu.dot_dimension_numbers<[1], [0], [0], [1], [0, 0, 1, 1], [], []>} : vector<8x72xbf16>, vector<72x1156xbf16>, vector<8x1156xf32> -> vector<8x1156xf32>
    %c0_40 = arith.constant 0 : index
    %c0_41 = arith.constant 0 : index
    %48 = vector.load %arg3[%c0_40, %c0_41] : memref<8x1xf32, #tpu.memory_space<vmem>>, vector<8x1xf32>
    %49 = vector.broadcast %48 : vector<8x1xf32> to vector<8x1156xf32>
    %50 = arith.addf %47, %49 : vector<8x1156xf32>
    %cst_42 = arith.constant 0.000000e+00 : f32
    %51 = vector.broadcast %cst_42 : f32 to vector<8x1156xf32>
    %52 = arith.maximumf %50, %51 : vector<8x1156xf32>
    %53 = arith.truncf %52 : vector<8x1156xf32> to vector<8x1156xbf16>
    %c0_43 = arith.constant 0 : index
    %c0_44 = arith.constant 0 : index
    %54 = vector.load %arg6[%c0_43, %c0_44] : memref<1x1156xbf16, #tpu.memory_space<vmem>>, vector<1x1156xbf16>
    %55 = vector.broadcast %54 : vector<1x1156xbf16> to vector<8x1156xbf16>
    %56 = arith.mulf %53, %55 : vector<8x1156xbf16>
    %cst_45 = arith.constant 0.000000e+00 : bf16
    %57 = vector.broadcast %cst_45 : bf16 to vector<8x128xbf16>
    %c0_46 = arith.constant 0 : index
    %c0_47 = arith.constant 0 : index
    %58 = vector.load %arg8[%c0_46, %c0_47] : memref<8x1412xbf16, #tpu.memory_space<vmem>>, vector<8x128xbf16>
    tpu.vector_store %arg8[%c0_46, %c0_47], %57 {strides = array<i32>} : memref<8x1412xbf16, #tpu.memory_space<vmem>>, vector<8x128xbf16>,
    %cst_48 = arith.constant 0.000000e+00 : bf16
    %59 = vector.broadcast %cst_48 : bf16 to vector<8x128xbf16>
    %c0_49 = arith.constant 0 : index
    %c1284 = arith.constant 1284 : index
    %60 = vector.load %arg8[%c0_49, %c1284] : memref<8x1412xbf16, #tpu.memory_space<vmem>>, vector<8x128xbf16>
    tpu.vector_store %arg8[%c0_49, %c1284], %59 {strides = array<i32>} : memref<8x1412xbf16, #tpu.memory_space<vmem>>, vector<8x128xbf16>,
    %c0_50 = arith.constant 0 : index
    %c128_51 = arith.constant 128 : index
    %61 = vector.load %arg8[%c0_50, %c128_51] : memref<8x1412xbf16, #tpu.memory_space<vmem>>, vector<8x1156xbf16>
    tpu.vector_store %arg8[%c0_50, %c128_51], %56 {strides = array<i32>} : memref<8x1412xbf16, #tpu.memory_space<vmem>>, vector<8x1156xbf16>,
    %c0_52 = arith.constant 0 : index
    %c93_53 = arith.constant 93 : index
    %62 = vector.load %arg8[%c0_52, %c93_53] : memref<8x1412xbf16, #tpu.memory_space<vmem>>, vector<8x1156xbf16>
    %c0_54 = arith.constant 0 : index
    %c0_55 = arith.constant 0 : index
    %63 = vector.load %arg9[%c0_54, %c0_55] : memref<80x1156xbf16, #tpu.memory_space<vmem>>, vector<8x1156xbf16>
    tpu.vector_store %arg9[%c0_54, %c0_55], %62 {strides = array<i32>} : memref<80x1156xbf16, #tpu.memory_space<vmem>>, vector<8x1156xbf16>,
    %c0_56 = arith.constant 0 : index
    %c94_57 = arith.constant 94 : index
    %64 = vector.load %arg8[%c0_56, %c94_57] : memref<8x1412xbf16, #tpu.memory_space<vmem>>, vector<8x1156xbf16>
    %c8_58 = arith.constant 8 : index
    %c0_59 = arith.constant 0 : index
    %65 = vector.load %arg9[%c8_58, %c0_59] : memref<80x1156xbf16, #tpu.memory_space<vmem>>, vector<8x1156xbf16>
    tpu.vector_store %arg9[%c8_58, %c0_59], %64 {strides = array<i32>} : memref<80x1156xbf16, #tpu.memory_space<vmem>>, vector<8x1156xbf16>,
    %c0_60 = arith.constant 0 : index
    %c95_61 = arith.constant 95 : index
    %66 = vector.load %arg8[%c0_60, %c95_61] : memref<8x1412xbf16, #tpu.memory_space<vmem>>, vector<8x1156xbf16>
    %c16_62 = arith.constant 16 : index
    %c0_63 = arith.constant 0 : index
    %67 = vector.load %arg9[%c16_62, %c0_63] : memref<80x1156xbf16, #tpu.memory_space<vmem>>, vector<8x1156xbf16>
    tpu.vector_store %arg9[%c16_62, %c0_63], %66 {strides = array<i32>} : memref<80x1156xbf16, #tpu.memory_space<vmem>>, vector<8x1156xbf16>,
    %c0_64 = arith.constant 0 : index
    %c127_65 = arith.constant 127 : index
    %68 = vector.load %arg8[%c0_64, %c127_65] : memref<8x1412xbf16, #tpu.memory_space<vmem>>, vector<8x1156xbf16>
    %c24_66 = arith.constant 24 : index
    %c0_67 = arith.constant 0 : index
    %69 = vector.load %arg9[%c24_66, %c0_67] : memref<80x1156xbf16, #tpu.memory_space<vmem>>, vector<8x1156xbf16>
    tpu.vector_store %arg9[%c24_66, %c0_67], %68 {strides = array<i32>} : memref<80x1156xbf16, #tpu.memory_space<vmem>>, vector<8x1156xbf16>,
    %c0_68 = arith.constant 0 : index
    %c128_69 = arith.constant 128 : index
    %70 = vector.load %arg8[%c0_68, %c128_69] : memref<8x1412xbf16, #tpu.memory_space<vmem>>, vector<8x1156xbf16>
    %c32_70 = arith.constant 32 : index
    %c0_71 = arith.constant 0 : index
    %71 = vector.load %arg9[%c32_70, %c0_71] : memref<80x1156xbf16, #tpu.memory_space<vmem>>, vector<8x1156xbf16>
    tpu.vector_store %arg9[%c32_70, %c0_71], %70 {strides = array<i32>} : memref<80x1156xbf16, #tpu.memory_space<vmem>>, vector<8x1156xbf16>,
    %c0_72 = arith.constant 0 : index
    %c129_73 = arith.constant 129 : index
    %72 = vector.load %arg8[%c0_72, %c129_73] : memref<8x1412xbf16, #tpu.memory_space<vmem>>, vector<8x1156xbf16>
    %c40_74 = arith.constant 40 : index
    %c0_75 = arith.constant 0 : index
    %73 = vector.load %arg9[%c40_74, %c0_75] : memref<80x1156xbf16, #tpu.memory_space<vmem>>, vector<8x1156xbf16>
    tpu.vector_store %arg9[%c40_74, %c0_75], %72 {strides = array<i32>} : memref<80x1156xbf16, #tpu.memory_space<vmem>>, vector<8x1156xbf16>,
    %c0_76 = arith.constant 0 : index
    %c161_77 = arith.constant 161 : index
    %74 = vector.load %arg8[%c0_76, %c161_77] : memref<8x1412xbf16, #tpu.memory_space<vmem>>, vector<8x1156xbf16>
    %c48_78 = arith.constant 48 : index
    %c0_79 = arith.constant 0 : index
    %75 = vector.load %arg9[%c48_78, %c0_79] : memref<80x1156xbf16, #tpu.memory_space<vmem>>, vector<8x1156xbf16>
    tpu.vector_store %arg9[%c48_78, %c0_79], %74 {strides = array<i32>} : memref<80x1156xbf16, #tpu.memory_space<vmem>>, vector<8x1156xbf16>,
    %c0_80 = arith.constant 0 : index
    %c162_81 = arith.constant 162 : index
    %76 = vector.load %arg8[%c0_80, %c162_81] : memref<8x1412xbf16, #tpu.memory_space<vmem>>, vector<8x1156xbf16>
    %c56_82 = arith.constant 56 : index
    %c0_83 = arith.constant 0 : index
    %77 = vector.load %arg9[%c56_82, %c0_83] : memref<80x1156xbf16, #tpu.memory_space<vmem>>, vector<8x1156xbf16>
    tpu.vector_store %arg9[%c56_82, %c0_83], %76 {strides = array<i32>} : memref<80x1156xbf16, #tpu.memory_space<vmem>>, vector<8x1156xbf16>,
    %c0_84 = arith.constant 0 : index
    %c163_85 = arith.constant 163 : index
    %78 = vector.load %arg8[%c0_84, %c163_85] : memref<8x1412xbf16, #tpu.memory_space<vmem>>, vector<8x1156xbf16>
    %c64_86 = arith.constant 64 : index
    %c0_87 = arith.constant 0 : index
    %79 = vector.load %arg9[%c64_86, %c0_87] : memref<80x1156xbf16, #tpu.memory_space<vmem>>, vector<8x1156xbf16>
    tpu.vector_store %arg9[%c64_86, %c0_87], %78 {strides = array<i32>} : memref<80x1156xbf16, #tpu.memory_space<vmem>>, vector<8x1156xbf16>,
    %c0_88 = arith.constant 0 : index
    %c0_89 = arith.constant 0 : index
    %c128_90 = arith.constant 128 : index
    %80 = vector.load %arg1[%c0_88, %c0_89, %c128_90] : memref<1x8x1412xbf16, #tpu.memory_space<vmem>>, vector<1x8x1156xbf16>
    %81 = vector.shape_cast %80 : vector<1x8x1156xbf16> to vector<8x1156xbf16>
    %c72 = arith.constant 72 : index
    %c0_91 = arith.constant 0 : index
    %82 = vector.load %arg9[%c72, %c0_91] : memref<80x1156xbf16, #tpu.memory_space<vmem>>, vector<8x1156xbf16>
    tpu.vector_store %arg9[%c72, %c0_91], %81 {strides = array<i32>} : memref<80x1156xbf16, #tpu.memory_space<vmem>>, vector<8x1156xbf16>,
    %c0_92 = arith.constant 0 : index
    %c0_93 = arith.constant 0 : index
    %83 = vector.load %arg4[%c0_92, %c0_93] : memref<8x80xbf16, #tpu.memory_space<vmem>>, vector<8x80xbf16>
    %c0_94 = arith.constant 0 : index
    %c0_95 = arith.constant 0 : index
    %84 = vector.load %arg9[%c0_94, %c0_95] : memref<80x1156xbf16, #tpu.memory_space<vmem>>, vector<80x1156xbf16>
    %cst_96 = arith.constant dense<0.000000e+00> : vector<8x1156xf32>
    %85 = tpu.matmul %83, %84, %cst_96 {dimension_numbers = #tpu.dot_dimension_numbers<[1], [0], [0], [1], [0, 0, 1, 1], [], []>} : vector<8x80xbf16>, vector<80x1156xbf16>, vector<8x1156xf32> -> vector<8x1156xf32>
    %c0_97 = arith.constant 0 : index
    %c0_98 = arith.constant 0 : index
    %86 = vector.load %arg5[%c0_97, %c0_98] : memref<8x1xf32, #tpu.memory_space<vmem>>, vector<8x1xf32>
    %87 = vector.broadcast %86 : vector<8x1xf32> to vector<8x1156xf32>
    %88 = arith.addf %85, %87 : vector<8x1156xf32>
    %89 = arith.truncf %88 : vector<8x1156xf32> to vector<8x1156xbf16>
    %c0_99 = arith.constant 0 : index
    %c0_100 = arith.constant 0 : index
    %c0_101 = arith.constant 0 : index
    %90 = vector.load %arg7[%c0_99, %c0_100, %c0_101] : memref<1x8x1156xbf16, #tpu.memory_space<vmem>>, vector<1x8x1156xbf16>
    %91 = vector.shape_cast %90 : vector<1x8x1156xbf16> to vector<8x1156xbf16>
    %92 = vector.shape_cast %89 : vector<8x1156xbf16> to vector<1x8x1156xbf16>
    tpu.vector_store %arg7[%c0_99, %c0_100, %c0_101], %92 {strides = array<i32>} : memref<1x8x1156xbf16, #tpu.memory_space<vmem>>, vector<1x8x1156xbf16>,
    return
  }
  func.func @transform_0(%arg0: i32) -> (i32, i32, i32) {
    %c0_i32 = arith.constant 0 : i32
    %c0_i32_0 = arith.constant 0 : i32
    %c0_i32_1 = arith.constant 0 : i32
    return %arg0, %c0_i32, %c0_i32_0 : i32, i32, i32
  }
  func.func @transform_1(%arg0: i32) -> (i32, i32) {
    %c0_i32 = arith.constant 0 : i32
    %c0_i32_0 = arith.constant 0 : i32
    %c0_i32_1 = arith.constant 0 : i32
    return %c0_i32, %c0_i32_0 : i32, i32
  }
  func.func @transform_2(%arg0: i32) -> (i32, i32) {
    %c0_i32 = arith.constant 0 : i32
    %c0_i32_0 = arith.constant 0 : i32
    %c0_i32_1 = arith.constant 0 : i32
    return %c0_i32, %c0_i32_0 : i32, i32
  }
  func.func @transform_3(%arg0: i32) -> (i32, i32) {
    %c0_i32 = arith.constant 0 : i32
    %c0_i32_0 = arith.constant 0 : i32
    %c0_i32_1 = arith.constant 0 : i32
    return %c0_i32, %c0_i32_0 : i32, i32
  }
  func.func @transform_4(%arg0: i32) -> (i32, i32) {
    %c0_i32 = arith.constant 0 : i32
    %c0_i32_0 = arith.constant 0 : i32
    %c0_i32_1 = arith.constant 0 : i32
    return %c0_i32, %c0_i32_0 : i32, i32
  }
  func.func @transform_5(%arg0: i32) -> (i32, i32) {
    %c0_i32 = arith.constant 0 : i32
    %c0_i32_0 = arith.constant 0 : i32
    %c0_i32_1 = arith.constant 0 : i32
    return %c0_i32, %c0_i32_0 : i32, i32
  }
  func.func @transform_6(%arg0: i32) -> (i32, i32, i32) {
    %c0_i32 = arith.constant 0 : i32
    %c0_i32_0 = arith.constant 0 : i32
    %c0_i32_1 = arith.constant 0 : i32
    return %arg0, %c0_i32, %c0_i32_0 : i32, i32, i32
  }
}

module attributes {stable_mosaic.version = 11 : i64} {
  func.func @_dblock_kernel(%arg0: i32, %arg1: memref<1x8x580xbf16, #tpu.memory_space<vmem>>, %arg2: memref<8x72xbf16, #tpu.memory_space<vmem>>, %arg3: memref<8x1xf32, #tpu.memory_space<vmem>>, %arg4: memref<8x80xbf16, #tpu.memory_space<vmem>>, %arg5: memref<8x1xf32, #tpu.memory_space<vmem>>, %arg6: memref<1x324xbf16, #tpu.memory_space<vmem>>, %arg7: memref<1x8x324xbf16, #tpu.memory_space<vmem>>, %arg8: memref<8x580xbf16, #tpu.memory_space<vmem>>, %arg9: memref<80x324xbf16, #tpu.memory_space<vmem>>) attributes {dimension_semantics = [#tpu.dimension_semantics<parallel>], iteration_bounds = array<i64: 8>, scalar_prefetch = 0 : i64, scratch_operands = 2 : i64, tpu.core_type = #tpu.core_type<tc>, window_params = [{transform_indices = @transform_0, window_bounds = array<i64: 1, 8, 580>}, {pipeline_mode = #tpu.pipeline_mode<synchronous>, transform_indices = @transform_1, window_bounds = array<i64: 8, 72>}, {pipeline_mode = #tpu.pipeline_mode<synchronous>, transform_indices = @transform_2, window_bounds = array<i64: 8, 1>}, {pipeline_mode = #tpu.pipeline_mode<synchronous>, transform_indices = @transform_3, window_bounds = array<i64: 8, 80>}, {pipeline_mode = #tpu.pipeline_mode<synchronous>, transform_indices = @transform_4, window_bounds = array<i64: 8, 1>}, {pipeline_mode = #tpu.pipeline_mode<synchronous>, transform_indices = @transform_5, window_bounds = array<i64: 1, 324>}, {transform_indices = @transform_6, window_bounds = array<i64: 1, 8, 324>}]} {
    %c0 = arith.constant 0 : index
    %c0_0 = arith.constant 0 : index
    %c109 = arith.constant 109 : index
    %0 = vector.load %arg1[%c0, %c0_0, %c109] : memref<1x8x580xbf16, #tpu.memory_space<vmem>>, vector<1x8x324xbf16>
    %1 = vector.shape_cast %0 : vector<1x8x324xbf16> to vector<8x324xbf16>
    %cst = arith.constant 0.000000e+00 : bf16
    %2 = vector.broadcast %cst : bf16 to vector<8x324xbf16>
    %3 = arith.maximumf %1, %2 : vector<8x324xbf16>
    %c0_1 = arith.constant 0 : index
    %c0_2 = arith.constant 0 : index
    %4 = vector.load %arg9[%c0_1, %c0_2] : memref<80x324xbf16, #tpu.memory_space<vmem>>, vector<8x324xbf16>
    tpu.vector_store %arg9[%c0_1, %c0_2], %3 {strides = array<i32>} : memref<80x324xbf16, #tpu.memory_space<vmem>>, vector<8x324xbf16>,
    %c0_3 = arith.constant 0 : index
    %c0_4 = arith.constant 0 : index
    %c110 = arith.constant 110 : index
    %5 = vector.load %arg1[%c0_3, %c0_4, %c110] : memref<1x8x580xbf16, #tpu.memory_space<vmem>>, vector<1x8x324xbf16>
    %6 = vector.shape_cast %5 : vector<1x8x324xbf16> to vector<8x324xbf16>
    %cst_5 = arith.constant 0.000000e+00 : bf16
    %7 = vector.broadcast %cst_5 : bf16 to vector<8x324xbf16>
    %8 = arith.maximumf %6, %7 : vector<8x324xbf16>
    %c8 = arith.constant 8 : index
    %c0_6 = arith.constant 0 : index
    %9 = vector.load %arg9[%c8, %c0_6] : memref<80x324xbf16, #tpu.memory_space<vmem>>, vector<8x324xbf16>
    tpu.vector_store %arg9[%c8, %c0_6], %8 {strides = array<i32>} : memref<80x324xbf16, #tpu.memory_space<vmem>>, vector<8x324xbf16>,
    %c0_7 = arith.constant 0 : index
    %c0_8 = arith.constant 0 : index
    %c111 = arith.constant 111 : index
    %10 = vector.load %arg1[%c0_7, %c0_8, %c111] : memref<1x8x580xbf16, #tpu.memory_space<vmem>>, vector<1x8x324xbf16>
    %11 = vector.shape_cast %10 : vector<1x8x324xbf16> to vector<8x324xbf16>
    %cst_9 = arith.constant 0.000000e+00 : bf16
    %12 = vector.broadcast %cst_9 : bf16 to vector<8x324xbf16>
    %13 = arith.maximumf %11, %12 : vector<8x324xbf16>
    %c16 = arith.constant 16 : index
    %c0_10 = arith.constant 0 : index
    %14 = vector.load %arg9[%c16, %c0_10] : memref<80x324xbf16, #tpu.memory_space<vmem>>, vector<8x324xbf16>
    tpu.vector_store %arg9[%c16, %c0_10], %13 {strides = array<i32>} : memref<80x324xbf16, #tpu.memory_space<vmem>>, vector<8x324xbf16>,
    %c0_11 = arith.constant 0 : index
    %c0_12 = arith.constant 0 : index
    %c127 = arith.constant 127 : index
    %15 = vector.load %arg1[%c0_11, %c0_12, %c127] : memref<1x8x580xbf16, #tpu.memory_space<vmem>>, vector<1x8x324xbf16>
    %16 = vector.shape_cast %15 : vector<1x8x324xbf16> to vector<8x324xbf16>
    %cst_13 = arith.constant 0.000000e+00 : bf16
    %17 = vector.broadcast %cst_13 : bf16 to vector<8x324xbf16>
    %18 = arith.maximumf %16, %17 : vector<8x324xbf16>
    %c24 = arith.constant 24 : index
    %c0_14 = arith.constant 0 : index
    %19 = vector.load %arg9[%c24, %c0_14] : memref<80x324xbf16, #tpu.memory_space<vmem>>, vector<8x324xbf16>
    tpu.vector_store %arg9[%c24, %c0_14], %18 {strides = array<i32>} : memref<80x324xbf16, #tpu.memory_space<vmem>>, vector<8x324xbf16>,
    %c0_15 = arith.constant 0 : index
    %c0_16 = arith.constant 0 : index
    %c128 = arith.constant 128 : index
    %20 = vector.load %arg1[%c0_15, %c0_16, %c128] : memref<1x8x580xbf16, #tpu.memory_space<vmem>>, vector<1x8x324xbf16>
    %21 = vector.shape_cast %20 : vector<1x8x324xbf16> to vector<8x324xbf16>
    %cst_17 = arith.constant 0.000000e+00 : bf16
    %22 = vector.broadcast %cst_17 : bf16 to vector<8x324xbf16>
    %23 = arith.maximumf %21, %22 : vector<8x324xbf16>
    %c32 = arith.constant 32 : index
    %c0_18 = arith.constant 0 : index
    %24 = vector.load %arg9[%c32, %c0_18] : memref<80x324xbf16, #tpu.memory_space<vmem>>, vector<8x324xbf16>
    tpu.vector_store %arg9[%c32, %c0_18], %23 {strides = array<i32>} : memref<80x324xbf16, #tpu.memory_space<vmem>>, vector<8x324xbf16>,
    %c0_19 = arith.constant 0 : index
    %c0_20 = arith.constant 0 : index
    %c129 = arith.constant 129 : index
    %25 = vector.load %arg1[%c0_19, %c0_20, %c129] : memref<1x8x580xbf16, #tpu.memory_space<vmem>>, vector<1x8x324xbf16>
    %26 = vector.shape_cast %25 : vector<1x8x324xbf16> to vector<8x324xbf16>
    %cst_21 = arith.constant 0.000000e+00 : bf16
    %27 = vector.broadcast %cst_21 : bf16 to vector<8x324xbf16>
    %28 = arith.maximumf %26, %27 : vector<8x324xbf16>
    %c40 = arith.constant 40 : index
    %c0_22 = arith.constant 0 : index
    %29 = vector.load %arg9[%c40, %c0_22] : memref<80x324xbf16, #tpu.memory_space<vmem>>, vector<8x324xbf16>
    tpu.vector_store %arg9[%c40, %c0_22], %28 {strides = array<i32>} : memref<80x324xbf16, #tpu.memory_space<vmem>>, vector<8x324xbf16>,
    %c0_23 = arith.constant 0 : index
    %c0_24 = arith.constant 0 : index
    %c145 = arith.constant 145 : index
    %30 = vector.load %arg1[%c0_23, %c0_24, %c145] : memref<1x8x580xbf16, #tpu.memory_space<vmem>>, vector<1x8x324xbf16>
    %31 = vector.shape_cast %30 : vector<1x8x324xbf16> to vector<8x324xbf16>
    %cst_25 = arith.constant 0.000000e+00 : bf16
    %32 = vector.broadcast %cst_25 : bf16 to vector<8x324xbf16>
    %33 = arith.maximumf %31, %32 : vector<8x324xbf16>
    %c48 = arith.constant 48 : index
    %c0_26 = arith.constant 0 : index
    %34 = vector.load %arg9[%c48, %c0_26] : memref<80x324xbf16, #tpu.memory_space<vmem>>, vector<8x324xbf16>
    tpu.vector_store %arg9[%c48, %c0_26], %33 {strides = array<i32>} : memref<80x324xbf16, #tpu.memory_space<vmem>>, vector<8x324xbf16>,
    %c0_27 = arith.constant 0 : index
    %c0_28 = arith.constant 0 : index
    %c146 = arith.constant 146 : index
    %35 = vector.load %arg1[%c0_27, %c0_28, %c146] : memref<1x8x580xbf16, #tpu.memory_space<vmem>>, vector<1x8x324xbf16>
    %36 = vector.shape_cast %35 : vector<1x8x324xbf16> to vector<8x324xbf16>
    %cst_29 = arith.constant 0.000000e+00 : bf16
    %37 = vector.broadcast %cst_29 : bf16 to vector<8x324xbf16>
    %38 = arith.maximumf %36, %37 : vector<8x324xbf16>
    %c56 = arith.constant 56 : index
    %c0_30 = arith.constant 0 : index
    %39 = vector.load %arg9[%c56, %c0_30] : memref<80x324xbf16, #tpu.memory_space<vmem>>, vector<8x324xbf16>
    tpu.vector_store %arg9[%c56, %c0_30], %38 {strides = array<i32>} : memref<80x324xbf16, #tpu.memory_space<vmem>>, vector<8x324xbf16>,
    %c0_31 = arith.constant 0 : index
    %c0_32 = arith.constant 0 : index
    %c147 = arith.constant 147 : index
    %40 = vector.load %arg1[%c0_31, %c0_32, %c147] : memref<1x8x580xbf16, #tpu.memory_space<vmem>>, vector<1x8x324xbf16>
    %41 = vector.shape_cast %40 : vector<1x8x324xbf16> to vector<8x324xbf16>
    %cst_33 = arith.constant 0.000000e+00 : bf16
    %42 = vector.broadcast %cst_33 : bf16 to vector<8x324xbf16>
    %43 = arith.maximumf %41, %42 : vector<8x324xbf16>
    %c64 = arith.constant 64 : index
    %c0_34 = arith.constant 0 : index
    %44 = vector.load %arg9[%c64, %c0_34] : memref<80x324xbf16, #tpu.memory_space<vmem>>, vector<8x324xbf16>
    tpu.vector_store %arg9[%c64, %c0_34], %43 {strides = array<i32>} : memref<80x324xbf16, #tpu.memory_space<vmem>>, vector<8x324xbf16>,
    %c0_35 = arith.constant 0 : index
    %c0_36 = arith.constant 0 : index
    %45 = vector.load %arg2[%c0_35, %c0_36] : memref<8x72xbf16, #tpu.memory_space<vmem>>, vector<8x72xbf16>
    %c0_37 = arith.constant 0 : index
    %c0_38 = arith.constant 0 : index
    %46 = vector.load %arg9[%c0_37, %c0_38] : memref<80x324xbf16, #tpu.memory_space<vmem>>, vector<72x324xbf16>
    %cst_39 = arith.constant dense<0.000000e+00> : vector<8x324xf32>
    %47 = tpu.matmul %45, %46, %cst_39 {dimension_numbers = #tpu.dot_dimension_numbers<[1], [0], [0], [1], [0, 0, 1, 1], [], []>} : vector<8x72xbf16>, vector<72x324xbf16>, vector<8x324xf32> -> vector<8x324xf32>
    %c0_40 = arith.constant 0 : index
    %c0_41 = arith.constant 0 : index
    %48 = vector.load %arg3[%c0_40, %c0_41] : memref<8x1xf32, #tpu.memory_space<vmem>>, vector<8x1xf32>
    %49 = vector.broadcast %48 : vector<8x1xf32> to vector<8x324xf32>
    %50 = arith.addf %47, %49 : vector<8x324xf32>
    %cst_42 = arith.constant 0.000000e+00 : f32
    %51 = vector.broadcast %cst_42 : f32 to vector<8x324xf32>
    %52 = arith.maximumf %50, %51 : vector<8x324xf32>
    %53 = arith.truncf %52 : vector<8x324xf32> to vector<8x324xbf16>
    %c0_43 = arith.constant 0 : index
    %c0_44 = arith.constant 0 : index
    %54 = vector.load %arg6[%c0_43, %c0_44] : memref<1x324xbf16, #tpu.memory_space<vmem>>, vector<1x324xbf16>
    %55 = vector.broadcast %54 : vector<1x324xbf16> to vector<8x324xbf16>
    %56 = arith.mulf %53, %55 : vector<8x324xbf16>
    %cst_45 = arith.constant 0.000000e+00 : bf16
    %57 = vector.broadcast %cst_45 : bf16 to vector<8x128xbf16>
    %c0_46 = arith.constant 0 : index
    %c0_47 = arith.constant 0 : index
    %58 = vector.load %arg8[%c0_46, %c0_47] : memref<8x580xbf16, #tpu.memory_space<vmem>>, vector<8x128xbf16>
    tpu.vector_store %arg8[%c0_46, %c0_47], %57 {strides = array<i32>} : memref<8x580xbf16, #tpu.memory_space<vmem>>, vector<8x128xbf16>,
    %cst_48 = arith.constant 0.000000e+00 : bf16
    %59 = vector.broadcast %cst_48 : bf16 to vector<8x128xbf16>
    %c0_49 = arith.constant 0 : index
    %c452 = arith.constant 452 : index
    %60 = vector.load %arg8[%c0_49, %c452] : memref<8x580xbf16, #tpu.memory_space<vmem>>, vector<8x128xbf16>
    tpu.vector_store %arg8[%c0_49, %c452], %59 {strides = array<i32>} : memref<8x580xbf16, #tpu.memory_space<vmem>>, vector<8x128xbf16>,
    %c0_50 = arith.constant 0 : index
    %c128_51 = arith.constant 128 : index
    %61 = vector.load %arg8[%c0_50, %c128_51] : memref<8x580xbf16, #tpu.memory_space<vmem>>, vector<8x324xbf16>
    tpu.vector_store %arg8[%c0_50, %c128_51], %56 {strides = array<i32>} : memref<8x580xbf16, #tpu.memory_space<vmem>>, vector<8x324xbf16>,
    %c0_52 = arith.constant 0 : index
    %c109_53 = arith.constant 109 : index
    %62 = vector.load %arg8[%c0_52, %c109_53] : memref<8x580xbf16, #tpu.memory_space<vmem>>, vector<8x324xbf16>
    %c0_54 = arith.constant 0 : index
    %c0_55 = arith.constant 0 : index
    %63 = vector.load %arg9[%c0_54, %c0_55] : memref<80x324xbf16, #tpu.memory_space<vmem>>, vector<8x324xbf16>
    tpu.vector_store %arg9[%c0_54, %c0_55], %62 {strides = array<i32>} : memref<80x324xbf16, #tpu.memory_space<vmem>>, vector<8x324xbf16>,
    %c0_56 = arith.constant 0 : index
    %c110_57 = arith.constant 110 : index
    %64 = vector.load %arg8[%c0_56, %c110_57] : memref<8x580xbf16, #tpu.memory_space<vmem>>, vector<8x324xbf16>
    %c8_58 = arith.constant 8 : index
    %c0_59 = arith.constant 0 : index
    %65 = vector.load %arg9[%c8_58, %c0_59] : memref<80x324xbf16, #tpu.memory_space<vmem>>, vector<8x324xbf16>
    tpu.vector_store %arg9[%c8_58, %c0_59], %64 {strides = array<i32>} : memref<80x324xbf16, #tpu.memory_space<vmem>>, vector<8x324xbf16>,
    %c0_60 = arith.constant 0 : index
    %c111_61 = arith.constant 111 : index
    %66 = vector.load %arg8[%c0_60, %c111_61] : memref<8x580xbf16, #tpu.memory_space<vmem>>, vector<8x324xbf16>
    %c16_62 = arith.constant 16 : index
    %c0_63 = arith.constant 0 : index
    %67 = vector.load %arg9[%c16_62, %c0_63] : memref<80x324xbf16, #tpu.memory_space<vmem>>, vector<8x324xbf16>
    tpu.vector_store %arg9[%c16_62, %c0_63], %66 {strides = array<i32>} : memref<80x324xbf16, #tpu.memory_space<vmem>>, vector<8x324xbf16>,
    %c0_64 = arith.constant 0 : index
    %c127_65 = arith.constant 127 : index
    %68 = vector.load %arg8[%c0_64, %c127_65] : memref<8x580xbf16, #tpu.memory_space<vmem>>, vector<8x324xbf16>
    %c24_66 = arith.constant 24 : index
    %c0_67 = arith.constant 0 : index
    %69 = vector.load %arg9[%c24_66, %c0_67] : memref<80x324xbf16, #tpu.memory_space<vmem>>, vector<8x324xbf16>
    tpu.vector_store %arg9[%c24_66, %c0_67], %68 {strides = array<i32>} : memref<80x324xbf16, #tpu.memory_space<vmem>>, vector<8x324xbf16>,
    %c0_68 = arith.constant 0 : index
    %c128_69 = arith.constant 128 : index
    %70 = vector.load %arg8[%c0_68, %c128_69] : memref<8x580xbf16, #tpu.memory_space<vmem>>, vector<8x324xbf16>
    %c32_70 = arith.constant 32 : index
    %c0_71 = arith.constant 0 : index
    %71 = vector.load %arg9[%c32_70, %c0_71] : memref<80x324xbf16, #tpu.memory_space<vmem>>, vector<8x324xbf16>
    tpu.vector_store %arg9[%c32_70, %c0_71], %70 {strides = array<i32>} : memref<80x324xbf16, #tpu.memory_space<vmem>>, vector<8x324xbf16>,
    %c0_72 = arith.constant 0 : index
    %c129_73 = arith.constant 129 : index
    %72 = vector.load %arg8[%c0_72, %c129_73] : memref<8x580xbf16, #tpu.memory_space<vmem>>, vector<8x324xbf16>
    %c40_74 = arith.constant 40 : index
    %c0_75 = arith.constant 0 : index
    %73 = vector.load %arg9[%c40_74, %c0_75] : memref<80x324xbf16, #tpu.memory_space<vmem>>, vector<8x324xbf16>
    tpu.vector_store %arg9[%c40_74, %c0_75], %72 {strides = array<i32>} : memref<80x324xbf16, #tpu.memory_space<vmem>>, vector<8x324xbf16>,
    %c0_76 = arith.constant 0 : index
    %c145_77 = arith.constant 145 : index
    %74 = vector.load %arg8[%c0_76, %c145_77] : memref<8x580xbf16, #tpu.memory_space<vmem>>, vector<8x324xbf16>
    %c48_78 = arith.constant 48 : index
    %c0_79 = arith.constant 0 : index
    %75 = vector.load %arg9[%c48_78, %c0_79] : memref<80x324xbf16, #tpu.memory_space<vmem>>, vector<8x324xbf16>
    tpu.vector_store %arg9[%c48_78, %c0_79], %74 {strides = array<i32>} : memref<80x324xbf16, #tpu.memory_space<vmem>>, vector<8x324xbf16>,
    %c0_80 = arith.constant 0 : index
    %c146_81 = arith.constant 146 : index
    %76 = vector.load %arg8[%c0_80, %c146_81] : memref<8x580xbf16, #tpu.memory_space<vmem>>, vector<8x324xbf16>
    %c56_82 = arith.constant 56 : index
    %c0_83 = arith.constant 0 : index
    %77 = vector.load %arg9[%c56_82, %c0_83] : memref<80x324xbf16, #tpu.memory_space<vmem>>, vector<8x324xbf16>
    tpu.vector_store %arg9[%c56_82, %c0_83], %76 {strides = array<i32>} : memref<80x324xbf16, #tpu.memory_space<vmem>>, vector<8x324xbf16>,
    %c0_84 = arith.constant 0 : index
    %c147_85 = arith.constant 147 : index
    %78 = vector.load %arg8[%c0_84, %c147_85] : memref<8x580xbf16, #tpu.memory_space<vmem>>, vector<8x324xbf16>
    %c64_86 = arith.constant 64 : index
    %c0_87 = arith.constant 0 : index
    %79 = vector.load %arg9[%c64_86, %c0_87] : memref<80x324xbf16, #tpu.memory_space<vmem>>, vector<8x324xbf16>
    tpu.vector_store %arg9[%c64_86, %c0_87], %78 {strides = array<i32>} : memref<80x324xbf16, #tpu.memory_space<vmem>>, vector<8x324xbf16>,
    %c0_88 = arith.constant 0 : index
    %c0_89 = arith.constant 0 : index
    %c128_90 = arith.constant 128 : index
    %80 = vector.load %arg1[%c0_88, %c0_89, %c128_90] : memref<1x8x580xbf16, #tpu.memory_space<vmem>>, vector<1x8x324xbf16>
    %81 = vector.shape_cast %80 : vector<1x8x324xbf16> to vector<8x324xbf16>
    %c72 = arith.constant 72 : index
    %c0_91 = arith.constant 0 : index
    %82 = vector.load %arg9[%c72, %c0_91] : memref<80x324xbf16, #tpu.memory_space<vmem>>, vector<8x324xbf16>
    tpu.vector_store %arg9[%c72, %c0_91], %81 {strides = array<i32>} : memref<80x324xbf16, #tpu.memory_space<vmem>>, vector<8x324xbf16>,
    %c0_92 = arith.constant 0 : index
    %c0_93 = arith.constant 0 : index
    %83 = vector.load %arg4[%c0_92, %c0_93] : memref<8x80xbf16, #tpu.memory_space<vmem>>, vector<8x80xbf16>
    %c0_94 = arith.constant 0 : index
    %c0_95 = arith.constant 0 : index
    %84 = vector.load %arg9[%c0_94, %c0_95] : memref<80x324xbf16, #tpu.memory_space<vmem>>, vector<80x324xbf16>
    %cst_96 = arith.constant dense<0.000000e+00> : vector<8x324xf32>
    %85 = tpu.matmul %83, %84, %cst_96 {dimension_numbers = #tpu.dot_dimension_numbers<[1], [0], [0], [1], [0, 0, 1, 1], [], []>} : vector<8x80xbf16>, vector<80x324xbf16>, vector<8x324xf32> -> vector<8x324xf32>
    %c0_97 = arith.constant 0 : index
    %c0_98 = arith.constant 0 : index
    %86 = vector.load %arg5[%c0_97, %c0_98] : memref<8x1xf32, #tpu.memory_space<vmem>>, vector<8x1xf32>
    %87 = vector.broadcast %86 : vector<8x1xf32> to vector<8x324xf32>
    %88 = arith.addf %85, %87 : vector<8x324xf32>
    %89 = arith.truncf %88 : vector<8x324xf32> to vector<8x324xbf16>
    %c0_99 = arith.constant 0 : index
    %c0_100 = arith.constant 0 : index
    %c0_101 = arith.constant 0 : index
    %90 = vector.load %arg7[%c0_99, %c0_100, %c0_101] : memref<1x8x324xbf16, #tpu.memory_space<vmem>>, vector<1x8x324xbf16>
    %91 = vector.shape_cast %90 : vector<1x8x324xbf16> to vector<8x324xbf16>
    %92 = vector.shape_cast %89 : vector<8x324xbf16> to vector<1x8x324xbf16>
    tpu.vector_store %arg7[%c0_99, %c0_100, %c0_101], %92 {strides = array<i32>} : memref<1x8x324xbf16, #tpu.memory_space<vmem>>, vector<1x8x324xbf16>,
    return
  }
  func.func @transform_0(%arg0: i32) -> (i32, i32, i32) {
    %c0_i32 = arith.constant 0 : i32
    %c0_i32_0 = arith.constant 0 : i32
    %c0_i32_1 = arith.constant 0 : i32
    return %arg0, %c0_i32, %c0_i32_0 : i32, i32, i32
  }
  func.func @transform_1(%arg0: i32) -> (i32, i32) {
    %c0_i32 = arith.constant 0 : i32
    %c0_i32_0 = arith.constant 0 : i32
    %c0_i32_1 = arith.constant 0 : i32
    return %c0_i32, %c0_i32_0 : i32, i32
  }
  func.func @transform_2(%arg0: i32) -> (i32, i32) {
    %c0_i32 = arith.constant 0 : i32
    %c0_i32_0 = arith.constant 0 : i32
    %c0_i32_1 = arith.constant 0 : i32
    return %c0_i32, %c0_i32_0 : i32, i32
  }
  func.func @transform_3(%arg0: i32) -> (i32, i32) {
    %c0_i32 = arith.constant 0 : i32
    %c0_i32_0 = arith.constant 0 : i32
    %c0_i32_1 = arith.constant 0 : i32
    return %c0_i32, %c0_i32_0 : i32, i32
  }
  func.func @transform_4(%arg0: i32) -> (i32, i32) {
    %c0_i32 = arith.constant 0 : i32
    %c0_i32_0 = arith.constant 0 : i32
    %c0_i32_1 = arith.constant 0 : i32
    return %c0_i32, %c0_i32_0 : i32, i32
  }
  func.func @transform_5(%arg0: i32) -> (i32, i32) {
    %c0_i32 = arith.constant 0 : i32
    %c0_i32_0 = arith.constant 0 : i32
    %c0_i32_1 = arith.constant 0 : i32
    return %c0_i32, %c0_i32_0 : i32, i32
  }
  func.func @transform_6(%arg0: i32) -> (i32, i32, i32) {
    %c0_i32 = arith.constant 0 : i32
    %c0_i32_0 = arith.constant 0 : i32
    %c0_i32_1 = arith.constant 0 : i32
    return %arg0, %c0_i32, %c0_i32_0 : i32, i32, i32
  }
}

module attributes {stable_mosaic.version = 11 : i64} {
  func.func @_dblock_kernel(%arg0: i32, %arg1: memref<1x8x356xbf16, #tpu.memory_space<vmem>>, %arg2: memref<8x72xbf16, #tpu.memory_space<vmem>>, %arg3: memref<8x1xf32, #tpu.memory_space<vmem>>, %arg4: memref<8x80xbf16, #tpu.memory_space<vmem>>, %arg5: memref<8x1xf32, #tpu.memory_space<vmem>>, %arg6: memref<1x100xbf16, #tpu.memory_space<vmem>>, %arg7: memref<1x8x100xbf16, #tpu.memory_space<vmem>>, %arg8: memref<8x356xbf16, #tpu.memory_space<vmem>>, %arg9: memref<80x100xbf16, #tpu.memory_space<vmem>>) attributes {dimension_semantics = [#tpu.dimension_semantics<parallel>], iteration_bounds = array<i64: 8>, scalar_prefetch = 0 : i64, scratch_operands = 2 : i64, tpu.core_type = #tpu.core_type<tc>, window_params = [{transform_indices = @transform_0, window_bounds = array<i64: 1, 8, 356>}, {pipeline_mode = #tpu.pipeline_mode<synchronous>, transform_indices = @transform_1, window_bounds = array<i64: 8, 72>}, {pipeline_mode = #tpu.pipeline_mode<synchronous>, transform_indices = @transform_2, window_bounds = array<i64: 8, 1>}, {pipeline_mode = #tpu.pipeline_mode<synchronous>, transform_indices = @transform_3, window_bounds = array<i64: 8, 80>}, {pipeline_mode = #tpu.pipeline_mode<synchronous>, transform_indices = @transform_4, window_bounds = array<i64: 8, 1>}, {pipeline_mode = #tpu.pipeline_mode<synchronous>, transform_indices = @transform_5, window_bounds = array<i64: 1, 100>}, {transform_indices = @transform_6, window_bounds = array<i64: 1, 8, 100>}]} {
    %c0 = arith.constant 0 : index
    %c0_0 = arith.constant 0 : index
    %c117 = arith.constant 117 : index
    %0 = vector.load %arg1[%c0, %c0_0, %c117] : memref<1x8x356xbf16, #tpu.memory_space<vmem>>, vector<1x8x100xbf16>
    %1 = vector.shape_cast %0 : vector<1x8x100xbf16> to vector<8x100xbf16>
    %cst = arith.constant 0.000000e+00 : bf16
    %2 = vector.broadcast %cst : bf16 to vector<8x100xbf16>
    %3 = arith.maximumf %1, %2 : vector<8x100xbf16>
    %c0_1 = arith.constant 0 : index
    %c0_2 = arith.constant 0 : index
    %4 = vector.load %arg9[%c0_1, %c0_2] : memref<80x100xbf16, #tpu.memory_space<vmem>>, vector<8x100xbf16>
    tpu.vector_store %arg9[%c0_1, %c0_2], %3 {strides = array<i32>} : memref<80x100xbf16, #tpu.memory_space<vmem>>, vector<8x100xbf16>,
    %c0_3 = arith.constant 0 : index
    %c0_4 = arith.constant 0 : index
    %c118 = arith.constant 118 : index
    %5 = vector.load %arg1[%c0_3, %c0_4, %c118] : memref<1x8x356xbf16, #tpu.memory_space<vmem>>, vector<1x8x100xbf16>
    %6 = vector.shape_cast %5 : vector<1x8x100xbf16> to vector<8x100xbf16>
    %cst_5 = arith.constant 0.000000e+00 : bf16
    %7 = vector.broadcast %cst_5 : bf16 to vector<8x100xbf16>
    %8 = arith.maximumf %6, %7 : vector<8x100xbf16>
    %c8 = arith.constant 8 : index
    %c0_6 = arith.constant 0 : index
    %9 = vector.load %arg9[%c8, %c0_6] : memref<80x100xbf16, #tpu.memory_space<vmem>>, vector<8x100xbf16>
    tpu.vector_store %arg9[%c8, %c0_6], %8 {strides = array<i32>} : memref<80x100xbf16, #tpu.memory_space<vmem>>, vector<8x100xbf16>,
    %c0_7 = arith.constant 0 : index
    %c0_8 = arith.constant 0 : index
    %c119 = arith.constant 119 : index
    %10 = vector.load %arg1[%c0_7, %c0_8, %c119] : memref<1x8x356xbf16, #tpu.memory_space<vmem>>, vector<1x8x100xbf16>
    %11 = vector.shape_cast %10 : vector<1x8x100xbf16> to vector<8x100xbf16>
    %cst_9 = arith.constant 0.000000e+00 : bf16
    %12 = vector.broadcast %cst_9 : bf16 to vector<8x100xbf16>
    %13 = arith.maximumf %11, %12 : vector<8x100xbf16>
    %c16 = arith.constant 16 : index
    %c0_10 = arith.constant 0 : index
    %14 = vector.load %arg9[%c16, %c0_10] : memref<80x100xbf16, #tpu.memory_space<vmem>>, vector<8x100xbf16>
    tpu.vector_store %arg9[%c16, %c0_10], %13 {strides = array<i32>} : memref<80x100xbf16, #tpu.memory_space<vmem>>, vector<8x100xbf16>,
    %c0_11 = arith.constant 0 : index
    %c0_12 = arith.constant 0 : index
    %c127 = arith.constant 127 : index
    %15 = vector.load %arg1[%c0_11, %c0_12, %c127] : memref<1x8x356xbf16, #tpu.memory_space<vmem>>, vector<1x8x100xbf16>
    %16 = vector.shape_cast %15 : vector<1x8x100xbf16> to vector<8x100xbf16>
    %cst_13 = arith.constant 0.000000e+00 : bf16
    %17 = vector.broadcast %cst_13 : bf16 to vector<8x100xbf16>
    %18 = arith.maximumf %16, %17 : vector<8x100xbf16>
    %c24 = arith.constant 24 : index
    %c0_14 = arith.constant 0 : index
    %19 = vector.load %arg9[%c24, %c0_14] : memref<80x100xbf16, #tpu.memory_space<vmem>>, vector<8x100xbf16>
    tpu.vector_store %arg9[%c24, %c0_14], %18 {strides = array<i32>} : memref<80x100xbf16, #tpu.memory_space<vmem>>, vector<8x100xbf16>,
    %c0_15 = arith.constant 0 : index
    %c0_16 = arith.constant 0 : index
    %c128 = arith.constant 128 : index
    %20 = vector.load %arg1[%c0_15, %c0_16, %c128] : memref<1x8x356xbf16, #tpu.memory_space<vmem>>, vector<1x8x100xbf16>
    %21 = vector.shape_cast %20 : vector<1x8x100xbf16> to vector<8x100xbf16>
    %cst_17 = arith.constant 0.000000e+00 : bf16
    %22 = vector.broadcast %cst_17 : bf16 to vector<8x100xbf16>
    %23 = arith.maximumf %21, %22 : vector<8x100xbf16>
    %c32 = arith.constant 32 : index
    %c0_18 = arith.constant 0 : index
    %24 = vector.load %arg9[%c32, %c0_18] : memref<80x100xbf16, #tpu.memory_space<vmem>>, vector<8x100xbf16>
    tpu.vector_store %arg9[%c32, %c0_18], %23 {strides = array<i32>} : memref<80x100xbf16, #tpu.memory_space<vmem>>, vector<8x100xbf16>,
    %c0_19 = arith.constant 0 : index
    %c0_20 = arith.constant 0 : index
    %c129 = arith.constant 129 : index
    %25 = vector.load %arg1[%c0_19, %c0_20, %c129] : memref<1x8x356xbf16, #tpu.memory_space<vmem>>, vector<1x8x100xbf16>
    %26 = vector.shape_cast %25 : vector<1x8x100xbf16> to vector<8x100xbf16>
    %cst_21 = arith.constant 0.000000e+00 : bf16
    %27 = vector.broadcast %cst_21 : bf16 to vector<8x100xbf16>
    %28 = arith.maximumf %26, %27 : vector<8x100xbf16>
    %c40 = arith.constant 40 : index
    %c0_22 = arith.constant 0 : index
    %29 = vector.load %arg9[%c40, %c0_22] : memref<80x100xbf16, #tpu.memory_space<vmem>>, vector<8x100xbf16>
    tpu.vector_store %arg9[%c40, %c0_22], %28 {strides = array<i32>} : memref<80x100xbf16, #tpu.memory_space<vmem>>, vector<8x100xbf16>,
    %c0_23 = arith.constant 0 : index
    %c0_24 = arith.constant 0 : index
    %c137 = arith.constant 137 : index
    %30 = vector.load %arg1[%c0_23, %c0_24, %c137] : memref<1x8x356xbf16, #tpu.memory_space<vmem>>, vector<1x8x100xbf16>
    %31 = vector.shape_cast %30 : vector<1x8x100xbf16> to vector<8x100xbf16>
    %cst_25 = arith.constant 0.000000e+00 : bf16
    %32 = vector.broadcast %cst_25 : bf16 to vector<8x100xbf16>
    %33 = arith.maximumf %31, %32 : vector<8x100xbf16>
    %c48 = arith.constant 48 : index
    %c0_26 = arith.constant 0 : index
    %34 = vector.load %arg9[%c48, %c0_26] : memref<80x100xbf16, #tpu.memory_space<vmem>>, vector<8x100xbf16>
    tpu.vector_store %arg9[%c48, %c0_26], %33 {strides = array<i32>} : memref<80x100xbf16, #tpu.memory_space<vmem>>, vector<8x100xbf16>,
    %c0_27 = arith.constant 0 : index
    %c0_28 = arith.constant 0 : index
    %c138 = arith.constant 138 : index
    %35 = vector.load %arg1[%c0_27, %c0_28, %c138] : memref<1x8x356xbf16, #tpu.memory_space<vmem>>, vector<1x8x100xbf16>
    %36 = vector.shape_cast %35 : vector<1x8x100xbf16> to vector<8x100xbf16>
    %cst_29 = arith.constant 0.000000e+00 : bf16
    %37 = vector.broadcast %cst_29 : bf16 to vector<8x100xbf16>
    %38 = arith.maximumf %36, %37 : vector<8x100xbf16>
    %c56 = arith.constant 56 : index
    %c0_30 = arith.constant 0 : index
    %39 = vector.load %arg9[%c56, %c0_30] : memref<80x100xbf16, #tpu.memory_space<vmem>>, vector<8x100xbf16>
    tpu.vector_store %arg9[%c56, %c0_30], %38 {strides = array<i32>} : memref<80x100xbf16, #tpu.memory_space<vmem>>, vector<8x100xbf16>,
    %c0_31 = arith.constant 0 : index
    %c0_32 = arith.constant 0 : index
    %c139 = arith.constant 139 : index
    %40 = vector.load %arg1[%c0_31, %c0_32, %c139] : memref<1x8x356xbf16, #tpu.memory_space<vmem>>, vector<1x8x100xbf16>
    %41 = vector.shape_cast %40 : vector<1x8x100xbf16> to vector<8x100xbf16>
    %cst_33 = arith.constant 0.000000e+00 : bf16
    %42 = vector.broadcast %cst_33 : bf16 to vector<8x100xbf16>
    %43 = arith.maximumf %41, %42 : vector<8x100xbf16>
    %c64 = arith.constant 64 : index
    %c0_34 = arith.constant 0 : index
    %44 = vector.load %arg9[%c64, %c0_34] : memref<80x100xbf16, #tpu.memory_space<vmem>>, vector<8x100xbf16>
    tpu.vector_store %arg9[%c64, %c0_34], %43 {strides = array<i32>} : memref<80x100xbf16, #tpu.memory_space<vmem>>, vector<8x100xbf16>,
    %c0_35 = arith.constant 0 : index
    %c0_36 = arith.constant 0 : index
    %45 = vector.load %arg2[%c0_35, %c0_36] : memref<8x72xbf16, #tpu.memory_space<vmem>>, vector<8x72xbf16>
    %c0_37 = arith.constant 0 : index
    %c0_38 = arith.constant 0 : index
    %46 = vector.load %arg9[%c0_37, %c0_38] : memref<80x100xbf16, #tpu.memory_space<vmem>>, vector<72x100xbf16>
    %cst_39 = arith.constant dense<0.000000e+00> : vector<8x100xf32>
    %47 = tpu.matmul %45, %46, %cst_39 {dimension_numbers = #tpu.dot_dimension_numbers<[1], [0], [0], [1], [0, 0, 1, 1], [], []>} : vector<8x72xbf16>, vector<72x100xbf16>, vector<8x100xf32> -> vector<8x100xf32>
    %c0_40 = arith.constant 0 : index
    %c0_41 = arith.constant 0 : index
    %48 = vector.load %arg3[%c0_40, %c0_41] : memref<8x1xf32, #tpu.memory_space<vmem>>, vector<8x1xf32>
    %49 = vector.broadcast %48 : vector<8x1xf32> to vector<8x100xf32>
    %50 = arith.addf %47, %49 : vector<8x100xf32>
    %cst_42 = arith.constant 0.000000e+00 : f32
    %51 = vector.broadcast %cst_42 : f32 to vector<8x100xf32>
    %52 = arith.maximumf %50, %51 : vector<8x100xf32>
    %53 = arith.truncf %52 : vector<8x100xf32> to vector<8x100xbf16>
    %c0_43 = arith.constant 0 : index
    %c0_44 = arith.constant 0 : index
    %54 = vector.load %arg6[%c0_43, %c0_44] : memref<1x100xbf16, #tpu.memory_space<vmem>>, vector<1x100xbf16>
    %55 = vector.broadcast %54 : vector<1x100xbf16> to vector<8x100xbf16>
    %56 = arith.mulf %53, %55 : vector<8x100xbf16>
    %cst_45 = arith.constant 0.000000e+00 : bf16
    %57 = vector.broadcast %cst_45 : bf16 to vector<8x128xbf16>
    %c0_46 = arith.constant 0 : index
    %c0_47 = arith.constant 0 : index
    %58 = vector.load %arg8[%c0_46, %c0_47] : memref<8x356xbf16, #tpu.memory_space<vmem>>, vector<8x128xbf16>
    tpu.vector_store %arg8[%c0_46, %c0_47], %57 {strides = array<i32>} : memref<8x356xbf16, #tpu.memory_space<vmem>>, vector<8x128xbf16>,
    %cst_48 = arith.constant 0.000000e+00 : bf16
    %59 = vector.broadcast %cst_48 : bf16 to vector<8x128xbf16>
    %c0_49 = arith.constant 0 : index
    %c228 = arith.constant 228 : index
    %60 = vector.load %arg8[%c0_49, %c228] : memref<8x356xbf16, #tpu.memory_space<vmem>>, vector<8x128xbf16>
    tpu.vector_store %arg8[%c0_49, %c228], %59 {strides = array<i32>} : memref<8x356xbf16, #tpu.memory_space<vmem>>, vector<8x128xbf16>,
    %c0_50 = arith.constant 0 : index
    %c128_51 = arith.constant 128 : index
    %61 = vector.load %arg8[%c0_50, %c128_51] : memref<8x356xbf16, #tpu.memory_space<vmem>>, vector<8x100xbf16>
    tpu.vector_store %arg8[%c0_50, %c128_51], %56 {strides = array<i32>} : memref<8x356xbf16, #tpu.memory_space<vmem>>, vector<8x100xbf16>,
    %c0_52 = arith.constant 0 : index
    %c117_53 = arith.constant 117 : index
    %62 = vector.load %arg8[%c0_52, %c117_53] : memref<8x356xbf16, #tpu.memory_space<vmem>>, vector<8x100xbf16>
    %c0_54 = arith.constant 0 : index
    %c0_55 = arith.constant 0 : index
    %63 = vector.load %arg9[%c0_54, %c0_55] : memref<80x100xbf16, #tpu.memory_space<vmem>>, vector<8x100xbf16>
    tpu.vector_store %arg9[%c0_54, %c0_55], %62 {strides = array<i32>} : memref<80x100xbf16, #tpu.memory_space<vmem>>, vector<8x100xbf16>,
    %c0_56 = arith.constant 0 : index
    %c118_57 = arith.constant 118 : index
    %64 = vector.load %arg8[%c0_56, %c118_57] : memref<8x356xbf16, #tpu.memory_space<vmem>>, vector<8x100xbf16>
    %c8_58 = arith.constant 8 : index
    %c0_59 = arith.constant 0 : index
    %65 = vector.load %arg9[%c8_58, %c0_59] : memref<80x100xbf16, #tpu.memory_space<vmem>>, vector<8x100xbf16>
    tpu.vector_store %arg9[%c8_58, %c0_59], %64 {strides = array<i32>} : memref<80x100xbf16, #tpu.memory_space<vmem>>, vector<8x100xbf16>,
    %c0_60 = arith.constant 0 : index
    %c119_61 = arith.constant 119 : index
    %66 = vector.load %arg8[%c0_60, %c119_61] : memref<8x356xbf16, #tpu.memory_space<vmem>>, vector<8x100xbf16>
    %c16_62 = arith.constant 16 : index
    %c0_63 = arith.constant 0 : index
    %67 = vector.load %arg9[%c16_62, %c0_63] : memref<80x100xbf16, #tpu.memory_space<vmem>>, vector<8x100xbf16>
    tpu.vector_store %arg9[%c16_62, %c0_63], %66 {strides = array<i32>} : memref<80x100xbf16, #tpu.memory_space<vmem>>, vector<8x100xbf16>,
    %c0_64 = arith.constant 0 : index
    %c127_65 = arith.constant 127 : index
    %68 = vector.load %arg8[%c0_64, %c127_65] : memref<8x356xbf16, #tpu.memory_space<vmem>>, vector<8x100xbf16>
    %c24_66 = arith.constant 24 : index
    %c0_67 = arith.constant 0 : index
    %69 = vector.load %arg9[%c24_66, %c0_67] : memref<80x100xbf16, #tpu.memory_space<vmem>>, vector<8x100xbf16>
    tpu.vector_store %arg9[%c24_66, %c0_67], %68 {strides = array<i32>} : memref<80x100xbf16, #tpu.memory_space<vmem>>, vector<8x100xbf16>,
    %c0_68 = arith.constant 0 : index
    %c128_69 = arith.constant 128 : index
    %70 = vector.load %arg8[%c0_68, %c128_69] : memref<8x356xbf16, #tpu.memory_space<vmem>>, vector<8x100xbf16>
    %c32_70 = arith.constant 32 : index
    %c0_71 = arith.constant 0 : index
    %71 = vector.load %arg9[%c32_70, %c0_71] : memref<80x100xbf16, #tpu.memory_space<vmem>>, vector<8x100xbf16>
    tpu.vector_store %arg9[%c32_70, %c0_71], %70 {strides = array<i32>} : memref<80x100xbf16, #tpu.memory_space<vmem>>, vector<8x100xbf16>,
    %c0_72 = arith.constant 0 : index
    %c129_73 = arith.constant 129 : index
    %72 = vector.load %arg8[%c0_72, %c129_73] : memref<8x356xbf16, #tpu.memory_space<vmem>>, vector<8x100xbf16>
    %c40_74 = arith.constant 40 : index
    %c0_75 = arith.constant 0 : index
    %73 = vector.load %arg9[%c40_74, %c0_75] : memref<80x100xbf16, #tpu.memory_space<vmem>>, vector<8x100xbf16>
    tpu.vector_store %arg9[%c40_74, %c0_75], %72 {strides = array<i32>} : memref<80x100xbf16, #tpu.memory_space<vmem>>, vector<8x100xbf16>,
    %c0_76 = arith.constant 0 : index
    %c137_77 = arith.constant 137 : index
    %74 = vector.load %arg8[%c0_76, %c137_77] : memref<8x356xbf16, #tpu.memory_space<vmem>>, vector<8x100xbf16>
    %c48_78 = arith.constant 48 : index
    %c0_79 = arith.constant 0 : index
    %75 = vector.load %arg9[%c48_78, %c0_79] : memref<80x100xbf16, #tpu.memory_space<vmem>>, vector<8x100xbf16>
    tpu.vector_store %arg9[%c48_78, %c0_79], %74 {strides = array<i32>} : memref<80x100xbf16, #tpu.memory_space<vmem>>, vector<8x100xbf16>,
    %c0_80 = arith.constant 0 : index
    %c138_81 = arith.constant 138 : index
    %76 = vector.load %arg8[%c0_80, %c138_81] : memref<8x356xbf16, #tpu.memory_space<vmem>>, vector<8x100xbf16>
    %c56_82 = arith.constant 56 : index
    %c0_83 = arith.constant 0 : index
    %77 = vector.load %arg9[%c56_82, %c0_83] : memref<80x100xbf16, #tpu.memory_space<vmem>>, vector<8x100xbf16>
    tpu.vector_store %arg9[%c56_82, %c0_83], %76 {strides = array<i32>} : memref<80x100xbf16, #tpu.memory_space<vmem>>, vector<8x100xbf16>,
    %c0_84 = arith.constant 0 : index
    %c139_85 = arith.constant 139 : index
    %78 = vector.load %arg8[%c0_84, %c139_85] : memref<8x356xbf16, #tpu.memory_space<vmem>>, vector<8x100xbf16>
    %c64_86 = arith.constant 64 : index
    %c0_87 = arith.constant 0 : index
    %79 = vector.load %arg9[%c64_86, %c0_87] : memref<80x100xbf16, #tpu.memory_space<vmem>>, vector<8x100xbf16>
    tpu.vector_store %arg9[%c64_86, %c0_87], %78 {strides = array<i32>} : memref<80x100xbf16, #tpu.memory_space<vmem>>, vector<8x100xbf16>,
    %c0_88 = arith.constant 0 : index
    %c0_89 = arith.constant 0 : index
    %c128_90 = arith.constant 128 : index
    %80 = vector.load %arg1[%c0_88, %c0_89, %c128_90] : memref<1x8x356xbf16, #tpu.memory_space<vmem>>, vector<1x8x100xbf16>
    %81 = vector.shape_cast %80 : vector<1x8x100xbf16> to vector<8x100xbf16>
    %c72 = arith.constant 72 : index
    %c0_91 = arith.constant 0 : index
    %82 = vector.load %arg9[%c72, %c0_91] : memref<80x100xbf16, #tpu.memory_space<vmem>>, vector<8x100xbf16>
    tpu.vector_store %arg9[%c72, %c0_91], %81 {strides = array<i32>} : memref<80x100xbf16, #tpu.memory_space<vmem>>, vector<8x100xbf16>,
    %c0_92 = arith.constant 0 : index
    %c0_93 = arith.constant 0 : index
    %83 = vector.load %arg4[%c0_92, %c0_93] : memref<8x80xbf16, #tpu.memory_space<vmem>>, vector<8x80xbf16>
    %c0_94 = arith.constant 0 : index
    %c0_95 = arith.constant 0 : index
    %84 = vector.load %arg9[%c0_94, %c0_95] : memref<80x100xbf16, #tpu.memory_space<vmem>>, vector<80x100xbf16>
    %cst_96 = arith.constant dense<0.000000e+00> : vector<8x100xf32>
    %85 = tpu.matmul %83, %84, %cst_96 {dimension_numbers = #tpu.dot_dimension_numbers<[1], [0], [0], [1], [0, 0, 1, 1], [], []>} : vector<8x80xbf16>, vector<80x100xbf16>, vector<8x100xf32> -> vector<8x100xf32>
    %c0_97 = arith.constant 0 : index
    %c0_98 = arith.constant 0 : index
    %86 = vector.load %arg5[%c0_97, %c0_98] : memref<8x1xf32, #tpu.memory_space<vmem>>, vector<8x1xf32>
    %87 = vector.broadcast %86 : vector<8x1xf32> to vector<8x100xf32>
    %88 = arith.addf %85, %87 : vector<8x100xf32>
    %89 = arith.truncf %88 : vector<8x100xf32> to vector<8x100xbf16>
    %c0_99 = arith.constant 0 : index
    %c0_100 = arith.constant 0 : index
    %c0_101 = arith.constant 0 : index
    %90 = vector.load %arg7[%c0_99, %c0_100, %c0_101] : memref<1x8x100xbf16, #tpu.memory_space<vmem>>, vector<1x8x100xbf16>
    %91 = vector.shape_cast %90 : vector<1x8x100xbf16> to vector<8x100xbf16>
    %92 = vector.shape_cast %89 : vector<8x100xbf16> to vector<1x8x100xbf16>
    tpu.vector_store %arg7[%c0_99, %c0_100, %c0_101], %92 {strides = array<i32>} : memref<1x8x100xbf16, #tpu.memory_space<vmem>>, vector<1x8x100xbf16>,
    return
  }
  func.func @transform_0(%arg0: i32) -> (i32, i32, i32) {
    %c0_i32 = arith.constant 0 : i32
    %c0_i32_0 = arith.constant 0 : i32
    %c0_i32_1 = arith.constant 0 : i32
    return %arg0, %c0_i32, %c0_i32_0 : i32, i32, i32
  }
  func.func @transform_1(%arg0: i32) -> (i32, i32) {
    %c0_i32 = arith.constant 0 : i32
    %c0_i32_0 = arith.constant 0 : i32
    %c0_i32_1 = arith.constant 0 : i32
    return %c0_i32, %c0_i32_0 : i32, i32
  }
  func.func @transform_2(%arg0: i32) -> (i32, i32) {
    %c0_i32 = arith.constant 0 : i32
    %c0_i32_0 = arith.constant 0 : i32
    %c0_i32_1 = arith.constant 0 : i32
    return %c0_i32, %c0_i32_0 : i32, i32
  }
  func.func @transform_3(%arg0: i32) -> (i32, i32) {
    %c0_i32 = arith.constant 0 : i32
    %c0_i32_0 = arith.constant 0 : i32
    %c0_i32_1 = arith.constant 0 : i32
    return %c0_i32, %c0_i32_0 : i32, i32
  }
  func.func @transform_4(%arg0: i32) -> (i32, i32) {
    %c0_i32 = arith.constant 0 : i32
    %c0_i32_0 = arith.constant 0 : i32
    %c0_i32_1 = arith.constant 0 : i32
    return %c0_i32, %c0_i32_0 : i32, i32
  }
  func.func @transform_5(%arg0: i32) -> (i32, i32) {
    %c0_i32 = arith.constant 0 : i32
    %c0_i32_0 = arith.constant 0 : i32
    %c0_i32_1 = arith.constant 0 : i32
    return %c0_i32, %c0_i32_0 : i32, i32
  }
  func.func @transform_6(%arg0: i32) -> (i32, i32, i32) {
    %c0_i32 = arith.constant 0 : i32
    %c0_i32_0 = arith.constant 0 : i32
    %c0_i32_1 = arith.constant 0 : i32
    return %arg0, %c0_i32, %c0_i32_0 : i32, i32, i32
  }
}

module attributes {stable_mosaic.version = 11 : i64} {
  func.func @_dblock_kernel(%arg0: i32, %arg1: memref<1x8x292xbf16, #tpu.memory_space<vmem>>, %arg2: memref<16x72xbf16, #tpu.memory_space<vmem>>, %arg3: memref<16x1xf32, #tpu.memory_space<vmem>>, %arg4: memref<16x152xbf16, #tpu.memory_space<vmem>>, %arg5: memref<16x1xf32, #tpu.memory_space<vmem>>, %arg6: memref<1x36xbf16, #tpu.memory_space<vmem>>, %arg7: memref<1x16x36xbf16, #tpu.memory_space<vmem>>, %arg8: memref<16x292xbf16, #tpu.memory_space<vmem>>, %arg9: memref<152x36xbf16, #tpu.memory_space<vmem>>) attributes {dimension_semantics = [#tpu.dimension_semantics<parallel>], iteration_bounds = array<i64: 8>, scalar_prefetch = 0 : i64, scratch_operands = 2 : i64, tpu.core_type = #tpu.core_type<tc>, window_params = [{transform_indices = @transform_0, window_bounds = array<i64: 1, 8, 292>}, {pipeline_mode = #tpu.pipeline_mode<synchronous>, transform_indices = @transform_1, window_bounds = array<i64: 16, 72>}, {pipeline_mode = #tpu.pipeline_mode<synchronous>, transform_indices = @transform_2, window_bounds = array<i64: 16, 1>}, {pipeline_mode = #tpu.pipeline_mode<synchronous>, transform_indices = @transform_3, window_bounds = array<i64: 16, 152>}, {pipeline_mode = #tpu.pipeline_mode<synchronous>, transform_indices = @transform_4, window_bounds = array<i64: 16, 1>}, {pipeline_mode = #tpu.pipeline_mode<synchronous>, transform_indices = @transform_5, window_bounds = array<i64: 1, 36>}, {transform_indices = @transform_6, window_bounds = array<i64: 1, 16, 36>}]} {
    %c0 = arith.constant 0 : index
    %c0_0 = arith.constant 0 : index
    %c121 = arith.constant 121 : index
    %0 = vector.load %arg1[%c0, %c0_0, %c121] : memref<1x8x292xbf16, #tpu.memory_space<vmem>>, vector<1x8x36xbf16>
    %1 = vector.shape_cast %0 : vector<1x8x36xbf16> to vector<8x36xbf16>
    %cst = arith.constant 0.000000e+00 : bf16
    %2 = vector.broadcast %cst : bf16 to vector<8x36xbf16>
    %3 = arith.maximumf %1, %2 : vector<8x36xbf16>
    %c0_1 = arith.constant 0 : index
    %c0_2 = arith.constant 0 : index
    %4 = vector.load %arg9[%c0_1, %c0_2] : memref<152x36xbf16, #tpu.memory_space<vmem>>, vector<8x36xbf16>
    tpu.vector_store %arg9[%c0_1, %c0_2], %3 {strides = array<i32>} : memref<152x36xbf16, #tpu.memory_space<vmem>>, vector<8x36xbf16>,
    %c0_3 = arith.constant 0 : index
    %c0_4 = arith.constant 0 : index
    %c122 = arith.constant 122 : index
    %5 = vector.load %arg1[%c0_3, %c0_4, %c122] : memref<1x8x292xbf16, #tpu.memory_space<vmem>>, vector<1x8x36xbf16>
    %6 = vector.shape_cast %5 : vector<1x8x36xbf16> to vector<8x36xbf16>
    %cst_5 = arith.constant 0.000000e+00 : bf16
    %7 = vector.broadcast %cst_5 : bf16 to vector<8x36xbf16>
    %8 = arith.maximumf %6, %7 : vector<8x36xbf16>
    %c8 = arith.constant 8 : index
    %c0_6 = arith.constant 0 : index
    %9 = vector.load %arg9[%c8, %c0_6] : memref<152x36xbf16, #tpu.memory_space<vmem>>, vector<8x36xbf16>
    tpu.vector_store %arg9[%c8, %c0_6], %8 {strides = array<i32>} : memref<152x36xbf16, #tpu.memory_space<vmem>>, vector<8x36xbf16>,
    %c0_7 = arith.constant 0 : index
    %c0_8 = arith.constant 0 : index
    %c123 = arith.constant 123 : index
    %10 = vector.load %arg1[%c0_7, %c0_8, %c123] : memref<1x8x292xbf16, #tpu.memory_space<vmem>>, vector<1x8x36xbf16>
    %11 = vector.shape_cast %10 : vector<1x8x36xbf16> to vector<8x36xbf16>
    %cst_9 = arith.constant 0.000000e+00 : bf16
    %12 = vector.broadcast %cst_9 : bf16 to vector<8x36xbf16>
    %13 = arith.maximumf %11, %12 : vector<8x36xbf16>
    %c16 = arith.constant 16 : index
    %c0_10 = arith.constant 0 : index
    %14 = vector.load %arg9[%c16, %c0_10] : memref<152x36xbf16, #tpu.memory_space<vmem>>, vector<8x36xbf16>
    tpu.vector_store %arg9[%c16, %c0_10], %13 {strides = array<i32>} : memref<152x36xbf16, #tpu.memory_space<vmem>>, vector<8x36xbf16>,
    %c0_11 = arith.constant 0 : index
    %c0_12 = arith.constant 0 : index
    %c127 = arith.constant 127 : index
    %15 = vector.load %arg1[%c0_11, %c0_12, %c127] : memref<1x8x292xbf16, #tpu.memory_space<vmem>>, vector<1x8x36xbf16>
    %16 = vector.shape_cast %15 : vector<1x8x36xbf16> to vector<8x36xbf16>
    %cst_13 = arith.constant 0.000000e+00 : bf16
    %17 = vector.broadcast %cst_13 : bf16 to vector<8x36xbf16>
    %18 = arith.maximumf %16, %17 : vector<8x36xbf16>
    %c24 = arith.constant 24 : index
    %c0_14 = arith.constant 0 : index
    %19 = vector.load %arg9[%c24, %c0_14] : memref<152x36xbf16, #tpu.memory_space<vmem>>, vector<8x36xbf16>
    tpu.vector_store %arg9[%c24, %c0_14], %18 {strides = array<i32>} : memref<152x36xbf16, #tpu.memory_space<vmem>>, vector<8x36xbf16>,
    %c0_15 = arith.constant 0 : index
    %c0_16 = arith.constant 0 : index
    %c128 = arith.constant 128 : index
    %20 = vector.load %arg1[%c0_15, %c0_16, %c128] : memref<1x8x292xbf16, #tpu.memory_space<vmem>>, vector<1x8x36xbf16>
    %21 = vector.shape_cast %20 : vector<1x8x36xbf16> to vector<8x36xbf16>
    %cst_17 = arith.constant 0.000000e+00 : bf16
    %22 = vector.broadcast %cst_17 : bf16 to vector<8x36xbf16>
    %23 = arith.maximumf %21, %22 : vector<8x36xbf16>
    %c32 = arith.constant 32 : index
    %c0_18 = arith.constant 0 : index
    %24 = vector.load %arg9[%c32, %c0_18] : memref<152x36xbf16, #tpu.memory_space<vmem>>, vector<8x36xbf16>
    tpu.vector_store %arg9[%c32, %c0_18], %23 {strides = array<i32>} : memref<152x36xbf16, #tpu.memory_space<vmem>>, vector<8x36xbf16>,
    %c0_19 = arith.constant 0 : index
    %c0_20 = arith.constant 0 : index
    %c129 = arith.constant 129 : index
    %25 = vector.load %arg1[%c0_19, %c0_20, %c129] : memref<1x8x292xbf16, #tpu.memory_space<vmem>>, vector<1x8x36xbf16>
    %26 = vector.shape_cast %25 : vector<1x8x36xbf16> to vector<8x36xbf16>
    %cst_21 = arith.constant 0.000000e+00 : bf16
    %27 = vector.broadcast %cst_21 : bf16 to vector<8x36xbf16>
    %28 = arith.maximumf %26, %27 : vector<8x36xbf16>
    %c40 = arith.constant 40 : index
    %c0_22 = arith.constant 0 : index
    %29 = vector.load %arg9[%c40, %c0_22] : memref<152x36xbf16, #tpu.memory_space<vmem>>, vector<8x36xbf16>
    tpu.vector_store %arg9[%c40, %c0_22], %28 {strides = array<i32>} : memref<152x36xbf16, #tpu.memory_space<vmem>>, vector<8x36xbf16>,
    %c0_23 = arith.constant 0 : index
    %c0_24 = arith.constant 0 : index
    %c133 = arith.constant 133 : index
    %30 = vector.load %arg1[%c0_23, %c0_24, %c133] : memref<1x8x292xbf16, #tpu.memory_space<vmem>>, vector<1x8x36xbf16>
    %31 = vector.shape_cast %30 : vector<1x8x36xbf16> to vector<8x36xbf16>
    %cst_25 = arith.constant 0.000000e+00 : bf16
    %32 = vector.broadcast %cst_25 : bf16 to vector<8x36xbf16>
    %33 = arith.maximumf %31, %32 : vector<8x36xbf16>
    %c48 = arith.constant 48 : index
    %c0_26 = arith.constant 0 : index
    %34 = vector.load %arg9[%c48, %c0_26] : memref<152x36xbf16, #tpu.memory_space<vmem>>, vector<8x36xbf16>
    tpu.vector_store %arg9[%c48, %c0_26], %33 {strides = array<i32>} : memref<152x36xbf16, #tpu.memory_space<vmem>>, vector<8x36xbf16>,
    %c0_27 = arith.constant 0 : index
    %c0_28 = arith.constant 0 : index
    %c134 = arith.constant 134 : index
    %35 = vector.load %arg1[%c0_27, %c0_28, %c134] : memref<1x8x292xbf16, #tpu.memory_space<vmem>>, vector<1x8x36xbf16>
    %36 = vector.shape_cast %35 : vector<1x8x36xbf16> to vector<8x36xbf16>
    %cst_29 = arith.constant 0.000000e+00 : bf16
    %37 = vector.broadcast %cst_29 : bf16 to vector<8x36xbf16>
    %38 = arith.maximumf %36, %37 : vector<8x36xbf16>
    %c56 = arith.constant 56 : index
    %c0_30 = arith.constant 0 : index
    %39 = vector.load %arg9[%c56, %c0_30] : memref<152x36xbf16, #tpu.memory_space<vmem>>, vector<8x36xbf16>
    tpu.vector_store %arg9[%c56, %c0_30], %38 {strides = array<i32>} : memref<152x36xbf16, #tpu.memory_space<vmem>>, vector<8x36xbf16>,
    %c0_31 = arith.constant 0 : index
    %c0_32 = arith.constant 0 : index
    %c135 = arith.constant 135 : index
    %40 = vector.load %arg1[%c0_31, %c0_32, %c135] : memref<1x8x292xbf16, #tpu.memory_space<vmem>>, vector<1x8x36xbf16>
    %41 = vector.shape_cast %40 : vector<1x8x36xbf16> to vector<8x36xbf16>
    %cst_33 = arith.constant 0.000000e+00 : bf16
    %42 = vector.broadcast %cst_33 : bf16 to vector<8x36xbf16>
    %43 = arith.maximumf %41, %42 : vector<8x36xbf16>
    %c64 = arith.constant 64 : index
    %c0_34 = arith.constant 0 : index
    %44 = vector.load %arg9[%c64, %c0_34] : memref<152x36xbf16, #tpu.memory_space<vmem>>, vector<8x36xbf16>
    tpu.vector_store %arg9[%c64, %c0_34], %43 {strides = array<i32>} : memref<152x36xbf16, #tpu.memory_space<vmem>>, vector<8x36xbf16>,
    %c0_35 = arith.constant 0 : index
    %c0_36 = arith.constant 0 : index
    %45 = vector.load %arg2[%c0_35, %c0_36] : memref<16x72xbf16, #tpu.memory_space<vmem>>, vector<16x72xbf16>
    %c0_37 = arith.constant 0 : index
    %c0_38 = arith.constant 0 : index
    %46 = vector.load %arg9[%c0_37, %c0_38] : memref<152x36xbf16, #tpu.memory_space<vmem>>, vector<72x36xbf16>
    %cst_39 = arith.constant dense<0.000000e+00> : vector<16x36xf32>
    %47 = tpu.matmul %45, %46, %cst_39 {dimension_numbers = #tpu.dot_dimension_numbers<[1], [0], [0], [1], [0, 0, 1, 1], [], []>} : vector<16x72xbf16>, vector<72x36xbf16>, vector<16x36xf32> -> vector<16x36xf32>
    %c0_40 = arith.constant 0 : index
    %c0_41 = arith.constant 0 : index
    %48 = vector.load %arg3[%c0_40, %c0_41] : memref<16x1xf32, #tpu.memory_space<vmem>>, vector<16x1xf32>
    %49 = vector.broadcast %48 : vector<16x1xf32> to vector<16x36xf32>
    %50 = arith.addf %47, %49 : vector<16x36xf32>
    %cst_42 = arith.constant 0.000000e+00 : f32
    %51 = vector.broadcast %cst_42 : f32 to vector<16x36xf32>
    %52 = arith.maximumf %50, %51 : vector<16x36xf32>
    %53 = arith.truncf %52 : vector<16x36xf32> to vector<16x36xbf16>
    %c0_43 = arith.constant 0 : index
    %c0_44 = arith.constant 0 : index
    %54 = vector.load %arg6[%c0_43, %c0_44] : memref<1x36xbf16, #tpu.memory_space<vmem>>, vector<1x36xbf16>
    %55 = vector.broadcast %54 : vector<1x36xbf16> to vector<16x36xbf16>
    %56 = arith.mulf %53, %55 : vector<16x36xbf16>
    %cst_45 = arith.constant 0.000000e+00 : bf16
    %57 = vector.broadcast %cst_45 : bf16 to vector<16x128xbf16>
    %c0_46 = arith.constant 0 : index
    %c0_47 = arith.constant 0 : index
    %58 = vector.load %arg8[%c0_46, %c0_47] : memref<16x292xbf16, #tpu.memory_space<vmem>>, vector<16x128xbf16>
    tpu.vector_store %arg8[%c0_46, %c0_47], %57 {strides = array<i32>} : memref<16x292xbf16, #tpu.memory_space<vmem>>, vector<16x128xbf16>,
    %cst_48 = arith.constant 0.000000e+00 : bf16
    %59 = vector.broadcast %cst_48 : bf16 to vector<16x128xbf16>
    %c0_49 = arith.constant 0 : index
    %c164 = arith.constant 164 : index
    %60 = vector.load %arg8[%c0_49, %c164] : memref<16x292xbf16, #tpu.memory_space<vmem>>, vector<16x128xbf16>
    tpu.vector_store %arg8[%c0_49, %c164], %59 {strides = array<i32>} : memref<16x292xbf16, #tpu.memory_space<vmem>>, vector<16x128xbf16>,
    %c0_50 = arith.constant 0 : index
    %c128_51 = arith.constant 128 : index
    %61 = vector.load %arg8[%c0_50, %c128_51] : memref<16x292xbf16, #tpu.memory_space<vmem>>, vector<16x36xbf16>
    tpu.vector_store %arg8[%c0_50, %c128_51], %56 {strides = array<i32>} : memref<16x292xbf16, #tpu.memory_space<vmem>>, vector<16x36xbf16>,
    %c0_52 = arith.constant 0 : index
    %c121_53 = arith.constant 121 : index
    %62 = vector.load %arg8[%c0_52, %c121_53] : memref<16x292xbf16, #tpu.memory_space<vmem>>, vector<16x36xbf16>
    %c0_54 = arith.constant 0 : index
    %c0_55 = arith.constant 0 : index
    %63 = vector.load %arg9[%c0_54, %c0_55] : memref<152x36xbf16, #tpu.memory_space<vmem>>, vector<16x36xbf16>
    tpu.vector_store %arg9[%c0_54, %c0_55], %62 {strides = array<i32>} : memref<152x36xbf16, #tpu.memory_space<vmem>>, vector<16x36xbf16>,
    %c0_56 = arith.constant 0 : index
    %c122_57 = arith.constant 122 : index
    %64 = vector.load %arg8[%c0_56, %c122_57] : memref<16x292xbf16, #tpu.memory_space<vmem>>, vector<16x36xbf16>
    %c16_58 = arith.constant 16 : index
    %c0_59 = arith.constant 0 : index
    %65 = vector.load %arg9[%c16_58, %c0_59] : memref<152x36xbf16, #tpu.memory_space<vmem>>, vector<16x36xbf16>
    tpu.vector_store %arg9[%c16_58, %c0_59], %64 {strides = array<i32>} : memref<152x36xbf16, #tpu.memory_space<vmem>>, vector<16x36xbf16>,
    %c0_60 = arith.constant 0 : index
    %c123_61 = arith.constant 123 : index
    %66 = vector.load %arg8[%c0_60, %c123_61] : memref<16x292xbf16, #tpu.memory_space<vmem>>, vector<16x36xbf16>
    %c32_62 = arith.constant 32 : index
    %c0_63 = arith.constant 0 : index
    %67 = vector.load %arg9[%c32_62, %c0_63] : memref<152x36xbf16, #tpu.memory_space<vmem>>, vector<16x36xbf16>
    tpu.vector_store %arg9[%c32_62, %c0_63], %66 {strides = array<i32>} : memref<152x36xbf16, #tpu.memory_space<vmem>>, vector<16x36xbf16>,
    %c0_64 = arith.constant 0 : index
    %c127_65 = arith.constant 127 : index
    %68 = vector.load %arg8[%c0_64, %c127_65] : memref<16x292xbf16, #tpu.memory_space<vmem>>, vector<16x36xbf16>
    %c48_66 = arith.constant 48 : index
    %c0_67 = arith.constant 0 : index
    %69 = vector.load %arg9[%c48_66, %c0_67] : memref<152x36xbf16, #tpu.memory_space<vmem>>, vector<16x36xbf16>
    tpu.vector_store %arg9[%c48_66, %c0_67], %68 {strides = array<i32>} : memref<152x36xbf16, #tpu.memory_space<vmem>>, vector<16x36xbf16>,
    %c0_68 = arith.constant 0 : index
    %c128_69 = arith.constant 128 : index
    %70 = vector.load %arg8[%c0_68, %c128_69] : memref<16x292xbf16, #tpu.memory_space<vmem>>, vector<16x36xbf16>
    %c64_70 = arith.constant 64 : index
    %c0_71 = arith.constant 0 : index
    %71 = vector.load %arg9[%c64_70, %c0_71] : memref<152x36xbf16, #tpu.memory_space<vmem>>, vector<16x36xbf16>
    tpu.vector_store %arg9[%c64_70, %c0_71], %70 {strides = array<i32>} : memref<152x36xbf16, #tpu.memory_space<vmem>>, vector<16x36xbf16>,
    %c0_72 = arith.constant 0 : index
    %c129_73 = arith.constant 129 : index
    %72 = vector.load %arg8[%c0_72, %c129_73] : memref<16x292xbf16, #tpu.memory_space<vmem>>, vector<16x36xbf16>
    %c80 = arith.constant 80 : index
    %c0_74 = arith.constant 0 : index
    %73 = vector.load %arg9[%c80, %c0_74] : memref<152x36xbf16, #tpu.memory_space<vmem>>, vector<16x36xbf16>
    tpu.vector_store %arg9[%c80, %c0_74], %72 {strides = array<i32>} : memref<152x36xbf16, #tpu.memory_space<vmem>>, vector<16x36xbf16>,
    %c0_75 = arith.constant 0 : index
    %c133_76 = arith.constant 133 : index
    %74 = vector.load %arg8[%c0_75, %c133_76] : memref<16x292xbf16, #tpu.memory_space<vmem>>, vector<16x36xbf16>
    %c96 = arith.constant 96 : index
    %c0_77 = arith.constant 0 : index
    %75 = vector.load %arg9[%c96, %c0_77] : memref<152x36xbf16, #tpu.memory_space<vmem>>, vector<16x36xbf16>
    tpu.vector_store %arg9[%c96, %c0_77], %74 {strides = array<i32>} : memref<152x36xbf16, #tpu.memory_space<vmem>>, vector<16x36xbf16>,
    %c0_78 = arith.constant 0 : index
    %c134_79 = arith.constant 134 : index
    %76 = vector.load %arg8[%c0_78, %c134_79] : memref<16x292xbf16, #tpu.memory_space<vmem>>, vector<16x36xbf16>
    %c112 = arith.constant 112 : index
    %c0_80 = arith.constant 0 : index
    %77 = vector.load %arg9[%c112, %c0_80] : memref<152x36xbf16, #tpu.memory_space<vmem>>, vector<16x36xbf16>
    tpu.vector_store %arg9[%c112, %c0_80], %76 {strides = array<i32>} : memref<152x36xbf16, #tpu.memory_space<vmem>>, vector<16x36xbf16>,
    %c0_81 = arith.constant 0 : index
    %c135_82 = arith.constant 135 : index
    %78 = vector.load %arg8[%c0_81, %c135_82] : memref<16x292xbf16, #tpu.memory_space<vmem>>, vector<16x36xbf16>
    %c128_83 = arith.constant 128 : index
    %c0_84 = arith.constant 0 : index
    %79 = vector.load %arg9[%c128_83, %c0_84] : memref<152x36xbf16, #tpu.memory_space<vmem>>, vector<16x36xbf16>
    tpu.vector_store %arg9[%c128_83, %c0_84], %78 {strides = array<i32>} : memref<152x36xbf16, #tpu.memory_space<vmem>>, vector<16x36xbf16>,
    %c0_85 = arith.constant 0 : index
    %c0_86 = arith.constant 0 : index
    %c128_87 = arith.constant 128 : index
    %80 = vector.load %arg1[%c0_85, %c0_86, %c128_87] : memref<1x8x292xbf16, #tpu.memory_space<vmem>>, vector<1x8x36xbf16>
    %81 = vector.shape_cast %80 : vector<1x8x36xbf16> to vector<8x36xbf16>
    %c144 = arith.constant 144 : index
    %c0_88 = arith.constant 0 : index
    %82 = vector.load %arg9[%c144, %c0_88] : memref<152x36xbf16, #tpu.memory_space<vmem>>, vector<8x36xbf16>
    tpu.vector_store %arg9[%c144, %c0_88], %81 {strides = array<i32>} : memref<152x36xbf16, #tpu.memory_space<vmem>>, vector<8x36xbf16>,
    %c0_89 = arith.constant 0 : index
    %c0_90 = arith.constant 0 : index
    %83 = vector.load %arg4[%c0_89, %c0_90] : memref<16x152xbf16, #tpu.memory_space<vmem>>, vector<16x152xbf16>
    %c0_91 = arith.constant 0 : index
    %c0_92 = arith.constant 0 : index
    %84 = vector.load %arg9[%c0_91, %c0_92] : memref<152x36xbf16, #tpu.memory_space<vmem>>, vector<152x36xbf16>
    %cst_93 = arith.constant dense<0.000000e+00> : vector<16x36xf32>
    %85 = tpu.matmul %83, %84, %cst_93 {dimension_numbers = #tpu.dot_dimension_numbers<[1], [0], [0], [1], [0, 0, 1, 1], [], []>} : vector<16x152xbf16>, vector<152x36xbf16>, vector<16x36xf32> -> vector<16x36xf32>
    %c0_94 = arith.constant 0 : index
    %c0_95 = arith.constant 0 : index
    %86 = vector.load %arg5[%c0_94, %c0_95] : memref<16x1xf32, #tpu.memory_space<vmem>>, vector<16x1xf32>
    %87 = vector.broadcast %86 : vector<16x1xf32> to vector<16x36xf32>
    %88 = arith.addf %85, %87 : vector<16x36xf32>
    %89 = arith.truncf %88 : vector<16x36xf32> to vector<16x36xbf16>
    %c0_96 = arith.constant 0 : index
    %c0_97 = arith.constant 0 : index
    %c0_98 = arith.constant 0 : index
    %90 = vector.load %arg7[%c0_96, %c0_97, %c0_98] : memref<1x16x36xbf16, #tpu.memory_space<vmem>>, vector<1x16x36xbf16>
    %91 = vector.shape_cast %90 : vector<1x16x36xbf16> to vector<16x36xbf16>
    %92 = vector.shape_cast %89 : vector<16x36xbf16> to vector<1x16x36xbf16>
    tpu.vector_store %arg7[%c0_96, %c0_97, %c0_98], %92 {strides = array<i32>} : memref<1x16x36xbf16, #tpu.memory_space<vmem>>, vector<1x16x36xbf16>,
    return
  }
  func.func @transform_0(%arg0: i32) -> (i32, i32, i32) {
    %c0_i32 = arith.constant 0 : i32
    %c0_i32_0 = arith.constant 0 : i32
    %c0_i32_1 = arith.constant 0 : i32
    return %arg0, %c0_i32, %c0_i32_0 : i32, i32, i32
  }
  func.func @transform_1(%arg0: i32) -> (i32, i32) {
    %c0_i32 = arith.constant 0 : i32
    %c0_i32_0 = arith.constant 0 : i32
    %c0_i32_1 = arith.constant 0 : i32
    return %c0_i32, %c0_i32_0 : i32, i32
  }
  func.func @transform_2(%arg0: i32) -> (i32, i32) {
    %c0_i32 = arith.constant 0 : i32
    %c0_i32_0 = arith.constant 0 : i32
    %c0_i32_1 = arith.constant 0 : i32
    return %c0_i32, %c0_i32_0 : i32, i32
  }
  func.func @transform_3(%arg0: i32) -> (i32, i32) {
    %c0_i32 = arith.constant 0 : i32
    %c0_i32_0 = arith.constant 0 : i32
    %c0_i32_1 = arith.constant 0 : i32
    return %c0_i32, %c0_i32_0 : i32, i32
  }
  func.func @transform_4(%arg0: i32) -> (i32, i32) {
    %c0_i32 = arith.constant 0 : i32
    %c0_i32_0 = arith.constant 0 : i32
    %c0_i32_1 = arith.constant 0 : i32
    return %c0_i32, %c0_i32_0 : i32, i32
  }
  func.func @transform_5(%arg0: i32) -> (i32, i32) {
    %c0_i32 = arith.constant 0 : i32
    %c0_i32_0 = arith.constant 0 : i32
    %c0_i32_1 = arith.constant 0 : i32
    return %c0_i32, %c0_i32_0 : i32, i32
  }
  func.func @transform_6(%arg0: i32) -> (i32, i32, i32) {
    %c0_i32 = arith.constant 0 : i32
    %c0_i32_0 = arith.constant 0 : i32
    %c0_i32_1 = arith.constant 0 : i32
    return %arg0, %c0_i32, %c0_i32_0 : i32, i32, i32
  }
}

module attributes {stable_mosaic.version = 11 : i64} {
  func.func @_mix_kernel(%arg0: i32, %arg1: memref<1x64x272xbf16, #tpu.memory_space<vmem>>, %arg2: memref<32x576xbf16, #tpu.memory_space<vmem>>, %arg3: memref<32x1xf32, #tpu.memory_space<vmem>>, %arg4: memref<1x32x16xf32, #tpu.memory_space<vmem>>, %arg5: memref<576x16xbf16, #tpu.memory_space<vmem>>) attributes {dimension_semantics = [#tpu.dimension_semantics<parallel>], iteration_bounds = array<i64: 2>, scalar_prefetch = 0 : i64, scratch_operands = 1 : i64, tpu.core_type = #tpu.core_type<tc>, window_params = [{transform_indices = @transform_0, window_bounds = array<i64: 1, 64, 272>}, {pipeline_mode = #tpu.pipeline_mode<synchronous>, transform_indices = @transform_1, window_bounds = array<i64: 32, 576>}, {pipeline_mode = #tpu.pipeline_mode<synchronous>, transform_indices = @transform_2, window_bounds = array<i64: 32, 1>}, {transform_indices = @transform_3, window_bounds = array<i64: 1, 32, 16>}]} {
    %c0 = arith.constant 0 : index
    %c0_0 = arith.constant 0 : index
    %c123 = arith.constant 123 : index
    %0 = vector.load %arg1[%c0, %c0_0, %c123] : memref<1x64x272xbf16, #tpu.memory_space<vmem>>, vector<1x64x16xbf16>
    %1 = vector.shape_cast %0 : vector<1x64x16xbf16> to vector<64x16xbf16>
    %c0_1 = arith.constant 0 : index
    %c0_2 = arith.constant 0 : index
    %2 = vector.load %arg5[%c0_1, %c0_2] : memref<576x16xbf16, #tpu.memory_space<vmem>>, vector<64x16xbf16>
    tpu.vector_store %arg5[%c0_1, %c0_2], %1 {strides = array<i32>} : memref<576x16xbf16, #tpu.memory_space<vmem>>, vector<64x16xbf16>,
    %c0_3 = arith.constant 0 : index
    %c0_4 = arith.constant 0 : index
    %c124 = arith.constant 124 : index
    %3 = vector.load %arg1[%c0_3, %c0_4, %c124] : memref<1x64x272xbf16, #tpu.memory_space<vmem>>, vector<1x64x16xbf16>
    %4 = vector.shape_cast %3 : vector<1x64x16xbf16> to vector<64x16xbf16>
    %c64 = arith.constant 64 : index
    %c0_5 = arith.constant 0 : index
    %5 = vector.load %arg5[%c64, %c0_5] : memref<576x16xbf16, #tpu.memory_space<vmem>>, vector<64x16xbf16>
    tpu.vector_store %arg5[%c64, %c0_5], %4 {strides = array<i32>} : memref<576x16xbf16, #tpu.memory_space<vmem>>, vector<64x16xbf16>,
    %c0_6 = arith.constant 0 : index
    %c0_7 = arith.constant 0 : index
    %c125 = arith.constant 125 : index
    %6 = vector.load %arg1[%c0_6, %c0_7, %c125] : memref<1x64x272xbf16, #tpu.memory_space<vmem>>, vector<1x64x16xbf16>
    %7 = vector.shape_cast %6 : vector<1x64x16xbf16> to vector<64x16xbf16>
    %c128 = arith.constant 128 : index
    %c0_8 = arith.constant 0 : index
    %8 = vector.load %arg5[%c128, %c0_8] : memref<576x16xbf16, #tpu.memory_space<vmem>>, vector<64x16xbf16>
    tpu.vector_store %arg5[%c128, %c0_8], %7 {strides = array<i32>} : memref<576x16xbf16, #tpu.memory_space<vmem>>, vector<64x16xbf16>,
    %c0_9 = arith.constant 0 : index
    %c0_10 = arith.constant 0 : index
    %c127 = arith.constant 127 : index
    %9 = vector.load %arg1[%c0_9, %c0_10, %c127] : memref<1x64x272xbf16, #tpu.memory_space<vmem>>, vector<1x64x16xbf16>
    %10 = vector.shape_cast %9 : vector<1x64x16xbf16> to vector<64x16xbf16>
    %c192 = arith.constant 192 : index
    %c0_11 = arith.constant 0 : index
    %11 = vector.load %arg5[%c192, %c0_11] : memref<576x16xbf16, #tpu.memory_space<vmem>>, vector<64x16xbf16>
    tpu.vector_store %arg5[%c192, %c0_11], %10 {strides = array<i32>} : memref<576x16xbf16, #tpu.memory_space<vmem>>, vector<64x16xbf16>,
    %c0_12 = arith.constant 0 : index
    %c0_13 = arith.constant 0 : index
    %c128_14 = arith.constant 128 : index
    %12 = vector.load %arg1[%c0_12, %c0_13, %c128_14] : memref<1x64x272xbf16, #tpu.memory_space<vmem>>, vector<1x64x16xbf16>
    %13 = vector.shape_cast %12 : vector<1x64x16xbf16> to vector<64x16xbf16>
    %c256 = arith.constant 256 : index
    %c0_15 = arith.constant 0 : index
    %14 = vector.load %arg5[%c256, %c0_15] : memref<576x16xbf16, #tpu.memory_space<vmem>>, vector<64x16xbf16>
    tpu.vector_store %arg5[%c256, %c0_15], %13 {strides = array<i32>} : memref<576x16xbf16, #tpu.memory_space<vmem>>, vector<64x16xbf16>,
    %c0_16 = arith.constant 0 : index
    %c0_17 = arith.constant 0 : index
    %c129 = arith.constant 129 : index
    %15 = vector.load %arg1[%c0_16, %c0_17, %c129] : memref<1x64x272xbf16, #tpu.memory_space<vmem>>, vector<1x64x16xbf16>
    %16 = vector.shape_cast %15 : vector<1x64x16xbf16> to vector<64x16xbf16>
    %c320 = arith.constant 320 : index
    %c0_18 = arith.constant 0 : index
    %17 = vector.load %arg5[%c320, %c0_18] : memref<576x16xbf16, #tpu.memory_space<vmem>>, vector<64x16xbf16>
    tpu.vector_store %arg5[%c320, %c0_18], %16 {strides = array<i32>} : memref<576x16xbf16, #tpu.memory_space<vmem>>, vector<64x16xbf16>,
    %c0_19 = arith.constant 0 : index
    %c0_20 = arith.constant 0 : index
    %c131 = arith.constant 131 : index
    %18 = vector.load %arg1[%c0_19, %c0_20, %c131] : memref<1x64x272xbf16, #tpu.memory_space<vmem>>, vector<1x64x16xbf16>
    %19 = vector.shape_cast %18 : vector<1x64x16xbf16> to vector<64x16xbf16>
    %c384 = arith.constant 384 : index
    %c0_21 = arith.constant 0 : index
    %20 = vector.load %arg5[%c384, %c0_21] : memref<576x16xbf16, #tpu.memory_space<vmem>>, vector<64x16xbf16>
    tpu.vector_store %arg5[%c384, %c0_21], %19 {strides = array<i32>} : memref<576x16xbf16, #tpu.memory_space<vmem>>, vector<64x16xbf16>,
    %c0_22 = arith.constant 0 : index
    %c0_23 = arith.constant 0 : index
    %c132 = arith.constant 132 : index
    %21 = vector.load %arg1[%c0_22, %c0_23, %c132] : memref<1x64x272xbf16, #tpu.memory_space<vmem>>, vector<1x64x16xbf16>
    %22 = vector.shape_cast %21 : vector<1x64x16xbf16> to vector<64x16xbf16>
    %c448 = arith.constant 448 : index
    %c0_24 = arith.constant 0 : index
    %23 = vector.load %arg5[%c448, %c0_24] : memref<576x16xbf16, #tpu.memory_space<vmem>>, vector<64x16xbf16>
    tpu.vector_store %arg5[%c448, %c0_24], %22 {strides = array<i32>} : memref<576x16xbf16, #tpu.memory_space<vmem>>, vector<64x16xbf16>,
    %c0_25 = arith.constant 0 : index
    %c0_26 = arith.constant 0 : index
    %c133 = arith.constant 133 : index
    %24 = vector.load %arg1[%c0_25, %c0_26, %c133] : memref<1x64x272xbf16, #tpu.memory_space<vmem>>, vector<1x64x16xbf16>
    %25 = vector.shape_cast %24 : vector<1x64x16xbf16> to vector<64x16xbf16>
    %c512 = arith.constant 512 : index
    %c0_27 = arith.constant 0 : index
    %26 = vector.load %arg5[%c512, %c0_27] : memref<576x16xbf16, #tpu.memory_space<vmem>>, vector<64x16xbf16>
    tpu.vector_store %arg5[%c512, %c0_27], %25 {strides = array<i32>} : memref<576x16xbf16, #tpu.memory_space<vmem>>, vector<64x16xbf16>,
    %c0_28 = arith.constant 0 : index
    %c0_29 = arith.constant 0 : index
    %27 = vector.load %arg2[%c0_28, %c0_29] : memref<32x576xbf16, #tpu.memory_space<vmem>>, vector<32x576xbf16>
    %c0_30 = arith.constant 0 : index
    %c0_31 = arith.constant 0 : index
    %28 = vector.load %arg5[%c0_30, %c0_31] : memref<576x16xbf16, #tpu.memory_space<vmem>>, vector<576x16xbf16>
    %cst = arith.constant dense<0.000000e+00> : vector<32x16xf32>
    %29 = tpu.matmul %27, %28, %cst {dimension_numbers = #tpu.dot_dimension_numbers<[1], [0], [0], [1], [0, 0, 1, 1], [], []>} : vector<32x576xbf16>, vector<576x16xbf16>, vector<32x16xf32> -> vector<32x16xf32>
    %c0_32 = arith.constant 0 : index
    %c0_33 = arith.constant 0 : index
    %30 = vector.load %arg3[%c0_32, %c0_33] : memref<32x1xf32, #tpu.memory_space<vmem>>, vector<32x1xf32>
    %31 = vector.broadcast %30 : vector<32x1xf32> to vector<32x16xf32>
    %32 = arith.addf %29, %31 : vector<32x16xf32>
    %cst_34 = arith.constant 0.000000e+00 : f32
    %33 = vector.broadcast %cst_34 : f32 to vector<32x16xf32>
    %34 = arith.maximumf %32, %33 : vector<32x16xf32>
    %c0_35 = arith.constant 0 : index
    %c0_36 = arith.constant 0 : index
    %c0_37 = arith.constant 0 : index
    %35 = vector.load %arg4[%c0_35, %c0_36, %c0_37] : memref<1x32x16xf32, #tpu.memory_space<vmem>>, vector<1x32x16xf32>
    %36 = vector.shape_cast %35 : vector<1x32x16xf32> to vector<32x16xf32>
    %37 = vector.shape_cast %34 : vector<32x16xf32> to vector<1x32x16xf32>
    tpu.vector_store %arg4[%c0_35, %c0_36, %c0_37], %37 {strides = array<i32>} : memref<1x32x16xf32, #tpu.memory_space<vmem>>, vector<1x32x16xf32>,
    return
  }
  func.func @transform_0(%arg0: i32) -> (i32, i32, i32) {
    %c0_i32 = arith.constant 0 : i32
    %c0_i32_0 = arith.constant 0 : i32
    %c0_i32_1 = arith.constant 0 : i32
    return %arg0, %c0_i32, %c0_i32_0 : i32, i32, i32
  }
  func.func @transform_1(%arg0: i32) -> (i32, i32) {
    %c0_i32 = arith.constant 0 : i32
    %c0_i32_0 = arith.constant 0 : i32
    %c0_i32_1 = arith.constant 0 : i32
    return %c0_i32, %c0_i32_0 : i32, i32
  }
  func.func @transform_2(%arg0: i32) -> (i32, i32) {
    %c0_i32 = arith.constant 0 : i32
    %c0_i32_0 = arith.constant 0 : i32
    %c0_i32_1 = arith.constant 0 : i32
    return %c0_i32, %c0_i32_0 : i32, i32
  }
  func.func @transform_3(%arg0: i32) -> (i32, i32, i32) {
    %c0_i32 = arith.constant 0 : i32
    %c0_i32_0 = arith.constant 0 : i32
    %c0_i32_1 = arith.constant 0 : i32
    return %arg0, %c0_i32, %c0_i32_0 : i32, i32, i32
  }
}

module attributes {stable_mosaic.version = 11 : i64} {
  func.func @_mix_kernel(%arg0: i32, %arg1: memref<1x32x292xbf16, #tpu.memory_space<vmem>>, %arg2: memref<16x288xbf16, #tpu.memory_space<vmem>>, %arg3: memref<16x1xf32, #tpu.memory_space<vmem>>, %arg4: memref<1x16x36xf32, #tpu.memory_space<vmem>>, %arg5: memref<288x36xbf16, #tpu.memory_space<vmem>>) attributes {dimension_semantics = [#tpu.dimension_semantics<parallel>], iteration_bounds = array<i64: 2>, scalar_prefetch = 0 : i64, scratch_operands = 1 : i64, tpu.core_type = #tpu.core_type<tc>, window_params = [{transform_indices = @transform_0, window_bounds = array<i64: 1, 32, 292>}, {pipeline_mode = #tpu.pipeline_mode<synchronous>, transform_indices = @transform_1, window_bounds = array<i64: 16, 288>}, {pipeline_mode = #tpu.pipeline_mode<synchronous>, transform_indices = @transform_2, window_bounds = array<i64: 16, 1>}, {transform_indices = @transform_3, window_bounds = array<i64: 1, 16, 36>}]} {
    %c0 = arith.constant 0 : index
    %c0_0 = arith.constant 0 : index
    %c121 = arith.constant 121 : index
    %0 = vector.load %arg1[%c0, %c0_0, %c121] : memref<1x32x292xbf16, #tpu.memory_space<vmem>>, vector<1x32x36xbf16>
    %1 = vector.shape_cast %0 : vector<1x32x36xbf16> to vector<32x36xbf16>
    %c0_1 = arith.constant 0 : index
    %c0_2 = arith.constant 0 : index
    %2 = vector.load %arg5[%c0_1, %c0_2] : memref<288x36xbf16, #tpu.memory_space<vmem>>, vector<32x36xbf16>
    tpu.vector_store %arg5[%c0_1, %c0_2], %1 {strides = array<i32>} : memref<288x36xbf16, #tpu.memory_space<vmem>>, vector<32x36xbf16>,
    %c0_3 = arith.constant 0 : index
    %c0_4 = arith.constant 0 : index
    %c122 = arith.constant 122 : index
    %3 = vector.load %arg1[%c0_3, %c0_4, %c122] : memref<1x32x292xbf16, #tpu.memory_space<vmem>>, vector<1x32x36xbf16>
    %4 = vector.shape_cast %3 : vector<1x32x36xbf16> to vector<32x36xbf16>
    %c32 = arith.constant 32 : index
    %c0_5 = arith.constant 0 : index
    %5 = vector.load %arg5[%c32, %c0_5] : memref<288x36xbf16, #tpu.memory_space<vmem>>, vector<32x36xbf16>
    tpu.vector_store %arg5[%c32, %c0_5], %4 {strides = array<i32>} : memref<288x36xbf16, #tpu.memory_space<vmem>>, vector<32x36xbf16>,
    %c0_6 = arith.constant 0 : index
    %c0_7 = arith.constant 0 : index
    %c123 = arith.constant 123 : index
    %6 = vector.load %arg1[%c0_6, %c0_7, %c123] : memref<1x32x292xbf16, #tpu.memory_space<vmem>>, vector<1x32x36xbf16>
    %7 = vector.shape_cast %6 : vector<1x32x36xbf16> to vector<32x36xbf16>
    %c64 = arith.constant 64 : index
    %c0_8 = arith.constant 0 : index
    %8 = vector.load %arg5[%c64, %c0_8] : memref<288x36xbf16, #tpu.memory_space<vmem>>, vector<32x36xbf16>
    tpu.vector_store %arg5[%c64, %c0_8], %7 {strides = array<i32>} : memref<288x36xbf16, #tpu.memory_space<vmem>>, vector<32x36xbf16>,
    %c0_9 = arith.constant 0 : index
    %c0_10 = arith.constant 0 : index
    %c127 = arith.constant 127 : index
    %9 = vector.load %arg1[%c0_9, %c0_10, %c127] : memref<1x32x292xbf16, #tpu.memory_space<vmem>>, vector<1x32x36xbf16>
    %10 = vector.shape_cast %9 : vector<1x32x36xbf16> to vector<32x36xbf16>
    %c96 = arith.constant 96 : index
    %c0_11 = arith.constant 0 : index
    %11 = vector.load %arg5[%c96, %c0_11] : memref<288x36xbf16, #tpu.memory_space<vmem>>, vector<32x36xbf16>
    tpu.vector_store %arg5[%c96, %c0_11], %10 {strides = array<i32>} : memref<288x36xbf16, #tpu.memory_space<vmem>>, vector<32x36xbf16>,
    %c0_12 = arith.constant 0 : index
    %c0_13 = arith.constant 0 : index
    %c128 = arith.constant 128 : index
    %12 = vector.load %arg1[%c0_12, %c0_13, %c128] : memref<1x32x292xbf16, #tpu.memory_space<vmem>>, vector<1x32x36xbf16>
    %13 = vector.shape_cast %12 : vector<1x32x36xbf16> to vector<32x36xbf16>
    %c128_14 = arith.constant 128 : index
    %c0_15 = arith.constant 0 : index
    %14 = vector.load %arg5[%c128_14, %c0_15] : memref<288x36xbf16, #tpu.memory_space<vmem>>, vector<32x36xbf16>
    tpu.vector_store %arg5[%c128_14, %c0_15], %13 {strides = array<i32>} : memref<288x36xbf16, #tpu.memory_space<vmem>>, vector<32x36xbf16>,
    %c0_16 = arith.constant 0 : index
    %c0_17 = arith.constant 0 : index
    %c129 = arith.constant 129 : index
    %15 = vector.load %arg1[%c0_16, %c0_17, %c129] : memref<1x32x292xbf16, #tpu.memory_space<vmem>>, vector<1x32x36xbf16>
    %16 = vector.shape_cast %15 : vector<1x32x36xbf16> to vector<32x36xbf16>
    %c160 = arith.constant 160 : index
    %c0_18 = arith.constant 0 : index
    %17 = vector.load %arg5[%c160, %c0_18] : memref<288x36xbf16, #tpu.memory_space<vmem>>, vector<32x36xbf16>
    tpu.vector_store %arg5[%c160, %c0_18], %16 {strides = array<i32>} : memref<288x36xbf16, #tpu.memory_space<vmem>>, vector<32x36xbf16>,
    %c0_19 = arith.constant 0 : index
    %c0_20 = arith.constant 0 : index
    %c133 = arith.constant 133 : index
    %18 = vector.load %arg1[%c0_19, %c0_20, %c133] : memref<1x32x292xbf16, #tpu.memory_space<vmem>>, vector<1x32x36xbf16>
    %19 = vector.shape_cast %18 : vector<1x32x36xbf16> to vector<32x36xbf16>
    %c192 = arith.constant 192 : index
    %c0_21 = arith.constant 0 : index
    %20 = vector.load %arg5[%c192, %c0_21] : memref<288x36xbf16, #tpu.memory_space<vmem>>, vector<32x36xbf16>
    tpu.vector_store %arg5[%c192, %c0_21], %19 {strides = array<i32>} : memref<288x36xbf16, #tpu.memory_space<vmem>>, vector<32x36xbf16>,
    %c0_22 = arith.constant 0 : index
    %c0_23 = arith.constant 0 : index
    %c134 = arith.constant 134 : index
    %21 = vector.load %arg1[%c0_22, %c0_23, %c134] : memref<1x32x292xbf16, #tpu.memory_space<vmem>>, vector<1x32x36xbf16>
    %22 = vector.shape_cast %21 : vector<1x32x36xbf16> to vector<32x36xbf16>
    %c224 = arith.constant 224 : index
    %c0_24 = arith.constant 0 : index
    %23 = vector.load %arg5[%c224, %c0_24] : memref<288x36xbf16, #tpu.memory_space<vmem>>, vector<32x36xbf16>
    tpu.vector_store %arg5[%c224, %c0_24], %22 {strides = array<i32>} : memref<288x36xbf16, #tpu.memory_space<vmem>>, vector<32x36xbf16>,
    %c0_25 = arith.constant 0 : index
    %c0_26 = arith.constant 0 : index
    %c135 = arith.constant 135 : index
    %24 = vector.load %arg1[%c0_25, %c0_26, %c135] : memref<1x32x292xbf16, #tpu.memory_space<vmem>>, vector<1x32x36xbf16>
    %25 = vector.shape_cast %24 : vector<1x32x36xbf16> to vector<32x36xbf16>
    %c256 = arith.constant 256 : index
    %c0_27 = arith.constant 0 : index
    %26 = vector.load %arg5[%c256, %c0_27] : memref<288x36xbf16, #tpu.memory_space<vmem>>, vector<32x36xbf16>
    tpu.vector_store %arg5[%c256, %c0_27], %25 {strides = array<i32>} : memref<288x36xbf16, #tpu.memory_space<vmem>>, vector<32x36xbf16>,
    %c0_28 = arith.constant 0 : index
    %c0_29 = arith.constant 0 : index
    %27 = vector.load %arg2[%c0_28, %c0_29] : memref<16x288xbf16, #tpu.memory_space<vmem>>, vector<16x288xbf16>
    %c0_30 = arith.constant 0 : index
    %c0_31 = arith.constant 0 : index
    %28 = vector.load %arg5[%c0_30, %c0_31] : memref<288x36xbf16, #tpu.memory_space<vmem>>, vector<288x36xbf16>
    %cst = arith.constant dense<0.000000e+00> : vector<16x36xf32>
    %29 = tpu.matmul %27, %28, %cst {dimension_numbers = #tpu.dot_dimension_numbers<[1], [0], [0], [1], [0, 0, 1, 1], [], []>} : vector<16x288xbf16>, vector<288x36xbf16>, vector<16x36xf32> -> vector<16x36xf32>
    %c0_32 = arith.constant 0 : index
    %c0_33 = arith.constant 0 : index
    %30 = vector.load %arg3[%c0_32, %c0_33] : memref<16x1xf32, #tpu.memory_space<vmem>>, vector<16x1xf32>
    %31 = vector.broadcast %30 : vector<16x1xf32> to vector<16x36xf32>
    %32 = arith.addf %29, %31 : vector<16x36xf32>
    %cst_34 = arith.constant 0.000000e+00 : f32
    %33 = vector.broadcast %cst_34 : f32 to vector<16x36xf32>
    %34 = arith.maximumf %32, %33 : vector<16x36xf32>
    %c0_35 = arith.constant 0 : index
    %c0_36 = arith.constant 0 : index
    %c0_37 = arith.constant 0 : index
    %35 = vector.load %arg4[%c0_35, %c0_36, %c0_37] : memref<1x16x36xf32, #tpu.memory_space<vmem>>, vector<1x16x36xf32>
    %36 = vector.shape_cast %35 : vector<1x16x36xf32> to vector<16x36xf32>
    %37 = vector.shape_cast %34 : vector<16x36xf32> to vector<1x16x36xf32>
    tpu.vector_store %arg4[%c0_35, %c0_36, %c0_37], %37 {strides = array<i32>} : memref<1x16x36xf32, #tpu.memory_space<vmem>>, vector<1x16x36xf32>,
    return
  }
  func.func @transform_0(%arg0: i32) -> (i32, i32, i32) {
    %c0_i32 = arith.constant 0 : i32
    %c0_i32_0 = arith.constant 0 : i32
    %c0_i32_1 = arith.constant 0 : i32
    return %arg0, %c0_i32, %c0_i32_0 : i32, i32, i32
  }
  func.func @transform_1(%arg0: i32) -> (i32, i32) {
    %c0_i32 = arith.constant 0 : i32
    %c0_i32_0 = arith.constant 0 : i32
    %c0_i32_1 = arith.constant 0 : i32
    return %c0_i32, %c0_i32_0 : i32, i32
  }
  func.func @transform_2(%arg0: i32) -> (i32, i32) {
    %c0_i32 = arith.constant 0 : i32
    %c0_i32_0 = arith.constant 0 : i32
    %c0_i32_1 = arith.constant 0 : i32
    return %c0_i32, %c0_i32_0 : i32, i32
  }
  func.func @transform_3(%arg0: i32) -> (i32, i32, i32) {
    %c0_i32 = arith.constant 0 : i32
    %c0_i32_0 = arith.constant 0 : i32
    %c0_i32_1 = arith.constant 0 : i32
    return %arg0, %c0_i32, %c0_i32_0 : i32, i32, i32
  }
}

module attributes {stable_mosaic.version = 11 : i64} {
  func.func @_mix_kernel(%arg0: i32, %arg1: memref<1x32x356xbf16, #tpu.memory_space<vmem>>, %arg2: memref<8x288xbf16, #tpu.memory_space<vmem>>, %arg3: memref<8x1xf32, #tpu.memory_space<vmem>>, %arg4: memref<1x8x100xf32, #tpu.memory_space<vmem>>, %arg5: memref<288x100xbf16, #tpu.memory_space<vmem>>) attributes {dimension_semantics = [#tpu.dimension_semantics<parallel>], iteration_bounds = array<i64: 2>, scalar_prefetch = 0 : i64, scratch_operands = 1 : i64, tpu.core_type = #tpu.core_type<tc>, window_params = [{transform_indices = @transform_0, window_bounds = array<i64: 1, 32, 356>}, {pipeline_mode = #tpu.pipeline_mode<synchronous>, transform_indices = @transform_1, window_bounds = array<i64: 8, 288>}, {pipeline_mode = #tpu.pipeline_mode<synchronous>, transform_indices = @transform_2, window_bounds = array<i64: 8, 1>}, {transform_indices = @transform_3, window_bounds = array<i64: 1, 8, 100>}]} {
    %c0 = arith.constant 0 : index
    %c0_0 = arith.constant 0 : index
    %c117 = arith.constant 117 : index
    %0 = vector.load %arg1[%c0, %c0_0, %c117] : memref<1x32x356xbf16, #tpu.memory_space<vmem>>, vector<1x32x100xbf16>
    %1 = vector.shape_cast %0 : vector<1x32x100xbf16> to vector<32x100xbf16>
    %c0_1 = arith.constant 0 : index
    %c0_2 = arith.constant 0 : index
    %2 = vector.load %arg5[%c0_1, %c0_2] : memref<288x100xbf16, #tpu.memory_space<vmem>>, vector<32x100xbf16>
    tpu.vector_store %arg5[%c0_1, %c0_2], %1 {strides = array<i32>} : memref<288x100xbf16, #tpu.memory_space<vmem>>, vector<32x100xbf16>,
    %c0_3 = arith.constant 0 : index
    %c0_4 = arith.constant 0 : index
    %c118 = arith.constant 118 : index
    %3 = vector.load %arg1[%c0_3, %c0_4, %c118] : memref<1x32x356xbf16, #tpu.memory_space<vmem>>, vector<1x32x100xbf16>
    %4 = vector.shape_cast %3 : vector<1x32x100xbf16> to vector<32x100xbf16>
    %c32 = arith.constant 32 : index
    %c0_5 = arith.constant 0 : index
    %5 = vector.load %arg5[%c32, %c0_5] : memref<288x100xbf16, #tpu.memory_space<vmem>>, vector<32x100xbf16>
    tpu.vector_store %arg5[%c32, %c0_5], %4 {strides = array<i32>} : memref<288x100xbf16, #tpu.memory_space<vmem>>, vector<32x100xbf16>,
    %c0_6 = arith.constant 0 : index
    %c0_7 = arith.constant 0 : index
    %c119 = arith.constant 119 : index
    %6 = vector.load %arg1[%c0_6, %c0_7, %c119] : memref<1x32x356xbf16, #tpu.memory_space<vmem>>, vector<1x32x100xbf16>
    %7 = vector.shape_cast %6 : vector<1x32x100xbf16> to vector<32x100xbf16>
    %c64 = arith.constant 64 : index
    %c0_8 = arith.constant 0 : index
    %8 = vector.load %arg5[%c64, %c0_8] : memref<288x100xbf16, #tpu.memory_space<vmem>>, vector<32x100xbf16>
    tpu.vector_store %arg5[%c64, %c0_8], %7 {strides = array<i32>} : memref<288x100xbf16, #tpu.memory_space<vmem>>, vector<32x100xbf16>,
    %c0_9 = arith.constant 0 : index
    %c0_10 = arith.constant 0 : index
    %c127 = arith.constant 127 : index
    %9 = vector.load %arg1[%c0_9, %c0_10, %c127] : memref<1x32x356xbf16, #tpu.memory_space<vmem>>, vector<1x32x100xbf16>
    %10 = vector.shape_cast %9 : vector<1x32x100xbf16> to vector<32x100xbf16>
    %c96 = arith.constant 96 : index
    %c0_11 = arith.constant 0 : index
    %11 = vector.load %arg5[%c96, %c0_11] : memref<288x100xbf16, #tpu.memory_space<vmem>>, vector<32x100xbf16>
    tpu.vector_store %arg5[%c96, %c0_11], %10 {strides = array<i32>} : memref<288x100xbf16, #tpu.memory_space<vmem>>, vector<32x100xbf16>,
    %c0_12 = arith.constant 0 : index
    %c0_13 = arith.constant 0 : index
    %c128 = arith.constant 128 : index
    %12 = vector.load %arg1[%c0_12, %c0_13, %c128] : memref<1x32x356xbf16, #tpu.memory_space<vmem>>, vector<1x32x100xbf16>
    %13 = vector.shape_cast %12 : vector<1x32x100xbf16> to vector<32x100xbf16>
    %c128_14 = arith.constant 128 : index
    %c0_15 = arith.constant 0 : index
    %14 = vector.load %arg5[%c128_14, %c0_15] : memref<288x100xbf16, #tpu.memory_space<vmem>>, vector<32x100xbf16>
    tpu.vector_store %arg5[%c128_14, %c0_15], %13 {strides = array<i32>} : memref<288x100xbf16, #tpu.memory_space<vmem>>, vector<32x100xbf16>,
    %c0_16 = arith.constant 0 : index
    %c0_17 = arith.constant 0 : index
    %c129 = arith.constant 129 : index
    %15 = vector.load %arg1[%c0_16, %c0_17, %c129] : memref<1x32x356xbf16, #tpu.memory_space<vmem>>, vector<1x32x100xbf16>
    %16 = vector.shape_cast %15 : vector<1x32x100xbf16> to vector<32x100xbf16>
    %c160 = arith.constant 160 : index
    %c0_18 = arith.constant 0 : index
    %17 = vector.load %arg5[%c160, %c0_18] : memref<288x100xbf16, #tpu.memory_space<vmem>>, vector<32x100xbf16>
    tpu.vector_store %arg5[%c160, %c0_18], %16 {strides = array<i32>} : memref<288x100xbf16, #tpu.memory_space<vmem>>, vector<32x100xbf16>,
    %c0_19 = arith.constant 0 : index
    %c0_20 = arith.constant 0 : index
    %c137 = arith.constant 137 : index
    %18 = vector.load %arg1[%c0_19, %c0_20, %c137] : memref<1x32x356xbf16, #tpu.memory_space<vmem>>, vector<1x32x100xbf16>
    %19 = vector.shape_cast %18 : vector<1x32x100xbf16> to vector<32x100xbf16>
    %c192 = arith.constant 192 : index
    %c0_21 = arith.constant 0 : index
    %20 = vector.load %arg5[%c192, %c0_21] : memref<288x100xbf16, #tpu.memory_space<vmem>>, vector<32x100xbf16>
    tpu.vector_store %arg5[%c192, %c0_21], %19 {strides = array<i32>} : memref<288x100xbf16, #tpu.memory_space<vmem>>, vector<32x100xbf16>,
    %c0_22 = arith.constant 0 : index
    %c0_23 = arith.constant 0 : index
    %c138 = arith.constant 138 : index
    %21 = vector.load %arg1[%c0_22, %c0_23, %c138] : memref<1x32x356xbf16, #tpu.memory_space<vmem>>, vector<1x32x100xbf16>
    %22 = vector.shape_cast %21 : vector<1x32x100xbf16> to vector<32x100xbf16>
    %c224 = arith.constant 224 : index
    %c0_24 = arith.constant 0 : index
    %23 = vector.load %arg5[%c224, %c0_24] : memref<288x100xbf16, #tpu.memory_space<vmem>>, vector<32x100xbf16>
    tpu.vector_store %arg5[%c224, %c0_24], %22 {strides = array<i32>} : memref<288x100xbf16, #tpu.memory_space<vmem>>, vector<32x100xbf16>,
    %c0_25 = arith.constant 0 : index
    %c0_26 = arith.constant 0 : index
    %c139 = arith.constant 139 : index
    %24 = vector.load %arg1[%c0_25, %c0_26, %c139] : memref<1x32x356xbf16, #tpu.memory_space<vmem>>, vector<1x32x100xbf16>
    %25 = vector.shape_cast %24 : vector<1x32x100xbf16> to vector<32x100xbf16>
    %c256 = arith.constant 256 : index
    %c0_27 = arith.constant 0 : index
    %26 = vector.load %arg5[%c256, %c0_27] : memref<288x100xbf16, #tpu.memory_space<vmem>>, vector<32x100xbf16>
    tpu.vector_store %arg5[%c256, %c0_27], %25 {strides = array<i32>} : memref<288x100xbf16, #tpu.memory_space<vmem>>, vector<32x100xbf16>,
    %c0_28 = arith.constant 0 : index
    %c0_29 = arith.constant 0 : index
    %27 = vector.load %arg2[%c0_28, %c0_29] : memref<8x288xbf16, #tpu.memory_space<vmem>>, vector<8x288xbf16>
    %c0_30 = arith.constant 0 : index
    %c0_31 = arith.constant 0 : index
    %28 = vector.load %arg5[%c0_30, %c0_31] : memref<288x100xbf16, #tpu.memory_space<vmem>>, vector<288x100xbf16>
    %cst = arith.constant dense<0.000000e+00> : vector<8x100xf32>
    %29 = tpu.matmul %27, %28, %cst {dimension_numbers = #tpu.dot_dimension_numbers<[1], [0], [0], [1], [0, 0, 1, 1], [], []>} : vector<8x288xbf16>, vector<288x100xbf16>, vector<8x100xf32> -> vector<8x100xf32>
    %c0_32 = arith.constant 0 : index
    %c0_33 = arith.constant 0 : index
    %30 = vector.load %arg3[%c0_32, %c0_33] : memref<8x1xf32, #tpu.memory_space<vmem>>, vector<8x1xf32>
    %31 = vector.broadcast %30 : vector<8x1xf32> to vector<8x100xf32>
    %32 = arith.addf %29, %31 : vector<8x100xf32>
    %cst_34 = arith.constant 0.000000e+00 : f32
    %33 = vector.broadcast %cst_34 : f32 to vector<8x100xf32>
    %34 = arith.maximumf %32, %33 : vector<8x100xf32>
    %c0_35 = arith.constant 0 : index
    %c0_36 = arith.constant 0 : index
    %c0_37 = arith.constant 0 : index
    %35 = vector.load %arg4[%c0_35, %c0_36, %c0_37] : memref<1x8x100xf32, #tpu.memory_space<vmem>>, vector<1x8x100xf32>
    %36 = vector.shape_cast %35 : vector<1x8x100xf32> to vector<8x100xf32>
    %37 = vector.shape_cast %34 : vector<8x100xf32> to vector<1x8x100xf32>
    tpu.vector_store %arg4[%c0_35, %c0_36, %c0_37], %37 {strides = array<i32>} : memref<1x8x100xf32, #tpu.memory_space<vmem>>, vector<1x8x100xf32>,
    return
  }
  func.func @transform_0(%arg0: i32) -> (i32, i32, i32) {
    %c0_i32 = arith.constant 0 : i32
    %c0_i32_0 = arith.constant 0 : i32
    %c0_i32_1 = arith.constant 0 : i32
    return %arg0, %c0_i32, %c0_i32_0 : i32, i32, i32
  }
  func.func @transform_1(%arg0: i32) -> (i32, i32) {
    %c0_i32 = arith.constant 0 : i32
    %c0_i32_0 = arith.constant 0 : i32
    %c0_i32_1 = arith.constant 0 : i32
    return %c0_i32, %c0_i32_0 : i32, i32
  }
  func.func @transform_2(%arg0: i32) -> (i32, i32) {
    %c0_i32 = arith.constant 0 : i32
    %c0_i32_0 = arith.constant 0 : i32
    %c0_i32_1 = arith.constant 0 : i32
    return %c0_i32, %c0_i32_0 : i32, i32
  }
  func.func @transform_3(%arg0: i32) -> (i32, i32, i32) {
    %c0_i32 = arith.constant 0 : i32
    %c0_i32_0 = arith.constant 0 : i32
    %c0_i32_1 = arith.constant 0 : i32
    return %arg0, %c0_i32, %c0_i32_0 : i32, i32, i32
  }
}

module attributes {stable_mosaic.version = 11 : i64} {
  func.func @_mix_kernel(%arg0: i32, %arg1: memref<1x32x580xbf16, #tpu.memory_space<vmem>>, %arg2: memref<4x288xbf16, #tpu.memory_space<vmem>>, %arg3: memref<4x1xf32, #tpu.memory_space<vmem>>, %arg4: memref<1x4x324xf32, #tpu.memory_space<vmem>>, %arg5: memref<288x324xbf16, #tpu.memory_space<vmem>>) attributes {dimension_semantics = [#tpu.dimension_semantics<parallel>], iteration_bounds = array<i64: 2>, scalar_prefetch = 0 : i64, scratch_operands = 1 : i64, tpu.core_type = #tpu.core_type<tc>, window_params = [{transform_indices = @transform_0, window_bounds = array<i64: 1, 32, 580>}, {pipeline_mode = #tpu.pipeline_mode<synchronous>, transform_indices = @transform_1, window_bounds = array<i64: 4, 288>}, {pipeline_mode = #tpu.pipeline_mode<synchronous>, transform_indices = @transform_2, window_bounds = array<i64: 4, 1>}, {transform_indices = @transform_3, window_bounds = array<i64: 1, 4, 324>}]} {
    %c0 = arith.constant 0 : index
    %c0_0 = arith.constant 0 : index
    %c109 = arith.constant 109 : index
    %0 = vector.load %arg1[%c0, %c0_0, %c109] : memref<1x32x580xbf16, #tpu.memory_space<vmem>>, vector<1x32x324xbf16>
    %1 = vector.shape_cast %0 : vector<1x32x324xbf16> to vector<32x324xbf16>
    %c0_1 = arith.constant 0 : index
    %c0_2 = arith.constant 0 : index
    %2 = vector.load %arg5[%c0_1, %c0_2] : memref<288x324xbf16, #tpu.memory_space<vmem>>, vector<32x324xbf16>
    tpu.vector_store %arg5[%c0_1, %c0_2], %1 {strides = array<i32>} : memref<288x324xbf16, #tpu.memory_space<vmem>>, vector<32x324xbf16>,
    %c0_3 = arith.constant 0 : index
    %c0_4 = arith.constant 0 : index
    %c110 = arith.constant 110 : index
    %3 = vector.load %arg1[%c0_3, %c0_4, %c110] : memref<1x32x580xbf16, #tpu.memory_space<vmem>>, vector<1x32x324xbf16>
    %4 = vector.shape_cast %3 : vector<1x32x324xbf16> to vector<32x324xbf16>
    %c32 = arith.constant 32 : index
    %c0_5 = arith.constant 0 : index
    %5 = vector.load %arg5[%c32, %c0_5] : memref<288x324xbf16, #tpu.memory_space<vmem>>, vector<32x324xbf16>
    tpu.vector_store %arg5[%c32, %c0_5], %4 {strides = array<i32>} : memref<288x324xbf16, #tpu.memory_space<vmem>>, vector<32x324xbf16>,
    %c0_6 = arith.constant 0 : index
    %c0_7 = arith.constant 0 : index
    %c111 = arith.constant 111 : index
    %6 = vector.load %arg1[%c0_6, %c0_7, %c111] : memref<1x32x580xbf16, #tpu.memory_space<vmem>>, vector<1x32x324xbf16>
    %7 = vector.shape_cast %6 : vector<1x32x324xbf16> to vector<32x324xbf16>
    %c64 = arith.constant 64 : index
    %c0_8 = arith.constant 0 : index
    %8 = vector.load %arg5[%c64, %c0_8] : memref<288x324xbf16, #tpu.memory_space<vmem>>, vector<32x324xbf16>
    tpu.vector_store %arg5[%c64, %c0_8], %7 {strides = array<i32>} : memref<288x324xbf16, #tpu.memory_space<vmem>>, vector<32x324xbf16>,
    %c0_9 = arith.constant 0 : index
    %c0_10 = arith.constant 0 : index
    %c127 = arith.constant 127 : index
    %9 = vector.load %arg1[%c0_9, %c0_10, %c127] : memref<1x32x580xbf16, #tpu.memory_space<vmem>>, vector<1x32x324xbf16>
    %10 = vector.shape_cast %9 : vector<1x32x324xbf16> to vector<32x324xbf16>
    %c96 = arith.constant 96 : index
    %c0_11 = arith.constant 0 : index
    %11 = vector.load %arg5[%c96, %c0_11] : memref<288x324xbf16, #tpu.memory_space<vmem>>, vector<32x324xbf16>
    tpu.vector_store %arg5[%c96, %c0_11], %10 {strides = array<i32>} : memref<288x324xbf16, #tpu.memory_space<vmem>>, vector<32x324xbf16>,
    %c0_12 = arith.constant 0 : index
    %c0_13 = arith.constant 0 : index
    %c128 = arith.constant 128 : index
    %12 = vector.load %arg1[%c0_12, %c0_13, %c128] : memref<1x32x580xbf16, #tpu.memory_space<vmem>>, vector<1x32x324xbf16>
    %13 = vector.shape_cast %12 : vector<1x32x324xbf16> to vector<32x324xbf16>
    %c128_14 = arith.constant 128 : index
    %c0_15 = arith.constant 0 : index
    %14 = vector.load %arg5[%c128_14, %c0_15] : memref<288x324xbf16, #tpu.memory_space<vmem>>, vector<32x324xbf16>
    tpu.vector_store %arg5[%c128_14, %c0_15], %13 {strides = array<i32>} : memref<288x324xbf16, #tpu.memory_space<vmem>>, vector<32x324xbf16>,
    %c0_16 = arith.constant 0 : index
    %c0_17 = arith.constant 0 : index
    %c129 = arith.constant 129 : index
    %15 = vector.load %arg1[%c0_16, %c0_17, %c129] : memref<1x32x580xbf16, #tpu.memory_space<vmem>>, vector<1x32x324xbf16>
    %16 = vector.shape_cast %15 : vector<1x32x324xbf16> to vector<32x324xbf16>
    %c160 = arith.constant 160 : index
    %c0_18 = arith.constant 0 : index
    %17 = vector.load %arg5[%c160, %c0_18] : memref<288x324xbf16, #tpu.memory_space<vmem>>, vector<32x324xbf16>
    tpu.vector_store %arg5[%c160, %c0_18], %16 {strides = array<i32>} : memref<288x324xbf16, #tpu.memory_space<vmem>>, vector<32x324xbf16>,
    %c0_19 = arith.constant 0 : index
    %c0_20 = arith.constant 0 : index
    %c145 = arith.constant 145 : index
    %18 = vector.load %arg1[%c0_19, %c0_20, %c145] : memref<1x32x580xbf16, #tpu.memory_space<vmem>>, vector<1x32x324xbf16>
    %19 = vector.shape_cast %18 : vector<1x32x324xbf16> to vector<32x324xbf16>
    %c192 = arith.constant 192 : index
    %c0_21 = arith.constant 0 : index
    %20 = vector.load %arg5[%c192, %c0_21] : memref<288x324xbf16, #tpu.memory_space<vmem>>, vector<32x324xbf16>
    tpu.vector_store %arg5[%c192, %c0_21], %19 {strides = array<i32>} : memref<288x324xbf16, #tpu.memory_space<vmem>>, vector<32x324xbf16>,
    %c0_22 = arith.constant 0 : index
    %c0_23 = arith.constant 0 : index
    %c146 = arith.constant 146 : index
    %21 = vector.load %arg1[%c0_22, %c0_23, %c146] : memref<1x32x580xbf16, #tpu.memory_space<vmem>>, vector<1x32x324xbf16>
    %22 = vector.shape_cast %21 : vector<1x32x324xbf16> to vector<32x324xbf16>
    %c224 = arith.constant 224 : index
    %c0_24 = arith.constant 0 : index
    %23 = vector.load %arg5[%c224, %c0_24] : memref<288x324xbf16, #tpu.memory_space<vmem>>, vector<32x324xbf16>
    tpu.vector_store %arg5[%c224, %c0_24], %22 {strides = array<i32>} : memref<288x324xbf16, #tpu.memory_space<vmem>>, vector<32x324xbf16>,
    %c0_25 = arith.constant 0 : index
    %c0_26 = arith.constant 0 : index
    %c147 = arith.constant 147 : index
    %24 = vector.load %arg1[%c0_25, %c0_26, %c147] : memref<1x32x580xbf16, #tpu.memory_space<vmem>>, vector<1x32x324xbf16>
    %25 = vector.shape_cast %24 : vector<1x32x324xbf16> to vector<32x324xbf16>
    %c256 = arith.constant 256 : index
    %c0_27 = arith.constant 0 : index
    %26 = vector.load %arg5[%c256, %c0_27] : memref<288x324xbf16, #tpu.memory_space<vmem>>, vector<32x324xbf16>
    tpu.vector_store %arg5[%c256, %c0_27], %25 {strides = array<i32>} : memref<288x324xbf16, #tpu.memory_space<vmem>>, vector<32x324xbf16>,
    %c0_28 = arith.constant 0 : index
    %c0_29 = arith.constant 0 : index
    %27 = vector.load %arg2[%c0_28, %c0_29] : memref<4x288xbf16, #tpu.memory_space<vmem>>, vector<4x288xbf16>
    %c0_30 = arith.constant 0 : index
    %c0_31 = arith.constant 0 : index
    %28 = vector.load %arg5[%c0_30, %c0_31] : memref<288x324xbf16, #tpu.memory_space<vmem>>, vector<288x324xbf16>
    %cst = arith.constant dense<0.000000e+00> : vector<4x324xf32>
    %29 = tpu.matmul %27, %28, %cst {dimension_numbers = #tpu.dot_dimension_numbers<[1], [0], [0], [1], [0, 0, 1, 1], [], []>} : vector<4x288xbf16>, vector<288x324xbf16>, vector<4x324xf32> -> vector<4x324xf32>
    %c0_32 = arith.constant 0 : index
    %c0_33 = arith.constant 0 : index
    %30 = vector.load %arg3[%c0_32, %c0_33] : memref<4x1xf32, #tpu.memory_space<vmem>>, vector<4x1xf32>
    %31 = vector.broadcast %30 : vector<4x1xf32> to vector<4x324xf32>
    %32 = arith.addf %29, %31 : vector<4x324xf32>
    %cst_34 = arith.constant 0.000000e+00 : f32
    %33 = vector.broadcast %cst_34 : f32 to vector<4x324xf32>
    %34 = arith.maximumf %32, %33 : vector<4x324xf32>
    %c0_35 = arith.constant 0 : index
    %c0_36 = arith.constant 0 : index
    %c0_37 = arith.constant 0 : index
    %35 = vector.load %arg4[%c0_35, %c0_36, %c0_37] : memref<1x4x324xf32, #tpu.memory_space<vmem>>, vector<1x4x324xf32>
    %36 = vector.shape_cast %35 : vector<1x4x324xf32> to vector<4x324xf32>
    %37 = vector.shape_cast %34 : vector<4x324xf32> to vector<1x4x324xf32>
    tpu.vector_store %arg4[%c0_35, %c0_36, %c0_37], %37 {strides = array<i32>} : memref<1x4x324xf32, #tpu.memory_space<vmem>>, vector<1x4x324xf32>,
    return
  }
  func.func @transform_0(%arg0: i32) -> (i32, i32, i32) {
    %c0_i32 = arith.constant 0 : i32
    %c0_i32_0 = arith.constant 0 : i32
    %c0_i32_1 = arith.constant 0 : i32
    return %arg0, %c0_i32, %c0_i32_0 : i32, i32, i32
  }
  func.func @transform_1(%arg0: i32) -> (i32, i32) {
    %c0_i32 = arith.constant 0 : i32
    %c0_i32_0 = arith.constant 0 : i32
    %c0_i32_1 = arith.constant 0 : i32
    return %c0_i32, %c0_i32_0 : i32, i32
  }
  func.func @transform_2(%arg0: i32) -> (i32, i32) {
    %c0_i32 = arith.constant 0 : i32
    %c0_i32_0 = arith.constant 0 : i32
    %c0_i32_1 = arith.constant 0 : i32
    return %c0_i32, %c0_i32_0 : i32, i32
  }
  func.func @transform_3(%arg0: i32) -> (i32, i32, i32) {
    %c0_i32 = arith.constant 0 : i32
    %c0_i32_0 = arith.constant 0 : i32
    %c0_i32_1 = arith.constant 0 : i32
    return %arg0, %c0_i32, %c0_i32_0 : i32, i32, i32
  }
}

</mosaic_0001>

<llo_original>
// kernel: context_conditioning_stack.8
$region0: #{context_conditioning_stack.8}
  #allocation0 [shape = 'u32[]', space=smem, size = 0x4, offset = 0x4, fixed_abs, tag = 'smem constant byte address 0x4 - core index']
  #allocation1 [shape = 'u32[72,128]{1,0:T(1,128)}', space=vmem, size = 0x9000, scoped, tag = 'internal scratch']
  #allocation2 [shape = 'bf16[8,1412]{1,0:T(8,128)(2,1)}', space=vmem, size = 0x6000, scoped, tag = 'scratch operand']
  #allocation3 [shape = 'bf16[80,1156]{1,0:T(8,128)(2,1)}', space=vmem, size = 0x32000, scoped, tag = 'scratch operand']
  %s0 = inlined_call_operand.vmem [shape: bf16[8,8,1412], index: 0, kind: input, shape index: {}]
  %s1 = inlined_call_operand.vmem [shape: bf16[8,72], index: 1, kind: input, shape index: {}]
  %s2 = inlined_call_operand.vmem [shape: f32[8,1], index: 2, kind: input, shape index: {}]
  %s3 = inlined_call_operand.vmem [shape: bf16[8,80], index: 3, kind: input, shape index: {}]
  %s4 = inlined_call_operand.vmem [shape: f32[8,1], index: 4, kind: input, shape index: {}]
  %s5 = inlined_call_operand.vmem [shape: bf16[1,1156], index: 5, kind: input, shape index: {}]
  %s6 = inlined_call_operand.vmem [shape: bf16[8,8,1156], index: 6, kind: output, shape index: {}]
  %s7 = sld [smem:[#allocation0]]
  $region57: #{context_conditioning_stack.8} parent=0
    _
  %s9 = ssub.s32 1, %s7
  %s10 = scalar_select 0, %s9, %s7
  loop: start=0, step=1, limit=10
  $region2: #{context_conditioning_stack.8} parent=0 // loop_pre_header
    _
  $region3: #{context_conditioning_stack.8} parent=0 // loop_header
    %s12 = sphi 0, %s16
    %p13 = scmp.ge.s32.totalorder %s12, 10
    %s22 = sphi 0, %s24
    %s25 = sphi 0, %s22
    %s26 = sphi 0, %s25
    %s42 = sphi 0, %s26
    %s46 = sphi 0, %s46
    %s48 = sphi 0, %s46
    %s49 = sphi 0, %s48
    %s63 = sphi 0, %s49
    %s67 = sphi 0, %s67
    %s69 = sphi 0, %s67
    %s70 = sphi 0, %s69
    %s84 = sphi 0, %s70
    %s88 = sphi 0, %s88
    %s90 = sphi 0, %s88
    %s91 = sphi 0, %s90
    %s105 = sphi 0, %s91
    %s109 = sphi 0, %s109
    %s111 = sphi 0, %s109
    %s112 = sphi 0, %s111
    %s126 = sphi 0, %s112
    %s130 = sphi 0, %s130
    %s132 = sphi 0, %s130
    %s133 = sphi 0, %s132
    %s147 = sphi 0, %s133
    %s153 = sphi 0, %s155
    %s156 = sphi 0, %s153
    %s157 = sphi 0, %s156
    %s173 = sphi 0, %s157
  $region4: #{context_conditioning_stack.8} parent=0 // loop_header_branch
    %15 = sbr.rel (%p13) target = $region8
  $region5: #{context_conditioning_stack.8} parent=0 // loop_body
    %s17 = ssub.s32 %s12, 1
    %s18 = ssub.s32 %s12, 2
    %s19 = sadd.s32 %s12, 1
    %s20 = ssub.s32 %s12, %s19
    %p21 = scmp.eq.s32.totalorder %s20, 0
    %s23 = sadd.s32 %s22, 1
    %s24 = scalar_select %p21, %s22, %s23
    %p27 = pneg %p21
    %p28 = scmp.eq.s32.totalorder %s12, 7
    %p29 = por %p27, %p28
    %p30 = scmp.ne.s32.totalorder %s22, %s25
    %p31 = scmp.eq.s32.totalorder %s12, 0
    %p32 = por %p30, %p31
    %p33 = scmp.ne.s32.totalorder %s22, %s25
    %p34 = scmp.eq.s32.totalorder %s17, 7
    %p35 = por %p33, %p34
    %p36 = scmp.ne.s32.totalorder %s25, %s26
    %p37 = scmp.eq.s32.totalorder %s17, 0
    %p38 = por %p36, %p37
    %p39 = scmp.ne.s32.totalorder %s25, %s26
    %p40 = scmp.eq.s32.totalorder %s18, 7
    %p41 = por %p39, %p40
    %p43 = scmp.ne.s32.totalorder %s26, %s42
    %p44 = scmp.eq.s32.totalorder %s18, 0
    %p45 = por %p43, %p44
    %s47 = sadd.s32 %s46, 1
    %p50 = scmp.eq.s32.totalorder %s12, 7
    %p51 = scmp.ne.s32.totalorder %s46, %s48
    %p52 = scmp.eq.s32.totalorder %s12, 0
    %p53 = por %p51, %p52
    %p54 = scmp.ne.s32.totalorder %s46, %s48
    %p55 = scmp.eq.s32.totalorder %s17, 7
    %p56 = por %p54, %p55
    %p57 = scmp.ne.s32.totalorder %s48, %s49
    %p58 = scmp.eq.s32.totalorder %s17, 0
    %p59 = por %p57, %p58
    %p60 = scmp.ne.s32.totalorder %s48, %s49
    %p61 = scmp.eq.s32.totalorder %s18, 7
    %p62 = por %p60, %p61
    %p64 = scmp.ne.s32.totalorder %s49, %s63
    %p65 = scmp.eq.s32.totalorder %s18, 0
    %p66 = por %p64, %p65
    %s68 = sadd.s32 %s67, 1
    %p71 = scmp.eq.s32.totalorder %s12, 7
    %p72 = scmp.ne.s32.totalorder %s67, %s69
    %p73 = scmp.eq.s32.totalorder %s12, 0
    %p74 = por %p72, %p73
    %p75 = scmp.ne.s32.totalorder %s67, %s69
    %p76 = scmp.eq.s32.totalorder %s17, 7
    %p77 = por %p75, %p76
    %p78 = scmp.ne.s32.totalorder %s69, %s70
    %p79 = scmp.eq.s32.totalorder %s17, 0
    %p80 = por %p78, %p79
    %p81 = scmp.ne.s32.totalorder %s69, %s70
    %p82 = scmp.eq.s32.totalorder %s18, 7
    %p83 = por %p81, %p82
    %p85 = scmp.ne.s32.totalorder %s70, %s84
    %p86 = scmp.eq.s32.totalorder %s18, 0
    %p87 = por %p85, %p86
    %s89 = sadd.s32 %s88, 1
    %p92 = scmp.eq.s32.totalorder %s12, 7
    %p93 = scmp.ne.s32.totalorder %s88, %s90
    %p94 = scmp.eq.s32.totalorder %s12, 0
    %p95 = por %p93, %p94
    %p96 = scmp.ne.s32.totalorder %s88, %s90
    %p97 = scmp.eq.s32.totalorder %s17, 7
    %p98 = por %p96, %p97
    %p99 = scmp.ne.s32.totalorder %s90, %s91
    %p100 = scmp.eq.s32.totalorder %s17, 0
    %p101 = por %p99, %p100
    %p102 = scmp.ne.s32.totalorder %s90, %s91
    %p103 = scmp.eq.s32.totalorder %s18, 7
    %p104 = por %p102, %p103
    %p106 = scmp.ne.s32.totalorder %s91, %s105
    %p107 = scmp.eq.s32.totalorder %s18, 0
    %p108 = por %p106, %p107
    %s110 = sadd.s32 %s109, 1
    %p113 = scmp.eq.s32.totalorder %s12, 7
    %p114 = scmp.ne.s32.totalorder %s109, %s111
    %p115 = scmp.eq.s32.totalorder %s12, 0
    %p116 = por %p114, %p115
    %p117 = scmp.ne.s32.totalorder %s109, %s111
    %p118 = scmp.eq.s32.totalorder %s17, 7
    %p119 = por %p117, %p118
    %p120 = scmp.ne.s32.totalorder %s111, %s112
    %p121 = scmp.eq.s32.totalorder %s17, 0
    %p122 = por %p120, %p121
    %p123 = scmp.ne.s32.totalorder %s111, %s112
    %p124 = scmp.eq.s32.totalorder %s18, 7
    %p125 = por %p123, %p124
    %p127 = scmp.ne.s32.totalorder %s112, %s126
    %p128 = scmp.eq.s32.totalorder %s18, 0
    %p129 = por %p127, %p128
    %s131 = sadd.s32 %s130, 1
    %p134 = scmp.eq.s32.totalorder %s12, 7
    %p135 = scmp.ne.s32.totalorder %s130, %s132
    %p136 = scmp.eq.s32.totalorder %s12, 0
    %p137 = por %p135, %p136
    %p138 = scmp.ne.s32.totalorder %s130, %s132
    %p139 = scmp.eq.s32.totalorder %s17, 7
    %p140 = por %p138, %p139
    %p141 = scmp.ne.s32.totalorder %s132, %s133
    %p142 = scmp.eq.s32.totalorder %s17, 0
    %p143 = por %p141, %p142
    %p144 = scmp.ne.s32.totalorder %s132, %s133
    %p145 = scmp.eq.s32.totalorder %s18, 7
    %p146 = por %p144, %p145
    %p148 = scmp.ne.s32.totalorder %s133, %s147
    %p149 = scmp.eq.s32.totalorder %s18, 0
    %p150 = por %p148, %p149
    %s151 = ssub.s32 %s12, %s19
    %p152 = scmp.eq.s32.totalorder %s151, 0
    %s154 = sadd.s32 %s153, 1
    %s155 = scalar_select %p152, %s153, %s154
    %p158 = pneg %p152
    %p159 = scmp.eq.s32.totalorder %s12, 7
    %p160 = por %p158, %p159
    %p161 = scmp.ne.s32.totalorder %s153, %s156
    %p162 = scmp.eq.s32.totalorder %s12, 0
    %p163 = por %p161, %p162
    %p164 = scmp.ne.s32.totalorder %s153, %s156
    %p165 = scmp.eq.s32.totalorder %s17, 7
    %p166 = por %p164, %p165
    %p167 = scmp.ne.s32.totalorder %s156, %s157
    %p168 = scmp.eq.s32.totalorder %s17, 0
    %p169 = por %p167, %p168
    %p170 = scmp.ne.s32.totalorder %s156, %s157
    %p171 = scmp.eq.s32.totalorder %s18, 7
    %p172 = por %p170, %p171
    %p174 = scmp.ne.s32.totalorder %s157, %s173
    %p175 = scmp.eq.s32.totalorder %s18, 0
    %p176 = por %p174, %p175
    %p177 = scmp.le.s32.totalorder 1, %s12
    %p178 = scmp.lt.s32.totalorder %s12, 9
    %p179 = pnand %p177, %p178
    %p180 = pneg %p179
    // Predicated region
    $region9: #{context_conditioning_stack.8} parent=5 // pred_check
      _
    $region10: #{context_conditioning_stack.8} parent=5 // pred_check_branch
      %182 = sbr.rel (%p179) target = $region12
    $region11: #{context_conditioning_stack.8} parent=5 // pred_region
      %s183 = ssub.s32 %s12, 1
      // Predicated region
      $region13: #{context_conditioning_stack.8} parent=11 // pred_check
        %p184 = pneg %p59
      $region14: #{context_conditioning_stack.8} parent=11 // pred_check_branch
        %186 = sbr.rel (%p184) target = $region16
      $region15: #{context_conditioning_stack.8} parent=11 // pred_region
        _
      $region16: #{context_conditioning_stack.8} parent=11 // pred_fallthru
        _
      // Predicated region
      $region17: #{context_conditioning_stack.8} parent=11 // pred_check
        %p187 = pneg %p80
      $region18: #{context_conditioning_stack.8} parent=11 // pred_check_branch
        %189 = sbr.rel (%p187) target = $region20
      $region19: #{context_conditioning_stack.8} parent=11 // pred_region
        _
      $region20: #{context_conditioning_stack.8} parent=11 // pred_fallthru
        _
      // Predicated region
      $region21: #{context_conditioning_stack.8} parent=11 // pred_check
        %p190 = pneg %p101
      $region22: #{context_conditioning_stack.8} parent=11 // pred_check_branch
        %192 = sbr.rel (%p190) target = $region24
      $region23: #{context_conditioning_stack.8} parent=11 // pred_region
        _
      $region24: #{context_conditioning_stack.8} parent=11 // pred_fallthru
        _
      // Predicated region
      $region25: #{context_conditioning_stack.8} parent=11 // pred_check
        %p193 = pneg %p122
      $region26: #{context_conditioning_stack.8} parent=11 // pred_check_branch
        %195 = sbr.rel (%p193) target = $region28
      $region27: #{context_conditioning_stack.8} parent=11 // pred_region
        _
      $region28: #{context_conditioning_stack.8} parent=11 // pred_fallthru
        _
      // Predicated region
      $region29: #{context_conditioning_stack.8} parent=11 // pred_check
        %p196 = pneg %p143
      $region30: #{context_conditioning_stack.8} parent=11 // pred_check_branch
        %198 = sbr.rel (%p196) target = $region32
      $region31: #{context_conditioning_stack.8} parent=11 // pred_region
        _
      $region32: #{context_conditioning_stack.8} parent=11 // pred_fallthru
        _
    $region12: #{context_conditioning_stack.8} parent=5 // pred_fallthru
      _
    %p199 = scmp.lt.s32.totalorder %s12, 8
    // Predicated region
    $region33: #{context_conditioning_stack.8} parent=5 // pred_check
      %p200 = pneg %p199
    $region34: #{context_conditioning_stack.8} parent=5 // pred_check_branch
      %202 = sbr.rel (%p200) target = $region36
    $region35: #{context_conditioning_stack.8} parent=5 // pred_region
      // Predicated region
      $region37: #{context_conditioning_stack.8} parent=35 // pred_check
        %p203 = pneg %p32
      $region38: #{context_conditioning_stack.8} parent=35 // pred_check_branch
        %205 = sbr.rel (%p203) target = $region40
      $region39: #{context_conditioning_stack.8} parent=35 // pred_region
        %p206 = scmp.lt.s32.totalorder %s12, 7
        %s207 = scalar_select %p206, %s12, 7
        %s208 = smul.addr %s207, 12
        %s209 = smul.addr %s208, 4
        %s210 = scalar_lea.vmem %s0, %s209
      $region40: #{context_conditioning_stack.8} parent=35 // pred_fallthru
        _
    $region36: #{context_conditioning_stack.8} parent=5 // pred_fallthru
      _
    %p211 = scmp.le.s32.totalorder 1, %s12
    %p212 = scmp.lt.s32.totalorder %s12, 9
    %p213 = pnand %p211, %p212
    %p214 = pneg %p213
    // Predicated region
    $region41: #{context_conditioning_stack.8} parent=5 // pred_check
      _
    $region42: #{context_conditioning_stack.8} parent=5 // pred_check_branch
      %216 = sbr.rel (%p213) target = $region44
    $region43: #{context_conditioning_stack.8} parent=5 // pred_region
      %s217 = ssub.s32 %s12, 1
      %p218 = scmp.lt.s32.totalorder %s17, 7
      %s219 = scalar_select %p218, %s17, 7
      %s220 = smul.addr %s219, 12
      %s221 = smul.addr %s220, 4
      %s222 = scalar_lea.vmem %s0, %s221
      %p223 = pneg %p38
      %p224 = pneg %p35
      %p225 = pneg %p59
      %p226 = pneg %p56
      %p227 = pneg %p80
      %p228 = pneg %p77
      %p229 = pneg %p101
      %p230 = pneg %p98
      %p231 = pneg %p122
      %p232 = pneg %p119
      %p233 = pneg %p143
      %p234 = pneg %p140
      %p235 = pneg %p169
      %p236 = pneg %p166
      %p237 = scmp.lt.s32.totalorder %s17, 7
      %s238 = scalar_select %p237, %s17, 7
      %s239 = smul.addr %s238, 10
      %s240 = smul.addr %s239, 4
      %s241 = scalar_lea.vmem %s6, %s240
      %p242 = scmp.lt.s32.totalorder %s17, 7
      %s243 = scalar_select %p242, %s17, 7
      %s244 = smul.addr %s243, 12
      %s245 = smul.addr %s244, 4
      %s246 = scalar_lea.vmem %s0, %s245
      %p247 = scmp.lt.s32.totalorder %s17, 7
      %s248 = scalar_select %p247, %s17, 7
      %s249 = smul.addr %s248, 10
      %s250 = smul.addr %s249, 4
      %s251 = scalar_lea.vmem %s6, %s250
      %v253 = vld [vmem:[%s246] sm:$0xff]
      %v254 = vld [vmem:[%s246 + $0x8] sm:$0xff]
      %v255 = vld [vmem:[%s246 + $0x10] sm:$0xff]
      %v256 = vld [vmem:[%s246 + $0x18] sm:$0xff]
      %v257 = vld [vmem:[%s246 + $0x20] sm:$0xff]
      %v258 = vunpack.c.l.bf16 %v253
      %v259 = vunpack.c.h.bf16 %v253
      %v260 = vunpack.c.l.bf16 %v254
      %v261 = vunpack.c.h.bf16 %v254
      %v262 = vunpack.c.l.bf16 %v255
      %v263 = vunpack.c.h.bf16 %v255
      %v264 = vunpack.c.l.bf16 %v256
      %v265 = vunpack.c.h.bf16 %v256
      %v266 = vunpack.c.l.bf16 %v257
      %v267 = vunpack.c.h.bf16 %v257
      %v268 = vmax.f32 %v258, 0.0
      %v269 = vmax.f32 %v259, 0.0
      %v270 = vmax.f32 %v260, 0.0
      %v271 = vmax.f32 %v261, 0.0
      %v272 = vmax.f32 %v262, 0.0
      %v273 = vmax.f32 %v263, 0.0
      %v274 = vmax.f32 %v264, 0.0
      %v275 = vmax.f32 %v265, 0.0
      %v276 = vmax.f32 %v266, 0.0
      %v277 = vmax.f32 %v267, 0.0
      %v278 = vpack.c.bf16 %v269, %v268
      %v279 = vpack.c.bf16 %v271, %v270
      %v280 = vpack.c.bf16 %v273, %v272
      %v281 = vpack.c.bf16 %v275, %v274
      %v282 = vpack.c.bf16 %v277, %v276
      %288 = vrot.lane.b32.xlu0 %v278, 35
      %v289 = vpop.permute.xlu0 %288
      %290 = vrot.lane.b32.xlu0 %v279, 35
      %v291 = vpop.permute.xlu0 %290
      %292 = vrot.lane.b32.xlu0 %v280, 35
      %v293 = vpop.permute.xlu0 %292
      %294 = vrot.lane.b32.xlu0 %v281, 35
      %v295 = vpop.permute.xlu0 %294
      %296 = vrot.lane.b32.xlu0 %v282, 35
      %v297 = vpop.permute.xlu0 %296
      %v298 = vrot.slane %v289, 4
      %v299 = vrot.slane %v291, 4
      %v300 = vrot.slane %v293, 4
      %v301 = vrot.slane %v295, 4
      %v302 = vrot.slane %v297, 4
      %vm303 = vcmask 1043456
      %v304 = vsel %vm303, %v298, %v299
      %vm305 = vcmask 285696
      %v306 = vsel %vm305, %v289, %v304
      %v307 = vsel %vm303, %v299, %v300
      %v308 = vsel %vm305, %v291, %v307
      %v309 = vsel %vm303, %v300, %v301
      %v310 = vsel %vm305, %v293, %v309
      %v311 = vsel %vm303, %v301, %v302
      %v312 = vsel %vm305, %v295, %v311
      %v313 = vsel %vm305, %v297, %v302
      %319 = vst [vmem:[#allocation3] sm:$0xff] %v306
      %320 = vst [vmem:[#allocation3 + $0x8] sm:$0xff] %v308
      %321 = vst [vmem:[#allocation3 + $0x10] sm:$0xff] %v310
      %322 = vst [vmem:[#allocation3 + $0x18] sm:$0xff] %v312
      %vm323 = vcmask 1043456
      %vm324 = vcmask 31748
      %vm325 = vmor %vm324, %vm323
      %326 = vst.msk [vmem:[#allocation3 + $0x20] sm:$0xff] %vm325, %v313
      %v327 = vld [vmem:[%s246] sm:$0xff]
      %v328 = vld [vmem:[%s246 + $0x8] sm:$0xff]
      %v329 = vld [vmem:[%s246 + $0x10] sm:$0xff]
      %v330 = vld [vmem:[%s246 + $0x18] sm:$0xff]
      %v331 = vld [vmem:[%s246 + $0x20] sm:$0xff]
      %v332 = vunpack.c.l.bf16 %v327
      %v333 = vunpack.c.h.bf16 %v327
      %v334 = vunpack.c.l.bf16 %v328
      %v335 = vunpack.c.h.bf16 %v328
      %v336 = vunpack.c.l.bf16 %v329
      %v337 = vunpack.c.h.bf16 %v329
      %v338 = vunpack.c.l.bf16 %v330
      %v339 = vunpack.c.h.bf16 %v330
      %v340 = vunpack.c.l.bf16 %v331
      %v341 = vunpack.c.h.bf16 %v331
      %v342 = vmax.f32 %v332, 0.0
      %v343 = vmax.f32 %v333, 0.0
      %v344 = vmax.f32 %v334, 0.0
      %v345 = vmax.f32 %v335, 0.0
      %v346 = vmax.f32 %v336, 0.0
      %v347 = vmax.f32 %v337, 0.0
      %v348 = vmax.f32 %v338, 0.0
      %v349 = vmax.f32 %v339, 0.0
      %v350 = vmax.f32 %v340, 0.0
      %v351 = vmax.f32 %v341, 0.0
      %v352 = vpack.c.bf16 %v343, %v342
      %v353 = vpack.c.bf16 %v345, %v344
      %v354 = vpack.c.bf16 %v347, %v346
      %v355 = vpack.c.bf16 %v349, %v348
      %v356 = vpack.c.bf16 %v351, %v350
      %362 = vrot.lane.b32.xlu0 %v352, 34
      %v363 = vpop.permute.xlu0 %362
      %364 = vrot.lane.b32.xlu0 %v353, 34
      %v365 = vpop.permute.xlu0 %364
      %366 = vrot.lane.b32.xlu0 %v354, 34
      %v367 = vpop.permute.xlu0 %366
      %368 = vrot.lane.b32.xlu0 %v355, 34
      %v369 = vpop.permute.xlu0 %368
      %370 = vrot.lane.b32.xlu0 %v356, 34
      %v371 = vpop.permute.xlu0 %370
      %v372 = vrot.slane %v363, 4
      %v373 = vrot.slane %v365, 4
      %v374 = vrot.slane %v367, 4
      %v375 = vrot.slane %v369, 4
      %v376 = vrot.slane %v371, 4
      %v377 = vsel %vm303, %v372, %v373
      %vm378 = vcmask 277504
      %v379 = vsel %vm378, %v363, %v377
      %v380 = vsel %vm303, %v373, %v374
      %v381 = vsel %vm378, %v365, %v380
      %v382 = vsel %vm303, %v374, %v375
      %v383 = vsel %vm378, %v367, %v382
      %v384 = vsel %vm303, %v375, %v376
      %v385 = vsel %vm378, %v369, %v384
      %v386 = vsel %vm378, %v371, %v376
      %392 = vst [vmem:[#allocation3 + $0x28] sm:$0xff] %v379
      %393 = vst [vmem:[#allocation3 + $0x30] sm:$0xff] %v381
      %394 = vst [vmem:[#allocation3 + $0x38] sm:$0xff] %v383
      %395 = vst [vmem:[#allocation3 + $0x40] sm:$0xff] %v385
      %396 = vst.msk [vmem:[#allocation3 + $0x48] sm:$0xff] %vm325, %v386
      %v397 = vld [vmem:[%s246] sm:$0xff]
      %v398 = vld [vmem:[%s246 + $0x8] sm:$0xff]
      %v399 = vld [vmem:[%s246 + $0x10] sm:$0xff]
      %v400 = vld [vmem:[%s246 + $0x18] sm:$0xff]
      %v401 = vld [vmem:[%s246 + $0x20] sm:$0xff]
      %v402 = vunpack.c.l.bf16 %v397
      %v403 = vunpack.c.h.bf16 %v397
      %v404 = vunpack.c.l.bf16 %v398
      %v405 = vunpack.c.h.bf16 %v398
      %v406 = vunpack.c.l.bf16 %v399
      %v407 = vunpack.c.h.bf16 %v399
      %v408 = vunpack.c.l.bf16 %v400
      %v409 = vunpack.c.h.bf16 %v400
      %v410 = vunpack.c.l.bf16 %v401
      %v411 = vunpack.c.h.bf16 %v401
      %v412 = vmax.f32 %v402, 0.0
      %v413 = vmax.f32 %v403, 0.0
      %v414 = vmax.f32 %v404, 0.0
      %v415 = vmax.f32 %v405, 0.0
      %v416 = vmax.f32 %v406, 0.0
      %v417 = vmax.f32 %v407, 0.0
      %v418 = vmax.f32 %v408, 0.0
      %v419 = vmax.f32 %v409, 0.0
      %v420 = vmax.f32 %v410, 0.0
      %v421 = vmax.f32 %v411, 0.0
      %v422 = vpack.c.bf16 %v413, %v412
      %v423 = vpack.c.bf16 %v415, %v414
      %v424 = vpack.c.bf16 %v417, %v416
      %v425 = vpack.c.bf16 %v419, %v418
      %v426 = vpack.c.bf16 %v421, %v420
      %432 = vrot.lane.b32.xlu0 %v422, 33
      %v433 = vpop.permute.xlu0 %432
      %434 = vrot.lane.b32.xlu0 %v423, 33
      %v435 = vpop.permute.xlu0 %434
      %436 = vrot.lane.b32.xlu0 %v424, 33
      %v437 = vpop.permute.xlu0 %436
      %438 = vrot.lane.b32.xlu0 %v425, 33
      %v439 = vpop.permute.xlu0 %438
      %440 = vrot.lane.b32.xlu0 %v426, 33
      %v441 = vpop.permute.xlu0 %440
      %v442 = vrot.slane %v433, 4
      %v443 = vrot.slane %v435, 4
      %v444 = vrot.slane %v437, 4
      %v445 = vrot.slane %v439, 4
      %v446 = vrot.slane %v441, 4
      %v447 = vsel %vm303, %v442, %v443
      %vm448 = vcmask 269312
      %v449 = vsel %vm448, %v433, %v447
      %v450 = vsel %vm303, %v443, %v444
      %v451 = vsel %vm448, %v435, %v450
      %v452 = vsel %vm303, %v444, %v445
      %v453 = vsel %vm448, %v437, %v452
      %v454 = vsel %vm303, %v445, %v446
      %v455 = vsel %vm448, %v439, %v454
      %v456 = vsel %vm448, %v441, %v446
      %462 = vst [vmem:[#allocation3 + $0x50] sm:$0xff] %v449
      %463 = vst [vmem:[#allocation3 + $0x58] sm:$0xff] %v451
      %464 = vst [vmem:[#allocation3 + $0x60] sm:$0xff] %v453
      %465 = vst [vmem:[#allocation3 + $0x68] sm:$0xff] %v455
      %466 = vst.msk [vmem:[#allocation3 + $0x70] sm:$0xff] %vm325, %v456
      %v467 = vld [vmem:[%s246] sm:$0xff]
      %v468 = vld [vmem:[%s246 + $0x8] sm:$0xff]
      %v469 = vld [vmem:[%s246 + $0x10] sm:$0xff]
      %v470 = vld [vmem:[%s246 + $0x18] sm:$0xff]
      %v471 = vld [vmem:[%s246 + $0x20] sm:$0xff]
      %v472 = vld [vmem:[%s246 + $0x28] sm:$0xf]
      %v473 = vunpack.c.l.bf16 %v467
      %v474 = vunpack.c.h.bf16 %v467
      %v475 = vunpack.c.l.bf16 %v468
      %v476 = vunpack.c.h.bf16 %v468
      %v477 = vunpack.c.l.bf16 %v469
      %v478 = vunpack.c.h.bf16 %v469
      %v479 = vunpack.c.l.bf16 %v470
      %v480 = vunpack.c.h.bf16 %v470
      %v481 = vunpack.c.l.bf16 %v471
      %v482 = vunpack.c.h.bf16 %v471
      %v483 = vunpack.c.l.bf16 %v472
      %v484 = vmax.f32 %v473, 0.0
      %v485 = vmax.f32 %v474, 0.0
      %v486 = vmax.f32 %v475, 0.0
      %v487 = vmax.f32 %v476, 0.0
      %v488 = vmax.f32 %v477, 0.0
      %v489 = vmax.f32 %v478, 0.0
      %v490 = vmax.f32 %v479, 0.0
      %v491 = vmax.f32 %v480, 0.0
      %v492 = vmax.f32 %v481, 0.0
      %v493 = vmax.f32 %v482, 0.0
      %v494 = vmax.f32 %v483, 0.0
      %v495 = vpack.c.bf16 %v485, %v484
      %v496 = vpack.c.bf16 %v487, %v486
      %v497 = vpack.c.bf16 %v489, %v488
      %v498 = vpack.c.bf16 %v491, %v490
      %v499 = vpack.c.bf16 %v493, %v492
      %v500 = vpack.c.bf16 %v494, %v494
      %507 = vrot.lane.b32.xlu0 %v495, 1
      %v508 = vpop.permute.xlu0 %507
      %509 = vrot.lane.b32.xlu0 %v496, 1
      %v510 = vpop.permute.xlu0 %509
      %511 = vrot.lane.b32.xlu0 %v497, 1
      %v512 = vpop.permute.xlu0 %511
      %513 = vrot.lane.b32.xlu0 %v498, 1
      %v514 = vpop.permute.xlu0 %513
      %515 = vrot.lane.b32.xlu0 %v499, 1
      %v516 = vpop.permute.xlu0 %515
      %517 = vrot.lane.b32.xlu0 %v500, 1
      %v518 = vpop.permute.xlu0 %517
      %v519 = vrot.slane %v508, 4
      %v520 = vrot.slane %v510, 4
      %v521 = vrot.slane %v512, 4
      %v522 = vrot.slane %v514, 4
      %v523 = vrot.slane %v516, 4
      %v524 = vrot.slane %v518, 4
      %v525 = vsel %vm303, %v519, %v520
      %vm526 = vcmask 7168
      %v527 = vsel %vm526, %v508, %v525
      %v528 = vsel %vm303, %v520, %v521
      %v529 = vsel %vm526, %v510, %v528
      %v530 = vsel %vm303, %v521, %v522
      %v531 = vsel %vm526, %v512, %v530
      %v532 = vsel %vm303, %v522, %v523
      %v533 = vsel %vm526, %v514, %v532
      %v534 = vsel %vm303, %v523, %v524
      %v535 = vsel %vm526, %v516, %v534
      %541 = vst [vmem:[#allocation3 + $0x78] sm:$0xff] %v527
      %542 = vst [vmem:[#allocation3 + $0x80] sm:$0xff] %v529
      %543 = vst [vmem:[#allocation3 + $0x88] sm:$0xff] %v531
      %544 = vst [vmem:[#allocation3 + $0x90] sm:$0xff] %v533
      %545 = vst.msk [vmem:[#allocation3 + $0x98] sm:$0xff] %vm325, %v535
      %v546 = vld [vmem:[%s246 + $0x4] sm:$0xff]
      %v547 = vld [vmem:[%s246 + $0xc] sm:$0xff]
      %v548 = vld [vmem:[%s246 + $0x14] sm:$0xff]
      %v549 = vld [vmem:[%s246 + $0x1c] sm:$0xff]
      %v550 = vld [vmem:[%s246 + $0x24] sm:$0xff]
      %v551 = vunpack.c.l.bf16 %v546
      %v552 = vunpack.c.h.bf16 %v546
      %v553 = vunpack.c.l.bf16 %v547
      %v554 = vunpack.c.h.bf16 %v547
      %v555 = vunpack.c.l.bf16 %v548
      %v556 = vunpack.c.h.bf16 %v548
      %v557 = vunpack.c.l.bf16 %v549
      %v558 = vunpack.c.h.bf16 %v549
      %v559 = vunpack.c.l.bf16 %v550
      %v560 = vunpack.c.h.bf16 %v550
      %v561 = vmax.f32 %v551, 0.0
      %v562 = vmax.f32 %v552, 0.0
      %v563 = vmax.f32 %v553, 0.0
      %v564 = vmax.f32 %v554, 0.0
      %v565 = vmax.f32 %v555, 0.0
      %v566 = vmax.f32 %v556, 0.0
      %v567 = vmax.f32 %v557, 0.0
      %v568 = vmax.f32 %v558, 0.0
      %v569 = vmax.f32 %v559, 0.0
      %v570 = vmax.f32 %v560, 0.0
      %v571 = vpack.c.bf16 %v562, %v561
      %v572 = vpack.c.bf16 %v564, %v563
      %v573 = vpack.c.bf16 %v566, %v565
      %v574 = vpack.c.bf16 %v568, %v567
      %v575 = vpack.c.bf16 %v570, %v569
      %576 = vst [vmem:[#allocation3 + $0xa0] sm:$0xff] %v571
      %577 = vst [vmem:[#allocation3 + $0xa8] sm:$0xff] %v572
      %578 = vst [vmem:[#allocation3 + $0xb0] sm:$0xff] %v573
      %579 = vst [vmem:[#allocation3 + $0xb8] sm:$0xff] %v574
      %580 = vst.msk [vmem:[#allocation3 + $0xc0] sm:$0xff] %vm325, %v575
      %v581 = vld [vmem:[%s246 + $0x4] sm:$0xff]
      %v582 = vld [vmem:[%s246 + $0xc] sm:$0xff]
      %v583 = vld [vmem:[%s246 + $0x14] sm:$0xff]
      %v584 = vld [vmem:[%s246 + $0x1c] sm:$0xff]
      %v585 = vld [vmem:[%s246 + $0x24] sm:$0xff]
      %v586 = vunpack.c.l.bf16 %v581
      %v587 = vunpack.c.h.bf16 %v581
      %v588 = vunpack.c.l.bf16 %v582
      %v589 = vunpack.c.h.bf16 %v582
      %v590 = vunpack.c.l.bf16 %v583
      %v591 = vunpack.c.h.bf16 %v583
      %v592 = vunpack.c.l.bf16 %v584
      %v593 = vunpack.c.h.bf16 %v584
      %v594 = vunpack.c.l.bf16 %v585
      %v595 = vunpack.c.h.bf16 %v585
      %v596 = vmax.f32 %v586, 0.0
      %v597 = vmax.f32 %v587, 0.0
      %v598 = vmax.f32 %v588, 0.0
      %v599 = vmax.f32 %v589, 0.0
      %v600 = vmax.f32 %v590, 0.0
      %v601 = vmax.f32 %v591, 0.0
      %v602 = vmax.f32 %v592, 0.0
      %v603 = vmax.f32 %v593, 0.0
      %v604 = vmax.f32 %v594, 0.0
      %v605 = vmax.f32 %v595, 0.0
      %v606 = vpack.c.bf16 %v597, %v596
      %v607 = vpack.c.bf16 %v599, %v598
      %v608 = vpack.c.bf16 %v601, %v600
      %v609 = vpack.c.bf16 %v603, %v602
      %v610 = vpack.c.bf16 %v605, %v604
      %616 = vrot.lane.b32.xlu0 %v606, 127
      %v617 = vpop.permute.xlu0 %616
      %618 = vrot.lane.b32.xlu0 %v607, 127
      %v619 = vpop.permute.xlu0 %618
      %620 = vrot.lane.b32.xlu0 %v608, 127
      %v621 = vpop.permute.xlu0 %620
      %622 = vrot.lane.b32.xlu0 %v609, 127
      %v623 = vpop.permute.xlu0 %622
      %624 = vrot.lane.b32.xlu0 %v610, 127
      %v625 = vpop.permute.xlu0 %624
      %v626 = vrot.slane %v617, 4
      %v627 = vrot.slane %v619, 4
      %v628 = vrot.slane %v621, 4
      %v629 = vrot.slane %v623, 4
      %v630 = vrot.slane %v625, 4
      %v631 = vsel %vm303, %v626, %v627
      %vm632 = vcmask 1039360
      %v633 = vsel %vm632, %v617, %v631
      %v634 = vsel %vm303, %v627, %v628
      %v635 = vsel %vm632, %v619, %v634
      %v636 = vsel %vm303, %v628, %v629
      %v637 = vsel %vm632, %v621, %v636
      %v638 = vsel %vm303, %v629, %v630
      %v639 = vsel %vm632, %v623, %v638
      %v640 = vsel %vm632, %v625, %v630
      %646 = vst [vmem:[#allocation3 + $0xc8] sm:$0xff] %v633
      %647 = vst [vmem:[#allocation3 + $0xd0] sm:$0xff] %v635
      %648 = vst [vmem:[#allocation3 + $0xd8] sm:$0xff] %v637
      %649 = vst [vmem:[#allocation3 + $0xe0] sm:$0xff] %v639
      %650 = vst.msk [vmem:[#allocation3 + $0xe8] sm:$0xff] %vm325, %v640
      %v651 = vld [vmem:[%s246 + $0x4] sm:$0xff]
      %v652 = vld [vmem:[%s246 + $0xc] sm:$0xff]
      %v653 = vld [vmem:[%s246 + $0x14] sm:$0xff]
      %v654 = vld [vmem:[%s246 + $0x1c] sm:$0xff]
      %v655 = vld [vmem:[%s246 + $0x24] sm:$0xff]
      %v656 = vunpack.c.l.bf16 %v651
      %v657 = vunpack.c.h.bf16 %v651
      %v658 = vunpack.c.l.bf16 %v652
      %v659 = vunpack.c.h.bf16 %v652
      %v660 = vunpack.c.l.bf16 %v653
      %v661 = vunpack.c.h.bf16 %v653
      %v662 = vunpack.c.l.bf16 %v654
      %v663 = vunpack.c.h.bf16 %v654
      %v664 = vunpack.c.l.bf16 %v655
      %v665 = vunpack.c.h.bf16 %v655
      %v666 = vmax.f32 %v656, 0.0
      %v667 = vmax.f32 %v657, 0.0
      %v668 = vmax.f32 %v658, 0.0
      %v669 = vmax.f32 %v659, 0.0
      %v670 = vmax.f32 %v660, 0.0
      %v671 = vmax.f32 %v661, 0.0
      %v672 = vmax.f32 %v662, 0.0
      %v673 = vmax.f32 %v663, 0.0
      %v674 = vmax.f32 %v664, 0.0
      %v675 = vmax.f32 %v665, 0.0
      %v676 = vpack.c.bf16 %v667, %v666
      %v677 = vpack.c.bf16 %v669, %v668
      %v678 = vpack.c.bf16 %v671, %v670
      %v679 = vpack.c.bf16 %v673, %v672
      %v680 = vpack.c.bf16 %v675, %v674
      %686 = vrot.lane.b32.xlu0 %v676, 95
      %v687 = vpop.permute.xlu0 %686
      %688 = vrot.lane.b32.xlu0 %v677, 95
      %v689 = vpop.permute.xlu0 %688
      %690 = vrot.lane.b32.xlu0 %v678, 95
      %v691 = vpop.permute.xlu0 %690
      %692 = vrot.lane.b32.xlu0 %v679, 95
      %v693 = vpop.permute.xlu0 %692
      %694 = vrot.lane.b32.xlu0 %v680, 95
      %v695 = vpop.permute.xlu0 %694
      %v696 = vrot.slane %v687, 4
      %v697 = vrot.slane %v689, 4
      %v698 = vrot.slane %v691, 4
      %v699 = vrot.slane %v693, 4
      %v700 = vrot.slane %v695, 4
      %v701 = vsel %vm303, %v696, %v697
      %vm702 = vcmask 777216
      %v703 = vsel %vm702, %v687, %v701
      %v704 = vsel %vm303, %v697, %v698
      %v705 = vsel %vm702, %v689, %v704
      %v706 = vsel %vm303, %v698, %v699
      %v707 = vsel %vm702, %v691, %v706
      %v708 = vsel %vm303, %v699, %v700
      %v709 = vsel %vm702, %v693, %v708
      %v710 = vsel %vm702, %v695, %v700
      %716 = vst [vmem:[#allocation3 + $0xf0] sm:$0xff] %v703
      %717 = vst [vmem:[#allocation3 + $0xf8] sm:$0xff] %v705
      %718 = vst [vmem:[#allocation3 + $0x100] sm:$0xff] %v707
      %719 = vst [vmem:[#allocation3 + $0x108] sm:$0xff] %v709
      %720 = vst.msk [vmem:[#allocation3 + $0x110] sm:$0xff] %vm325, %v710
      %v721 = vld [vmem:[%s246 + $0x4] sm:$0xff]
      %v722 = vld [vmem:[%s246 + $0xc] sm:$0xff]
      %v723 = vld [vmem:[%s246 + $0x14] sm:$0xff]
      %v724 = vld [vmem:[%s246 + $0x1c] sm:$0xff]
      %v725 = vld [vmem:[%s246 + $0x24] sm:$0xff]
      %v726 = vunpack.c.l.bf16 %v721
      %v727 = vunpack.c.h.bf16 %v721
      %v728 = vunpack.c.l.bf16 %v722
      %v729 = vunpack.c.h.bf16 %v722
      %v730 = vunpack.c.l.bf16 %v723
      %v731 = vunpack.c.h.bf16 %v723
      %v732 = vunpack.c.l.bf16 %v724
      %v733 = vunpack.c.h.bf16 %v724
      %v734 = vunpack.c.l.bf16 %v725
      %v735 = vunpack.c.h.bf16 %v725
      %v736 = vmax.f32 %v726, 0.0
      %v737 = vmax.f32 %v727, 0.0
      %v738 = vmax.f32 %v728, 0.0
      %v739 = vmax.f32 %v729, 0.0
      %v740 = vmax.f32 %v730, 0.0
      %v741 = vmax.f32 %v731, 0.0
      %v742 = vmax.f32 %v732, 0.0
      %v743 = vmax.f32 %v733, 0.0
      %v744 = vmax.f32 %v734, 0.0
      %v745 = vmax.f32 %v735, 0.0
      %v746 = vpack.c.bf16 %v737, %v736
      %v747 = vpack.c.bf16 %v739, %v738
      %v748 = vpack.c.bf16 %v741, %v740
      %v749 = vpack.c.bf16 %v743, %v742
      %v750 = vpack.c.bf16 %v745, %v744
      %756 = vrot.lane.b32.xlu0 %v746, 94
      %v757 = vpop.permute.xlu0 %756
      %758 = vrot.lane.b32.xlu0 %v747, 94
      %v759 = vpop.permute.xlu0 %758
      %760 = vrot.lane.b32.xlu0 %v748, 94
      %v761 = vpop.permute.xlu0 %760
      %762 = vrot.lane.b32.xlu0 %v749, 94
      %v763 = vpop.permute.xlu0 %762
      %764 = vrot.lane.b32.xlu0 %v750, 94
      %v765 = vpop.permute.xlu0 %764
      %v766 = vrot.slane %v757, 4
      %v767 = vrot.slane %v759, 4
      %v768 = vrot.slane %v761, 4
      %v769 = vrot.slane %v763, 4
      %v770 = vrot.slane %v765, 4
      %v771 = vsel %vm303, %v766, %v767
      %vm772 = vcmask 769024
      %v773 = vsel %vm772, %v757, %v771
      %v774 = vsel %vm303, %v767, %v768
      %v775 = vsel %vm772, %v759, %v774
      %v776 = vsel %vm303, %v768, %v769
      %v777 = vsel %vm772, %v761, %v776
      %v778 = vsel %vm303, %v769, %v770
      %v779 = vsel %vm772, %v763, %v778
      %v780 = vsel %vm772, %v765, %v770
      %786 = vst [vmem:[#allocation3 + $0x118] sm:$0xff] %v773
      %787 = vst [vmem:[#allocation3 + $0x120] sm:$0xff] %v775
      %788 = vst [vmem:[#allocation3 + $0x128] sm:$0xff] %v777
      %789 = vst [vmem:[#allocation3 + $0x130] sm:$0xff] %v779
      %790 = vst.msk [vmem:[#allocation3 + $0x138] sm:$0xff] %vm325, %v780
      %v791 = vld [vmem:[%s246 + $0x4] sm:$0xff]
      %v792 = vld [vmem:[%s246 + $0xc] sm:$0xff]
      %v793 = vld [vmem:[%s246 + $0x14] sm:$0xff]
      %v794 = vld [vmem:[%s246 + $0x1c] sm:$0xff]
      %v795 = vld [vmem:[%s246 + $0x24] sm:$0xff]
      %v796 = vunpack.c.l.bf16 %v791
      %v797 = vunpack.c.h.bf16 %v791
      %v798 = vunpack.c.l.bf16 %v792
      %v799 = vunpack.c.h.bf16 %v792
      %v800 = vunpack.c.l.bf16 %v793
      %v801 = vunpack.c.h.bf16 %v793
      %v802 = vunpack.c.l.bf16 %v794
      %v803 = vunpack.c.h.bf16 %v794
      %v804 = vunpack.c.l.bf16 %v795
      %v805 = vunpack.c.h.bf16 %v795
      %v806 = vmax.f32 %v796, 0.0
      %v807 = vmax.f32 %v797, 0.0
      %v808 = vmax.f32 %v798, 0.0
      %v809 = vmax.f32 %v799, 0.0
      %v810 = vmax.f32 %v800, 0.0
      %v811 = vmax.f32 %v801, 0.0
      %v812 = vmax.f32 %v802, 0.0
      %v813 = vmax.f32 %v803, 0.0
      %v814 = vmax.f32 %v804, 0.0
      %v815 = vmax.f32 %v805, 0.0
      %v816 = vpack.c.bf16 %v807, %v806
      %v817 = vpack.c.bf16 %v809, %v808
      %v818 = vpack.c.bf16 %v811, %v810
      %v819 = vpack.c.bf16 %v813, %v812
      %v820 = vpack.c.bf16 %v815, %v814
      %826 = vrot.lane.b32.xlu0 %v816, 93
      %v827 = vpop.permute.xlu0 %826
      %828 = vrot.lane.b32.xlu0 %v817, 93
      %v829 = vpop.permute.xlu0 %828
      %830 = vrot.lane.b32.xlu0 %v818, 93
      %v831 = vpop.permute.xlu0 %830
      %832 = vrot.lane.b32.xlu0 %v819, 93
      %v833 = vpop.permute.xlu0 %832
      %834 = vrot.lane.b32.xlu0 %v820, 93
      %v835 = vpop.permute.xlu0 %834
      %v836 = vrot.slane %v827, 4
      %v837 = vrot.slane %v829, 4
      %v838 = vrot.slane %v831, 4
      %v839 = vrot.slane %v833, 4
      %v840 = vrot.slane %v835, 4
      %v841 = vsel %vm303, %v836, %v837
      %vm842 = vcmask 760832
      %v843 = vsel %vm842, %v827, %v841
      %v844 = vsel %vm303, %v837, %v838
      %v845 = vsel %vm842, %v829, %v844
      %v846 = vsel %vm303, %v838, %v839
      %v847 = vsel %vm842, %v831, %v846
      %v848 = vsel %vm303, %v839, %v840
      %v849 = vsel %vm842, %v833, %v848
      %v850 = vsel %vm842, %v835, %v840
      %856 = vst [vmem:[#allocation3 + $0x140] sm:$0xff] %v843
      %857 = vst [vmem:[#allocation3 + $0x148] sm:$0xff] %v845
      %858 = vst [vmem:[#allocation3 + $0x150] sm:$0xff] %v847
      %859 = vst [vmem:[#allocation3 + $0x158] sm:$0xff] %v849
      %860 = vst.msk [vmem:[#allocation3 + $0x160] sm:$0xff] %vm325, %v850
      %v861 = vld [vmem:[%s1] sm:$0xf]
      %v862 = vld [vmem:[#allocation3] sm:$0xff]
      %v863 = vld [vmem:[#allocation3 + $0x8] sm:$0xff]
      %v864 = vld [vmem:[#allocation3 + $0x10] sm:$0xff]
      %v865 = vld [vmem:[#allocation3 + $0x18] sm:$0xff]
      %v866 = vld [vmem:[#allocation3 + $0x20] sm:$0xff]
      %v867 = vld [vmem:[#allocation3 + $0x28] sm:$0xff]
      %v868 = vld [vmem:[#allocation3 + $0x30] sm:$0xff]
      %v869 = vld [vmem:[#allocation3 + $0x38] sm:$0xff]
      %v870 = vld [vmem:[#allocation3 + $0x40] sm:$0xff]
      %v871 = vld [vmem:[#allocation3 + $0x48] sm:$0xff]
      %v872 = vld [vmem:[#allocation3 + $0x50] sm:$0xff]
      %v873 = vld [vmem:[#allocation3 + $0x58] sm:$0xff]
      %v874 = vld [vmem:[#allocation3 + $0x60] sm:$0xff]
      %v875 = vld [vmem:[#allocation3 + $0x68] sm:$0xff]
      %v876 = vld [vmem:[#allocation3 + $0x70] sm:$0xff]
      %v877 = vld [vmem:[#allocation3 + $0x78] sm:$0xff]
      %v878 = vld [vmem:[#allocation3 + $0x80] sm:$0xff]
      %v879 = vld [vmem:[#allocation3 + $0x88] sm:$0xff]
      %v880 = vld [vmem:[#allocation3 + $0x90] sm:$0xff]
      %v881 = vld [vmem:[#allocation3 + $0x98] sm:$0xff]
      %v882 = vld [vmem:[#allocation3 + $0xa0] sm:$0xff]
      %v883 = vld [vmem:[#allocation3 + $0xa8] sm:$0xff]
      %v884 = vld [vmem:[#allocation3 + $0xb0] sm:$0xff]
      %v885 = vld [vmem:[#allocation3 + $0xb8] sm:$0xff]
      %v886 = vld [vmem:[#allocation3 + $0xc0] sm:$0xff]
      %v887 = vld [vmem:[#allocation3 + $0xc8] sm:$0xff]
      %v888 = vld [vmem:[#allocation3 + $0xd0] sm:$0xff]
      %v889 = vld [vmem:[#allocation3 + $0xd8] sm:$0xff]
      %v890 = vld [vmem:[#allocation3 + $0xe0] sm:$0xff]
      %v891 = vld [vmem:[#allocation3 + $0xe8] sm:$0xff]
      %v892 = vld [vmem:[#allocation3 + $0xf0] sm:$0xff]
      %v893 = vld [vmem:[#allocation3 + $0xf8] sm:$0xff]
      %v894 = vld [vmem:[#allocation3 + $0x100] sm:$0xff]
      %v895 = vld [vmem:[#allocation3 + $0x108] sm:$0xff]
      %v896 = vld [vmem:[#allocation3 + $0x110] sm:$0xff]
      %v897 = vld [vmem:[#allocation3 + $0x118] sm:$0xff]
      %v898 = vld [vmem:[#allocation3 + $0x120] sm:$0xff]
      %v899 = vld [vmem:[#allocation3 + $0x128] sm:$0xff]
      %v900 = vld [vmem:[#allocation3 + $0x130] sm:$0xff]
      %v901 = vld [vmem:[#allocation3 + $0x138] sm:$0xff]
      %v902 = vld [vmem:[#allocation3 + $0x140] sm:$0xff]
      %v903 = vld [vmem:[#allocation3 + $0x148] sm:$0xff]
      %v904 = vld [vmem:[#allocation3 + $0x150] sm:$0xff]
      %v905 = vld [vmem:[#allocation3 + $0x158] sm:$0xff]
      %v906 = vld [vmem:[#allocation3 + $0x160] sm:$0xff]
      %v907 = vld [vmem:[%s2] sm:$0xff]
      %909 = vset.pattern.permute.xlu0 0
      %910 = vperm.xlu0 %909, %v907
      %v911 = vpop.permute.xlu0 %910
      %v958 = vunpack.c.l.b16 %v862
      %v959 = vunpack.c.h.b16 %v862
      %v960 = vunpack.c.l.b16 %v863
      %v961 = vunpack.c.h.b16 %v863
      %v962 = vunpack.c.l.b16 %v864
      %v963 = vunpack.c.h.b16 %v864
      %v964 = vunpack.c.l.b16 %v865
      %v965 = vunpack.c.h.b16 %v865
      %v966 = vunpack.c.l.b16 %v866
      %v967 = vunpack.c.h.b16 %v866
      %v968 = vunpack.c.l.b16 %v867
      %v969 = vunpack.c.h.b16 %v867
      %v970 = vunpack.c.l.b16 %v868
      %v971 = vunpack.c.h.b16 %v868
      %v972 = vunpack.c.l.b16 %v869
      %v973 = vunpack.c.h.b16 %v869
      %v974 = vunpack.c.l.b16 %v870
      %v975 = vunpack.c.h.b16 %v870
      %v976 = vunpack.c.l.b16 %v871
      %v977 = vunpack.c.h.b16 %v871
      %v978 = vunpack.c.l.b16 %v872
      %v979 = vunpack.c.h.b16 %v872
      %v980 = vunpack.c.l.b16 %v873
      %v981 = vunpack.c.h.b16 %v873
      %v982 = vunpack.c.l.b16 %v874
      %v983 = vunpack.c.h.b16 %v874
      %v984 = vunpack.c.l.b16 %v875
      %v985 = vunpack.c.h.b16 %v875
      %v986 = vunpack.c.l.b16 %v876
      %v987 = vunpack.c.h.b16 %v876
      %v988 = vunpack.c.l.b16 %v877
      %v989 = vunpack.c.h.b16 %v877
      %v990 = vunpack.c.l.b16 %v878
      %v991 = vunpack.c.h.b16 %v878
      %v992 = vunpack.c.l.b16 %v879
      %v993 = vunpack.c.h.b16 %v879
      %v994 = vunpack.c.l.b16 %v880
      %v995 = vunpack.c.h.b16 %v880
      %v996 = vunpack.c.l.b16 %v881
      %v997 = vunpack.c.h.b16 %v881
      %v998 = vunpack.c.l.b16 %v882
      %v999 = vunpack.c.h.b16 %v882
      %v1000 = vunpack.c.l.b16 %v883
      %v1001 = vunpack.c.h.b16 %v883
      %v1002 = vunpack.c.l.b16 %v884
      %v1003 = vunpack.c.h.b16 %v884
      %v1004 = vunpack.c.l.b16 %v885
      %v1005 = vunpack.c.h.b16 %v885
      %v1006 = vunpack.c.l.b16 %v886
      %v1007 = vunpack.c.h.b16 %v886
      %v1008 = vunpack.c.l.b16 %v887
      %v1009 = vunpack.c.h.b16 %v887
      %v1010 = vunpack.c.l.b16 %v888
      %v1011 = vunpack.c.h.b16 %v888
      %v1012 = vunpack.c.l.b16 %v889
      %v1013 = vunpack.c.h.b16 %v889
      %v1014 = vunpack.c.l.b16 %v890
      %v1015 = vunpack.c.h.b16 %v890
      %v1016 = vunpack.c.l.b16 %v891
      %v1017 = vunpack.c.h.b16 %v891
      %v1018 = vunpack.c.l.b16 %v892
      %v1019 = vunpack.c.h.b16 %v892
      %v1020 = vunpack.c.l.b16 %v893
      %v1021 = vunpack.c.h.b16 %v893
      %v1022 = vunpack.c.l.b16 %v894
      %v1023 = vunpack.c.h.b16 %v894
      %v1024 = vunpack.c.l.b16 %v895
      %v1025 = vunpack.c.h.b16 %v895
      %v1026 = vunpack.c.l.b16 %v896
      %v1027 = vunpack.c.h.b16 %v896
      %v1028 = vunpack.c.l.b16 %v897
      %v1029 = vunpack.c.h.b16 %v897
      %v1030 = vunpack.c.l.b16 %v898
      %v1031 = vunpack.c.h.b16 %v898
      %v1032 = vunpack.c.l.b16 %v899
      %v1033 = vunpack.c.h.b16 %v899
      %v1034 = vunpack.c.l.b16 %v900
      %v1035 = vunpack.c.h.b16 %v900
      %v1036 = vunpack.c.l.b16 %v901
      %v1037 = vunpack.c.h.b16 %v901
      %v1038 = vunpack.c.l.b16 %v902
      %v1039 = vunpack.c.h.b16 %v902
      %v1040 = vunpack.c.l.b16 %v903
      %v1041 = vunpack.c.h.b16 %v903
      %v1042 = vunpack.c.l.b16 %v904
      %v1043 = vunpack.c.h.b16 %v904
      %v1044 = vunpack.c.l.b16 %v905
      %v1045 = vunpack.c.h.b16 %v905
      %v1046 = vunpack.c.l.b16 %v906
      %v1047 = vunpack.c.h.b16 %v906
      %v1048 = vpack.c.b16 %v968, %v958
      %v1049 = vpack.c.b16 %v969, %v959
      %v1050 = vpack.c.b16 %v970, %v960
      %v1051 = vpack.c.b16 %v971, %v961
      %v1052 = vpack.c.b16 %v972, %v962
      %v1053 = vpack.c.b16 %v973, %v963
      %v1054 = vpack.c.b16 %v974, %v964
      %v1055 = vpack.c.b16 %v975, %v965
      %v1056 = vpack.c.b16 %v976, %v966
      %v1057 = vpack.c.b16 %v977, %v967
      %v1058 = vpack.c.b16 %v988, %v978
      %v1059 = vpack.c.b16 %v989, %v979
      %v1060 = vpack.c.b16 %v990, %v980
      %v1061 = vpack.c.b16 %v991, %v981
      %v1062 = vpack.c.b16 %v992, %v982
      %v1063 = vpack.c.b16 %v993, %v983
      %v1064 = vpack.c.b16 %v994, %v984
      %v1065 = vpack.c.b16 %v995, %v985
      %v1066 = vpack.c.b16 %v996, %v986
      %v1067 = vpack.c.b16 %v997, %v987
      %v1068 = vpack.c.b16 %v1008, %v998
      %v1069 = vpack.c.b16 %v1009, %v999
      %v1070 = vpack.c.b16 %v1010, %v1000
      %v1071 = vpack.c.b16 %v1011, %v1001
      %v1072 = vpack.c.b16 %v1012, %v1002
      %v1073 = vpack.c.b16 %v1013, %v1003
      %v1074 = vpack.c.b16 %v1014, %v1004
      %v1075 = vpack.c.b16 %v1015, %v1005
      %v1076 = vpack.c.b16 %v1016, %v1006
      %v1077 = vpack.c.b16 %v1017, %v1007
      %v1078 = vpack.c.b16 %v1028, %v1018
      %v1079 = vpack.c.b16 %v1029, %v1019
      %v1080 = vpack.c.b16 %v1030, %v1020
      %v1081 = vpack.c.b16 %v1031, %v1021
      %v1082 = vpack.c.b16 %v1032, %v1022
      %v1083 = vpack.c.b16 %v1033, %v1023
      %v1084 = vpack.c.b16 %v1034, %v1024
      %v1085 = vpack.c.b16 %v1035, %v1025
      %v1086 = vpack.c.b16 %v1036, %v1026
      %v1087 = vpack.c.b16 %v1037, %v1027
      %v1088 = vpack.c.b16 %v1038, %v1038
      %v1089 = vpack.c.b16 %v1039, %v1039
      %v1090 = vpack.c.b16 %v1040, %v1040
      %v1091 = vpack.c.b16 %v1041, %v1041
      %v1092 = vpack.c.b16 %v1042, %v1042
      %v1093 = vpack.c.b16 %v1043, %v1043
      %v1094 = vpack.c.b16 %v1044, %v1044
      %v1095 = vpack.c.b16 %v1045, %v1045
      %v1096 = vpack.c.b16 %v1046, %v1046
      %v1097 = vpack.c.b16 %v1047, %v1047
      %vm1138 = vcmask 588800
      %v1140 = vsel %vm1138, %v861, 0
      %v1143 = vsel %vm323, %v1088, 0
      %v1146 = vsel %vm323, %v1089, 0
      %v1149 = vsel %vm323, %v1090, 0
      %v1152 = vsel %vm323, %v1091, 0
      %v1155 = vsel %vm323, %v1092, 0
      %v1158 = vsel %vm323, %v1093, 0
      %v1161 = vsel %vm323, %v1094, 0
      %v1164 = vsel %vm323, %v1095, 0
      %v1167 = vsel %vm323, %v1096, 0
      %v1170 = vsel %vm323, %v1097, 0
      %1172 = vmatpush.bf16.msra.mxu0 0
      %1173 = vmatpush.bf16.msra.mxu0 0
      %1174 = vmatpush.bf16.msra.mxu0 0
      %1175 = vmatpush.bf16.msra.mxu0 %v1143
      %1176 = vmatpush.bf16.msra.mxu0 %v1078
      %1177 = vmatpush.bf16.msra.mxu0 %v1068
      %1178 = vmatpush.bf16.msra.mxu0 %v1058
      %1179 = vmatpush.bf16.msra.mxu0 %v1048
      %1180 = vmatmul.bf16.gmra.mxu0 %v1140
      %v1181 = vpop.f32.mrf.mxu0
      %v1182 = vadd.f32 %v911, %v1181
      %v1183 = vpop.f32.mrf.mxu0
      %1184 = vdwg.mxu0
      %1185 = vmatpush.bf16.msra.mxu0 0
      %1186 = vmatpush.bf16.msra.mxu0 0
      %1187 = vmatpush.bf16.msra.mxu0 0
      %1188 = vmatpush.bf16.msra.mxu0 %v1146
      %1189 = vmatpush.bf16.msra.mxu0 %v1079
      %1190 = vmatpush.bf16.msra.mxu0 %v1069
      %1191 = vmatpush.bf16.msra.mxu0 %v1059
      %1192 = vmatpush.bf16.msra.mxu0 %v1049
      %1193 = vmatmul.bf16.gmra.mxu0 %v1140
      %v1194 = vpop.f32.mrf.mxu0
      %v1195 = vadd.f32 %v911, %v1194
      %v1196 = vpop.f32.mrf.mxu0
      %1197 = vdwg.mxu0
      %1198 = vmatpush.bf16.msra.mxu0 0
      %1199 = vmatpush.bf16.msra.mxu0 0
      %1200 = vmatpush.bf16.msra.mxu0 0
      %1201 = vmatpush.bf16.msra.mxu0 %v1149
      %1202 = vmatpush.bf16.msra.mxu0 %v1080
      %1203 = vmatpush.bf16.msra.mxu0 %v1070
      %1204 = vmatpush.bf16.msra.mxu0 %v1060
      %1205 = vmatpush.bf16.msra.mxu0 %v1050
      %1206 = vmatmul.bf16.gmra.mxu0 %v1140
      %v1207 = vpop.f32.mrf.mxu0
      %v1208 = vadd.f32 %v911, %v1207
      %v1209 = vpop.f32.mrf.mxu0
      %1210 = vdwg.mxu0
      %1211 = vmatpush.bf16.msra.mxu0 0
      %1212 = vmatpush.bf16.msra.mxu0 0
      %1213 = vmatpush.bf16.msra.mxu0 0
      %1214 = vmatpush.bf16.msra.mxu0 %v1152
      %1215 = vmatpush.bf16.msra.mxu0 %v1081
      %1216 = vmatpush.bf16.msra.mxu0 %v1071
      %1217 = vmatpush.bf16.msra.mxu0 %v1061
      %1218 = vmatpush.bf16.msra.mxu0 %v1051
      %1219 = vmatmul.bf16.gmra.mxu0 %v1140
      %v1220 = vpop.f32.mrf.mxu0
      %v1221 = vadd.f32 %v911, %v1220
      %v1222 = vpop.f32.mrf.mxu0
      %1223 = vdwg.mxu0
      %1224 = vmatpush.bf16.msra.mxu0 0
      %1225 = vmatpush.bf16.msra.mxu0 0
      %1226 = vmatpush.bf16.msra.mxu0 0
      %1227 = vmatpush.bf16.msra.mxu0 %v1155
      %1228 = vmatpush.bf16.msra.mxu0 %v1082
      %1229 = vmatpush.bf16.msra.mxu0 %v1072
      %1230 = vmatpush.bf16.msra.mxu0 %v1062
      %1231 = vmatpush.bf16.msra.mxu0 %v1052
      %1232 = vmatmul.bf16.gmra.mxu0 %v1140
      %v1233 = vpop.f32.mrf.mxu0
      %v1234 = vadd.f32 %v911, %v1233
      %v1235 = vpop.f32.mrf.mxu0
      %1236 = vdwg.mxu0
      %1237 = vmatpush.bf16.msra.mxu0 0
      %1238 = vmatpush.bf16.msra.mxu0 0
      %1239 = vmatpush.bf16.msra.mxu0 0
      %1240 = vmatpush.bf16.msra.mxu0 %v1158
      %1241 = vmatpush.bf16.msra.mxu0 %v1083
      %1242 = vmatpush.bf16.msra.mxu0 %v1073
      %1243 = vmatpush.bf16.msra.mxu0 %v1063
      %1244 = vmatpush.bf16.msra.mxu0 %v1053
      %1245 = vmatmul.bf16.gmra.mxu0 %v1140
      %v1246 = vpop.f32.mrf.mxu0
      %v1247 = vadd.f32 %v911, %v1246
      %v1248 = vpop.f32.mrf.mxu0
      %1249 = vdwg.mxu0
      %1250 = vmatpush.bf16.msra.mxu0 0
      %1251 = vmatpush.bf16.msra.mxu0 0
      %1252 = vmatpush.bf16.msra.mxu0 0
      %1253 = vmatpush.bf16.msra.mxu0 %v1161
      %1254 = vmatpush.bf16.msra.mxu0 %v1084
      %1255 = vmatpush.bf16.msra.mxu0 %v1074
      %1256 = vmatpush.bf16.msra.mxu0 %v1064
      %1257 = vmatpush.bf16.msra.mxu0 %v1054
      %1258 = vmatmul.bf16.gmra.mxu0 %v1140
      %v1259 = vpop.f32.mrf.mxu0
      %v1260 = vadd.f32 %v911, %v1259
      %v1261 = vpop.f32.mrf.mxu0
      %1262 = vdwg.mxu0
      %1263 = vmatpush.bf16.msra.mxu0 0
      %1264 = vmatpush.bf16.msra.mxu0 0
      %1265 = vmatpush.bf16.msra.mxu0 0
      %1266 = vmatpush.bf16.msra.mxu0 %v1164
      %1267 = vmatpush.bf16.msra.mxu0 %v1085
      %1268 = vmatpush.bf16.msra.mxu0 %v1075
      %1269 = vmatpush.bf16.msra.mxu0 %v1065
      %1270 = vmatpush.bf16.msra.mxu0 %v1055
      %1271 = vmatmul.bf16.gmra.mxu0 %v1140
      %v1272 = vpop.f32.mrf.mxu0
      %v1273 = vadd.f32 %v911, %v1272
      %v1274 = vpop.f32.mrf.mxu0
      %1275 = vdwg.mxu0
      %1276 = vmatpush.bf16.msra.mxu0 0
      %1277 = vmatpush.bf16.msra.mxu0 0
      %1278 = vmatpush.bf16.msra.mxu0 0
      %1279 = vmatpush.bf16.msra.mxu0 %v1167
      %1280 = vmatpush.bf16.msra.mxu0 %v1086
      %1281 = vmatpush.bf16.msra.mxu0 %v1076
      %1282 = vmatpush.bf16.msra.mxu0 %v1066
      %1283 = vmatpush.bf16.msra.mxu0 %v1056
      %1284 = vmatmul.bf16.gmra.mxu0 %v1140
      %v1285 = vpop.f32.mrf.mxu0
      %v1286 = vadd.f32 %v911, %v1285
      %v1287 = vpop.f32.mrf.mxu0
      %1288 = vdwg.mxu0
      %1289 = vmatpush.bf16.msra.mxu0 0
      %1290 = vmatpush.bf16.msra.mxu0 0
      %1291 = vmatpush.bf16.msra.mxu0 0
      %1292 = vmatpush.bf16.msra.mxu0 %v1170
      %1293 = vmatpush.bf16.msra.mxu0 %v1087
      %1294 = vmatpush.bf16.msra.mxu0 %v1077
      %1295 = vmatpush.bf16.msra.mxu0 %v1067
      %1296 = vmatpush.bf16.msra.mxu0 %v1057
      %1297 = vmatmul.bf16.gmra.mxu0 %v1140
      %v1298 = vpop.f32.mrf.mxu0
      %v1299 = vadd.f32 %v911, %v1298
      %v1300 = vpop.f32.mrf.mxu0
      %1301 = vdwg.mxu0
      %v1302 = vmax.f32 %v1182, 0.0
      %v1303 = vmax.f32 %v1195, 0.0
      %v1304 = vmax.f32 %v1208, 0.0
      %v1305 = vmax.f32 %v1221, 0.0
      %v1306 = vmax.f32 %v1234, 0.0
      %v1307 = vmax.f32 %v1247, 0.0
      %v1308 = vmax.f32 %v1260, 0.0
      %v1309 = vmax.f32 %v1273, 0.0
      %v1310 = vmax.f32 %v1286, 0.0
      %v1311 = vmax.f32 %v1299, 0.0
      %v1312 = vpack.c.bf16 %v1303, %v1302
      %v1313 = vpack.c.bf16 %v1305, %v1304
      %v1314 = vpack.c.bf16 %v1307, %v1306
      %v1315 = vpack.c.bf16 %v1309, %v1308
      %v1316 = vpack.c.bf16 %v1311, %v1310
      %v1317 = vld [vmem:[%s5] sm:$0xff]
      %v1318 = vld [vmem:[%s5 + $0x8] sm:$0x3]
      %1320 = vst [vmem:[#allocation1] ss:$9 sm:$0xff] %v1317
      %v1321 = vld [vmem:[#allocation1] sm:$0xff]
      %v1322 = vld [vmem:[#allocation1 + $0x9] sm:$0xff]
      %v1323 = vld [vmem:[#allocation1 + $0x12] sm:$0xff]
      %v1324 = vld [vmem:[#allocation1 + $0x1b] sm:$0xff]
      %v1325 = vld [vmem:[#allocation1 + $0x24] sm:$0xff]
      %v1326 = vld [vmem:[#allocation1 + $0x2d] sm:$0xff]
      %v1327 = vld [vmem:[#allocation1 + $0x36] sm:$0xff]
      %v1328 = vld [vmem:[#allocation1 + $0x3f] sm:$0xff]
      %1330 = vst [vmem:[#allocation1] ss:$9 sm:$0xff] %v1318
      %v1331 = vld [vmem:[#allocation1] sm:$0xff]
      %v1332 = vld [vmem:[#allocation1 + $0x9] sm:$0xff]
      %v1333 = vpack.i.b16 %v1321, %v1321
      %v1335 = vperm.slane %v1333, 0
      %v1336 = vpack.i.b16 %v1322, %v1322
      %v1338 = vperm.slane %v1336, 0
      %v1339 = vpack.i.b16 %v1323, %v1323
      %v1341 = vperm.slane %v1339, 0
      %v1342 = vpack.i.b16 %v1324, %v1324
      %v1344 = vperm.slane %v1342, 0
      %v1345 = vpack.i.b16 %v1325, %v1325
      %v1347 = vperm.slane %v1345, 0
      %v1348 = vpack.i.b16 %v1326, %v1326
      %v1350 = vperm.slane %v1348, 0
      %v1351 = vpack.i.b16 %v1327, %v1327
      %v1353 = vperm.slane %v1351, 0
      %v1354 = vpack.i.b16 %v1328, %v1328
      %v1356 = vperm.slane %v1354, 0
      %v1357 = vpack.i.b16 %v1331, %v1331
      %v1359 = vperm.slane %v1357, 0
      %v1360 = vpack.i.b16 %v1332, %v1332
      %v1362 = vperm.slane %v1360, 0
      %v1363 = vunpack.c.l.bf16 %v1312
      %v1364 = vunpack.c.h.bf16 %v1312
      %v1365 = vunpack.c.l.bf16 %v1313
      %v1366 = vunpack.c.h.bf16 %v1313
      %v1367 = vunpack.c.l.bf16 %v1314
      %v1368 = vunpack.c.h.bf16 %v1314
      %v1369 = vunpack.c.l.bf16 %v1315
      %v1370 = vunpack.c.h.bf16 %v1315
      %v1371 = vunpack.c.l.bf16 %v1316
      %v1372 = vunpack.c.h.bf16 %v1316
      %v1373 = vunpack.c.l.bf16 %v1335
      %v1374 = vunpack.c.l.bf16 %v1338
      %v1375 = vunpack.c.l.bf16 %v1341
      %v1376 = vunpack.c.l.bf16 %v1344
      %v1377 = vunpack.c.l.bf16 %v1347
      %v1378 = vunpack.c.l.bf16 %v1350
      %v1379 = vunpack.c.l.bf16 %v1353
      %v1380 = vunpack.c.l.bf16 %v1356
      %v1381 = vunpack.c.l.bf16 %v1359
      %v1382 = vunpack.c.l.bf16 %v1362
      %v1383 = vmul.f32 %v1363, %v1373
      %v1384 = vmul.f32 %v1364, %v1374
      %v1385 = vmul.f32 %v1365, %v1375
      %v1386 = vmul.f32 %v1366, %v1376
      %v1387 = vmul.f32 %v1367, %v1377
      %v1388 = vmul.f32 %v1368, %v1378
      %v1389 = vmul.f32 %v1369, %v1379
      %v1390 = vmul.f32 %v1370, %v1380
      %v1391 = vmul.f32 %v1371, %v1381
      %v1392 = vmul.f32 %v1372, %v1382
      %v1393 = vpack.c.bf16 %v1384, %v1383
      %v1394 = vpack.c.bf16 %v1386, %v1385
      %v1395 = vpack.c.bf16 %v1388, %v1387
      %v1396 = vpack.c.bf16 %v1390, %v1389
      %v1397 = vpack.c.bf16 %v1392, %v1391
      %1398 = vst [vmem:[#allocation2] sm:$0xf] 0
      %vm1399 = vcmask 1043488
      %vm1400 = vmor %vm324, %vm1399
      %1401 = vst.msk [vmem:[#allocation2 + $0x28] sm:$0xff] %vm1400, 0
      %1402 = vst [vmem:[#allocation2 + $0x4] sm:$0xff] %v1393
      %1403 = vst [vmem:[#allocation2 + $0xc] sm:$0xff] %v1394
      %1404 = vst [vmem:[#allocation2 + $0x14] sm:$0xff] %v1395
      %1405 = vst [vmem:[#allocation2 + $0x1c] sm:$0xff] %v1396
      %1406 = vst.msk [vmem:[#allocation2 + $0x24] sm:$0xff] %vm325, %v1397
      %v1407 = vld [vmem:[#allocation2] sm:$0xff]
      %v1408 = vld [vmem:[#allocation2 + $0x8] sm:$0xff]
      %v1409 = vld [vmem:[#allocation2 + $0x10] sm:$0xff]
      %v1410 = vld [vmem:[#allocation2 + $0x18] sm:$0xff]
      %v1411 = vld [vmem:[#allocation2 + $0x20] sm:$0xff]
      %1417 = vrot.lane.b32.xlu0 %v1407, 35
      %v1418 = vpop.permute.xlu0 %1417
      %1419 = vrot.lane.b32.xlu0 %v1408, 35
      %v1420 = vpop.permute.xlu0 %1419
      %1421 = vrot.lane.b32.xlu0 %v1409, 35
      %v1422 = vpop.permute.xlu0 %1421
      %1423 = vrot.lane.b32.xlu0 %v1410, 35
      %v1424 = vpop.permute.xlu0 %1423
      %1425 = vrot.lane.b32.xlu0 %v1411, 35
      %v1426 = vpop.permute.xlu0 %1425
      %v1427 = vrot.slane %v1418, 4
      %v1428 = vrot.slane %v1420, 4
      %v1429 = vrot.slane %v1422, 4
      %v1430 = vrot.slane %v1424, 4
      %v1431 = vrot.slane %v1426, 4
      %v1432 = vsel %vm303, %v1427, %v1428
      %v1433 = vsel %vm305, %v1418, %v1432
      %v1434 = vsel %vm303, %v1428, %v1429
      %v1435 = vsel %vm305, %v1420, %v1434
      %v1436 = vsel %vm303, %v1429, %v1430
      %v1437 = vsel %vm305, %v1422, %v1436
      %v1438 = vsel %vm303, %v1430, %v1431
      %v1439 = vsel %vm305, %v1424, %v1438
      %v1440 = vsel %vm305, %v1426, %v1431
      %1446 = vst [vmem:[#allocation3] sm:$0xff] %v1433
      %1447 = vst [vmem:[#allocation3 + $0x8] sm:$0xff] %v1435
      %1448 = vst [vmem:[#allocation3 + $0x10] sm:$0xff] %v1437
      %1449 = vst [vmem:[#allocation3 + $0x18] sm:$0xff] %v1439
      %1450 = vst.msk [vmem:[#allocation3 + $0x20] sm:$0xff] %vm325, %v1440
      %v1451 = vld [vmem:[#allocation2] sm:$0xff]
      %v1452 = vld [vmem:[#allocation2 + $0x8] sm:$0xff]
      %v1453 = vld [vmem:[#allocation2 + $0x10] sm:$0xff]
      %v1454 = vld [vmem:[#allocation2 + $0x18] sm:$0xff]
      %v1455 = vld [vmem:[#allocation2 + $0x20] sm:$0xff]
      %1461 = vrot.lane.b32.xlu0 %v1451, 34
      %v1462 = vpop.permute.xlu0 %1461
      %1463 = vrot.lane.b32.xlu0 %v1452, 34
      %v1464 = vpop.permute.xlu0 %1463
      %1465 = vrot.lane.b32.xlu0 %v1453, 34
      %v1466 = vpop.permute.xlu0 %1465
      %1467 = vrot.lane.b32.xlu0 %v1454, 34
      %v1468 = vpop.permute.xlu0 %1467
      %1469 = vrot.lane.b32.xlu0 %v1455, 34
      %v1470 = vpop.permute.xlu0 %1469
      %v1471 = vrot.slane %v1462, 4
      %v1472 = vrot.slane %v1464, 4
      %v1473 = vrot.slane %v1466, 4
      %v1474 = vrot.slane %v1468, 4
      %v1475 = vrot.slane %v1470, 4
      %v1476 = vsel %vm303, %v1471, %v1472
      %v1477 = vsel %vm378, %v1462, %v1476
      %v1478 = vsel %vm303, %v1472, %v1473
      %v1479 = vsel %vm378, %v1464, %v1478
      %v1480 = vsel %vm303, %v1473, %v1474
      %v1481 = vsel %vm378, %v1466, %v1480
      %v1482 = vsel %vm303, %v1474, %v1475
      %v1483 = vsel %vm378, %v1468, %v1482
      %v1484 = vsel %vm378, %v1470, %v1475
      %1490 = vst [vmem:[#allocation3 + $0x28] sm:$0xff] %v1477
      %1491 = vst [vmem:[#allocation3 + $0x30] sm:$0xff] %v1479
      %1492 = vst [vmem:[#allocation3 + $0x38] sm:$0xff] %v1481
      %1493 = vst [vmem:[#allocation3 + $0x40] sm:$0xff] %v1483
      %1494 = vst.msk [vmem:[#allocation3 + $0x48] sm:$0xff] %vm325, %v1484
      %v1495 = vld [vmem:[#allocation2] sm:$0xff]
      %v1496 = vld [vmem:[#allocation2 + $0x8] sm:$0xff]
      %v1497 = vld [vmem:[#allocation2 + $0x10] sm:$0xff]
      %v1498 = vld [vmem:[#allocation2 + $0x18] sm:$0xff]
      %v1499 = vld [vmem:[#allocation2 + $0x20] sm:$0xff]
      %1505 = vrot.lane.b32.xlu0 %v1495, 33
      %v1506 = vpop.permute.xlu0 %1505
      %1507 = vrot.lane.b32.xlu0 %v1496, 33
      %v1508 = vpop.permute.xlu0 %1507
      %1509 = vrot.lane.b32.xlu0 %v1497, 33
      %v1510 = vpop.permute.xlu0 %1509
      %1511 = vrot.lane.b32.xlu0 %v1498, 33
      %v1512 = vpop.permute.xlu0 %1511
      %1513 = vrot.lane.b32.xlu0 %v1499, 33
      %v1514 = vpop.permute.xlu0 %1513
      %v1515 = vrot.slane %v1506, 4
      %v1516 = vrot.slane %v1508, 4
      %v1517 = vrot.slane %v1510, 4
      %v1518 = vrot.slane %v1512, 4
      %v1519 = vrot.slane %v1514, 4
      %v1520 = vsel %vm303, %v1515, %v1516
      %v1521 = vsel %vm448, %v1506, %v1520
      %v1522 = vsel %vm303, %v1516, %v1517
      %v1523 = vsel %vm448, %v1508, %v1522
      %v1524 = vsel %vm303, %v1517, %v1518
      %v1525 = vsel %vm448, %v1510, %v1524
      %v1526 = vsel %vm303, %v1518, %v1519
      %v1527 = vsel %vm448, %v1512, %v1526
      %v1528 = vsel %vm448, %v1514, %v1519
      %1534 = vst [vmem:[#allocation3 + $0x50] sm:$0xff] %v1521
      %1535 = vst [vmem:[#allocation3 + $0x58] sm:$0xff] %v1523
      %1536 = vst [vmem:[#allocation3 + $0x60] sm:$0xff] %v1525
      %1537 = vst [vmem:[#allocation3 + $0x68] sm:$0xff] %v1527
      %1538 = vst.msk [vmem:[#allocation3 + $0x70] sm:$0xff] %vm325, %v1528
      %v1539 = vld [vmem:[#allocation2] sm:$0xff]
      %v1540 = vld [vmem:[#allocation2 + $0x8] sm:$0xff]
      %v1541 = vld [vmem:[#allocation2 + $0x10] sm:$0xff]
      %v1542 = vld [vmem:[#allocation2 + $0x18] sm:$0xff]
      %v1543 = vld [vmem:[#allocation2 + $0x20] sm:$0xff]
      %v1544 = vld [vmem:[#allocation2 + $0x28] sm:$0xf]
      %1551 = vrot.lane.b32.xlu0 %v1539, 1
      %v1552 = vpop.permute.xlu0 %1551
      %1553 = vrot.lane.b32.xlu0 %v1540, 1
      %v1554 = vpop.permute.xlu0 %1553
      %1555 = vrot.lane.b32.xlu0 %v1541, 1
      %v1556 = vpop.permute.xlu0 %1555
      %1557 = vrot.lane.b32.xlu0 %v1542, 1
      %v1558 = vpop.permute.xlu0 %1557
      %1559 = vrot.lane.b32.xlu0 %v1543, 1
      %v1560 = vpop.permute.xlu0 %1559
      %1561 = vrot.lane.b32.xlu0 %v1544, 1
      %v1562 = vpop.permute.xlu0 %1561
      %v1563 = vrot.slane %v1552, 4
      %v1564 = vrot.slane %v1554, 4
      %v1565 = vrot.slane %v1556, 4
      %v1566 = vrot.slane %v1558, 4
      %v1567 = vrot.slane %v1560, 4
      %v1568 = vrot.slane %v1562, 4
      %v1569 = vsel %vm303, %v1563, %v1564
      %v1570 = vsel %vm526, %v1552, %v1569
      %v1571 = vsel %vm303, %v1564, %v1565
      %v1572 = vsel %vm526, %v1554, %v1571
      %v1573 = vsel %vm303, %v1565, %v1566
      %v1574 = vsel %vm526, %v1556, %v1573
      %v1575 = vsel %vm303, %v1566, %v1567
      %v1576 = vsel %vm526, %v1558, %v1575
      %v1577 = vsel %vm303, %v1567, %v1568
      %v1578 = vsel %vm526, %v1560, %v1577
      %1584 = vst [vmem:[#allocation3 + $0x78] sm:$0xff] %v1570
      %1585 = vst [vmem:[#allocation3 + $0x80] sm:$0xff] %v1572
      %1586 = vst [vmem:[#allocation3 + $0x88] sm:$0xff] %v1574
      %1587 = vst [vmem:[#allocation3 + $0x90] sm:$0xff] %v1576
      %1588 = vst.msk [vmem:[#allocation3 + $0x98] sm:$0xff] %vm325, %v1578
      %v1589 = vld [vmem:[#allocation2 + $0x4] sm:$0xff]
      %v1590 = vld [vmem:[#allocation2 + $0xc] sm:$0xff]
      %v1591 = vld [vmem:[#allocation2 + $0x14] sm:$0xff]
      %v1592 = vld [vmem:[#allocation2 + $0x1c] sm:$0xff]
      %v1593 = vld [vmem:[#allocation2 + $0x24] sm:$0xff]
      %1594 = vst [vmem:[#allocation3 + $0xa0] sm:$0xff] %v1589
      %1595 = vst [vmem:[#allocation3 + $0xa8] sm:$0xff] %v1590
      %1596 = vst [vmem:[#allocation3 + $0xb0] sm:$0xff] %v1591
      %1597 = vst [vmem:[#allocation3 + $0xb8] sm:$0xff] %v1592
      %1598 = vst.msk [vmem:[#allocation3 + $0xc0] sm:$0xff] %vm325, %v1593
      %v1599 = vld [vmem:[#allocation2 + $0x4] sm:$0xff]
      %v1600 = vld [vmem:[#allocation2 + $0xc] sm:$0xff]
      %v1601 = vld [vmem:[#allocation2 + $0x14] sm:$0xff]
      %v1602 = vld [vmem:[#allocation2 + $0x1c] sm:$0xff]
      %v1603 = vld [vmem:[#allocation2 + $0x24] sm:$0xff]
      %1609 = vrot.lane.b32.xlu0 %v1599, 127
      %v1610 = vpop.permute.xlu0 %1609
      %1611 = vrot.lane.b32.xlu0 %v1600, 127
      %v1612 = vpop.permute.xlu0 %1611
      %1613 = vrot.lane.b32.xlu0 %v1601, 127
      %v1614 = vpop.permute.xlu0 %1613
      %1615 = vrot.lane.b32.xlu0 %v1602, 127
      %v1616 = vpop.permute.xlu0 %1615
      %1617 = vrot.lane.b32.xlu0 %v1603, 127
      %v1618 = vpop.permute.xlu0 %1617
      %v1619 = vrot.slane %v1610, 4
      %v1620 = vrot.slane %v1612, 4
      %v1621 = vrot.slane %v1614, 4
      %v1622 = vrot.slane %v1616, 4
      %v1623 = vrot.slane %v1618, 4
      %v1624 = vsel %vm303, %v1619, %v1620
      %v1625 = vsel %vm632, %v1610, %v1624
      %v1626 = vsel %vm303, %v1620, %v1621
      %v1627 = vsel %vm632, %v1612, %v1626
      %v1628 = vsel %vm303, %v1621, %v1622
      %v1629 = vsel %vm632, %v1614, %v1628
      %v1630 = vsel %vm303, %v1622, %v1623
      %v1631 = vsel %vm632, %v1616, %v1630
      %v1632 = vsel %vm632, %v1618, %v1623
      %1638 = vst [vmem:[#allocation3 + $0xc8] sm:$0xff] %v1625
      %1639 = vst [vmem:[#allocation3 + $0xd0] sm:$0xff] %v1627
      %1640 = vst [vmem:[#allocation3 + $0xd8] sm:$0xff] %v1629
      %1641 = vst [vmem:[#allocation3 + $0xe0] sm:$0xff] %v1631
      %1642 = vst.msk [vmem:[#allocation3 + $0xe8] sm:$0xff] %vm325, %v1632
      %v1643 = vld [vmem:[#allocation2 + $0x4] sm:$0xff]
      %v1644 = vld [vmem:[#allocation2 + $0xc] sm:$0xff]
      %v1645 = vld [vmem:[#allocation2 + $0x14] sm:$0xff]
      %v1646 = vld [vmem:[#allocation2 + $0x1c] sm:$0xff]
      %v1647 = vld [vmem:[#allocation2 + $0x24] sm:$0xff]
      %1653 = vrot.lane.b32.xlu0 %v1643, 95
      %v1654 = vpop.permute.xlu0 %1653
      %1655 = vrot.lane.b32.xlu0 %v1644, 95
      %v1656 = vpop.permute.xlu0 %1655
      %1657 = vrot.lane.b32.xlu0 %v1645, 95
      %v1658 = vpop.permute.xlu0 %1657
      %1659 = vrot.lane.b32.xlu0 %v1646, 95
      %v1660 = vpop.permute.xlu0 %1659
      %1661 = vrot.lane.b32.xlu0 %v1647, 95
      %v1662 = vpop.permute.xlu0 %1661
      %v1663 = vrot.slane %v1654, 4
      %v1664 = vrot.slane %v1656, 4
      %v1665 = vrot.slane %v1658, 4
      %v1666 = vrot.slane %v1660, 4
      %v1667 = vrot.slane %v1662, 4
      %v1668 = vsel %vm303, %v1663, %v1664
      %v1669 = vsel %vm702, %v1654, %v1668
      %v1670 = vsel %vm303, %v1664, %v1665
      %v1671 = vsel %vm702, %v1656, %v1670
      %v1672 = vsel %vm303, %v1665, %v1666
      %v1673 = vsel %vm702, %v1658, %v1672
      %v1674 = vsel %vm303, %v1666, %v1667
      %v1675 = vsel %vm702, %v1660, %v1674
      %v1676 = vsel %vm702, %v1662, %v1667
      %1682 = vst [vmem:[#allocation3 + $0xf0] sm:$0xff] %v1669
      %1683 = vst [vmem:[#allocation3 + $0xf8] sm:$0xff] %v1671
      %1684 = vst [vmem:[#allocation3 + $0x100] sm:$0xff] %v1673
      %1685 = vst [vmem:[#allocation3 + $0x108] sm:$0xff] %v1675
      %1686 = vst.msk [vmem:[#allocation3 + $0x110] sm:$0xff] %vm325, %v1676
      %v1687 = vld [vmem:[#allocation2 + $0x4] sm:$0xff]
      %v1688 = vld [vmem:[#allocation2 + $0xc] sm:$0xff]
      %v1689 = vld [vmem:[#allocation2 + $0x14] sm:$0xff]
      %v1690 = vld [vmem:[#allocation2 + $0x1c] sm:$0xff]
      %v1691 = vld [vmem:[#allocation2 + $0x24] sm:$0xff]
      %1697 = vrot.lane.b32.xlu0 %v1687, 94
      %v1698 = vpop.permute.xlu0 %1697
      %1699 = vrot.lane.b32.xlu0 %v1688, 94
      %v1700 = vpop.permute.xlu0 %1699
      %1701 = vrot.lane.b32.xlu0 %v1689, 94
      %v1702 = vpop.permute.xlu0 %1701
      %1703 = vrot.lane.b32.xlu0 %v1690, 94
      %v1704 = vpop.permute.xlu0 %1703
      %1705 = vrot.lane.b32.xlu0 %v1691, 94
      %v1706 = vpop.permute.xlu0 %1705
      %v1707 = vrot.slane %v1698, 4
      %v1708 = vrot.slane %v1700, 4
      %v1709 = vrot.slane %v1702, 4
      %v1710 = vrot.slane %v1704, 4
      %v1711 = vrot.slane %v1706, 4
      %v1712 = vsel %vm303, %v1707, %v1708
      %v1713 = vsel %vm772, %v1698, %v1712
      %v1714 = vsel %vm303, %v1708, %v1709
      %v1715 = vsel %vm772, %v1700, %v1714
      %v1716 = vsel %vm303, %v1709, %v1710
      %v1717 = vsel %vm772, %v1702, %v1716
      %v1718 = vsel %vm303, %v1710, %v1711
      %v1719 = vsel %vm772, %v1704, %v1718
      %v1720 = vsel %vm772, %v1706, %v1711
      %1726 = vst [vmem:[#allocation3 + $0x118] sm:$0xff] %v1713
      %1727 = vst [vmem:[#allocation3 + $0x120] sm:$0xff] %v1715
      %1728 = vst [vmem:[#allocation3 + $0x128] sm:$0xff] %v1717
      %1729 = vst [vmem:[#allocation3 + $0x130] sm:$0xff] %v1719
      %1730 = vst.msk [vmem:[#allocation3 + $0x138] sm:$0xff] %vm325, %v1720
      %v1731 = vld [vmem:[#allocation2 + $0x4] sm:$0xff]
      %v1732 = vld [vmem:[#allocation2 + $0xc] sm:$0xff]
      %v1733 = vld [vmem:[#allocation2 + $0x14] sm:$0xff]
      %v1734 = vld [vmem:[#allocation2 + $0x1c] sm:$0xff]
      %v1735 = vld [vmem:[#allocation2 + $0x24] sm:$0xff]
      %1741 = vrot.lane.b32.xlu0 %v1731, 93
      %v1742 = vpop.permute.xlu0 %1741
      %1743 = vrot.lane.b32.xlu0 %v1732, 93
      %v1744 = vpop.permute.xlu0 %1743
      %1745 = vrot.lane.b32.xlu0 %v1733, 93
      %v1746 = vpop.permute.xlu0 %1745
      %1747 = vrot.lane.b32.xlu0 %v1734, 93
      %v1748 = vpop.permute.xlu0 %1747
      %1749 = vrot.lane.b32.xlu0 %v1735, 93
      %v1750 = vpop.permute.xlu0 %1749
      %v1751 = vrot.slane %v1742, 4
      %v1752 = vrot.slane %v1744, 4
      %v1753 = vrot.slane %v1746, 4
      %v1754 = vrot.slane %v1748, 4
      %v1755 = vrot.slane %v1750, 4
      %v1756 = vsel %vm303, %v1751, %v1752
      %v1757 = vsel %vm842, %v1742, %v1756
      %v1758 = vsel %vm303, %v1752, %v1753
      %v1759 = vsel %vm842, %v1744, %v1758
      %v1760 = vsel %vm303, %v1753, %v1754
      %v1761 = vsel %vm842, %v1746, %v1760
      %v1762 = vsel %vm303, %v1754, %v1755
      %v1763 = vsel %vm842, %v1748, %v1762
      %v1764 = vsel %vm842, %v1750, %v1755
      %1770 = vst [vmem:[#allocation3 + $0x140] sm:$0xff] %v1757
      %1771 = vst [vmem:[#allocation3 + $0x148] sm:$0xff] %v1759
      %1772 = vst [vmem:[#allocation3 + $0x150] sm:$0xff] %v1761
      %1773 = vst [vmem:[#allocation3 + $0x158] sm:$0xff] %v1763
      %1774 = vst.msk [vmem:[#allocation3 + $0x160] sm:$0xff] %vm325, %v1764
      %v1775 = vld [vmem:[%s246 + $0x4] sm:$0xff]
      %v1776 = vld [vmem:[%s246 + $0xc] sm:$0xff]
      %v1777 = vld [vmem:[%s246 + $0x14] sm:$0xff]
      %v1778 = vld [vmem:[%s246 + $0x1c] sm:$0xff]
      %v1779 = vld [vmem:[%s246 + $0x24] sm:$0xff]
      %1780 = vst [vmem:[#allocation3 + $0x168] sm:$0xff] %v1775
      %1781 = vst [vmem:[#allocation3 + $0x170] sm:$0xff] %v1776
      %1782 = vst [vmem:[#allocation3 + $0x178] sm:$0xff] %v1777
      %1783 = vst [vmem:[#allocation3 + $0x180] sm:$0xff] %v1778
      %1784 = vst.msk [vmem:[#allocation3 + $0x188] sm:$0xff] %vm325, %v1779
      %v1785 = vld [vmem:[%s3] sm:$0xf]
      %v1786 = vld [vmem:[#allocation3] sm:$0xff]
      %v1787 = vld [vmem:[#allocation3 + $0x8] sm:$0xff]
      %v1788 = vld [vmem:[#allocation3 + $0x10] sm:$0xff]
      %v1789 = vld [vmem:[#allocation3 + $0x18] sm:$0xff]
      %v1790 = vld [vmem:[#allocation3 + $0x20] sm:$0xff]
      %v1791 = vld [vmem:[#allocation3 + $0x28] sm:$0xff]
      %v1792 = vld [vmem:[#allocation3 + $0x30] sm:$0xff]
      %v1793 = vld [vmem:[#allocation3 + $0x38] sm:$0xff]
      %v1794 = vld [vmem:[#allocation3 + $0x40] sm:$0xff]
      %v1795 = vld [vmem:[#allocation3 + $0x48] sm:$0xff]
      %v1796 = vld [vmem:[#allocation3 + $0x50] sm:$0xff]
      %v1797 = vld [vmem:[#allocation3 + $0x58] sm:$0xff]
      %v1798 = vld [vmem:[#allocation3 + $0x60] sm:$0xff]
      %v1799 = vld [vmem:[#allocation3 + $0x68] sm:$0xff]
      %v1800 = vld [vmem:[#allocation3 + $0x70] sm:$0xff]
      %v1801 = vld [vmem:[#allocation3 + $0x78] sm:$0xff]
      %v1802 = vld [vmem:[#allocation3 + $0x80] sm:$0xff]
      %v1803 = vld [vmem:[#allocation3 + $0x88] sm:$0xff]
      %v1804 = vld [vmem:[#allocation3 + $0x90] sm:$0xff]
      %v1805 = vld [vmem:[#allocation3 + $0x98] sm:$0xff]
      %v1806 = vld [vmem:[#allocation3 + $0xa0] sm:$0xff]
      %v1807 = vld [vmem:[#allocation3 + $0xa8] sm:$0xff]
      %v1808 = vld [vmem:[#allocation3 + $0xb0] sm:$0xff]
      %v1809 = vld [vmem:[#allocation3 + $0xb8] sm:$0xff]
      %v1810 = vld [vmem:[#allocation3 + $0xc0] sm:$0xff]
      %v1811 = vld [vmem:[#allocation3 + $0xc8] sm:$0xff]
      %v1812 = vld [vmem:[#allocation3 + $0xd0] sm:$0xff]
      %v1813 = vld [vmem:[#allocation3 + $0xd8] sm:$0xff]
      %v1814 = vld [vmem:[#allocation3 + $0xe0] sm:$0xff]
      %v1815 = vld [vmem:[#allocation3 + $0xe8] sm:$0xff]
      %v1816 = vld [vmem:[#allocation3 + $0xf0] sm:$0xff]
      %v1817 = vld [vmem:[#allocation3 + $0xf8] sm:$0xff]
      %v1818 = vld [vmem:[#allocation3 + $0x100] sm:$0xff]
      %v1819 = vld [vmem:[#allocation3 + $0x108] sm:$0xff]
      %v1820 = vld [vmem:[#allocation3 + $0x110] sm:$0xff]
      %v1821 = vld [vmem:[#allocation3 + $0x118] sm:$0xff]
      %v1822 = vld [vmem:[#allocation3 + $0x120] sm:$0xff]
      %v1823 = vld [vmem:[#allocation3 + $0x128] sm:$0xff]
      %v1824 = vld [vmem:[#allocation3 + $0x130] sm:$0xff]
      %v1825 = vld [vmem:[#allocation3 + $0x138] sm:$0xff]
      %v1826 = vld [vmem:[#allocation3 + $0x140] sm:$0xff]
      %v1827 = vld [vmem:[#allocation3 + $0x148] sm:$0xff]
      %v1828 = vld [vmem:[#allocation3 + $0x150] sm:$0xff]
      %v1829 = vld [vmem:[#allocation3 + $0x158] sm:$0xff]
      %v1830 = vld [vmem:[#allocation3 + $0x160] sm:$0xff]
      %v1831 = vld [vmem:[#allocation3 + $0x168] sm:$0xff]
      %v1832 = vld [vmem:[#allocation3 + $0x170] sm:$0xff]
      %v1833 = vld [vmem:[#allocation3 + $0x178] sm:$0xff]
      %v1834 = vld [vmem:[#allocation3 + $0x180] sm:$0xff]
      %v1835 = vld [vmem:[#allocation3 + $0x188] sm:$0xff]
      %v1836 = vld [vmem:[%s4] sm:$0xff]
      %1838 = vset.pattern.permute.xlu0 0
      %1839 = vperm.xlu0 %1838, %v1836
      %v1840 = vpop.permute.xlu0 %1839
      %v1892 = vunpack.c.l.b16 %v1786
      %v1893 = vunpack.c.h.b16 %v1786
      %v1894 = vunpack.c.l.b16 %v1787
      %v1895 = vunpack.c.h.b16 %v1787
      %v1896 = vunpack.c.l.b16 %v1788
      %v1897 = vunpack.c.h.b16 %v1788
      %v1898 = vunpack.c.l.b16 %v1789
      %v1899 = vunpack.c.h.b16 %v1789
      %v1900 = vunpack.c.l.b16 %v1790
      %v1901 = vunpack.c.h.b16 %v1790
      %v1902 = vunpack.c.l.b16 %v1791
      %v1903 = vunpack.c.h.b16 %v1791
      %v1904 = vunpack.c.l.b16 %v1792
      %v1905 = vunpack.c.h.b16 %v1792
      %v1906 = vunpack.c.l.b16 %v1793
      %v1907 = vunpack.c.h.b16 %v1793
      %v1908 = vunpack.c.l.b16 %v1794
      %v1909 = vunpack.c.h.b16 %v1794
      %v1910 = vunpack.c.l.b16 %v1795
      %v1911 = vunpack.c.h.b16 %v1795
      %v1912 = vunpack.c.l.b16 %v1796
      %v1913 = vunpack.c.h.b16 %v1796
      %v1914 = vunpack.c.l.b16 %v1797
      %v1915 = vunpack.c.h.b16 %v1797
      %v1916 = vunpack.c.l.b16 %v1798
      %v1917 = vunpack.c.h.b16 %v1798
      %v1918 = vunpack.c.l.b16 %v1799
      %v1919 = vunpack.c.h.b16 %v1799
      %v1920 = vunpack.c.l.b16 %v1800
      %v1921 = vunpack.c.h.b16 %v1800
      %v1922 = vunpack.c.l.b16 %v1801
      %v1923 = vunpack.c.h.b16 %v1801
      %v1924 = vunpack.c.l.b16 %v1802
      %v1925 = vunpack.c.h.b16 %v1802
      %v1926 = vunpack.c.l.b16 %v1803
      %v1927 = vunpack.c.h.b16 %v1803
      %v1928 = vunpack.c.l.b16 %v1804
      %v1929 = vunpack.c.h.b16 %v1804
      %v1930 = vunpack.c.l.b16 %v1805
      %v1931 = vunpack.c.h.b16 %v1805
      %v1932 = vunpack.c.l.b16 %v1806
      %v1933 = vunpack.c.h.b16 %v1806
      %v1934 = vunpack.c.l.b16 %v1807
      %v1935 = vunpack.c.h.b16 %v1807
      %v1936 = vunpack.c.l.b16 %v1808
      %v1937 = vunpack.c.h.b16 %v1808
      %v1938 = vunpack.c.l.b16 %v1809
      %v1939 = vunpack.c.h.b16 %v1809
      %v1940 = vunpack.c.l.b16 %v1810
      %v1941 = vunpack.c.h.b16 %v1810
      %v1942 = vunpack.c.l.b16 %v1811
      %v1943 = vunpack.c.h.b16 %v1811
      %v1944 = vunpack.c.l.b16 %v1812
      %v1945 = vunpack.c.h.b16 %v1812
      %v1946 = vunpack.c.l.b16 %v1813
      %v1947 = vunpack.c.h.b16 %v1813
      %v1948 = vunpack.c.l.b16 %v1814
      %v1949 = vunpack.c.h.b16 %v1814
      %v1950 = vunpack.c.l.b16 %v1815
      %v1951 = vunpack.c.h.b16 %v1815
      %v1952 = vunpack.c.l.b16 %v1816
      %v1953 = vunpack.c.h.b16 %v1816
      %v1954 = vunpack.c.l.b16 %v1817
      %v1955 = vunpack.c.h.b16 %v1817
      %v1956 = vunpack.c.l.b16 %v1818
      %v1957 = vunpack.c.h.b16 %v1818
      %v1958 = vunpack.c.l.b16 %v1819
      %v1959 = vunpack.c.h.b16 %v1819
      %v1960 = vunpack.c.l.b16 %v1820
      %v1961 = vunpack.c.h.b16 %v1820
      %v1962 = vunpack.c.l.b16 %v1821
      %v1963 = vunpack.c.h.b16 %v1821
      %v1964 = vunpack.c.l.b16 %v1822
      %v1965 = vunpack.c.h.b16 %v1822
      %v1966 = vunpack.c.l.b16 %v1823
      %v1967 = vunpack.c.h.b16 %v1823
      %v1968 = vunpack.c.l.b16 %v1824
      %v1969 = vunpack.c.h.b16 %v1824
      %v1970 = vunpack.c.l.b16 %v1825
      %v1971 = vunpack.c.h.b16 %v1825
      %v1972 = vunpack.c.l.b16 %v1826
      %v1973 = vunpack.c.h.b16 %v1826
      %v1974 = vunpack.c.l.b16 %v1827
      %v1975 = vunpack.c.h.b16 %v1827
      %v1976 = vunpack.c.l.b16 %v1828
      %v1977 = vunpack.c.h.b16 %v1828
      %v1978 = vunpack.c.l.b16 %v1829
      %v1979 = vunpack.c.h.b16 %v1829
      %v1980 = vunpack.c.l.b16 %v1830
      %v1981 = vunpack.c.h.b16 %v1830
      %v1982 = vunpack.c.l.b16 %v1831
      %v1983 = vunpack.c.h.b16 %v1831
      %v1984 = vunpack.c.l.b16 %v1832
      %v1985 = vunpack.c.h.b16 %v1832
      %v1986 = vunpack.c.l.b16 %v1833
      %v1987 = vunpack.c.h.b16 %v1833
      %v1988 = vunpack.c.l.b16 %v1834
      %v1989 = vunpack.c.h.b16 %v1834
      %v1990 = vunpack.c.l.b16 %v1835
      %v1991 = vunpack.c.h.b16 %v1835
      %v1992 = vpack.c.b16 %v1902, %v1892
      %v1993 = vpack.c.b16 %v1903, %v1893
      %v1994 = vpack.c.b16 %v1904, %v1894
      %v1995 = vpack.c.b16 %v1905, %v1895
      %v1996 = vpack.c.b16 %v1906, %v1896
      %v1997 = vpack.c.b16 %v1907, %v1897
      %v1998 = vpack.c.b16 %v1908, %v1898
      %v1999 = vpack.c.b16 %v1909, %v1899
      %v2000 = vpack.c.b16 %v1910, %v1900
      %v2001 = vpack.c.b16 %v1911, %v1901
      %v2002 = vpack.c.b16 %v1922, %v1912
      %v2003 = vpack.c.b16 %v1923, %v1913
      %v2004 = vpack.c.b16 %v1924, %v1914
      %v2005 = vpack.c.b16 %v1925, %v1915
      %v2006 = vpack.c.b16 %v1926, %v1916
      %v2007 = vpack.c.b16 %v1927, %v1917
      %v2008 = vpack.c.b16 %v1928, %v1918
      %v2009 = vpack.c.b16 %v1929, %v1919
      %v2010 = vpack.c.b16 %v1930, %v1920
      %v2011 = vpack.c.b16 %v1931, %v1921
      %v2012 = vpack.c.b16 %v1942, %v1932
      %v2013 = vpack.c.b16 %v1943, %v1933
      %v2014 = vpack.c.b16 %v1944, %v1934
      %v2015 = vpack.c.b16 %v1945, %v1935
      %v2016 = vpack.c.b16 %v1946, %v1936
      %v2017 = vpack.c.b16 %v1947, %v1937
      %v2018 = vpack.c.b16 %v1948, %v1938
      %v2019 = vpack.c.b16 %v1949, %v1939
      %v2020 = vpack.c.b16 %v1950, %v1940
      %v2021 = vpack.c.b16 %v1951, %v1941
      %v2022 = vpack.c.b16 %v1962, %v1952
      %v2023 = vpack.c.b16 %v1963, %v1953
      %v2024 = vpack.c.b16 %v1964, %v1954
      %v2025 = vpack.c.b16 %v1965, %v1955
      %v2026 = vpack.c.b16 %v1966, %v1956
      %v2027 = vpack.c.b16 %v1967, %v1957
      %v2028 = vpack.c.b16 %v1968, %v1958
      %v2029 = vpack.c.b16 %v1969, %v1959
      %v2030 = vpack.c.b16 %v1970, %v1960
      %v2031 = vpack.c.b16 %v1971, %v1961
      %v2032 = vpack.c.b16 %v1982, %v1972
      %v2033 = vpack.c.b16 %v1983, %v1973
      %v2034 = vpack.c.b16 %v1984, %v1974
      %v2035 = vpack.c.b16 %v1985, %v1975
      %v2036 = vpack.c.b16 %v1986, %v1976
      %v2037 = vpack.c.b16 %v1987, %v1977
      %v2038 = vpack.c.b16 %v1988, %v1978
      %v2039 = vpack.c.b16 %v1989, %v1979
      %v2040 = vpack.c.b16 %v1990, %v1980
      %v2041 = vpack.c.b16 %v1991, %v1981
      %vm2092 = vcmask 654336
      %v2094 = vsel %vm2092, %v1785, 0
      %2096 = vmatpush.bf16.msra.mxu0 0
      %2097 = vmatpush.bf16.msra.mxu0 0
      %2098 = vmatpush.bf16.msra.mxu0 0
      %2099 = vmatpush.bf16.msra.mxu0 %v2032
      %2100 = vmatpush.bf16.msra.mxu0 %v2022
      %2101 = vmatpush.bf16.msra.mxu0 %v2012
      %2102 = vmatpush.bf16.msra.mxu0 %v2002
      %2103 = vmatpush.bf16.msra.mxu0 %v1992
      %2104 = vmatmul.bf16.gmra.mxu0 %v2094
      %v2105 = vpop.f32.mrf.mxu0
      %v2106 = vadd.f32 %v1840, %v2105
      %v2107 = vpop.f32.mrf.mxu0
      %2108 = vdwg.mxu0
      %2109 = vmatpush.bf16.msra.mxu0 0
      %2110 = vmatpush.bf16.msra.mxu0 0
      %2111 = vmatpush.bf16.msra.mxu0 0
      %2112 = vmatpush.bf16.msra.mxu0 %v2033
      %2113 = vmatpush.bf16.msra.mxu0 %v2023
      %2114 = vmatpush.bf16.msra.mxu0 %v2013
      %2115 = vmatpush.bf16.msra.mxu0 %v2003
      %2116 = vmatpush.bf16.msra.mxu0 %v1993
      %2117 = vmatmul.bf16.gmra.mxu0 %v2094
      %v2118 = vpop.f32.mrf.mxu0
      %v2119 = vadd.f32 %v1840, %v2118
      %v2120 = vpop.f32.mrf.mxu0
      %2121 = vdwg.mxu0
      %2122 = vmatpush.bf16.msra.mxu0 0
      %2123 = vmatpush.bf16.msra.mxu0 0
      %2124 = vmatpush.bf16.msra.mxu0 0
      %2125 = vmatpush.bf16.msra.mxu0 %v2034
      %2126 = vmatpush.bf16.msra.mxu0 %v2024
      %2127 = vmatpush.bf16.msra.mxu0 %v2014
      %2128 = vmatpush.bf16.msra.mxu0 %v2004
      %2129 = vmatpush.bf16.msra.mxu0 %v1994
      %2130 = vmatmul.bf16.gmra.mxu0 %v2094
      %v2131 = vpop.f32.mrf.mxu0
      %v2132 = vadd.f32 %v1840, %v2131
      %v2133 = vpop.f32.mrf.mxu0
      %2134 = vdwg.mxu0
      %2135 = vmatpush.bf16.msra.mxu0 0
      %2136 = vmatpush.bf16.msra.mxu0 0
      %2137 = vmatpush.bf16.msra.mxu0 0
      %2138 = vmatpush.bf16.msra.mxu0 %v2035
      %2139 = vmatpush.bf16.msra.mxu0 %v2025
      %2140 = vmatpush.bf16.msra.mxu0 %v2015
      %2141 = vmatpush.bf16.msra.mxu0 %v2005
      %2142 = vmatpush.bf16.msra.mxu0 %v1995
      %2143 = vmatmul.bf16.gmra.mxu0 %v2094
      %v2144 = vpop.f32.mrf.mxu0
      %v2145 = vadd.f32 %v1840, %v2144
      %v2146 = vpop.f32.mrf.mxu0
      %2147 = vdwg.mxu0
      %2148 = vmatpush.bf16.msra.mxu0 0
      %2149 = vmatpush.bf16.msra.mxu0 0
      %2150 = vmatpush.bf16.msra.mxu0 0
      %2151 = vmatpush.bf16.msra.mxu0 %v2036
      %2152 = vmatpush.bf16.msra.mxu0 %v2026
      %2153 = vmatpush.bf16.msra.mxu0 %v2016
      %2154 = vmatpush.bf16.msra.mxu0 %v2006
      %2155 = vmatpush.bf16.msra.mxu0 %v1996
      %2156 = vmatmul.bf16.gmra.mxu0 %v2094
      %v2157 = vpop.f32.mrf.mxu0
      %v2158 = vadd.f32 %v1840, %v2157
      %v2159 = vpop.f32.mrf.mxu0
      %2160 = vdwg.mxu0
      %2161 = vmatpush.bf16.msra.mxu0 0
      %2162 = vmatpush.bf16.msra.mxu0 0
      %2163 = vmatpush.bf16.msra.mxu0 0
      %2164 = vmatpush.bf16.msra.mxu0 %v2037
      %2165 = vmatpush.bf16.msra.mxu0 %v2027
      %2166 = vmatpush.bf16.msra.mxu0 %v2017
      %2167 = vmatpush.bf16.msra.mxu0 %v2007
      %2168 = vmatpush.bf16.msra.mxu0 %v1997
      %2169 = vmatmul.bf16.gmra.mxu0 %v2094
      %v2170 = vpop.f32.mrf.mxu0
      %v2171 = vadd.f32 %v1840, %v2170
      %v2172 = vpop.f32.mrf.mxu0
      %2173 = vdwg.mxu0
      %2174 = vmatpush.bf16.msra.mxu0 0
      %2175 = vmatpush.bf16.msra.mxu0 0
      %2176 = vmatpush.bf16.msra.mxu0 0
      %2177 = vmatpush.bf16.msra.mxu0 %v2038
      %2178 = vmatpush.bf16.msra.mxu0 %v2028
      %2179 = vmatpush.bf16.msra.mxu0 %v2018
      %2180 = vmatpush.bf16.msra.mxu0 %v2008
      %2181 = vmatpush.bf16.msra.mxu0 %v1998
      %2182 = vmatmul.bf16.gmra.mxu0 %v2094
      %v2183 = vpop.f32.mrf.mxu0
      %v2184 = vadd.f32 %v1840, %v2183
      %v2185 = vpop.f32.mrf.mxu0
      %2186 = vdwg.mxu0
      %2187 = vmatpush.bf16.msra.mxu0 0
      %2188 = vmatpush.bf16.msra.mxu0 0
      %2189 = vmatpush.bf16.msra.mxu0 0
      %2190 = vmatpush.bf16.msra.mxu0 %v2039
      %2191 = vmatpush.bf16.msra.mxu0 %v2029
      %2192 = vmatpush.bf16.msra.mxu0 %v2019
      %2193 = vmatpush.bf16.msra.mxu0 %v2009
      %2194 = vmatpush.bf16.msra.mxu0 %v1999
      %2195 = vmatmul.bf16.gmra.mxu0 %v2094
      %v2196 = vpop.f32.mrf.mxu0
      %v2197 = vadd.f32 %v1840, %v2196
      %v2198 = vpop.f32.mrf.mxu0
      %2199 = vdwg.mxu0
      %2200 = vmatpush.bf16.msra.mxu0 0
      %2201 = vmatpush.bf16.msra.mxu0 0
      %2202 = vmatpush.bf16.msra.mxu0 0
      %2203 = vmatpush.bf16.msra.mxu0 %v2040
      %2204 = vmatpush.bf16.msra.mxu0 %v2030
      %2205 = vmatpush.bf16.msra.mxu0 %v2020
      %2206 = vmatpush.bf16.msra.mxu0 %v2010
      %2207 = vmatpush.bf16.msra.mxu0 %v2000
      %2208 = vmatmul.bf16.gmra.mxu0 %v2094
      %v2209 = vpop.f32.mrf.mxu0
      %v2210 = vadd.f32 %v1840, %v2209
      %v2211 = vpop.f32.mrf.mxu0
      %2212 = vdwg.mxu0
      %2213 = vmatpush.bf16.msra.mxu0 0
      %2214 = vmatpush.bf16.msra.mxu0 0
      %2215 = vmatpush.bf16.msra.mxu0 0
      %2216 = vmatpush.bf16.msra.mxu0 %v2041
      %2217 = vmatpush.bf16.msra.mxu0 %v2031
      %2218 = vmatpush.bf16.msra.mxu0 %v2021
      %2219 = vmatpush.bf16.msra.mxu0 %v2011
      %2220 = vmatpush.bf16.msra.mxu0 %v2001
      %2221 = vmatmul.bf16.gmra.mxu0 %v2094
      %v2222 = vpop.f32.mrf.mxu0
      %v2223 = vadd.f32 %v1840, %v2222
      %v2224 = vpop.f32.mrf.mxu0
      %2225 = vdwg.mxu0
      %v2226 = vpack.c.bf16 %v2119, %v2106
      %v2227 = vpack.c.bf16 %v2145, %v2132
      %v2228 = vpack.c.bf16 %v2171, %v2158
      %v2229 = vpack.c.bf16 %v2197, %v2184
      %v2230 = vpack.c.bf16 %v2223, %v2210
      %2231 = vst [vmem:[%s251] sm:$0xff] %v2226
      %2232 = vst [vmem:[%s251 + $0x8] sm:$0xff] %v2227
      %2233 = vst [vmem:[%s251 + $0x10] sm:$0xff] %v2228
      %2234 = vst [vmem:[%s251 + $0x18] sm:$0xff] %v2229
      %2235 = vst.msk [vmem:[%s251 + $0x20] sm:$0xff] %vm325, %v2230
      %p2236 = scmp.lt.s32.totalorder %s17, 7
      %s2237 = scalar_select %p2236, %s17, 7
      %s2238 = smul.addr %s2237, 10
      %s2239 = smul.addr %s2238, 4
      %s2240 = scalar_lea.vmem %s6, %s2239
      // Predicated region
      $region45: #{context_conditioning_stack.8} parent=43 // pred_check
        %p2241 = pneg %p166
      $region46: #{context_conditioning_stack.8} parent=43 // pred_check_branch
        %2243 = sbr.rel (%p2241) target = $region48
      $region47: #{context_conditioning_stack.8} parent=43 // pred_region
        _
      $region48: #{context_conditioning_stack.8} parent=43 // pred_fallthru
        _
    $region44: #{context_conditioning_stack.8} parent=5 // pred_fallthru
      _
    %p2244 = scmp.le.s32.totalorder 2, %s12
    // Predicated region
    $region49: #{context_conditioning_stack.8} parent=5 // pred_check
      %p2245 = pneg %p2244
    $region50: #{context_conditioning_stack.8} parent=5 // pred_check_branch
      %2247 = sbr.rel (%p2245) target = $region52
    $region51: #{context_conditioning_stack.8} parent=5 // pred_region
      %s2248 = ssub.s32 %s12, 2
      // Predicated region
      $region53: #{context_conditioning_stack.8} parent=51 // pred_check
        %p2249 = pneg %p172
      $region54: #{context_conditioning_stack.8} parent=51 // pred_check_branch
        %2251 = sbr.rel (%p2249) target = $region56
      $region55: #{context_conditioning_stack.8} parent=51 // pred_region
        %p2252 = scmp.lt.s32.totalorder %s18, 7
        %s2253 = scalar_select %p2252, %s18, 7
        %s2254 = smul.addr %s2253, 10
        %s2255 = smul.addr %s2254, 4
        %s2256 = scalar_lea.vmem %s6, %s2255
      $region56: #{context_conditioning_stack.8} parent=51 // pred_fallthru
        _
    $region52: #{context_conditioning_stack.8} parent=5 // pred_fallthru
      _
  $region6: #{context_conditioning_stack.8} parent=0 // loop_footer
    %s16 = sadd.s32 1, %s12
  $region7: #{context_conditioning_stack.8} parent=0 // loop_footer_branch
    %11 = sbr.rel target = $region3
  $region8: #{context_conditioning_stack.8} parent=0 // loop_exit
    _

// kernel: context_conditioning_stack.9
$region0: #{context_conditioning_stack.9}
  #allocation0 [shape = 'u32[]', space=smem, size = 0x4, offset = 0x4, fixed_abs, tag = 'smem constant byte address 0x4 - core index']
  #allocation1 [shape = 'u32[72,128]{1,0:T(1,128)}', space=vmem, size = 0x9000, scoped, tag = 'internal scratch']
  #allocation2 [shape = 'bf16[8,580]{1,0:T(8,128)(2,1)}', space=vmem, size = 0x2800, scoped, tag = 'scratch operand']
  #allocation3 [shape = 'bf16[80,324]{1,0:T(8,128)(2,1)}', space=vmem, size = 0xf000, scoped, tag = 'scratch operand']
  %s0 = inlined_call_operand.vmem [shape: bf16[8,8,580], index: 0, kind: input, shape index: {}]
  %s1 = inlined_call_operand.vmem [shape: bf16[8,72], index: 1, kind: input, shape index: {}]
  %s2 = inlined_call_operand.vmem [shape: f32[8,1], index: 2, kind: input, shape index: {}]
  %s3 = inlined_call_operand.vmem [shape: bf16[8,80], index: 3, kind: input, shape index: {}]
  %s4 = inlined_call_operand.vmem [shape: f32[8,1], index: 4, kind: input, shape index: {}]
  %s5 = inlined_call_operand.vmem [shape: bf16[1,324], index: 5, kind: input, shape index: {}]
  %s6 = inlined_call_operand.vmem [shape: bf16[8,8,324], index: 6, kind: output, shape index: {}]
  %s7 = sld [smem:[#allocation0]]
  $region57: #{context_conditioning_stack.9} parent=0
    _
  %s9 = ssub.s32 1, %s7
  %s10 = scalar_select 0, %s9, %s7
  loop: start=0, step=1, limit=10
  $region2: #{context_conditioning_stack.9} parent=0 // loop_pre_header
    _
  $region3: #{context_conditioning_stack.9} parent=0 // loop_header
    %s12 = sphi 0, %s16
    %p13 = scmp.ge.s32.totalorder %s12, 10
    %s22 = sphi 0, %s24
    %s25 = sphi 0, %s22
    %s26 = sphi 0, %s25
    %s42 = sphi 0, %s26
    %s46 = sphi 0, %s46
    %s48 = sphi 0, %s46
    %s49 = sphi 0, %s48
    %s63 = sphi 0, %s49
    %s67 = sphi 0, %s67
    %s69 = sphi 0, %s67
    %s70 = sphi 0, %s69
    %s84 = sphi 0, %s70
    %s88 = sphi 0, %s88
    %s90 = sphi 0, %s88
    %s91 = sphi 0, %s90
    %s105 = sphi 0, %s91
    %s109 = sphi 0, %s109
    %s111 = sphi 0, %s109
    %s112 = sphi 0, %s111
    %s126 = sphi 0, %s112
    %s130 = sphi 0, %s130
    %s132 = sphi 0, %s130
    %s133 = sphi 0, %s132
    %s147 = sphi 0, %s133
    %s153 = sphi 0, %s155
    %s156 = sphi 0, %s153
    %s157 = sphi 0, %s156
    %s173 = sphi 0, %s157
  $region4: #{context_conditioning_stack.9} parent=0 // loop_header_branch
    %15 = sbr.rel (%p13) target = $region8
  $region5: #{context_conditioning_stack.9} parent=0 // loop_body
    %s17 = ssub.s32 %s12, 1
    %s18 = ssub.s32 %s12, 2
    %s19 = sadd.s32 %s12, 1
    %s20 = ssub.s32 %s12, %s19
    %p21 = scmp.eq.s32.totalorder %s20, 0
    %s23 = sadd.s32 %s22, 1
    %s24 = scalar_select %p21, %s22, %s23
    %p27 = pneg %p21
    %p28 = scmp.eq.s32.totalorder %s12, 7
    %p29 = por %p27, %p28
    %p30 = scmp.ne.s32.totalorder %s22, %s25
    %p31 = scmp.eq.s32.totalorder %s12, 0
    %p32 = por %p30, %p31
    %p33 = scmp.ne.s32.totalorder %s22, %s25
    %p34 = scmp.eq.s32.totalorder %s17, 7
    %p35 = por %p33, %p34
    %p36 = scmp.ne.s32.totalorder %s25, %s26
    %p37 = scmp.eq.s32.totalorder %s17, 0
    %p38 = por %p36, %p37
    %p39 = scmp.ne.s32.totalorder %s25, %s26
    %p40 = scmp.eq.s32.totalorder %s18, 7
    %p41 = por %p39, %p40
    %p43 = scmp.ne.s32.totalorder %s26, %s42
    %p44 = scmp.eq.s32.totalorder %s18, 0
    %p45 = por %p43, %p44
    %s47 = sadd.s32 %s46, 1
    %p50 = scmp.eq.s32.totalorder %s12, 7
    %p51 = scmp.ne.s32.totalorder %s46, %s48
    %p52 = scmp.eq.s32.totalorder %s12, 0
    %p53 = por %p51, %p52
    %p54 = scmp.ne.s32.totalorder %s46, %s48
    %p55 = scmp.eq.s32.totalorder %s17, 7
    %p56 = por %p54, %p55
    %p57 = scmp.ne.s32.totalorder %s48, %s49
    %p58 = scmp.eq.s32.totalorder %s17, 0
    %p59 = por %p57, %p58
    %p60 = scmp.ne.s32.totalorder %s48, %s49
    %p61 = scmp.eq.s32.totalorder %s18, 7
    %p62 = por %p60, %p61
    %p64 = scmp.ne.s32.totalorder %s49, %s63
    %p65 = scmp.eq.s32.totalorder %s18, 0
    %p66 = por %p64, %p65
    %s68 = sadd.s32 %s67, 1
    %p71 = scmp.eq.s32.totalorder %s12, 7
    %p72 = scmp.ne.s32.totalorder %s67, %s69
    %p73 = scmp.eq.s32.totalorder %s12, 0
    %p74 = por %p72, %p73
    %p75 = scmp.ne.s32.totalorder %s67, %s69
    %p76 = scmp.eq.s32.totalorder %s17, 7
    %p77 = por %p75, %p76
    %p78 = scmp.ne.s32.totalorder %s69, %s70
    %p79 = scmp.eq.s32.totalorder %s17, 0
    %p80 = por %p78, %p79
    %p81 = scmp.ne.s32.totalorder %s69, %s70
    %p82 = scmp.eq.s32.totalorder %s18, 7
    %p83 = por %p81, %p82
    %p85 = scmp.ne.s32.totalorder %s70, %s84
    %p86 = scmp.eq.s32.totalorder %s18, 0
    %p87 = por %p85, %p86
    %s89 = sadd.s32 %s88, 1
    %p92 = scmp.eq.s32.totalorder %s12, 7
    %p93 = scmp.ne.s32.totalorder %s88, %s90
    %p94 = scmp.eq.s32.totalorder %s12, 0
    %p95 = por %p93, %p94
    %p96 = scmp.ne.s32.totalorder %s88, %s90
    %p97 = scmp.eq.s32.totalorder %s17, 7
    %p98 = por %p96, %p97
    %p99 = scmp.ne.s32.totalorder %s90, %s91
    %p100 = scmp.eq.s32.totalorder %s17, 0
    %p101 = por %p99, %p100
    %p102 = scmp.ne.s32.totalorder %s90, %s91
    %p103 = scmp.eq.s32.totalorder %s18, 7
    %p104 = por %p102, %p103
    %p106 = scmp.ne.s32.totalorder %s91, %s105
    %p107 = scmp.eq.s32.totalorder %s18, 0
    %p108 = por %p106, %p107
    %s110 = sadd.s32 %s109, 1
    %p113 = scmp.eq.s32.totalorder %s12, 7
    %p114 = scmp.ne.s32.totalorder %s109, %s111
    %p115 = scmp.eq.s32.totalorder %s12, 0
    %p116 = por %p114, %p115
    %p117 = scmp.ne.s32.totalorder %s109, %s111
    %p118 = scmp.eq.s32.totalorder %s17, 7
    %p119 = por %p117, %p118
    %p120 = scmp.ne.s32.totalorder %s111, %s112
    %p121 = scmp.eq.s32.totalorder %s17, 0
    %p122 = por %p120, %p121
    %p123 = scmp.ne.s32.totalorder %s111, %s112
    %p124 = scmp.eq.s32.totalorder %s18, 7
    %p125 = por %p123, %p124
    %p127 = scmp.ne.s32.totalorder %s112, %s126
    %p128 = scmp.eq.s32.totalorder %s18, 0
    %p129 = por %p127, %p128
    %s131 = sadd.s32 %s130, 1
    %p134 = scmp.eq.s32.totalorder %s12, 7
    %p135 = scmp.ne.s32.totalorder %s130, %s132
    %p136 = scmp.eq.s32.totalorder %s12, 0
    %p137 = por %p135, %p136
    %p138 = scmp.ne.s32.totalorder %s130, %s132
    %p139 = scmp.eq.s32.totalorder %s17, 7
    %p140 = por %p138, %p139
    %p141 = scmp.ne.s32.totalorder %s132, %s133
    %p142 = scmp.eq.s32.totalorder %s17, 0
    %p143 = por %p141, %p142
    %p144 = scmp.ne.s32.totalorder %s132, %s133
    %p145 = scmp.eq.s32.totalorder %s18, 7
    %p146 = por %p144, %p145
    %p148 = scmp.ne.s32.totalorder %s133, %s147
    %p149 = scmp.eq.s32.totalorder %s18, 0
    %p150 = por %p148, %p149
    %s151 = ssub.s32 %s12, %s19
    %p152 = scmp.eq.s32.totalorder %s151, 0
    %s154 = sadd.s32 %s153, 1
    %s155 = scalar_select %p152, %s153, %s154
    %p158 = pneg %p152
    %p159 = scmp.eq.s32.totalorder %s12, 7
    %p160 = por %p158, %p159
    %p161 = scmp.ne.s32.totalorder %s153, %s156
    %p162 = scmp.eq.s32.totalorder %s12, 0
    %p163 = por %p161, %p162
    %p164 = scmp.ne.s32.totalorder %s153, %s156
    %p165 = scmp.eq.s32.totalorder %s17, 7
    %p166 = por %p164, %p165
    %p167 = scmp.ne.s32.totalorder %s156, %s157
    %p168 = scmp.eq.s32.totalorder %s17, 0
    %p169 = por %p167, %p168
    %p170 = scmp.ne.s32.totalorder %s156, %s157
    %p171 = scmp.eq.s32.totalorder %s18, 7
    %p172 = por %p170, %p171
    %p174 = scmp.ne.s32.totalorder %s157, %s173
    %p175 = scmp.eq.s32.totalorder %s18, 0
    %p176 = por %p174, %p175
    %p177 = scmp.le.s32.totalorder 1, %s12
    %p178 = scmp.lt.s32.totalorder %s12, 9
    %p179 = pnand %p177, %p178
    %p180 = pneg %p179
    // Predicated region
    $region9: #{context_conditioning_stack.9} parent=5 // pred_check
      _
    $region10: #{context_conditioning_stack.9} parent=5 // pred_check_branch
      %182 = sbr.rel (%p179) target = $region12
    $region11: #{context_conditioning_stack.9} parent=5 // pred_region
      %s183 = ssub.s32 %s12, 1
      // Predicated region
      $region13: #{context_conditioning_stack.9} parent=11 // pred_check
        %p184 = pneg %p59
      $region14: #{context_conditioning_stack.9} parent=11 // pred_check_branch
        %186 = sbr.rel (%p184) target = $region16
      $region15: #{context_conditioning_stack.9} parent=11 // pred_region
        _
      $region16: #{context_conditioning_stack.9} parent=11 // pred_fallthru
        _
      // Predicated region
      $region17: #{context_conditioning_stack.9} parent=11 // pred_check
        %p187 = pneg %p80
      $region18: #{context_conditioning_stack.9} parent=11 // pred_check_branch
        %189 = sbr.rel (%p187) target = $region20
      $region19: #{context_conditioning_stack.9} parent=11 // pred_region
        _
      $region20: #{context_conditioning_stack.9} parent=11 // pred_fallthru
        _
      // Predicated region
      $region21: #{context_conditioning_stack.9} parent=11 // pred_check
        %p190 = pneg %p101
      $region22: #{context_conditioning_stack.9} parent=11 // pred_check_branch
        %192 = sbr.rel (%p190) target = $region24
      $region23: #{context_conditioning_stack.9} parent=11 // pred_region
        _
      $region24: #{context_conditioning_stack.9} parent=11 // pred_fallthru
        _
      // Predicated region
      $region25: #{context_conditioning_stack.9} parent=11 // pred_check
        %p193 = pneg %p122
      $region26: #{context_conditioning_stack.9} parent=11 // pred_check_branch
        %195 = sbr.rel (%p193) target = $region28
      $region27: #{context_conditioning_stack.9} parent=11 // pred_region
        _
      $region28: #{context_conditioning_stack.9} parent=11 // pred_fallthru
        _
      // Predicated region
      $region29: #{context_conditioning_stack.9} parent=11 // pred_check
        %p196 = pneg %p143
      $region30: #{context_conditioning_stack.9} parent=11 // pred_check_branch
        %198 = sbr.rel (%p196) target = $region32
      $region31: #{context_conditioning_stack.9} parent=11 // pred_region
        _
      $region32: #{context_conditioning_stack.9} parent=11 // pred_fallthru
        _
    $region12: #{context_conditioning_stack.9} parent=5 // pred_fallthru
      _
    %p199 = scmp.lt.s32.totalorder %s12, 8
    // Predicated region
    $region33: #{context_conditioning_stack.9} parent=5 // pred_check
      %p200 = pneg %p199
    $region34: #{context_conditioning_stack.9} parent=5 // pred_check_branch
      %202 = sbr.rel (%p200) target = $region36
    $region35: #{context_conditioning_stack.9} parent=5 // pred_region
      // Predicated region
      $region37: #{context_conditioning_stack.9} parent=35 // pred_check
        %p203 = pneg %p32
      $region38: #{context_conditioning_stack.9} parent=35 // pred_check_branch
        %205 = sbr.rel (%p203) target = $region40
      $region39: #{context_conditioning_stack.9} parent=35 // pred_region
        %p206 = scmp.lt.s32.totalorder %s12, 7
        %s207 = scalar_select %p206, %s12, 7
        %s208 = smul.addr %s207, 5
        %s209 = smul.addr %s208, 4
        %s210 = scalar_lea.vmem %s0, %s209
      $region40: #{context_conditioning_stack.9} parent=35 // pred_fallthru
        _
    $region36: #{context_conditioning_stack.9} parent=5 // pred_fallthru
      _
    %p211 = scmp.le.s32.totalorder 1, %s12
    %p212 = scmp.lt.s32.totalorder %s12, 9
    %p213 = pnand %p211, %p212
    %p214 = pneg %p213
    // Predicated region
    $region41: #{context_conditioning_stack.9} parent=5 // pred_check
      _
    $region42: #{context_conditioning_stack.9} parent=5 // pred_check_branch
      %216 = sbr.rel (%p213) target = $region44
    $region43: #{context_conditioning_stack.9} parent=5 // pred_region
      %s217 = ssub.s32 %s12, 1
      %p218 = scmp.lt.s32.totalorder %s17, 7
      %s219 = scalar_select %p218, %s17, 7
      %s220 = smul.addr %s219, 5
      %s221 = smul.addr %s220, 4
      %s222 = scalar_lea.vmem %s0, %s221
      %p223 = pneg %p38
      %p224 = pneg %p35
      %p225 = pneg %p59
      %p226 = pneg %p56
      %p227 = pneg %p80
      %p228 = pneg %p77
      %p229 = pneg %p101
      %p230 = pneg %p98
      %p231 = pneg %p122
      %p232 = pneg %p119
      %p233 = pneg %p143
      %p234 = pneg %p140
      %p235 = pneg %p169
      %p236 = pneg %p166
      %p237 = scmp.lt.s32.totalorder %s17, 7
      %s238 = scalar_select %p237, %s17, 7
      %s239 = smul.addr %s238, 3
      %s240 = smul.addr %s239, 4
      %s241 = scalar_lea.vmem %s6, %s240
      %p242 = scmp.lt.s32.totalorder %s17, 7
      %s243 = scalar_select %p242, %s17, 7
      %s244 = smul.addr %s243, 5
      %s245 = smul.addr %s244, 4
      %s246 = scalar_lea.vmem %s0, %s245
      %p247 = scmp.lt.s32.totalorder %s17, 7
      %s248 = scalar_select %p247, %s17, 7
      %s249 = smul.addr %s248, 3
      %s250 = smul.addr %s249, 4
      %s251 = scalar_lea.vmem %s6, %s250
      %v253 = vld [vmem:[%s246] sm:$0xff]
      %v254 = vld [vmem:[%s246 + $0x8] sm:$0xff]
      %v255 = vunpack.c.l.bf16 %v253
      %v256 = vunpack.c.h.bf16 %v253
      %v257 = vunpack.c.l.bf16 %v254
      %v258 = vunpack.c.h.bf16 %v254
      %v259 = vmax.f32 %v255, 0.0
      %v260 = vmax.f32 %v256, 0.0
      %v261 = vmax.f32 %v257, 0.0
      %v262 = vmax.f32 %v258, 0.0
      %v263 = vpack.c.bf16 %v260, %v259
      %v264 = vpack.c.bf16 %v262, %v261
      %267 = vrot.lane.b32.xlu0 %v263, 19
      %v268 = vpop.permute.xlu0 %267
      %269 = vrot.lane.b32.xlu0 %v264, 19
      %v270 = vpop.permute.xlu0 %269
      %v271 = vrot.slane %v268, 4
      %v272 = vrot.slane %v270, 4
      %vm273 = vcmask 1043456
      %v274 = vsel %vm273, %v271, %v272
      %vm275 = vcmask 154624
      %v276 = vsel %vm275, %v268, %v274
      %v277 = vsel %vm275, %v270, %v272
      %280 = vst [vmem:[#allocation3] sm:$0xff] %v276
      %vm281 = vcmask 551936
      %282 = vst.msk [vmem:[#allocation3 + $0x8] sm:$0xf] %vm281, %v277
      %v283 = vld [vmem:[%s246] sm:$0xff]
      %v284 = vld [vmem:[%s246 + $0x8] sm:$0xff]
      %v285 = vunpack.c.l.bf16 %v283
      %v286 = vunpack.c.h.bf16 %v283
      %v287 = vunpack.c.l.bf16 %v284
      %v288 = vunpack.c.h.bf16 %v284
      %v289 = vmax.f32 %v285, 0.0
      %v290 = vmax.f32 %v286, 0.0
      %v291 = vmax.f32 %v287, 0.0
      %v292 = vmax.f32 %v288, 0.0
      %v293 = vpack.c.bf16 %v290, %v289
      %v294 = vpack.c.bf16 %v292, %v291
      %297 = vrot.lane.b32.xlu0 %v293, 18
      %v298 = vpop.permute.xlu0 %297
      %299 = vrot.lane.b32.xlu0 %v294, 18
      %v300 = vpop.permute.xlu0 %299
      %v301 = vrot.slane %v298, 4
      %v302 = vrot.slane %v300, 4
      %v303 = vsel %vm273, %v301, %v302
      %vm304 = vcmask 146432
      %v305 = vsel %vm304, %v298, %v303
      %v306 = vsel %vm304, %v300, %v302
      %309 = vst [vmem:[#allocation3 + $0xc] sm:$0xff] %v305
      %310 = vst.msk [vmem:[#allocation3 + $0x14] sm:$0xf] %vm281, %v306
      %v311 = vld [vmem:[%s246] sm:$0xff]
      %v312 = vld [vmem:[%s246 + $0x8] sm:$0xff]
      %v313 = vunpack.c.l.bf16 %v311
      %v314 = vunpack.c.h.bf16 %v311
      %v315 = vunpack.c.l.bf16 %v312
      %v316 = vunpack.c.h.bf16 %v312
      %v317 = vmax.f32 %v313, 0.0
      %v318 = vmax.f32 %v314, 0.0
      %v319 = vmax.f32 %v315, 0.0
      %v320 = vmax.f32 %v316, 0.0
      %v321 = vpack.c.bf16 %v318, %v317
      %v322 = vpack.c.bf16 %v320, %v319
      %325 = vrot.lane.b32.xlu0 %v321, 17
      %v326 = vpop.permute.xlu0 %325
      %327 = vrot.lane.b32.xlu0 %v322, 17
      %v328 = vpop.permute.xlu0 %327
      %v329 = vrot.slane %v326, 4
      %v330 = vrot.slane %v328, 4
      %v331 = vsel %vm273, %v329, %v330
      %vm332 = vcmask 138240
      %v333 = vsel %vm332, %v326, %v331
      %v334 = vsel %vm332, %v328, %v330
      %337 = vst [vmem:[#allocation3 + $0x18] sm:$0xff] %v333
      %338 = vst.msk [vmem:[#allocation3 + $0x20] sm:$0xf] %vm281, %v334
      %v339 = vld [vmem:[%s246] sm:$0xff]
      %v340 = vld [vmem:[%s246 + $0x8] sm:$0xff]
      %v341 = vunpack.c.l.bf16 %v339
      %v342 = vunpack.c.h.bf16 %v339
      %v343 = vunpack.c.l.bf16 %v340
      %v344 = vunpack.c.h.bf16 %v340
      %v345 = vmax.f32 %v341, 0.0
      %v346 = vmax.f32 %v342, 0.0
      %v347 = vmax.f32 %v343, 0.0
      %v348 = vmax.f32 %v344, 0.0
      %v349 = vpack.c.bf16 %v346, %v345
      %v350 = vpack.c.bf16 %v348, %v347
      %353 = vrot.lane.b32.xlu0 %v349, 1
      %v354 = vpop.permute.xlu0 %353
      %355 = vrot.lane.b32.xlu0 %v350, 1
      %v356 = vpop.permute.xlu0 %355
      %v357 = vrot.slane %v354, 4
      %v358 = vrot.slane %v356, 4
      %v359 = vsel %vm273, %v357, %v358
      %vm360 = vcmask 7168
      %v361 = vsel %vm360, %v354, %v359
      %v362 = vsel %vm360, %v356, %v358
      %365 = vst [vmem:[#allocation3 + $0x24] sm:$0xff] %v361
      %366 = vst.msk [vmem:[#allocation3 + $0x2c] sm:$0xf] %vm281, %v362
      %v367 = vld [vmem:[%s246 + $0x4] sm:$0xff]
      %v368 = vld [vmem:[%s246 + $0xc] sm:$0xf]
      %v369 = vunpack.c.l.bf16 %v367
      %v370 = vunpack.c.h.bf16 %v367
      %v371 = vunpack.c.l.bf16 %v368
      %v372 = vmax.f32 %v369, 0.0
      %v373 = vmax.f32 %v370, 0.0
      %v374 = vmax.f32 %v371, 0.0
      %v375 = vpack.c.bf16 %v373, %v372
      %v376 = vpack.c.bf16 %v374, %v374
      %377 = vst [vmem:[#allocation3 + $0x30] sm:$0xff] %v375
      %378 = vst.msk [vmem:[#allocation3 + $0x38] sm:$0xf] %vm281, %v376
      %v379 = vld [vmem:[%s246 + $0x4] sm:$0xff]
      %v380 = vld [vmem:[%s246 + $0xc] sm:$0xf]
      %v381 = vunpack.c.l.bf16 %v379
      %v382 = vunpack.c.h.bf16 %v379
      %v383 = vunpack.c.l.bf16 %v380
      %v384 = vmax.f32 %v381, 0.0
      %v385 = vmax.f32 %v382, 0.0
      %v386 = vmax.f32 %v383, 0.0
      %v387 = vpack.c.bf16 %v385, %v384
      %v388 = vpack.c.bf16 %v386, %v386
      %391 = vrot.lane.b32.xlu0 %v387, 127
      %v392 = vpop.permute.xlu0 %391
      %393 = vrot.lane.b32.xlu0 %v388, 127
      %v394 = vpop.permute.xlu0 %393
      %v395 = vrot.slane %v392, 4
      %v396 = vrot.slane %v394, 4
      %v397 = vsel %vm273, %v395, %v396
      %vm398 = vcmask 1039360
      %v399 = vsel %vm398, %v392, %v397
      %402 = vst [vmem:[#allocation3 + $0x3c] sm:$0xff] %v399
      %403 = vst.msk [vmem:[#allocation3 + $0x44] sm:$0xf] %vm281, %v394
      %v404 = vld [vmem:[%s246 + $0x4] sm:$0xff]
      %v405 = vld [vmem:[%s246 + $0xc] sm:$0xf]
      %v406 = vunpack.c.l.bf16 %v404
      %v407 = vunpack.c.h.bf16 %v404
      %v408 = vunpack.c.l.bf16 %v405
      %v409 = vmax.f32 %v406, 0.0
      %v410 = vmax.f32 %v407, 0.0
      %v411 = vmax.f32 %v408, 0.0
      %v412 = vpack.c.bf16 %v410, %v409
      %v413 = vpack.c.bf16 %v411, %v411
      %416 = vrot.lane.b32.xlu0 %v412, 111
      %v417 = vpop.permute.xlu0 %416
      %418 = vrot.lane.b32.xlu0 %v413, 111
      %v419 = vpop.permute.xlu0 %418
      %v420 = vrot.slane %v417, 4
      %v421 = vrot.slane %v419, 4
      %v422 = vsel %vm273, %v420, %v421
      %vm423 = vcmask 908288
      %v424 = vsel %vm423, %v417, %v422
      %427 = vst [vmem:[#allocation3 + $0x48] sm:$0xff] %v424
      %428 = vst.msk [vmem:[#allocation3 + $0x50] sm:$0xf] %vm281, %v419
      %v429 = vld [vmem:[%s246 + $0x4] sm:$0xff]
      %v430 = vld [vmem:[%s246 + $0xc] sm:$0xf]
      %v431 = vunpack.c.l.bf16 %v429
      %v432 = vunpack.c.h.bf16 %v429
      %v433 = vunpack.c.l.bf16 %v430
      %v434 = vmax.f32 %v431, 0.0
      %v435 = vmax.f32 %v432, 0.0
      %v436 = vmax.f32 %v433, 0.0
      %v437 = vpack.c.bf16 %v435, %v434
      %v438 = vpack.c.bf16 %v436, %v436
      %441 = vrot.lane.b32.xlu0 %v437, 110
      %v442 = vpop.permute.xlu0 %441
      %443 = vrot.lane.b32.xlu0 %v438, 110
      %v444 = vpop.permute.xlu0 %443
      %v445 = vrot.slane %v442, 4
      %v446 = vrot.slane %v444, 4
      %v447 = vsel %vm273, %v445, %v446
      %vm448 = vcmask 900096
      %v449 = vsel %vm448, %v442, %v447
      %452 = vst [vmem:[#allocation3 + $0x54] sm:$0xff] %v449
      %453 = vst.msk [vmem:[#allocation3 + $0x5c] sm:$0xf] %vm281, %v444
      %v454 = vld [vmem:[%s246 + $0x4] sm:$0xff]
      %v455 = vld [vmem:[%s246 + $0xc] sm:$0xf]
      %v456 = vunpack.c.l.bf16 %v454
      %v457 = vunpack.c.h.bf16 %v454
      %v458 = vunpack.c.l.bf16 %v455
      %v459 = vmax.f32 %v456, 0.0
      %v460 = vmax.f32 %v457, 0.0
      %v461 = vmax.f32 %v458, 0.0
      %v462 = vpack.c.bf16 %v460, %v459
      %v463 = vpack.c.bf16 %v461, %v461
      %466 = vrot.lane.b32.xlu0 %v462, 109
      %v467 = vpop.permute.xlu0 %466
      %468 = vrot.lane.b32.xlu0 %v463, 109
      %v469 = vpop.permute.xlu0 %468
      %v470 = vrot.slane %v467, 4
      %v471 = vrot.slane %v469, 4
      %v472 = vsel %vm273, %v470, %v471
      %vm473 = vcmask 891904
      %v474 = vsel %vm473, %v467, %v472
      %477 = vst [vmem:[#allocation3 + $0x60] sm:$0xff] %v474
      %478 = vst.msk [vmem:[#allocation3 + $0x68] sm:$0xf] %vm281, %v469
      %v479 = vld [vmem:[%s1] sm:$0xf]
      %v480 = vld [vmem:[#allocation3] sm:$0xff]
      %v481 = vld [vmem:[#allocation3 + $0x8] sm:$0xf]
      %v482 = vld [vmem:[#allocation3 + $0xc] sm:$0xff]
      %v483 = vld [vmem:[#allocation3 + $0x14] sm:$0xf]
      %v484 = vld [vmem:[#allocation3 + $0x18] sm:$0xff]
      %v485 = vld [vmem:[#allocation3 + $0x20] sm:$0xf]
      %v486 = vld [vmem:[#allocation3 + $0x24] sm:$0xff]
      %v487 = vld [vmem:[#allocation3 + $0x2c] sm:$0xf]
      %v488 = vld [vmem:[#allocation3 + $0x30] sm:$0xff]
      %v489 = vld [vmem:[#allocation3 + $0x38] sm:$0xf]
      %v490 = vld [vmem:[#allocation3 + $0x3c] sm:$0xff]
      %v491 = vld [vmem:[#allocation3 + $0x44] sm:$0xf]
      %v492 = vld [vmem:[#allocation3 + $0x48] sm:$0xff]
      %v493 = vld [vmem:[#allocation3 + $0x50] sm:$0xf]
      %v494 = vld [vmem:[#allocation3 + $0x54] sm:$0xff]
      %v495 = vld [vmem:[#allocation3 + $0x5c] sm:$0xf]
      %v496 = vld [vmem:[#allocation3 + $0x60] sm:$0xff]
      %v497 = vld [vmem:[#allocation3 + $0x68] sm:$0xf]
      %v498 = vld [vmem:[%s2] sm:$0xff]
      %500 = vset.pattern.permute.xlu0 0
      %501 = vperm.xlu0 %500, %v498
      %v502 = vpop.permute.xlu0 %501
      %v522 = vunpack.c.l.b16 %v480
      %v523 = vunpack.c.h.b16 %v480
      %v524 = vunpack.c.l.b16 %v481
      %v525 = vunpack.c.l.b16 %v482
      %v526 = vunpack.c.h.b16 %v482
      %v527 = vunpack.c.l.b16 %v483
      %v528 = vunpack.c.l.b16 %v484
      %v529 = vunpack.c.h.b16 %v484
      %v530 = vunpack.c.l.b16 %v485
      %v531 = vunpack.c.l.b16 %v486
      %v532 = vunpack.c.h.b16 %v486
      %v533 = vunpack.c.l.b16 %v487
      %v534 = vunpack.c.l.b16 %v488
      %v535 = vunpack.c.h.b16 %v488
      %v536 = vunpack.c.l.b16 %v489
      %v537 = vunpack.c.l.b16 %v490
      %v538 = vunpack.c.h.b16 %v490
      %v539 = vunpack.c.l.b16 %v491
      %v540 = vunpack.c.l.b16 %v492
      %v541 = vunpack.c.h.b16 %v492
      %v542 = vunpack.c.l.b16 %v493
      %v543 = vunpack.c.l.b16 %v494
      %v544 = vunpack.c.h.b16 %v494
      %v545 = vunpack.c.l.b16 %v495
      %v546 = vunpack.c.l.b16 %v496
      %v547 = vunpack.c.h.b16 %v496
      %v548 = vunpack.c.l.b16 %v497
      %v549 = vpack.c.b16 %v525, %v522
      %v550 = vpack.c.b16 %v526, %v523
      %v551 = vpack.c.b16 %v527, %v524
      %v552 = vpack.c.b16 %v531, %v528
      %v553 = vpack.c.b16 %v532, %v529
      %v554 = vpack.c.b16 %v533, %v530
      %v555 = vpack.c.b16 %v537, %v534
      %v556 = vpack.c.b16 %v538, %v535
      %v557 = vpack.c.b16 %v539, %v536
      %v558 = vpack.c.b16 %v543, %v540
      %v559 = vpack.c.b16 %v544, %v541
      %v560 = vpack.c.b16 %v545, %v542
      %v561 = vpack.c.b16 %v546, %v546
      %v562 = vpack.c.b16 %v547, %v547
      %v563 = vpack.c.b16 %v548, %v548
      %vm576 = vcmask 588800
      %v578 = vsel %vm576, %v479, 0
      %vm580 = vcmask 1043456
      %v582 = vsel %vm580, %v561, 0
      %v585 = vsel %vm580, %v562, 0
      %v588 = vsel %vm580, %v563, 0
      %590 = vmatpush.bf16.msra.mxu0 0
      %591 = vmatpush.bf16.msra.mxu0 0
      %592 = vmatpush.bf16.msra.mxu0 0
      %593 = vmatpush.bf16.msra.mxu0 %v582
      %594 = vmatpush.bf16.msra.mxu0 %v558
      %595 = vmatpush.bf16.msra.mxu0 %v555
      %596 = vmatpush.bf16.msra.mxu0 %v552
      %597 = vmatpush.bf16.msra.mxu0 %v549
      %598 = vmatmul.bf16.gmra.mxu0 %v578
      %v599 = vpop.f32.mrf.mxu0
      %v600 = vadd.f32 %v502, %v599
      %v601 = vpop.f32.mrf.mxu0
      %602 = vdwg.mxu0
      %603 = vmatpush.bf16.msra.mxu0 0
      %604 = vmatpush.bf16.msra.mxu0 0
      %605 = vmatpush.bf16.msra.mxu0 0
      %606 = vmatpush.bf16.msra.mxu0 %v585
      %607 = vmatpush.bf16.msra.mxu0 %v559
      %608 = vmatpush.bf16.msra.mxu0 %v556
      %609 = vmatpush.bf16.msra.mxu0 %v553
      %610 = vmatpush.bf16.msra.mxu0 %v550
      %611 = vmatmul.bf16.gmra.mxu0 %v578
      %v612 = vpop.f32.mrf.mxu0
      %v613 = vadd.f32 %v502, %v612
      %v614 = vpop.f32.mrf.mxu0
      %615 = vdwg.mxu0
      %616 = vmatpush.bf16.msra.mxu0 0
      %617 = vmatpush.bf16.msra.mxu0 0
      %618 = vmatpush.bf16.msra.mxu0 0
      %619 = vmatpush.bf16.msra.mxu0 %v588
      %620 = vmatpush.bf16.msra.mxu0 %v560
      %621 = vmatpush.bf16.msra.mxu0 %v557
      %622 = vmatpush.bf16.msra.mxu0 %v554
      %623 = vmatpush.bf16.msra.mxu0 %v551
      %624 = vmatmul.bf16.gmra.mxu0 %v578
      %v625 = vpop.f32.mrf.mxu0
      %v626 = vadd.f32 %v502, %v625
      %v627 = vpop.f32.mrf.mxu0
      %628 = vdwg.mxu0
      %v629 = vmax.f32 %v600, 0.0
      %v630 = vmax.f32 %v613, 0.0
      %v631 = vmax.f32 %v626, 0.0
      %v632 = vpack.c.bf16 %v630, %v629
      %v633 = vpack.c.bf16 %v631, %v631
      %v634 = vld [vmem:[%s5] sm:$0x7]
      %636 = vst [vmem:[#allocation1] ss:$9 sm:$0xff] %v634
      %v637 = vld [vmem:[#allocation1] sm:$0xff]
      %v638 = vld [vmem:[#allocation1 + $0x9] sm:$0xff]
      %v639 = vld [vmem:[#allocation1 + $0x12] sm:$0xff]
      %v640 = vpack.i.b16 %v637, %v637
      %v642 = vperm.slane %v640, 0
      %v643 = vpack.i.b16 %v638, %v638
      %v645 = vperm.slane %v643, 0
      %v646 = vpack.i.b16 %v639, %v639
      %v648 = vperm.slane %v646, 0
      %v649 = vunpack.c.l.bf16 %v632
      %v650 = vunpack.c.h.bf16 %v632
      %v651 = vunpack.c.l.bf16 %v633
      %v652 = vunpack.c.l.bf16 %v642
      %v653 = vunpack.c.l.bf16 %v645
      %v654 = vunpack.c.l.bf16 %v648
      %v655 = vmul.f32 %v649, %v652
      %v656 = vmul.f32 %v650, %v653
      %v657 = vmul.f32 %v651, %v654
      %v658 = vpack.c.bf16 %v656, %v655
      %v659 = vpack.c.bf16 %v657, %v657
      %660 = vst [vmem:[#allocation2] sm:$0xf] 0
      %vm661 = vcmask 1044000
      %vm662 = vcmask 556036
      %vm663 = vmor %vm662, %vm661
      %664 = vst.msk [vmem:[#allocation2 + $0xc] sm:$0xff] %vm663, 0
      %665 = vst [vmem:[#allocation2 + $0x4] sm:$0xff] %v658
      %666 = vst.msk [vmem:[#allocation2 + $0xc] sm:$0xf] %vm281, %v659
      %v667 = vld [vmem:[#allocation2] sm:$0xff]
      %v668 = vld [vmem:[#allocation2 + $0x8] sm:$0xff]
      %671 = vrot.lane.b32.xlu0 %v667, 19
      %v672 = vpop.permute.xlu0 %671
      %673 = vrot.lane.b32.xlu0 %v668, 19
      %v674 = vpop.permute.xlu0 %673
      %v675 = vrot.slane %v672, 4
      %v676 = vrot.slane %v674, 4
      %v677 = vsel %vm273, %v675, %v676
      %v678 = vsel %vm275, %v672, %v677
      %v679 = vsel %vm275, %v674, %v676
      %682 = vst [vmem:[#allocation3] sm:$0xff] %v678
      %683 = vst.msk [vmem:[#allocation3 + $0x8] sm:$0xf] %vm281, %v679
      %v684 = vld [vmem:[#allocation2] sm:$0xff]
      %v685 = vld [vmem:[#allocation2 + $0x8] sm:$0xff]
      %688 = vrot.lane.b32.xlu0 %v684, 18
      %v689 = vpop.permute.xlu0 %688
      %690 = vrot.lane.b32.xlu0 %v685, 18
      %v691 = vpop.permute.xlu0 %690
      %v692 = vrot.slane %v689, 4
      %v693 = vrot.slane %v691, 4
      %v694 = vsel %vm273, %v692, %v693
      %v695 = vsel %vm304, %v689, %v694
      %v696 = vsel %vm304, %v691, %v693
      %699 = vst [vmem:[#allocation3 + $0xc] sm:$0xff] %v695
      %700 = vst.msk [vmem:[#allocation3 + $0x14] sm:$0xf] %vm281, %v696
      %v701 = vld [vmem:[#allocation2] sm:$0xff]
      %v702 = vld [vmem:[#allocation2 + $0x8] sm:$0xff]
      %705 = vrot.lane.b32.xlu0 %v701, 17
      %v706 = vpop.permute.xlu0 %705
      %707 = vrot.lane.b32.xlu0 %v702, 17
      %v708 = vpop.permute.xlu0 %707
      %v709 = vrot.slane %v706, 4
      %v710 = vrot.slane %v708, 4
      %v711 = vsel %vm273, %v709, %v710
      %v712 = vsel %vm332, %v706, %v711
      %v713 = vsel %vm332, %v708, %v710
      %716 = vst [vmem:[#allocation3 + $0x18] sm:$0xff] %v712
      %717 = vst.msk [vmem:[#allocation3 + $0x20] sm:$0xf] %vm281, %v713
      %v718 = vld [vmem:[#allocation2] sm:$0xff]
      %v719 = vld [vmem:[#allocation2 + $0x8] sm:$0xff]
      %722 = vrot.lane.b32.xlu0 %v718, 1
      %v723 = vpop.permute.xlu0 %722
      %724 = vrot.lane.b32.xlu0 %v719, 1
      %v725 = vpop.permute.xlu0 %724
      %v726 = vrot.slane %v723, 4
      %v727 = vrot.slane %v725, 4
      %v728 = vsel %vm273, %v726, %v727
      %v729 = vsel %vm360, %v723, %v728
      %v730 = vsel %vm360, %v725, %v727
      %733 = vst [vmem:[#allocation3 + $0x24] sm:$0xff] %v729
      %734 = vst.msk [vmem:[#allocation3 + $0x2c] sm:$0xf] %vm281, %v730
      %v735 = vld [vmem:[#allocation2 + $0x4] sm:$0xff]
      %v736 = vld [vmem:[#allocation2 + $0xc] sm:$0xf]
      %737 = vst [vmem:[#allocation3 + $0x30] sm:$0xff] %v735
      %738 = vst.msk [vmem:[#allocation3 + $0x38] sm:$0xf] %vm281, %v736
      %v739 = vld [vmem:[#allocation2 + $0x4] sm:$0xff]
      %v740 = vld [vmem:[#allocation2 + $0xc] sm:$0xf]
      %743 = vrot.lane.b32.xlu0 %v739, 127
      %v744 = vpop.permute.xlu0 %743
      %745 = vrot.lane.b32.xlu0 %v740, 127
      %v746 = vpop.permute.xlu0 %745
      %v747 = vrot.slane %v744, 4
      %v748 = vrot.slane %v746, 4
      %v749 = vsel %vm273, %v747, %v748
      %v750 = vsel %vm398, %v744, %v749
      %753 = vst [vmem:[#allocation3 + $0x3c] sm:$0xff] %v750
      %754 = vst.msk [vmem:[#allocation3 + $0x44] sm:$0xf] %vm281, %v746
      %v755 = vld [vmem:[#allocation2 + $0x4] sm:$0xff]
      %v756 = vld [vmem:[#allocation2 + $0xc] sm:$0xf]
      %759 = vrot.lane.b32.xlu0 %v755, 111
      %v760 = vpop.permute.xlu0 %759
      %761 = vrot.lane.b32.xlu0 %v756, 111
      %v762 = vpop.permute.xlu0 %761
      %v763 = vrot.slane %v760, 4
      %v764 = vrot.slane %v762, 4
      %v765 = vsel %vm273, %v763, %v764
      %v766 = vsel %vm423, %v760, %v765
      %769 = vst [vmem:[#allocation3 + $0x48] sm:$0xff] %v766
      %770 = vst.msk [vmem:[#allocation3 + $0x50] sm:$0xf] %vm281, %v762
      %v771 = vld [vmem:[#allocation2 + $0x4] sm:$0xff]
      %v772 = vld [vmem:[#allocation2 + $0xc] sm:$0xf]
      %775 = vrot.lane.b32.xlu0 %v771, 110
      %v776 = vpop.permute.xlu0 %775
      %777 = vrot.lane.b32.xlu0 %v772, 110
      %v778 = vpop.permute.xlu0 %777
      %v779 = vrot.slane %v776, 4
      %v780 = vrot.slane %v778, 4
      %v781 = vsel %vm273, %v779, %v780
      %v782 = vsel %vm448, %v776, %v781
      %785 = vst [vmem:[#allocation3 + $0x54] sm:$0xff] %v782
      %786 = vst.msk [vmem:[#allocation3 + $0x5c] sm:$0xf] %vm281, %v778
      %v787 = vld [vmem:[#allocation2 + $0x4] sm:$0xff]
      %v788 = vld [vmem:[#allocation2 + $0xc] sm:$0xf]
      %791 = vrot.lane.b32.xlu0 %v787, 109
      %v792 = vpop.permute.xlu0 %791
      %793 = vrot.lane.b32.xlu0 %v788, 109
      %v794 = vpop.permute.xlu0 %793
      %v795 = vrot.slane %v792, 4
      %v796 = vrot.slane %v794, 4
      %v797 = vsel %vm273, %v795, %v796
      %v798 = vsel %vm473, %v792, %v797
      %801 = vst [vmem:[#allocation3 + $0x60] sm:$0xff] %v798
      %802 = vst.msk [vmem:[#allocation3 + $0x68] sm:$0xf] %vm281, %v794
      %v803 = vld [vmem:[%s246 + $0x4] sm:$0xff]
      %v804 = vld [vmem:[%s246 + $0xc] sm:$0xf]
      %805 = vst [vmem:[#allocation3 + $0x6c] sm:$0xff] %v803
      %806 = vst.msk [vmem:[#allocation3 + $0x74] sm:$0xf] %vm281, %v804
      %v807 = vld [vmem:[%s3] sm:$0xf]
      %v808 = vld [vmem:[#allocation3] sm:$0xff]
      %v809 = vld [vmem:[#allocation3 + $0x8] sm:$0xf]
      %v810 = vld [vmem:[#allocation3 + $0xc] sm:$0xff]
      %v811 = vld [vmem:[#allocation3 + $0x14] sm:$0xf]
      %v812 = vld [vmem:[#allocation3 + $0x18] sm:$0xff]
      %v813 = vld [vmem:[#allocation3 + $0x20] sm:$0xf]
      %v814 = vld [vmem:[#allocation3 + $0x24] sm:$0xff]
      %v815 = vld [vmem:[#allocation3 + $0x2c] sm:$0xf]
      %v816 = vld [vmem:[#allocation3 + $0x30] sm:$0xff]
      %v817 = vld [vmem:[#allocation3 + $0x38] sm:$0xf]
      %v818 = vld [vmem:[#allocation3 + $0x3c] sm:$0xff]
      %v819 = vld [vmem:[#allocation3 + $0x44] sm:$0xf]
      %v820 = vld [vmem:[#allocation3 + $0x48] sm:$0xff]
      %v821 = vld [vmem:[#allocation3 + $0x50] sm:$0xf]
      %v822 = vld [vmem:[#allocation3 + $0x54] sm:$0xff]
      %v823 = vld [vmem:[#allocation3 + $0x5c] sm:$0xf]
      %v824 = vld [vmem:[#allocation3 + $0x60] sm:$0xff]
      %v825 = vld [vmem:[#allocation3 + $0x68] sm:$0xf]
      %v826 = vld [vmem:[#allocation3 + $0x6c] sm:$0xff]
      %v827 = vld [vmem:[#allocation3 + $0x74] sm:$0xf]
      %v828 = vld [vmem:[%s4] sm:$0xff]
      %830 = vset.pattern.permute.xlu0 0
      %831 = vperm.xlu0 %830, %v828
      %v832 = vpop.permute.xlu0 %831
      %v854 = vunpack.c.l.b16 %v808
      %v855 = vunpack.c.h.b16 %v808
      %v856 = vunpack.c.l.b16 %v809
      %v857 = vunpack.c.l.b16 %v810
      %v858 = vunpack.c.h.b16 %v810
      %v859 = vunpack.c.l.b16 %v811
      %v860 = vunpack.c.l.b16 %v812
      %v861 = vunpack.c.h.b16 %v812
      %v862 = vunpack.c.l.b16 %v813
      %v863 = vunpack.c.l.b16 %v814
      %v864 = vunpack.c.h.b16 %v814
      %v865 = vunpack.c.l.b16 %v815
      %v866 = vunpack.c.l.b16 %v816
      %v867 = vunpack.c.h.b16 %v816
      %v868 = vunpack.c.l.b16 %v817
      %v869 = vunpack.c.l.b16 %v818
      %v870 = vunpack.c.h.b16 %v818
      %v871 = vunpack.c.l.b16 %v819
      %v872 = vunpack.c.l.b16 %v820
      %v873 = vunpack.c.h.b16 %v820
      %v874 = vunpack.c.l.b16 %v821
      %v875 = vunpack.c.l.b16 %v822
      %v876 = vunpack.c.h.b16 %v822
      %v877 = vunpack.c.l.b16 %v823
      %v878 = vunpack.c.l.b16 %v824
      %v879 = vunpack.c.h.b16 %v824
      %v880 = vunpack.c.l.b16 %v825
      %v881 = vunpack.c.l.b16 %v826
      %v882 = vunpack.c.h.b16 %v826
      %v883 = vunpack.c.l.b16 %v827
      %v884 = vpack.c.b16 %v857, %v854
      %v885 = vpack.c.b16 %v858, %v855
      %v886 = vpack.c.b16 %v859, %v856
      %v887 = vpack.c.b16 %v863, %v860
      %v888 = vpack.c.b16 %v864, %v861
      %v889 = vpack.c.b16 %v865, %v862
      %v890 = vpack.c.b16 %v869, %v866
      %v891 = vpack.c.b16 %v870, %v867
      %v892 = vpack.c.b16 %v871, %v868
      %v893 = vpack.c.b16 %v875, %v872
      %v894 = vpack.c.b16 %v876, %v873
      %v895 = vpack.c.b16 %v877, %v874
      %v896 = vpack.c.b16 %v881, %v878
      %v897 = vpack.c.b16 %v882, %v879
      %v898 = vpack.c.b16 %v883, %v880
      %vm914 = vcmask 654336
      %v916 = vsel %vm914, %v807, 0
      %918 = vmatpush.bf16.msra.mxu0 0
      %919 = vmatpush.bf16.msra.mxu0 0
      %920 = vmatpush.bf16.msra.mxu0 0
      %921 = vmatpush.bf16.msra.mxu0 %v896
      %922 = vmatpush.bf16.msra.mxu0 %v893
      %923 = vmatpush.bf16.msra.mxu0 %v890
      %924 = vmatpush.bf16.msra.mxu0 %v887
      %925 = vmatpush.bf16.msra.mxu0 %v884
      %926 = vmatmul.bf16.gmra.mxu0 %v916
      %v927 = vpop.f32.mrf.mxu0
      %v928 = vadd.f32 %v832, %v927
      %v929 = vpop.f32.mrf.mxu0
      %930 = vdwg.mxu0
      %931 = vmatpush.bf16.msra.mxu0 0
      %932 = vmatpush.bf16.msra.mxu0 0
      %933 = vmatpush.bf16.msra.mxu0 0
      %934 = vmatpush.bf16.msra.mxu0 %v897
      %935 = vmatpush.bf16.msra.mxu0 %v894
      %936 = vmatpush.bf16.msra.mxu0 %v891
      %937 = vmatpush.bf16.msra.mxu0 %v888
      %938 = vmatpush.bf16.msra.mxu0 %v885
      %939 = vmatmul.bf16.gmra.mxu0 %v916
      %v940 = vpop.f32.mrf.mxu0
      %v941 = vadd.f32 %v832, %v940
      %v942 = vpop.f32.mrf.mxu0
      %943 = vdwg.mxu0
      %944 = vmatpush.bf16.msra.mxu0 0
      %945 = vmatpush.bf16.msra.mxu0 0
      %946 = vmatpush.bf16.msra.mxu0 0
      %947 = vmatpush.bf16.msra.mxu0 %v898
      %948 = vmatpush.bf16.msra.mxu0 %v895
      %949 = vmatpush.bf16.msra.mxu0 %v892
      %950 = vmatpush.bf16.msra.mxu0 %v889
      %951 = vmatpush.bf16.msra.mxu0 %v886
      %952 = vmatmul.bf16.gmra.mxu0 %v916
      %v953 = vpop.f32.mrf.mxu0
      %v954 = vadd.f32 %v832, %v953
      %v955 = vpop.f32.mrf.mxu0
      %956 = vdwg.mxu0
      %v957 = vpack.c.bf16 %v941, %v928
      %v958 = vpack.c.bf16 %v954, %v954
      %959 = vst [vmem:[%s251] sm:$0xff] %v957
      %960 = vst.msk [vmem:[%s251 + $0x8] sm:$0xf] %vm281, %v958
      %p961 = scmp.lt.s32.totalorder %s17, 7
      %s962 = scalar_select %p961, %s17, 7
      %s963 = smul.addr %s962, 3
      %s964 = smul.addr %s963, 4
      %s965 = scalar_lea.vmem %s6, %s964
      // Predicated region
      $region45: #{context_conditioning_stack.9} parent=43 // pred_check
        %p966 = pneg %p166
      $region46: #{context_conditioning_stack.9} parent=43 // pred_check_branch
        %968 = sbr.rel (%p966) target = $region48
      $region47: #{context_conditioning_stack.9} parent=43 // pred_region
        _
      $region48: #{context_conditioning_stack.9} parent=43 // pred_fallthru
        _
    $region44: #{context_conditioning_stack.9} parent=5 // pred_fallthru
      _
    %p969 = scmp.le.s32.totalorder 2, %s12
    // Predicated region
    $region49: #{context_conditioning_stack.9} parent=5 // pred_check
      %p970 = pneg %p969
    $region50: #{context_conditioning_stack.9} parent=5 // pred_check_branch
      %972 = sbr.rel (%p970) target = $region52
    $region51: #{context_conditioning_stack.9} parent=5 // pred_region
      %s973 = ssub.s32 %s12, 2
      // Predicated region
      $region53: #{context_conditioning_stack.9} parent=51 // pred_check
        %p974 = pneg %p172
      $region54: #{context_conditioning_stack.9} parent=51 // pred_check_branch
        %976 = sbr.rel (%p974) target = $region56
      $region55: #{context_conditioning_stack.9} parent=51 // pred_region
        %p977 = scmp.lt.s32.totalorder %s18, 7
        %s978 = scalar_select %p977, %s18, 7
        %s979 = smul.addr %s978, 3
        %s980 = smul.addr %s979, 4
        %s981 = scalar_lea.vmem %s6, %s980
      $region56: #{context_conditioning_stack.9} parent=51 // pred_fallthru
        _
    $region52: #{context_conditioning_stack.9} parent=5 // pred_fallthru
      _
  $region6: #{context_conditioning_stack.9} parent=0 // loop_footer
    %s16 = sadd.s32 1, %s12
  $region7: #{context_conditioning_stack.9} parent=0 // loop_footer_branch
    %11 = sbr.rel target = $region3
  $region8: #{context_conditioning_stack.9} parent=0 // loop_exit
    _

// kernel: context_conditioning_stack.10
$region0: #{context_conditioning_stack.10}
  #allocation0 [shape = 'u32[]', space=smem, size = 0x4, offset = 0x4, fixed_abs, tag = 'smem constant byte address 0x4 - core index']
  #allocation1 [shape = 'u32[72,128]{1,0:T(1,128)}', space=vmem, size = 0x9000, scoped, tag = 'internal scratch']
  #allocation2 [shape = 'bf16[8,356]{1,0:T(8,128)(2,1)}', space=vmem, size = 0x1800, scoped, tag = 'scratch operand']
  #allocation3 [shape = 'bf16[80,100]{1,0:T(8,128)(2,1)}', space=vmem, size = 0x5000, scoped, tag = 'scratch operand']
  %s0 = inlined_call_operand.vmem [shape: bf16[8,8,356], index: 0, kind: input, shape index: {}]
  %s1 = inlined_call_operand.vmem [shape: bf16[8,72], index: 1, kind: input, shape index: {}]
  %s2 = inlined_call_operand.vmem [shape: f32[8,1], index: 2, kind: input, shape index: {}]
  %s3 = inlined_call_operand.vmem [shape: bf16[8,80], index: 3, kind: input, shape index: {}]
  %s4 = inlined_call_operand.vmem [shape: f32[8,1], index: 4, kind: input, shape index: {}]
  %s5 = inlined_call_operand.vmem [shape: bf16[1,100], index: 5, kind: input, shape index: {}]
  %s6 = inlined_call_operand.vmem [shape: bf16[8,8,100], index: 6, kind: output, shape index: {}]
  %s7 = sld [smem:[#allocation0]]
  $region57: #{context_conditioning_stack.10} parent=0
    _
  %s9 = ssub.s32 1, %s7
  %s10 = scalar_select 0, %s9, %s7
  loop: start=0, step=1, limit=10
  $region2: #{context_conditioning_stack.10} parent=0 // loop_pre_header
    _
  $region3: #{context_conditioning_stack.10} parent=0 // loop_header
    %s12 = sphi 0, %s16
    %p13 = scmp.ge.s32.totalorder %s12, 10
    %s22 = sphi 0, %s24
    %s25 = sphi 0, %s22
    %s26 = sphi 0, %s25
    %s42 = sphi 0, %s26
    %s46 = sphi 0, %s46
    %s48 = sphi 0, %s46
    %s49 = sphi 0, %s48
    %s63 = sphi 0, %s49
    %s67 = sphi 0, %s67
    %s69 = sphi 0, %s67
    %s70 = sphi 0, %s69
    %s84 = sphi 0, %s70
    %s88 = sphi 0, %s88
    %s90 = sphi 0, %s88
    %s91 = sphi 0, %s90
    %s105 = sphi 0, %s91
    %s109 = sphi 0, %s109
    %s111 = sphi 0, %s109
    %s112 = sphi 0, %s111
    %s126 = sphi 0, %s112
    %s130 = sphi 0, %s130
    %s132 = sphi 0, %s130
    %s133 = sphi 0, %s132
    %s147 = sphi 0, %s133
    %s153 = sphi 0, %s155
    %s156 = sphi 0, %s153
    %s157 = sphi 0, %s156
    %s173 = sphi 0, %s157
  $region4: #{context_conditioning_stack.10} parent=0 // loop_header_branch
    %15 = sbr.rel (%p13) target = $region8
  $region5: #{context_conditioning_stack.10} parent=0 // loop_body
    %s17 = ssub.s32 %s12, 1
    %s18 = ssub.s32 %s12, 2
    %s19 = sadd.s32 %s12, 1
    %s20 = ssub.s32 %s12, %s19
    %p21 = scmp.eq.s32.totalorder %s20, 0
    %s23 = sadd.s32 %s22, 1
    %s24 = scalar_select %p21, %s22, %s23
    %p27 = pneg %p21
    %p28 = scmp.eq.s32.totalorder %s12, 7
    %p29 = por %p27, %p28
    %p30 = scmp.ne.s32.totalorder %s22, %s25
    %p31 = scmp.eq.s32.totalorder %s12, 0
    %p32 = por %p30, %p31
    %p33 = scmp.ne.s32.totalorder %s22, %s25
    %p34 = scmp.eq.s32.totalorder %s17, 7
    %p35 = por %p33, %p34
    %p36 = scmp.ne.s32.totalorder %s25, %s26
    %p37 = scmp.eq.s32.totalorder %s17, 0
    %p38 = por %p36, %p37
    %p39 = scmp.ne.s32.totalorder %s25, %s26
    %p40 = scmp.eq.s32.totalorder %s18, 7
    %p41 = por %p39, %p40
    %p43 = scmp.ne.s32.totalorder %s26, %s42
    %p44 = scmp.eq.s32.totalorder %s18, 0
    %p45 = por %p43, %p44
    %s47 = sadd.s32 %s46, 1
    %p50 = scmp.eq.s32.totalorder %s12, 7
    %p51 = scmp.ne.s32.totalorder %s46, %s48
    %p52 = scmp.eq.s32.totalorder %s12, 0
    %p53 = por %p51, %p52
    %p54 = scmp.ne.s32.totalorder %s46, %s48
    %p55 = scmp.eq.s32.totalorder %s17, 7
    %p56 = por %p54, %p55
    %p57 = scmp.ne.s32.totalorder %s48, %s49
    %p58 = scmp.eq.s32.totalorder %s17, 0
    %p59 = por %p57, %p58
    %p60 = scmp.ne.s32.totalorder %s48, %s49
    %p61 = scmp.eq.s32.totalorder %s18, 7
    %p62 = por %p60, %p61
    %p64 = scmp.ne.s32.totalorder %s49, %s63
    %p65 = scmp.eq.s32.totalorder %s18, 0
    %p66 = por %p64, %p65
    %s68 = sadd.s32 %s67, 1
    %p71 = scmp.eq.s32.totalorder %s12, 7
    %p72 = scmp.ne.s32.totalorder %s67, %s69
    %p73 = scmp.eq.s32.totalorder %s12, 0
    %p74 = por %p72, %p73
    %p75 = scmp.ne.s32.totalorder %s67, %s69
    %p76 = scmp.eq.s32.totalorder %s17, 7
    %p77 = por %p75, %p76
    %p78 = scmp.ne.s32.totalorder %s69, %s70
    %p79 = scmp.eq.s32.totalorder %s17, 0
    %p80 = por %p78, %p79
    %p81 = scmp.ne.s32.totalorder %s69, %s70
    %p82 = scmp.eq.s32.totalorder %s18, 7
    %p83 = por %p81, %p82
    %p85 = scmp.ne.s32.totalorder %s70, %s84
    %p86 = scmp.eq.s32.totalorder %s18, 0
    %p87 = por %p85, %p86
    %s89 = sadd.s32 %s88, 1
    %p92 = scmp.eq.s32.totalorder %s12, 7
    %p93 = scmp.ne.s32.totalorder %s88, %s90
    %p94 = scmp.eq.s32.totalorder %s12, 0
    %p95 = por %p93, %p94
    %p96 = scmp.ne.s32.totalorder %s88, %s90
    %p97 = scmp.eq.s32.totalorder %s17, 7
    %p98 = por %p96, %p97
    %p99 = scmp.ne.s32.totalorder %s90, %s91
    %p100 = scmp.eq.s32.totalorder %s17, 0
    %p101 = por %p99, %p100
    %p102 = scmp.ne.s32.totalorder %s90, %s91
    %p103 = scmp.eq.s32.totalorder %s18, 7
    %p104 = por %p102, %p103
    %p106 = scmp.ne.s32.totalorder %s91, %s105
    %p107 = scmp.eq.s32.totalorder %s18, 0
    %p108 = por %p106, %p107
    %s110 = sadd.s32 %s109, 1
    %p113 = scmp.eq.s32.totalorder %s12, 7
    %p114 = scmp.ne.s32.totalorder %s109, %s111
    %p115 = scmp.eq.s32.totalorder %s12, 0
    %p116 = por %p114, %p115
    %p117 = scmp.ne.s32.totalorder %s109, %s111
    %p118 = scmp.eq.s32.totalorder %s17, 7
    %p119 = por %p117, %p118
    %p120 = scmp.ne.s32.totalorder %s111, %s112
    %p121 = scmp.eq.s32.totalorder %s17, 0
    %p122 = por %p120, %p121
    %p123 = scmp.ne.s32.totalorder %s111, %s112
    %p124 = scmp.eq.s32.totalorder %s18, 7
    %p125 = por %p123, %p124
    %p127 = scmp.ne.s32.totalorder %s112, %s126
    %p128 = scmp.eq.s32.totalorder %s18, 0
    %p129 = por %p127, %p128
    %s131 = sadd.s32 %s130, 1
    %p134 = scmp.eq.s32.totalorder %s12, 7
    %p135 = scmp.ne.s32.totalorder %s130, %s132
    %p136 = scmp.eq.s32.totalorder %s12, 0
    %p137 = por %p135, %p136
    %p138 = scmp.ne.s32.totalorder %s130, %s132
    %p139 = scmp.eq.s32.totalorder %s17, 7
    %p140 = por %p138, %p139
    %p141 = scmp.ne.s32.totalorder %s132, %s133
    %p142 = scmp.eq.s32.totalorder %s17, 0
    %p143 = por %p141, %p142
    %p144 = scmp.ne.s32.totalorder %s132, %s133
    %p145 = scmp.eq.s32.totalorder %s18, 7
    %p146 = por %p144, %p145
    %p148 = scmp.ne.s32.totalorder %s133, %s147
    %p149 = scmp.eq.s32.totalorder %s18, 0
    %p150 = por %p148, %p149
    %s151 = ssub.s32 %s12, %s19
    %p152 = scmp.eq.s32.totalorder %s151, 0
    %s154 = sadd.s32 %s153, 1
    %s155 = scalar_select %p152, %s153, %s154
    %p158 = pneg %p152
    %p159 = scmp.eq.s32.totalorder %s12, 7
    %p160 = por %p158, %p159
    %p161 = scmp.ne.s32.totalorder %s153, %s156
    %p162 = scmp.eq.s32.totalorder %s12, 0
    %p163 = por %p161, %p162
    %p164 = scmp.ne.s32.totalorder %s153, %s156
    %p165 = scmp.eq.s32.totalorder %s17, 7
    %p166 = por %p164, %p165
    %p167 = scmp.ne.s32.totalorder %s156, %s157
    %p168 = scmp.eq.s32.totalorder %s17, 0
    %p169 = por %p167, %p168
    %p170 = scmp.ne.s32.totalorder %s156, %s157
    %p171 = scmp.eq.s32.totalorder %s18, 7
    %p172 = por %p170, %p171
    %p174 = scmp.ne.s32.totalorder %s157, %s173
    %p175 = scmp.eq.s32.totalorder %s18, 0
    %p176 = por %p174, %p175
    %p177 = scmp.le.s32.totalorder 1, %s12
    %p178 = scmp.lt.s32.totalorder %s12, 9
    %p179 = pnand %p177, %p178
    %p180 = pneg %p179
    // Predicated region
    $region9: #{context_conditioning_stack.10} parent=5 // pred_check
      _
    $region10: #{context_conditioning_stack.10} parent=5 // pred_check_branch
      %182 = sbr.rel (%p179) target = $region12
    $region11: #{context_conditioning_stack.10} parent=5 // pred_region
      %s183 = ssub.s32 %s12, 1
      // Predicated region
      $region13: #{context_conditioning_stack.10} parent=11 // pred_check
        %p184 = pneg %p59
      $region14: #{context_conditioning_stack.10} parent=11 // pred_check_branch
        %186 = sbr.rel (%p184) target = $region16
      $region15: #{context_conditioning_stack.10} parent=11 // pred_region
        _
      $region16: #{context_conditioning_stack.10} parent=11 // pred_fallthru
        _
      // Predicated region
      $region17: #{context_conditioning_stack.10} parent=11 // pred_check
        %p187 = pneg %p80
      $region18: #{context_conditioning_stack.10} parent=11 // pred_check_branch
        %189 = sbr.rel (%p187) target = $region20
      $region19: #{context_conditioning_stack.10} parent=11 // pred_region
        _
      $region20: #{context_conditioning_stack.10} parent=11 // pred_fallthru
        _
      // Predicated region
      $region21: #{context_conditioning_stack.10} parent=11 // pred_check
        %p190 = pneg %p101
      $region22: #{context_conditioning_stack.10} parent=11 // pred_check_branch
        %192 = sbr.rel (%p190) target = $region24
      $region23: #{context_conditioning_stack.10} parent=11 // pred_region
        _
      $region24: #{context_conditioning_stack.10} parent=11 // pred_fallthru
        _
      // Predicated region
      $region25: #{context_conditioning_stack.10} parent=11 // pred_check
        %p193 = pneg %p122
      $region26: #{context_conditioning_stack.10} parent=11 // pred_check_branch
        %195 = sbr.rel (%p193) target = $region28
      $region27: #{context_conditioning_stack.10} parent=11 // pred_region
        _
      $region28: #{context_conditioning_stack.10} parent=11 // pred_fallthru
        _
      // Predicated region
      $region29: #{context_conditioning_stack.10} parent=11 // pred_check
        %p196 = pneg %p143
      $region30: #{context_conditioning_stack.10} parent=11 // pred_check_branch
        %198 = sbr.rel (%p196) target = $region32
      $region31: #{context_conditioning_stack.10} parent=11 // pred_region
        _
      $region32: #{context_conditioning_stack.10} parent=11 // pred_fallthru
        _
    $region12: #{context_conditioning_stack.10} parent=5 // pred_fallthru
      _
    %p199 = scmp.lt.s32.totalorder %s12, 8
    // Predicated region
    $region33: #{context_conditioning_stack.10} parent=5 // pred_check
      %p200 = pneg %p199
    $region34: #{context_conditioning_stack.10} parent=5 // pred_check_branch
      %202 = sbr.rel (%p200) target = $region36
    $region35: #{context_conditioning_stack.10} parent=5 // pred_region
      // Predicated region
      $region37: #{context_conditioning_stack.10} parent=35 // pred_check
        %p203 = pneg %p32
      $region38: #{context_conditioning_stack.10} parent=35 // pred_check_branch
        %205 = sbr.rel (%p203) target = $region40
      $region39: #{context_conditioning_stack.10} parent=35 // pred_region
        %p206 = scmp.lt.s32.totalorder %s12, 7
        %s207 = scalar_select %p206, %s12, 7
        %s208 = smul.addr %s207, 3
        %s209 = smul.addr %s208, 4
        %s210 = scalar_lea.vmem %s0, %s209
      $region40: #{context_conditioning_stack.10} parent=35 // pred_fallthru
        _
    $region36: #{context_conditioning_stack.10} parent=5 // pred_fallthru
      _
    %p211 = scmp.le.s32.totalorder 1, %s12
    %p212 = scmp.lt.s32.totalorder %s12, 9
    %p213 = pnand %p211, %p212
    %p214 = pneg %p213
    // Predicated region
    $region41: #{context_conditioning_stack.10} parent=5 // pred_check
      _
    $region42: #{context_conditioning_stack.10} parent=5 // pred_check_branch
      %216 = sbr.rel (%p213) target = $region44
    $region43: #{context_conditioning_stack.10} parent=5 // pred_region
      %s217 = ssub.s32 %s12, 1
      %p218 = scmp.lt.s32.totalorder %s17, 7
      %s219 = scalar_select %p218, %s17, 7
      %s220 = smul.addr %s219, 3
      %s221 = smul.addr %s220, 4
      %s222 = scalar_lea.vmem %s0, %s221
      %p223 = pneg %p38
      %p224 = pneg %p35
      %p225 = pneg %p59
      %p226 = pneg %p56
      %p227 = pneg %p80
      %p228 = pneg %p77
      %p229 = pneg %p101
      %p230 = pneg %p98
      %p231 = pneg %p122
      %p232 = pneg %p119
      %p233 = pneg %p143
      %p234 = pneg %p140
      %p235 = pneg %p169
      %p236 = pneg %p166
      %p237 = scmp.lt.s32.totalorder %s17, 7
      %s238 = scalar_select %p237, %s17, 7
      %s239 = smul.addr %s238, 4
      %s240 = scalar_lea.vmem %s6, %s239
      %p241 = scmp.lt.s32.totalorder %s17, 7
      %s242 = scalar_select %p241, %s17, 7
      %s243 = smul.addr %s242, 3
      %s244 = smul.addr %s243, 4
      %s245 = scalar_lea.vmem %s0, %s244
      %p246 = scmp.lt.s32.totalorder %s17, 7
      %s247 = scalar_select %p246, %s17, 7
      %s248 = smul.addr %s247, 4
      %s249 = scalar_lea.vmem %s6, %s248
      %v251 = vld [vmem:[%s245] sm:$0xff]
      %v252 = vunpack.c.l.bf16 %v251
      %v253 = vunpack.c.h.bf16 %v251
      %v254 = vmax.f32 %v252, 0.0
      %v255 = vmax.f32 %v253, 0.0
      %v256 = vpack.c.bf16 %v255, %v254
      %258 = vrot.lane.b32.xlu0 %v256, 11
      %v259 = vpop.permute.xlu0 %258
      %v260 = vrot.slane %v259, 4
      %vm261 = vcmask 89088
      %v262 = vsel %vm261, %v259, %v260
      %vm264 = vcmask 814080
      %265 = vst.msk [vmem:[#allocation3] sm:$0xf] %vm264, %v262
      %v266 = vld [vmem:[%s245] sm:$0xff]
      %v267 = vunpack.c.l.bf16 %v266
      %v268 = vunpack.c.h.bf16 %v266
      %v269 = vmax.f32 %v267, 0.0
      %v270 = vmax.f32 %v268, 0.0
      %v271 = vpack.c.bf16 %v270, %v269
      %273 = vrot.lane.b32.xlu0 %v271, 10
      %v274 = vpop.permute.xlu0 %273
      %v275 = vrot.slane %v274, 4
      %vm276 = vcmask 80896
      %v277 = vsel %vm276, %v274, %v275
      %279 = vst.msk [vmem:[#allocation3 + $0x4] sm:$0xf] %vm264, %v277
      %v280 = vld [vmem:[%s245] sm:$0xff]
      %v281 = vunpack.c.l.bf16 %v280
      %v282 = vunpack.c.h.bf16 %v280
      %v283 = vmax.f32 %v281, 0.0
      %v284 = vmax.f32 %v282, 0.0
      %v285 = vpack.c.bf16 %v284, %v283
      %287 = vrot.lane.b32.xlu0 %v285, 9
      %v288 = vpop.permute.xlu0 %287
      %v289 = vrot.slane %v288, 4
      %vm290 = vcmask 72704
      %v291 = vsel %vm290, %v288, %v289
      %293 = vst.msk [vmem:[#allocation3 + $0x8] sm:$0xf] %vm264, %v291
      %v294 = vld [vmem:[%s245] sm:$0xff]
      %v295 = vunpack.c.l.bf16 %v294
      %v296 = vunpack.c.h.bf16 %v294
      %v297 = vmax.f32 %v295, 0.0
      %v298 = vmax.f32 %v296, 0.0
      %v299 = vpack.c.bf16 %v298, %v297
      %301 = vrot.lane.b32.xlu0 %v299, 1
      %v302 = vpop.permute.xlu0 %301
      %v303 = vrot.slane %v302, 4
      %vm304 = vcmask 7168
      %v305 = vsel %vm304, %v302, %v303
      %307 = vst.msk [vmem:[#allocation3 + $0xc] sm:$0xf] %vm264, %v305
      %v308 = vld [vmem:[%s245 + $0x4] sm:$0xf]
      %v309 = vunpack.c.l.bf16 %v308
      %v310 = vmax.f32 %v309, 0.0
      %v311 = vpack.c.bf16 %v310, %v310
      %312 = vst.msk [vmem:[#allocation3 + $0x10] sm:$0xf] %vm264, %v311
      %v313 = vld [vmem:[%s245 + $0x4] sm:$0xf]
      %v314 = vunpack.c.l.bf16 %v313
      %v315 = vmax.f32 %v314, 0.0
      %v316 = vpack.c.bf16 %v315, %v315
      %318 = vrot.lane.b32.xlu0 %v316, 127
      %v319 = vpop.permute.xlu0 %318
      %321 = vst.msk [vmem:[#allocation3 + $0x14] sm:$0xf] %vm264, %v319
      %v322 = vld [vmem:[%s245 + $0x4] sm:$0xf]
      %v323 = vunpack.c.l.bf16 %v322
      %v324 = vmax.f32 %v323, 0.0
      %v325 = vpack.c.bf16 %v324, %v324
      %327 = vrot.lane.b32.xlu0 %v325, 119
      %v328 = vpop.permute.xlu0 %327
      %330 = vst.msk [vmem:[#allocation3 + $0x18] sm:$0xf] %vm264, %v328
      %v331 = vld [vmem:[%s245 + $0x4] sm:$0xf]
      %v332 = vunpack.c.l.bf16 %v331
      %v333 = vmax.f32 %v332, 0.0
      %v334 = vpack.c.bf16 %v333, %v333
      %336 = vrot.lane.b32.xlu0 %v334, 118
      %v337 = vpop.permute.xlu0 %336
      %339 = vst.msk [vmem:[#allocation3 + $0x1c] sm:$0xf] %vm264, %v337
      %v340 = vld [vmem:[%s245 + $0x4] sm:$0xf]
      %v341 = vunpack.c.l.bf16 %v340
      %v342 = vmax.f32 %v341, 0.0
      %v343 = vpack.c.bf16 %v342, %v342
      %345 = vrot.lane.b32.xlu0 %v343, 117
      %v346 = vpop.permute.xlu0 %345
      %348 = vst.msk [vmem:[#allocation3 + $0x20] sm:$0xf] %vm264, %v346
      %v349 = vld [vmem:[%s1] sm:$0xf]
      %v350 = vld [vmem:[#allocation3] sm:$0xf]
      %v351 = vld [vmem:[#allocation3 + $0x4] sm:$0xf]
      %v352 = vld [vmem:[#allocation3 + $0x8] sm:$0xf]
      %v353 = vld [vmem:[#allocation3 + $0xc] sm:$0xf]
      %v354 = vld [vmem:[#allocation3 + $0x10] sm:$0xf]
      %v355 = vld [vmem:[#allocation3 + $0x14] sm:$0xf]
      %v356 = vld [vmem:[#allocation3 + $0x18] sm:$0xf]
      %v357 = vld [vmem:[#allocation3 + $0x1c] sm:$0xf]
      %v358 = vld [vmem:[#allocation3 + $0x20] sm:$0xf]
      %v359 = vld [vmem:[%s2] sm:$0xff]
      %361 = vset.pattern.permute.xlu0 0
      %362 = vperm.xlu0 %361, %v359
      %v363 = vpop.permute.xlu0 %362
      %v374 = vunpack.c.l.b16 %v350
      %v375 = vunpack.c.l.b16 %v351
      %v376 = vunpack.c.l.b16 %v352
      %v377 = vunpack.c.l.b16 %v353
      %v378 = vunpack.c.l.b16 %v354
      %v379 = vunpack.c.l.b16 %v355
      %v380 = vunpack.c.l.b16 %v356
      %v381 = vunpack.c.l.b16 %v357
      %v382 = vunpack.c.l.b16 %v358
      %v383 = vpack.c.b16 %v375, %v374
      %v384 = vpack.c.b16 %v377, %v376
      %v385 = vpack.c.b16 %v379, %v378
      %v386 = vpack.c.b16 %v381, %v380
      %v387 = vpack.c.b16 %v382, %v382
      %vm392 = vcmask 588800
      %v394 = vsel %vm392, %v349, 0
      %vm396 = vcmask 1043456
      %v398 = vsel %vm396, %v387, 0
      %400 = vmatpush.bf16.msra.mxu0 0
      %401 = vmatpush.bf16.msra.mxu0 0
      %402 = vmatpush.bf16.msra.mxu0 0
      %403 = vmatpush.bf16.msra.mxu0 %v398
      %404 = vmatpush.bf16.msra.mxu0 %v386
      %405 = vmatpush.bf16.msra.mxu0 %v385
      %406 = vmatpush.bf16.msra.mxu0 %v384
      %407 = vmatpush.bf16.msra.mxu0 %v383
      %408 = vmatmul.bf16.gmra.mxu0 %v394
      %v409 = vpop.f32.mrf.mxu0
      %v410 = vadd.f32 %v363, %v409
      %v411 = vpop.f32.mrf.mxu0
      %412 = vdwg.mxu0
      %v413 = vmax.f32 %v410, 0.0
      %v414 = vpack.c.bf16 %v413, %v413
      %v415 = vld [vmem:[%s5] sm:$0x1]
      %v417 = vpack.i.b16 %v415, %v415
      %v419 = vperm.slane %v417, 0
      %v420 = vunpack.c.l.bf16 %v414
      %v421 = vunpack.c.l.bf16 %v419
      %v422 = vmul.f32 %v420, %v421
      %v423 = vpack.c.bf16 %v422, %v422
      %424 = vst [vmem:[#allocation2] sm:$0xf] 0
      %vm425 = vcmask 1044256
      %vm426 = vcmask 818180
      %vm427 = vmor %vm426, %vm425
      %428 = vst.msk [vmem:[#allocation2 + $0x4] sm:$0xff] %vm427, 0
      %429 = vst.msk [vmem:[#allocation2 + $0x4] sm:$0xf] %vm264, %v423
      %v430 = vld [vmem:[#allocation2] sm:$0xff]
      %432 = vrot.lane.b32.xlu0 %v430, 11
      %v433 = vpop.permute.xlu0 %432
      %v434 = vrot.slane %v433, 4
      %v435 = vsel %vm261, %v433, %v434
      %437 = vst.msk [vmem:[#allocation3] sm:$0xf] %vm264, %v435
      %v438 = vld [vmem:[#allocation2] sm:$0xff]
      %440 = vrot.lane.b32.xlu0 %v438, 10
      %v441 = vpop.permute.xlu0 %440
      %v442 = vrot.slane %v441, 4
      %v443 = vsel %vm276, %v441, %v442
      %445 = vst.msk [vmem:[#allocation3 + $0x4] sm:$0xf] %vm264, %v443
      %v446 = vld [vmem:[#allocation2] sm:$0xff]
      %448 = vrot.lane.b32.xlu0 %v446, 9
      %v449 = vpop.permute.xlu0 %448
      %v450 = vrot.slane %v449, 4
      %v451 = vsel %vm290, %v449, %v450
      %453 = vst.msk [vmem:[#allocation3 + $0x8] sm:$0xf] %vm264, %v451
      %v454 = vld [vmem:[#allocation2] sm:$0xff]
      %456 = vrot.lane.b32.xlu0 %v454, 1
      %v457 = vpop.permute.xlu0 %456
      %v458 = vrot.slane %v457, 4
      %v459 = vsel %vm304, %v457, %v458
      %461 = vst.msk [vmem:[#allocation3 + $0xc] sm:$0xf] %vm264, %v459
      %v462 = vld [vmem:[#allocation2 + $0x4] sm:$0xf]
      %463 = vst.msk [vmem:[#allocation3 + $0x10] sm:$0xf] %vm264, %v462
      %v464 = vld [vmem:[#allocation2 + $0x4] sm:$0xf]
      %466 = vrot.lane.b32.xlu0 %v464, 127
      %v467 = vpop.permute.xlu0 %466
      %469 = vst.msk [vmem:[#allocation3 + $0x14] sm:$0xf] %vm264, %v467
      %v470 = vld [vmem:[#allocation2 + $0x4] sm:$0xf]
      %472 = vrot.lane.b32.xlu0 %v470, 119
      %v473 = vpop.permute.xlu0 %472
      %475 = vst.msk [vmem:[#allocation3 + $0x18] sm:$0xf] %vm264, %v473
      %v476 = vld [vmem:[#allocation2 + $0x4] sm:$0xf]
      %478 = vrot.lane.b32.xlu0 %v476, 118
      %v479 = vpop.permute.xlu0 %478
      %481 = vst.msk [vmem:[#allocation3 + $0x1c] sm:$0xf] %vm264, %v479
      %v482 = vld [vmem:[#allocation2 + $0x4] sm:$0xf]
      %484 = vrot.lane.b32.xlu0 %v482, 117
      %v485 = vpop.permute.xlu0 %484
      %487 = vst.msk [vmem:[#allocation3 + $0x20] sm:$0xf] %vm264, %v485
      %v488 = vld [vmem:[%s245 + $0x4] sm:$0xf]
      %489 = vst.msk [vmem:[#allocation3 + $0x24] sm:$0xf] %vm264, %v488
      %v490 = vld [vmem:[%s3] sm:$0xf]
      %v491 = vld [vmem:[#allocation3] sm:$0xf]
      %v492 = vld [vmem:[#allocation3 + $0x4] sm:$0xf]
      %v493 = vld [vmem:[#allocation3 + $0x8] sm:$0xf]
      %v494 = vld [vmem:[#allocation3 + $0xc] sm:$0xf]
      %v495 = vld [vmem:[#allocation3 + $0x10] sm:$0xf]
      %v496 = vld [vmem:[#allocation3 + $0x14] sm:$0xf]
      %v497 = vld [vmem:[#allocation3 + $0x18] sm:$0xf]
      %v498 = vld [vmem:[#allocation3 + $0x1c] sm:$0xf]
      %v499 = vld [vmem:[#allocation3 + $0x20] sm:$0xf]
      %v500 = vld [vmem:[#allocation3 + $0x24] sm:$0xf]
      %v501 = vld [vmem:[%s4] sm:$0xff]
      %503 = vset.pattern.permute.xlu0 0
      %504 = vperm.xlu0 %503, %v501
      %v505 = vpop.permute.xlu0 %504
      %v517 = vunpack.c.l.b16 %v491
      %v518 = vunpack.c.l.b16 %v492
      %v519 = vunpack.c.l.b16 %v493
      %v520 = vunpack.c.l.b16 %v494
      %v521 = vunpack.c.l.b16 %v495
      %v522 = vunpack.c.l.b16 %v496
      %v523 = vunpack.c.l.b16 %v497
      %v524 = vunpack.c.l.b16 %v498
      %v525 = vunpack.c.l.b16 %v499
      %v526 = vunpack.c.l.b16 %v500
      %v527 = vpack.c.b16 %v518, %v517
      %v528 = vpack.c.b16 %v520, %v519
      %v529 = vpack.c.b16 %v522, %v521
      %v530 = vpack.c.b16 %v524, %v523
      %v531 = vpack.c.b16 %v526, %v525
      %vm537 = vcmask 654336
      %v539 = vsel %vm537, %v490, 0
      %541 = vmatpush.bf16.msra.mxu0 0
      %542 = vmatpush.bf16.msra.mxu0 0
      %543 = vmatpush.bf16.msra.mxu0 0
      %544 = vmatpush.bf16.msra.mxu0 %v531
      %545 = vmatpush.bf16.msra.mxu0 %v530
      %546 = vmatpush.bf16.msra.mxu0 %v529
      %547 = vmatpush.bf16.msra.mxu0 %v528
      %548 = vmatpush.bf16.msra.mxu0 %v527
      %549 = vmatmul.bf16.gmra.mxu0 %v539
      %v550 = vpop.f32.mrf.mxu0
      %v551 = vadd.f32 %v505, %v550
      %v552 = vpop.f32.mrf.mxu0
      %553 = vdwg.mxu0
      %v554 = vpack.c.bf16 %v551, %v551
      %555 = vst.msk [vmem:[%s249] sm:$0xf] %vm264, %v554
      %p556 = scmp.lt.s32.totalorder %s17, 7
      %s557 = scalar_select %p556, %s17, 7
      %s558 = smul.addr %s557, 4
      %s559 = scalar_lea.vmem %s6, %s558
      // Predicated region
      $region45: #{context_conditioning_stack.10} parent=43 // pred_check
        %p560 = pneg %p166
      $region46: #{context_conditioning_stack.10} parent=43 // pred_check_branch
        %562 = sbr.rel (%p560) target = $region48
      $region47: #{context_conditioning_stack.10} parent=43 // pred_region
        _
      $region48: #{context_conditioning_stack.10} parent=43 // pred_fallthru
        _
    $region44: #{context_conditioning_stack.10} parent=5 // pred_fallthru
      _
    %p563 = scmp.le.s32.totalorder 2, %s12
    // Predicated region
    $region49: #{context_conditioning_stack.10} parent=5 // pred_check
      %p564 = pneg %p563
    $region50: #{context_conditioning_stack.10} parent=5 // pred_check_branch
      %566 = sbr.rel (%p564) target = $region52
    $region51: #{context_conditioning_stack.10} parent=5 // pred_region
      %s567 = ssub.s32 %s12, 2
      // Predicated region
      $region53: #{context_conditioning_stack.10} parent=51 // pred_check
        %p568 = pneg %p172
      $region54: #{context_conditioning_stack.10} parent=51 // pred_check_branch
        %570 = sbr.rel (%p568) target = $region56
      $region55: #{context_conditioning_stack.10} parent=51 // pred_region
        %p571 = scmp.lt.s32.totalorder %s18, 7
        %s572 = scalar_select %p571, %s18, 7
        %s573 = smul.addr %s572, 4
        %s574 = scalar_lea.vmem %s6, %s573
      $region56: #{context_conditioning_stack.10} parent=51 // pred_fallthru
        _
    $region52: #{context_conditioning_stack.10} parent=5 // pred_fallthru
      _
  $region6: #{context_conditioning_stack.10} parent=0 // loop_footer
    %s16 = sadd.s32 1, %s12
  $region7: #{context_conditioning_stack.10} parent=0 // loop_footer_branch
    %11 = sbr.rel target = $region3
  $region8: #{context_conditioning_stack.10} parent=0 // loop_exit
    _

// kernel: context_conditioning_stack.11
$region0: #{context_conditioning_stack.11}
  #allocation0 [shape = 'u32[]', space=smem, size = 0x4, offset = 0x4, fixed_abs, tag = 'smem constant byte address 0x4 - core index']
  #allocation1 [shape = 'u32[72,128]{1,0:T(1,128)}', space=vmem, size = 0x9000, scoped, tag = 'internal scratch']
  #allocation2 [shape = 'bf16[16,292]{1,0:T(8,128)(2,1)}', space=vmem, size = 0x3000, scoped, tag = 'scratch operand']
  #allocation3 [shape = 'bf16[152,36]{1,0:T(8,128)(2,1)}', space=vmem, size = 0x9800, scoped, tag = 'scratch operand']
  %s0 = inlined_call_operand.vmem [shape: bf16[8,8,292], index: 0, kind: input, shape index: {}]
  %s1 = inlined_call_operand.vmem [shape: bf16[16,72], index: 1, kind: input, shape index: {}]
  %s2 = inlined_call_operand.vmem [shape: f32[16,1], index: 2, kind: input, shape index: {}]
  %s3 = inlined_call_operand.vmem [shape: bf16[16,152], index: 3, kind: input, shape index: {}]
  %s4 = inlined_call_operand.vmem [shape: f32[16,1], index: 4, kind: input, shape index: {}]
  %s5 = inlined_call_operand.vmem [shape: bf16[1,36], index: 5, kind: input, shape index: {}]
  %s6 = inlined_call_operand.vmem [shape: bf16[8,16,36], index: 6, kind: output, shape index: {}]
  %s7 = sld [smem:[#allocation0]]
  $region57: #{context_conditioning_stack.11} parent=0
    _
  %s9 = ssub.s32 1, %s7
  %s10 = scalar_select 0, %s9, %s7
  loop: start=0, step=1, limit=10
  $region2: #{context_conditioning_stack.11} parent=0 // loop_pre_header
    _
  $region3: #{context_conditioning_stack.11} parent=0 // loop_header
    %s12 = sphi 0, %s16
    %p13 = scmp.ge.s32.totalorder %s12, 10
    %s22 = sphi 0, %s24
    %s25 = sphi 0, %s22
    %s26 = sphi 0, %s25
    %s42 = sphi 0, %s26
    %s46 = sphi 0, %s46
    %s48 = sphi 0, %s46
    %s49 = sphi 0, %s48
    %s63 = sphi 0, %s49
    %s67 = sphi 0, %s67
    %s69 = sphi 0, %s67
    %s70 = sphi 0, %s69
    %s84 = sphi 0, %s70
    %s88 = sphi 0, %s88
    %s90 = sphi 0, %s88
    %s91 = sphi 0, %s90
    %s105 = sphi 0, %s91
    %s109 = sphi 0, %s109
    %s111 = sphi 0, %s109
    %s112 = sphi 0, %s111
    %s126 = sphi 0, %s112
    %s130 = sphi 0, %s130
    %s132 = sphi 0, %s130
    %s133 = sphi 0, %s132
    %s147 = sphi 0, %s133
    %s153 = sphi 0, %s155
    %s156 = sphi 0, %s153
    %s157 = sphi 0, %s156
    %s173 = sphi 0, %s157
  $region4: #{context_conditioning_stack.11} parent=0 // loop_header_branch
    %15 = sbr.rel (%p13) target = $region8
  $region5: #{context_conditioning_stack.11} parent=0 // loop_body
    %s17 = ssub.s32 %s12, 1
    %s18 = ssub.s32 %s12, 2
    %s19 = sadd.s32 %s12, 1
    %s20 = ssub.s32 %s12, %s19
    %p21 = scmp.eq.s32.totalorder %s20, 0
    %s23 = sadd.s32 %s22, 1
    %s24 = scalar_select %p21, %s22, %s23
    %p27 = pneg %p21
    %p28 = scmp.eq.s32.totalorder %s12, 7
    %p29 = por %p27, %p28
    %p30 = scmp.ne.s32.totalorder %s22, %s25
    %p31 = scmp.eq.s32.totalorder %s12, 0
    %p32 = por %p30, %p31
    %p33 = scmp.ne.s32.totalorder %s22, %s25
    %p34 = scmp.eq.s32.totalorder %s17, 7
    %p35 = por %p33, %p34
    %p36 = scmp.ne.s32.totalorder %s25, %s26
    %p37 = scmp.eq.s32.totalorder %s17, 0
    %p38 = por %p36, %p37
    %p39 = scmp.ne.s32.totalorder %s25, %s26
    %p40 = scmp.eq.s32.totalorder %s18, 7
    %p41 = por %p39, %p40
    %p43 = scmp.ne.s32.totalorder %s26, %s42
    %p44 = scmp.eq.s32.totalorder %s18, 0
    %p45 = por %p43, %p44
    %s47 = sadd.s32 %s46, 1
    %p50 = scmp.eq.s32.totalorder %s12, 7
    %p51 = scmp.ne.s32.totalorder %s46, %s48
    %p52 = scmp.eq.s32.totalorder %s12, 0
    %p53 = por %p51, %p52
    %p54 = scmp.ne.s32.totalorder %s46, %s48
    %p55 = scmp.eq.s32.totalorder %s17, 7
    %p56 = por %p54, %p55
    %p57 = scmp.ne.s32.totalorder %s48, %s49
    %p58 = scmp.eq.s32.totalorder %s17, 0
    %p59 = por %p57, %p58
    %p60 = scmp.ne.s32.totalorder %s48, %s49
    %p61 = scmp.eq.s32.totalorder %s18, 7
    %p62 = por %p60, %p61
    %p64 = scmp.ne.s32.totalorder %s49, %s63
    %p65 = scmp.eq.s32.totalorder %s18, 0
    %p66 = por %p64, %p65
    %s68 = sadd.s32 %s67, 1
    %p71 = scmp.eq.s32.totalorder %s12, 7
    %p72 = scmp.ne.s32.totalorder %s67, %s69
    %p73 = scmp.eq.s32.totalorder %s12, 0
    %p74 = por %p72, %p73
    %p75 = scmp.ne.s32.totalorder %s67, %s69
    %p76 = scmp.eq.s32.totalorder %s17, 7
    %p77 = por %p75, %p76
    %p78 = scmp.ne.s32.totalorder %s69, %s70
    %p79 = scmp.eq.s32.totalorder %s17, 0
    %p80 = por %p78, %p79
    %p81 = scmp.ne.s32.totalorder %s69, %s70
    %p82 = scmp.eq.s32.totalorder %s18, 7
    %p83 = por %p81, %p82
    %p85 = scmp.ne.s32.totalorder %s70, %s84
    %p86 = scmp.eq.s32.totalorder %s18, 0
    %p87 = por %p85, %p86
    %s89 = sadd.s32 %s88, 1
    %p92 = scmp.eq.s32.totalorder %s12, 7
    %p93 = scmp.ne.s32.totalorder %s88, %s90
    %p94 = scmp.eq.s32.totalorder %s12, 0
    %p95 = por %p93, %p94
    %p96 = scmp.ne.s32.totalorder %s88, %s90
    %p97 = scmp.eq.s32.totalorder %s17, 7
    %p98 = por %p96, %p97
    %p99 = scmp.ne.s32.totalorder %s90, %s91
    %p100 = scmp.eq.s32.totalorder %s17, 0
    %p101 = por %p99, %p100
    %p102 = scmp.ne.s32.totalorder %s90, %s91
    %p103 = scmp.eq.s32.totalorder %s18, 7
    %p104 = por %p102, %p103
    %p106 = scmp.ne.s32.totalorder %s91, %s105
    %p107 = scmp.eq.s32.totalorder %s18, 0
    %p108 = por %p106, %p107
    %s110 = sadd.s32 %s109, 1
    %p113 = scmp.eq.s32.totalorder %s12, 7
    %p114 = scmp.ne.s32.totalorder %s109, %s111
    %p115 = scmp.eq.s32.totalorder %s12, 0
    %p116 = por %p114, %p115
    %p117 = scmp.ne.s32.totalorder %s109, %s111
    %p118 = scmp.eq.s32.totalorder %s17, 7
    %p119 = por %p117, %p118
    %p120 = scmp.ne.s32.totalorder %s111, %s112
    %p121 = scmp.eq.s32.totalorder %s17, 0
    %p122 = por %p120, %p121
    %p123 = scmp.ne.s32.totalorder %s111, %s112
    %p124 = scmp.eq.s32.totalorder %s18, 7
    %p125 = por %p123, %p124
    %p127 = scmp.ne.s32.totalorder %s112, %s126
    %p128 = scmp.eq.s32.totalorder %s18, 0
    %p129 = por %p127, %p128
    %s131 = sadd.s32 %s130, 1
    %p134 = scmp.eq.s32.totalorder %s12, 7
    %p135 = scmp.ne.s32.totalorder %s130, %s132
    %p136 = scmp.eq.s32.totalorder %s12, 0
    %p137 = por %p135, %p136
    %p138 = scmp.ne.s32.totalorder %s130, %s132
    %p139 = scmp.eq.s32.totalorder %s17, 7
    %p140 = por %p138, %p139
    %p141 = scmp.ne.s32.totalorder %s132, %s133
    %p142 = scmp.eq.s32.totalorder %s17, 0
    %p143 = por %p141, %p142
    %p144 = scmp.ne.s32.totalorder %s132, %s133
    %p145 = scmp.eq.s32.totalorder %s18, 7
    %p146 = por %p144, %p145
    %p148 = scmp.ne.s32.totalorder %s133, %s147
    %p149 = scmp.eq.s32.totalorder %s18, 0
    %p150 = por %p148, %p149
    %s151 = ssub.s32 %s12, %s19
    %p152 = scmp.eq.s32.totalorder %s151, 0
    %s154 = sadd.s32 %s153, 1
    %s155 = scalar_select %p152, %s153, %s154
    %p158 = pneg %p152
    %p159 = scmp.eq.s32.totalorder %s12, 7
    %p160 = por %p158, %p159
    %p161 = scmp.ne.s32.totalorder %s153, %s156
    %p162 = scmp.eq.s32.totalorder %s12, 0
    %p163 = por %p161, %p162
    %p164 = scmp.ne.s32.totalorder %s153, %s156
    %p165 = scmp.eq.s32.totalorder %s17, 7
    %p166 = por %p164, %p165
    %p167 = scmp.ne.s32.totalorder %s156, %s157
    %p168 = scmp.eq.s32.totalorder %s17, 0
    %p169 = por %p167, %p168
    %p170 = scmp.ne.s32.totalorder %s156, %s157
    %p171 = scmp.eq.s32.totalorder %s18, 7
    %p172 = por %p170, %p171
    %p174 = scmp.ne.s32.totalorder %s157, %s173
    %p175 = scmp.eq.s32.totalorder %s18, 0
    %p176 = por %p174, %p175
    %p177 = scmp.le.s32.totalorder 1, %s12
    %p178 = scmp.lt.s32.totalorder %s12, 9
    %p179 = pnand %p177, %p178
    %p180 = pneg %p179
    // Predicated region
    $region9: #{context_conditioning_stack.11} parent=5 // pred_check
      _
    $region10: #{context_conditioning_stack.11} parent=5 // pred_check_branch
      %182 = sbr.rel (%p179) target = $region12
    $region11: #{context_conditioning_stack.11} parent=5 // pred_region
      %s183 = ssub.s32 %s12, 1
      // Predicated region
      $region13: #{context_conditioning_stack.11} parent=11 // pred_check
        %p184 = pneg %p59
      $region14: #{context_conditioning_stack.11} parent=11 // pred_check_branch
        %186 = sbr.rel (%p184) target = $region16
      $region15: #{context_conditioning_stack.11} parent=11 // pred_region
        _
      $region16: #{context_conditioning_stack.11} parent=11 // pred_fallthru
        _
      // Predicated region
      $region17: #{context_conditioning_stack.11} parent=11 // pred_check
        %p187 = pneg %p80
      $region18: #{context_conditioning_stack.11} parent=11 // pred_check_branch
        %189 = sbr.rel (%p187) target = $region20
      $region19: #{context_conditioning_stack.11} parent=11 // pred_region
        _
      $region20: #{context_conditioning_stack.11} parent=11 // pred_fallthru
        _
      // Predicated region
      $region21: #{context_conditioning_stack.11} parent=11 // pred_check
        %p190 = pneg %p101
      $region22: #{context_conditioning_stack.11} parent=11 // pred_check_branch
        %192 = sbr.rel (%p190) target = $region24
      $region23: #{context_conditioning_stack.11} parent=11 // pred_region
        _
      $region24: #{context_conditioning_stack.11} parent=11 // pred_fallthru
        _
      // Predicated region
      $region25: #{context_conditioning_stack.11} parent=11 // pred_check
        %p193 = pneg %p122
      $region26: #{context_conditioning_stack.11} parent=11 // pred_check_branch
        %195 = sbr.rel (%p193) target = $region28
      $region27: #{context_conditioning_stack.11} parent=11 // pred_region
        _
      $region28: #{context_conditioning_stack.11} parent=11 // pred_fallthru
        _
      // Predicated region
      $region29: #{context_conditioning_stack.11} parent=11 // pred_check
        %p196 = pneg %p143
      $region30: #{context_conditioning_stack.11} parent=11 // pred_check_branch
        %198 = sbr.rel (%p196) target = $region32
      $region31: #{context_conditioning_stack.11} parent=11 // pred_region
        _
      $region32: #{context_conditioning_stack.11} parent=11 // pred_fallthru
        _
    $region12: #{context_conditioning_stack.11} parent=5 // pred_fallthru
      _
    %p199 = scmp.lt.s32.totalorder %s12, 8
    // Predicated region
    $region33: #{context_conditioning_stack.11} parent=5 // pred_check
      %p200 = pneg %p199
    $region34: #{context_conditioning_stack.11} parent=5 // pred_check_branch
      %202 = sbr.rel (%p200) target = $region36
    $region35: #{context_conditioning_stack.11} parent=5 // pred_region
      // Predicated region
      $region37: #{context_conditioning_stack.11} parent=35 // pred_check
        %p203 = pneg %p32
      $region38: #{context_conditioning_stack.11} parent=35 // pred_check_branch
        %205 = sbr.rel (%p203) target = $region40
      $region39: #{context_conditioning_stack.11} parent=35 // pred_region
        %p206 = scmp.lt.s32.totalorder %s12, 7
        %s207 = scalar_select %p206, %s12, 7
        %s208 = smul.addr %s207, 3
        %s209 = smul.addr %s208, 4
        %s210 = scalar_lea.vmem %s0, %s209
      $region40: #{context_conditioning_stack.11} parent=35 // pred_fallthru
        _
    $region36: #{context_conditioning_stack.11} parent=5 // pred_fallthru
      _
    %p211 = scmp.le.s32.totalorder 1, %s12
    %p212 = scmp.lt.s32.totalorder %s12, 9
    %p213 = pnand %p211, %p212
    %p214 = pneg %p213
    // Predicated region
    $region41: #{context_conditioning_stack.11} parent=5 // pred_check
      _
    $region42: #{context_conditioning_stack.11} parent=5 // pred_check_branch
      %216 = sbr.rel (%p213) target = $region44
    $region43: #{context_conditioning_stack.11} parent=5 // pred_region
      %s217 = ssub.s32 %s12, 1
      %p218 = scmp.lt.s32.totalorder %s17, 7
      %s219 = scalar_select %p218, %s17, 7
      %s220 = smul.addr %s219, 3
      %s221 = smul.addr %s220, 4
      %s222 = scalar_lea.vmem %s0, %s221
      %p223 = pneg %p38
      %p224 = pneg %p35
      %p225 = pneg %p59
      %p226 = pneg %p56
      %p227 = pneg %p80
      %p228 = pneg %p77
      %p229 = pneg %p101
      %p230 = pneg %p98
      %p231 = pneg %p122
      %p232 = pneg %p119
      %p233 = pneg %p143
      %p234 = pneg %p140
      %p235 = pneg %p169
      %p236 = pneg %p166
      %p237 = scmp.lt.s32.totalorder %s17, 7
      %s238 = scalar_select %p237, %s17, 7
      %s239 = smul.addr %s238, 2
      %s240 = smul.addr %s239, 4
      %s241 = scalar_lea.vmem %s6, %s240
      %p242 = scmp.lt.s32.totalorder %s17, 7
      %s243 = scalar_select %p242, %s17, 7
      %s244 = smul.addr %s243, 3
      %s245 = smul.addr %s244, 4
      %s246 = scalar_lea.vmem %s0, %s245
      %p247 = scmp.lt.s32.totalorder %s17, 7
      %s248 = scalar_select %p247, %s17, 7
      %s249 = smul.addr %s248, 2
      %s250 = smul.addr %s249, 4
      %s251 = scalar_lea.vmem %s6, %s250
      %v253 = vld [vmem:[%s246] sm:$0xff]
      %v254 = vunpack.c.l.bf16 %v253
      %v255 = vunpack.c.h.bf16 %v253
      %v256 = vmax.f32 %v254, 0.0
      %v257 = vmax.f32 %v255, 0.0
      %v258 = vpack.c.bf16 %v257, %v256
      %260 = vrot.lane.b32.xlu0 %v258, 7
      %v261 = vpop.permute.xlu0 %260
      %v262 = vrot.slane %v261, 4
      %vm263 = vcmask 56320
      %v264 = vsel %vm263, %v261, %v262
      %vm266 = vcmask 289792
      %267 = vst.msk [vmem:[#allocation3] sm:$0xf] %vm266, %v264
      %v268 = vld [vmem:[%s246] sm:$0xff]
      %v269 = vunpack.c.l.bf16 %v268
      %v270 = vunpack.c.h.bf16 %v268
      %v271 = vmax.f32 %v269, 0.0
      %v272 = vmax.f32 %v270, 0.0
      %v273 = vpack.c.bf16 %v272, %v271
      %275 = vrot.lane.b32.xlu0 %v273, 6
      %v276 = vpop.permute.xlu0 %275
      %v277 = vrot.slane %v276, 4
      %vm278 = vcmask 48128
      %v279 = vsel %vm278, %v276, %v277
      %281 = vst.msk [vmem:[#allocation3 + $0x4] sm:$0xf] %vm266, %v279
      %v282 = vld [vmem:[%s246] sm:$0xff]
      %v283 = vunpack.c.l.bf16 %v282
      %v284 = vunpack.c.h.bf16 %v282
      %v285 = vmax.f32 %v283, 0.0
      %v286 = vmax.f32 %v284, 0.0
      %v287 = vpack.c.bf16 %v286, %v285
      %289 = vrot.lane.b32.xlu0 %v287, 5
      %v290 = vpop.permute.xlu0 %289
      %v291 = vrot.slane %v290, 4
      %vm292 = vcmask 39936
      %v293 = vsel %vm292, %v290, %v291
      %295 = vst.msk [vmem:[#allocation3 + $0x8] sm:$0xf] %vm266, %v293
      %v296 = vld [vmem:[%s246] sm:$0xff]
      %v297 = vunpack.c.l.bf16 %v296
      %v298 = vunpack.c.h.bf16 %v296
      %v299 = vmax.f32 %v297, 0.0
      %v300 = vmax.f32 %v298, 0.0
      %v301 = vpack.c.bf16 %v300, %v299
      %303 = vrot.lane.b32.xlu0 %v301, 1
      %v304 = vpop.permute.xlu0 %303
      %v305 = vrot.slane %v304, 4
      %vm306 = vcmask 7168
      %v307 = vsel %vm306, %v304, %v305
      %309 = vst.msk [vmem:[#allocation3 + $0xc] sm:$0xf] %vm266, %v307
      %v310 = vld [vmem:[%s246 + $0x4] sm:$0xf]
      %v311 = vunpack.c.l.bf16 %v310
      %v312 = vmax.f32 %v311, 0.0
      %v313 = vpack.c.bf16 %v312, %v312
      %314 = vst.msk [vmem:[#allocation3 + $0x10] sm:$0xf] %vm266, %v313
      %v315 = vld [vmem:[%s246 + $0x4] sm:$0xf]
      %v316 = vunpack.c.l.bf16 %v315
      %v317 = vmax.f32 %v316, 0.0
      %v318 = vpack.c.bf16 %v317, %v317
      %320 = vrot.lane.b32.xlu0 %v318, 127
      %v321 = vpop.permute.xlu0 %320
      %323 = vst.msk [vmem:[#allocation3 + $0x14] sm:$0xf] %vm266, %v321
      %v324 = vld [vmem:[%s246 + $0x4] sm:$0xf]
      %v325 = vunpack.c.l.bf16 %v324
      %v326 = vmax.f32 %v325, 0.0
      %v327 = vpack.c.bf16 %v326, %v326
      %329 = vrot.lane.b32.xlu0 %v327, 123
      %v330 = vpop.permute.xlu0 %329
      %332 = vst.msk [vmem:[#allocation3 + $0x18] sm:$0xf] %vm266, %v330
      %v333 = vld [vmem:[%s246 + $0x4] sm:$0xf]
      %v334 = vunpack.c.l.bf16 %v333
      %v335 = vmax.f32 %v334, 0.0
      %v336 = vpack.c.bf16 %v335, %v335
      %338 = vrot.lane.b32.xlu0 %v336, 122
      %v339 = vpop.permute.xlu0 %338
      %341 = vst.msk [vmem:[#allocation3 + $0x1c] sm:$0xf] %vm266, %v339
      %v342 = vld [vmem:[%s246 + $0x4] sm:$0xf]
      %v343 = vunpack.c.l.bf16 %v342
      %v344 = vmax.f32 %v343, 0.0
      %v345 = vpack.c.bf16 %v344, %v344
      %347 = vrot.lane.b32.xlu0 %v345, 121
      %v348 = vpop.permute.xlu0 %347
      %350 = vst.msk [vmem:[#allocation3 + $0x20] sm:$0xf] %vm266, %v348
      %v351 = vld [vmem:[%s1] sm:$0xf]
      %v352 = vld [vmem:[%s1 + $0x4] sm:$0xf]
      %v353 = vld [vmem:[#allocation3] sm:$0xf]
      %v354 = vld [vmem:[#allocation3 + $0x4] sm:$0xf]
      %v355 = vld [vmem:[#allocation3 + $0x8] sm:$0xf]
      %v356 = vld [vmem:[#allocation3 + $0xc] sm:$0xf]
      %v357 = vld [vmem:[#allocation3 + $0x10] sm:$0xf]
      %v358 = vld [vmem:[#allocation3 + $0x14] sm:$0xf]
      %v359 = vld [vmem:[#allocation3 + $0x18] sm:$0xf]
      %v360 = vld [vmem:[#allocation3 + $0x1c] sm:$0xf]
      %v361 = vld [vmem:[#allocation3 + $0x20] sm:$0xf]
      %v362 = vld [vmem:[%s2] sm:$0xff]
      %v363 = vld [vmem:[%s2 + $0x8] sm:$0xff]
      %365 = vset.pattern.permute.xlu0 0
      %366 = vperm.xlu0 %365, %v362
      %v367 = vpop.permute.xlu0 %366
      %370 = vset.pattern.permute.xlu0 0
      %371 = vperm.xlu0 %370, %v363
      %v372 = vpop.permute.xlu0 %371
      %v376 = vunpack.c.l.b16 %v351
      %v377 = vunpack.c.l.b16 %v352
      %v378 = vpack.c.b16 %v377, %v376
      %v388 = vunpack.c.l.b16 %v353
      %v389 = vunpack.c.l.b16 %v354
      %v390 = vunpack.c.l.b16 %v355
      %v391 = vunpack.c.l.b16 %v356
      %v392 = vunpack.c.l.b16 %v357
      %v393 = vunpack.c.l.b16 %v358
      %v394 = vunpack.c.l.b16 %v359
      %v395 = vunpack.c.l.b16 %v360
      %v396 = vunpack.c.l.b16 %v361
      %v397 = vpack.c.b16 %v389, %v388
      %v398 = vpack.c.b16 %v391, %v390
      %v399 = vpack.c.b16 %v393, %v392
      %v400 = vpack.c.b16 %v395, %v394
      %v401 = vpack.c.b16 %v396, %v396
      %vm406 = vcmask 588800
      %v408 = vsel %vm406, %v378, 0
      %vm410 = vcmask 1043456
      %v412 = vsel %vm410, %v401, 0
      %414 = vmatpush.bf16.msra.mxu0 0
      %415 = vmatpush.bf16.msra.mxu0 0
      %416 = vmatpush.bf16.msra.mxu0 0
      %417 = vmatpush.bf16.msra.mxu0 %v412
      %418 = vmatpush.bf16.msra.mxu0 %v400
      %419 = vmatpush.bf16.msra.mxu0 %v399
      %420 = vmatpush.bf16.msra.mxu0 %v398
      %421 = vmatpush.bf16.msra.mxu0 %v397
      %422 = vmatmul.bf16.gmra.mxu0 %v408
      %v423 = vpop.f32.mrf.mxu0
      %v424 = vadd.f32 %v367, %v423
      %v425 = vpop.f32.mrf.mxu0
      %v426 = vadd.f32 %v372, %v425
      %427 = vdwg.mxu0
      %v428 = vmax.f32 %v424, 0.0
      %v429 = vmax.f32 %v426, 0.0
      %v430 = vpack.c.bf16 %v428, %v428
      %v431 = vpack.c.bf16 %v429, %v429
      %v432 = vld [vmem:[%s5] sm:$0x1]
      %v434 = vpack.i.b16 %v432, %v432
      %v436 = vperm.slane %v434, 0
      %v437 = vunpack.c.l.bf16 %v430
      %v438 = vunpack.c.l.bf16 %v431
      %v439 = vunpack.c.l.bf16 %v436
      %v440 = vmul.f32 %v437, %v439
      %v441 = vmul.f32 %v438, %v439
      %v442 = vpack.c.bf16 %v440, %v440
      %v443 = vpack.c.bf16 %v441, %v441
      %444 = vst [vmem:[#allocation2] sm:$0xf] 0
      %445 = vst [vmem:[#allocation2 + $0xc] sm:$0xf] 0
      %vm446 = vcmask 1043744
      %vm447 = vcmask 293892
      %vm448 = vmor %vm447, %vm446
      %449 = vst.msk [vmem:[#allocation2 + $0x4] sm:$0xff] %vm448, 0
      %450 = vst.msk [vmem:[#allocation2 + $0x10] sm:$0xff] %vm448, 0
      %451 = vst.msk [vmem:[#allocation2 + $0x4] sm:$0xf] %vm266, %v442
      %452 = vst.msk [vmem:[#allocation2 + $0x10] sm:$0xf] %vm266, %v443
      %v453 = vld [vmem:[#allocation2] sm:$0xff]
      %v454 = vld [vmem:[#allocation2 + $0xc] sm:$0xff]
      %457 = vrot.lane.b32.xlu0 %v453, 7
      %v458 = vpop.permute.xlu0 %457
      %459 = vrot.lane.b32.xlu0 %v454, 7
      %v460 = vpop.permute.xlu0 %459
      %v461 = vrot.slane %v458, 4
      %v462 = vrot.slane %v460, 4
      %v463 = vsel %vm263, %v458, %v461
      %v464 = vsel %vm263, %v460, %v462
      %467 = vst.msk [vmem:[#allocation3] sm:$0xf] %vm266, %v463
      %468 = vst.msk [vmem:[#allocation3 + $0x4] sm:$0xf] %vm266, %v464
      %v469 = vld [vmem:[#allocation2] sm:$0xff]
      %v470 = vld [vmem:[#allocation2 + $0xc] sm:$0xff]
      %473 = vrot.lane.b32.xlu0 %v469, 6
      %v474 = vpop.permute.xlu0 %473
      %475 = vrot.lane.b32.xlu0 %v470, 6
      %v476 = vpop.permute.xlu0 %475
      %v477 = vrot.slane %v474, 4
      %v478 = vrot.slane %v476, 4
      %v479 = vsel %vm278, %v474, %v477
      %v480 = vsel %vm278, %v476, %v478
      %483 = vst.msk [vmem:[#allocation3 + $0x8] sm:$0xf] %vm266, %v479
      %484 = vst.msk [vmem:[#allocation3 + $0xc] sm:$0xf] %vm266, %v480
      %v485 = vld [vmem:[#allocation2] sm:$0xff]
      %v486 = vld [vmem:[#allocation2 + $0xc] sm:$0xff]
      %489 = vrot.lane.b32.xlu0 %v485, 5
      %v490 = vpop.permute.xlu0 %489
      %491 = vrot.lane.b32.xlu0 %v486, 5
      %v492 = vpop.permute.xlu0 %491
      %v493 = vrot.slane %v490, 4
      %v494 = vrot.slane %v492, 4
      %v495 = vsel %vm292, %v490, %v493
      %v496 = vsel %vm292, %v492, %v494
      %499 = vst.msk [vmem:[#allocation3 + $0x10] sm:$0xf] %vm266, %v495
      %500 = vst.msk [vmem:[#allocation3 + $0x14] sm:$0xf] %vm266, %v496
      %v501 = vld [vmem:[#allocation2] sm:$0xff]
      %v502 = vld [vmem:[#allocation2 + $0xc] sm:$0xff]
      %505 = vrot.lane.b32.xlu0 %v501, 1
      %v506 = vpop.permute.xlu0 %505
      %507 = vrot.lane.b32.xlu0 %v502, 1
      %v508 = vpop.permute.xlu0 %507
      %v509 = vrot.slane %v506, 4
      %v510 = vrot.slane %v508, 4
      %v511 = vsel %vm306, %v506, %v509
      %v512 = vsel %vm306, %v508, %v510
      %515 = vst.msk [vmem:[#allocation3 + $0x18] sm:$0xf] %vm266, %v511
      %516 = vst.msk [vmem:[#allocation3 + $0x1c] sm:$0xf] %vm266, %v512
      %v517 = vld [vmem:[#allocation2 + $0x4] sm:$0xf]
      %v518 = vld [vmem:[#allocation2 + $0x10] sm:$0xf]
      %519 = vst.msk [vmem:[#allocation3 + $0x20] sm:$0xf] %vm266, %v517
      %520 = vst.msk [vmem:[#allocation3 + $0x24] sm:$0xf] %vm266, %v518
      %v521 = vld [vmem:[#allocation2 + $0x4] sm:$0xf]
      %v522 = vld [vmem:[#allocation2 + $0x10] sm:$0xf]
      %525 = vrot.lane.b32.xlu0 %v521, 127
      %v526 = vpop.permute.xlu0 %525
      %527 = vrot.lane.b32.xlu0 %v522, 127
      %v528 = vpop.permute.xlu0 %527
      %531 = vst.msk [vmem:[#allocation3 + $0x28] sm:$0xf] %vm266, %v526
      %532 = vst.msk [vmem:[#allocation3 + $0x2c] sm:$0xf] %vm266, %v528
      %v533 = vld [vmem:[#allocation2 + $0x4] sm:$0xf]
      %v534 = vld [vmem:[#allocation2 + $0x10] sm:$0xf]
      %537 = vrot.lane.b32.xlu0 %v533, 123
      %v538 = vpop.permute.xlu0 %537
      %539 = vrot.lane.b32.xlu0 %v534, 123
      %v540 = vpop.permute.xlu0 %539
      %543 = vst.msk [vmem:[#allocation3 + $0x30] sm:$0xf] %vm266, %v538
      %544 = vst.msk [vmem:[#allocation3 + $0x34] sm:$0xf] %vm266, %v540
      %v545 = vld [vmem:[#allocation2 + $0x4] sm:$0xf]
      %v546 = vld [vmem:[#allocation2 + $0x10] sm:$0xf]
      %549 = vrot.lane.b32.xlu0 %v545, 122
      %v550 = vpop.permute.xlu0 %549
      %551 = vrot.lane.b32.xlu0 %v546, 122
      %v552 = vpop.permute.xlu0 %551
      %555 = vst.msk [vmem:[#allocation3 + $0x38] sm:$0xf] %vm266, %v550
      %556 = vst.msk [vmem:[#allocation3 + $0x3c] sm:$0xf] %vm266, %v552
      %v557 = vld [vmem:[#allocation2 + $0x4] sm:$0xf]
      %v558 = vld [vmem:[#allocation2 + $0x10] sm:$0xf]
      %561 = vrot.lane.b32.xlu0 %v557, 121
      %v562 = vpop.permute.xlu0 %561
      %563 = vrot.lane.b32.xlu0 %v558, 121
      %v564 = vpop.permute.xlu0 %563
      %567 = vst.msk [vmem:[#allocation3 + $0x40] sm:$0xf] %vm266, %v562
      %568 = vst.msk [vmem:[#allocation3 + $0x44] sm:$0xf] %vm266, %v564
      %v569 = vld [vmem:[%s246 + $0x4] sm:$0xf]
      %570 = vst.msk [vmem:[#allocation3 + $0x48] sm:$0xf] %vm266, %v569
      %v571 = vld [vmem:[%s3] sm:$0xff]
      %v572 = vld [vmem:[%s3 + $0x8] sm:$0xff]
      %v573 = vld [vmem:[#allocation3] sm:$0xf]
      %v574 = vld [vmem:[#allocation3 + $0x4] sm:$0xf]
      %v575 = vld [vmem:[#allocation3 + $0x8] sm:$0xf]
      %v576 = vld [vmem:[#allocation3 + $0xc] sm:$0xf]
      %v577 = vld [vmem:[#allocation3 + $0x10] sm:$0xf]
      %v578 = vld [vmem:[#allocation3 + $0x14] sm:$0xf]
      %v579 = vld [vmem:[#allocation3 + $0x18] sm:$0xf]
      %v580 = vld [vmem:[#allocation3 + $0x1c] sm:$0xf]
      %v581 = vld [vmem:[#allocation3 + $0x20] sm:$0xf]
      %v582 = vld [vmem:[#allocation3 + $0x24] sm:$0xf]
      %v583 = vld [vmem:[#allocation3 + $0x28] sm:$0xf]
      %v584 = vld [vmem:[#allocation3 + $0x2c] sm:$0xf]
      %v585 = vld [vmem:[#allocation3 + $0x30] sm:$0xf]
      %v586 = vld [vmem:[#allocation3 + $0x34] sm:$0xf]
      %v587 = vld [vmem:[#allocation3 + $0x38] sm:$0xf]
      %v588 = vld [vmem:[#allocation3 + $0x3c] sm:$0xf]
      %v589 = vld [vmem:[#allocation3 + $0x40] sm:$0xf]
      %v590 = vld [vmem:[#allocation3 + $0x44] sm:$0xf]
      %v591 = vld [vmem:[#allocation3 + $0x48] sm:$0xf]
      %v592 = vld [vmem:[%s4] sm:$0xff]
      %v593 = vld [vmem:[%s4 + $0x8] sm:$0xff]
      %595 = vset.pattern.permute.xlu0 0
      %596 = vperm.xlu0 %595, %v592
      %v597 = vpop.permute.xlu0 %596
      %600 = vset.pattern.permute.xlu0 0
      %601 = vperm.xlu0 %600, %v593
      %v602 = vpop.permute.xlu0 %601
      %v606 = vunpack.c.l.b16 %v571
      %v607 = vunpack.c.h.b16 %v571
      %v608 = vunpack.c.l.b16 %v572
      %v609 = vunpack.c.h.b16 %v572
      %v610 = vpack.c.b16 %v608, %v606
      %v611 = vpack.c.b16 %v609, %v607
      %v632 = vunpack.c.l.b16 %v573
      %v633 = vunpack.c.l.b16 %v574
      %v634 = vunpack.c.l.b16 %v575
      %v635 = vunpack.c.l.b16 %v576
      %v636 = vunpack.c.l.b16 %v577
      %v637 = vunpack.c.l.b16 %v578
      %v638 = vunpack.c.l.b16 %v579
      %v639 = vunpack.c.l.b16 %v580
      %v640 = vunpack.c.l.b16 %v581
      %v641 = vunpack.c.l.b16 %v582
      %v642 = vunpack.c.l.b16 %v583
      %v643 = vunpack.c.l.b16 %v584
      %v644 = vunpack.c.l.b16 %v585
      %v645 = vunpack.c.l.b16 %v586
      %v646 = vunpack.c.l.b16 %v587
      %v647 = vunpack.c.l.b16 %v588
      %v648 = vunpack.c.l.b16 %v589
      %v649 = vunpack.c.l.b16 %v590
      %v650 = vunpack.c.l.b16 %v591
      %v651 = vpack.c.b16 %v633, %v632
      %v652 = vpack.c.b16 %v635, %v634
      %v653 = vpack.c.b16 %v637, %v636
      %v654 = vpack.c.b16 %v639, %v638
      %v655 = vpack.c.b16 %v641, %v640
      %v656 = vpack.c.b16 %v643, %v642
      %v657 = vpack.c.b16 %v645, %v644
      %v658 = vpack.c.b16 %v647, %v646
      %v659 = vpack.c.b16 %v649, %v648
      %v660 = vpack.c.b16 %v650, %v650
      %vm670 = vcmask 195584
      %v672 = vsel %vm670, %v611, 0
      %v675 = vsel %vm410, %v660, 0
      %677 = vmatpush.bf16.msra.mxu0 %v658
      %678 = vmatpush.bf16.msra.mxu0 %v657
      %679 = vmatpush.bf16.msra.mxu0 %v656
      %680 = vmatpush.bf16.msra.mxu0 %v655
      %681 = vmatpush.bf16.msra.mxu0 %v654
      %682 = vmatpush.bf16.msra.mxu0 %v653
      %683 = vmatpush.bf16.msra.mxu0 %v652
      %684 = vmatpush.bf16.msra.mxu0 %v651
      %685 = vmatmul.bf16.gmra.mxu0 %v610
      %v686 = vpop.f32.mrf.mxu0
      %v687 = vadd.f32 %v597, %v686
      %v688 = vpop.f32.mrf.mxu0
      %v689 = vadd.f32 %v602, %v688
      %690 = vdwg.mxu0
      %691 = vmatpush.bf16.msra.mxu0 0
      %692 = vmatpush.bf16.msra.mxu0 0
      %693 = vmatpush.bf16.msra.mxu0 0
      %694 = vmatpush.bf16.msra.mxu0 0
      %695 = vmatpush.bf16.msra.mxu0 0
      %696 = vmatpush.bf16.msra.mxu0 0
      %697 = vmatpush.bf16.msra.mxu0 %v675
      %698 = vmatpush.bf16.msra.mxu0 %v659
      %699 = vmatmul.bf16.gmra.mxu0 %v672
      %v700 = vpop.f32.mrf.mxu0
      %v701 = vadd.f32 %v687, %v700
      %v702 = vpop.f32.mrf.mxu0
      %v703 = vadd.f32 %v689, %v702
      %704 = vdwg.mxu0
      %v705 = vpack.c.bf16 %v701, %v701
      %v706 = vpack.c.bf16 %v703, %v703
      %707 = vst.msk [vmem:[%s251] sm:$0xf] %vm266, %v705
      %708 = vst.msk [vmem:[%s251 + $0x4] sm:$0xf] %vm266, %v706
      %p709 = scmp.lt.s32.totalorder %s17, 7
      %s710 = scalar_select %p709, %s17, 7
      %s711 = smul.addr %s710, 2
      %s712 = smul.addr %s711, 4
      %s713 = scalar_lea.vmem %s6, %s712
      // Predicated region
      $region45: #{context_conditioning_stack.11} parent=43 // pred_check
        %p714 = pneg %p166
      $region46: #{context_conditioning_stack.11} parent=43 // pred_check_branch
        %716 = sbr.rel (%p714) target = $region48
      $region47: #{context_conditioning_stack.11} parent=43 // pred_region
        _
      $region48: #{context_conditioning_stack.11} parent=43 // pred_fallthru
        _
    $region44: #{context_conditioning_stack.11} parent=5 // pred_fallthru
      _
    %p717 = scmp.le.s32.totalorder 2, %s12
    // Predicated region
    $region49: #{context_conditioning_stack.11} parent=5 // pred_check
      %p718 = pneg %p717
    $region50: #{context_conditioning_stack.11} parent=5 // pred_check_branch
      %720 = sbr.rel (%p718) target = $region52
    $region51: #{context_conditioning_stack.11} parent=5 // pred_region
      %s721 = ssub.s32 %s12, 2
      // Predicated region
      $region53: #{context_conditioning_stack.11} parent=51 // pred_check
        %p722 = pneg %p172
      $region54: #{context_conditioning_stack.11} parent=51 // pred_check_branch
        %724 = sbr.rel (%p722) target = $region56
      $region55: #{context_conditioning_stack.11} parent=51 // pred_region
        %p725 = scmp.lt.s32.totalorder %s18, 7
        %s726 = scalar_select %p725, %s18, 7
        %s727 = smul.addr %s726, 2
        %s728 = smul.addr %s727, 4
        %s729 = scalar_lea.vmem %s6, %s728
      $region56: #{context_conditioning_stack.11} parent=51 // pred_fallthru
        _
    $region52: #{context_conditioning_stack.11} parent=5 // pred_fallthru
      _
  $region6: #{context_conditioning_stack.11} parent=0 // loop_footer
    %s16 = sadd.s32 1, %s12
  $region7: #{context_conditioning_stack.11} parent=0 // loop_footer_branch
    %11 = sbr.rel target = $region3
  $region8: #{context_conditioning_stack.11} parent=0 // loop_exit
    _

// kernel: context_conditioning_stack.15
$region0: #{context_conditioning_stack.15}
  #allocation0 [shape = 'u32[]', space=smem, size = 0x4, offset = 0x4, fixed_abs, tag = 'smem constant byte address 0x4 - core index']
  #allocation1 [shape = 'u32[72,128]{1,0:T(1,128)}', space=vmem, size = 0x9000, scoped, tag = 'internal scratch']
  #allocation2 [shape = 'bf16[576,16]{1,0:T(8,128)(2,1)}', space=vmem, size = 0x24000, scoped, tag = 'scratch operand']
  %s0 = inlined_call_operand.vmem [shape: bf16[2,64,272], index: 0, kind: input, shape index: {}]
  %s1 = inlined_call_operand.vmem [shape: bf16[32,576], index: 1, kind: input, shape index: {}]
  %s2 = inlined_call_operand.vmem [shape: f32[32,1], index: 2, kind: input, shape index: {}]
  %s3 = inlined_call_operand.vmem [shape: f32[2,32,16], index: 3, kind: output, shape index: {}]
  %s4 = sld [smem:[#allocation0]]
  $region45: #{context_conditioning_stack.15} parent=0
    _
  %s6 = ssub.s32 1, %s4
  %s7 = scalar_select 0, %s6, %s4
  loop: start=0, step=1, limit=4
  $region2: #{context_conditioning_stack.15} parent=0 // loop_pre_header
    _
  $region3: #{context_conditioning_stack.15} parent=0 // loop_header
    %s9 = sphi 0, %s13
    %p10 = scmp.ge.s32.totalorder %s9, 4
    %s19 = sphi 0, %s21
    %s22 = sphi 0, %s19
    %s23 = sphi 0, %s22
    %s39 = sphi 0, %s23
    %s43 = sphi 0, %s43
    %s45 = sphi 0, %s43
    %s46 = sphi 0, %s45
    %s60 = sphi 0, %s46
    %s64 = sphi 0, %s64
    %s66 = sphi 0, %s64
    %s67 = sphi 0, %s66
    %s81 = sphi 0, %s67
    %s87 = sphi 0, %s89
    %s90 = sphi 0, %s87
    %s91 = sphi 0, %s90
    %s107 = sphi 0, %s91
  $region4: #{context_conditioning_stack.15} parent=0 // loop_header_branch
    %12 = sbr.rel (%p10) target = $region8
  $region5: #{context_conditioning_stack.15} parent=0 // loop_body
    %s14 = ssub.s32 %s9, 1
    %s15 = ssub.s32 %s9, 2
    %s16 = sadd.s32 %s9, 1
    %s17 = ssub.s32 %s9, %s16
    %p18 = scmp.eq.s32.totalorder %s17, 0
    %s20 = sadd.s32 %s19, 1
    %s21 = scalar_select %p18, %s19, %s20
    %p24 = pneg %p18
    %p25 = scmp.eq.s32.totalorder %s9, 1
    %p26 = por %p24, %p25
    %p27 = scmp.ne.s32.totalorder %s19, %s22
    %p28 = scmp.eq.s32.totalorder %s9, 0
    %p29 = por %p27, %p28
    %p30 = scmp.ne.s32.totalorder %s19, %s22
    %p31 = scmp.eq.s32.totalorder %s14, 1
    %p32 = por %p30, %p31
    %p33 = scmp.ne.s32.totalorder %s22, %s23
    %p34 = scmp.eq.s32.totalorder %s14, 0
    %p35 = por %p33, %p34
    %p36 = scmp.ne.s32.totalorder %s22, %s23
    %p37 = scmp.eq.s32.totalorder %s15, 1
    %p38 = por %p36, %p37
    %p40 = scmp.ne.s32.totalorder %s23, %s39
    %p41 = scmp.eq.s32.totalorder %s15, 0
    %p42 = por %p40, %p41
    %s44 = sadd.s32 %s43, 1
    %p47 = scmp.eq.s32.totalorder %s9, 1
    %p48 = scmp.ne.s32.totalorder %s43, %s45
    %p49 = scmp.eq.s32.totalorder %s9, 0
    %p50 = por %p48, %p49
    %p51 = scmp.ne.s32.totalorder %s43, %s45
    %p52 = scmp.eq.s32.totalorder %s14, 1
    %p53 = por %p51, %p52
    %p54 = scmp.ne.s32.totalorder %s45, %s46
    %p55 = scmp.eq.s32.totalorder %s14, 0
    %p56 = por %p54, %p55
    %p57 = scmp.ne.s32.totalorder %s45, %s46
    %p58 = scmp.eq.s32.totalorder %s15, 1
    %p59 = por %p57, %p58
    %p61 = scmp.ne.s32.totalorder %s46, %s60
    %p62 = scmp.eq.s32.totalorder %s15, 0
    %p63 = por %p61, %p62
    %s65 = sadd.s32 %s64, 1
    %p68 = scmp.eq.s32.totalorder %s9, 1
    %p69 = scmp.ne.s32.totalorder %s64, %s66
    %p70 = scmp.eq.s32.totalorder %s9, 0
    %p71 = por %p69, %p70
    %p72 = scmp.ne.s32.totalorder %s64, %s66
    %p73 = scmp.eq.s32.totalorder %s14, 1
    %p74 = por %p72, %p73
    %p75 = scmp.ne.s32.totalorder %s66, %s67
    %p76 = scmp.eq.s32.totalorder %s14, 0
    %p77 = por %p75, %p76
    %p78 = scmp.ne.s32.totalorder %s66, %s67
    %p79 = scmp.eq.s32.totalorder %s15, 1
    %p80 = por %p78, %p79
    %p82 = scmp.ne.s32.totalorder %s67, %s81
    %p83 = scmp.eq.s32.totalorder %s15, 0
    %p84 = por %p82, %p83
    %s85 = ssub.s32 %s9, %s16
    %p86 = scmp.eq.s32.totalorder %s85, 0
    %s88 = sadd.s32 %s87, 1
    %s89 = scalar_select %p86, %s87, %s88
    %p92 = pneg %p86
    %p93 = scmp.eq.s32.totalorder %s9, 1
    %p94 = por %p92, %p93
    %p95 = scmp.ne.s32.totalorder %s87, %s90
    %p96 = scmp.eq.s32.totalorder %s9, 0
    %p97 = por %p95, %p96
    %p98 = scmp.ne.s32.totalorder %s87, %s90
    %p99 = scmp.eq.s32.totalorder %s14, 1
    %p100 = por %p98, %p99
    %p101 = scmp.ne.s32.totalorder %s90, %s91
    %p102 = scmp.eq.s32.totalorder %s14, 0
    %p103 = por %p101, %p102
    %p104 = scmp.ne.s32.totalorder %s90, %s91
    %p105 = scmp.eq.s32.totalorder %s15, 1
    %p106 = por %p104, %p105
    %p108 = scmp.ne.s32.totalorder %s91, %s107
    %p109 = scmp.eq.s32.totalorder %s15, 0
    %p110 = por %p108, %p109
    %p111 = scmp.le.s32.totalorder 1, %s9
    %p112 = scmp.lt.s32.totalorder %s9, 3
    %p113 = pnand %p111, %p112
    %p114 = pneg %p113
    // Predicated region
    $region9: #{context_conditioning_stack.15} parent=5 // pred_check
      _
    $region10: #{context_conditioning_stack.15} parent=5 // pred_check_branch
      %116 = sbr.rel (%p113) target = $region12
    $region11: #{context_conditioning_stack.15} parent=5 // pred_region
      %s117 = ssub.s32 %s9, 1
      // Predicated region
      $region13: #{context_conditioning_stack.15} parent=11 // pred_check
        %p118 = pneg %p56
      $region14: #{context_conditioning_stack.15} parent=11 // pred_check_branch
        %120 = sbr.rel (%p118) target = $region16
      $region15: #{context_conditioning_stack.15} parent=11 // pred_region
        _
      $region16: #{context_conditioning_stack.15} parent=11 // pred_fallthru
        _
      // Predicated region
      $region17: #{context_conditioning_stack.15} parent=11 // pred_check
        %p121 = pneg %p77
      $region18: #{context_conditioning_stack.15} parent=11 // pred_check_branch
        %123 = sbr.rel (%p121) target = $region20
      $region19: #{context_conditioning_stack.15} parent=11 // pred_region
        _
      $region20: #{context_conditioning_stack.15} parent=11 // pred_fallthru
        _
    $region12: #{context_conditioning_stack.15} parent=5 // pred_fallthru
      _
    %p124 = scmp.lt.s32.totalorder %s9, 2
    // Predicated region
    $region21: #{context_conditioning_stack.15} parent=5 // pred_check
      %p125 = pneg %p124
    $region22: #{context_conditioning_stack.15} parent=5 // pred_check_branch
      %127 = sbr.rel (%p125) target = $region24
    $region23: #{context_conditioning_stack.15} parent=5 // pred_region
      // Predicated region
      $region25: #{context_conditioning_stack.15} parent=23 // pred_check
        %p128 = pneg %p29
      $region26: #{context_conditioning_stack.15} parent=23 // pred_check_branch
        %130 = sbr.rel (%p128) target = $region28
      $region27: #{context_conditioning_stack.15} parent=23 // pred_region
        %p131 = scmp.lt.s32.totalorder %s9, 1
        %s132 = scalar_select %p131, %s9, 1
        %s133 = smul.addr %s132, 24
        %s134 = smul.addr %s133, 4
        %s135 = scalar_lea.vmem %s0, %s134
      $region28: #{context_conditioning_stack.15} parent=23 // pred_fallthru
        _
    $region24: #{context_conditioning_stack.15} parent=5 // pred_fallthru
      _
    %p136 = scmp.le.s32.totalorder 1, %s9
    %p137 = scmp.lt.s32.totalorder %s9, 3
    %p138 = pnand %p136, %p137
    %p139 = pneg %p138
    // Predicated region
    $region29: #{context_conditioning_stack.15} parent=5 // pred_check
      _
    $region30: #{context_conditioning_stack.15} parent=5 // pred_check_branch
      %141 = sbr.rel (%p138) target = $region32
    $region31: #{context_conditioning_stack.15} parent=5 // pred_region
      %s142 = ssub.s32 %s9, 1
      %p143 = scmp.lt.s32.totalorder %s14, 1
      %s144 = scalar_select %p143, %s14, 1
      %s145 = smul.addr %s144, 24
      %s146 = smul.addr %s145, 4
      %s147 = scalar_lea.vmem %s0, %s146
      %p148 = pneg %p35
      %p149 = pneg %p32
      %p150 = pneg %p56
      %p151 = pneg %p53
      %p152 = pneg %p77
      %p153 = pneg %p74
      %p154 = pneg %p103
      %p155 = pneg %p100
      %p156 = scmp.lt.s32.totalorder %s14, 1
      %s157 = scalar_select %p156, %s14, 1
      %s158 = smul.addr %s157, 4
      %s159 = smul.addr %s158, 8
      %s160 = scalar_lea.vmem %s3, %s159
      %p161 = scmp.lt.s32.totalorder %s14, 1
      %s162 = scalar_select %p161, %s14, 1
      %s163 = smul.addr %s162, 24
      %s164 = smul.addr %s163, 4
      %s165 = scalar_lea.vmem %s0, %s164
      %p166 = scmp.lt.s32.totalorder %s14, 1
      %s167 = scalar_select %p166, %s14, 1
      %s168 = smul.addr %s167, 4
      %s169 = smul.addr %s168, 8
      %s170 = scalar_lea.vmem %s3, %s169
      %v172 = vld [vmem:[%s165] sm:$0xff]
      %v173 = vld [vmem:[%s165 + $0xc] sm:$0xff]
      %v174 = vld [vmem:[%s165 + $0x18] sm:$0xff]
      %v175 = vld [vmem:[%s165 + $0x24] sm:$0xff]
      %v176 = vld [vmem:[%s165 + $0x30] sm:$0xff]
      %v177 = vld [vmem:[%s165 + $0x3c] sm:$0xff]
      %v178 = vld [vmem:[%s165 + $0x48] sm:$0xff]
      %v179 = vld [vmem:[%s165 + $0x54] sm:$0xff]
      %188 = vrot.lane.b32.xlu0 %v172, 5
      %v189 = vpop.permute.xlu0 %188
      %190 = vrot.lane.b32.xlu0 %v173, 5
      %v191 = vpop.permute.xlu0 %190
      %192 = vrot.lane.b32.xlu0 %v174, 5
      %v193 = vpop.permute.xlu0 %192
      %194 = vrot.lane.b32.xlu0 %v175, 5
      %v195 = vpop.permute.xlu0 %194
      %196 = vrot.lane.b32.xlu0 %v176, 5
      %v197 = vpop.permute.xlu0 %196
      %198 = vrot.lane.b32.xlu0 %v177, 5
      %v199 = vpop.permute.xlu0 %198
      %200 = vrot.lane.b32.xlu0 %v178, 5
      %v201 = vpop.permute.xlu0 %200
      %202 = vrot.lane.b32.xlu0 %v179, 5
      %v203 = vpop.permute.xlu0 %202
      %v204 = vrot.slane %v189, 4
      %v205 = vrot.slane %v191, 4
      %v206 = vrot.slane %v193, 4
      %v207 = vrot.slane %v195, 4
      %v208 = vrot.slane %v197, 4
      %v209 = vrot.slane %v199, 4
      %v210 = vrot.slane %v201, 4
      %v211 = vrot.slane %v203, 4
      %vm212 = vcmask 39936
      %v213 = vsel %vm212, %v189, %v204
      %v214 = vsel %vm212, %v191, %v205
      %v215 = vsel %vm212, %v193, %v206
      %v216 = vsel %vm212, %v195, %v207
      %v217 = vsel %vm212, %v197, %v208
      %v218 = vsel %vm212, %v199, %v209
      %v219 = vsel %vm212, %v201, %v210
      %v220 = vsel %vm212, %v203, %v211
      %vm229 = vcmask 125952
      %230 = vst.msk [vmem:[#allocation2] sm:$0xf] %vm229, %v213
      %231 = vst.msk [vmem:[#allocation2 + $0x4] sm:$0xf] %vm229, %v214
      %232 = vst.msk [vmem:[#allocation2 + $0x8] sm:$0xf] %vm229, %v215
      %233 = vst.msk [vmem:[#allocation2 + $0xc] sm:$0xf] %vm229, %v216
      %234 = vst.msk [vmem:[#allocation2 + $0x10] sm:$0xf] %vm229, %v217
      %235 = vst.msk [vmem:[#allocation2 + $0x14] sm:$0xf] %vm229, %v218
      %236 = vst.msk [vmem:[#allocation2 + $0x18] sm:$0xf] %vm229, %v219
      %237 = vst.msk [vmem:[#allocation2 + $0x1c] sm:$0xf] %vm229, %v220
      %v238 = vld [vmem:[%s165] sm:$0xff]
      %v239 = vld [vmem:[%s165 + $0xc] sm:$0xff]
      %v240 = vld [vmem:[%s165 + $0x18] sm:$0xff]
      %v241 = vld [vmem:[%s165 + $0x24] sm:$0xff]
      %v242 = vld [vmem:[%s165 + $0x30] sm:$0xff]
      %v243 = vld [vmem:[%s165 + $0x3c] sm:$0xff]
      %v244 = vld [vmem:[%s165 + $0x48] sm:$0xff]
      %v245 = vld [vmem:[%s165 + $0x54] sm:$0xff]
      %254 = vrot.lane.b32.xlu0 %v238, 4
      %v255 = vpop.permute.xlu0 %254
      %256 = vrot.lane.b32.xlu0 %v239, 4
      %v257 = vpop.permute.xlu0 %256
      %258 = vrot.lane.b32.xlu0 %v240, 4
      %v259 = vpop.permute.xlu0 %258
      %260 = vrot.lane.b32.xlu0 %v241, 4
      %v261 = vpop.permute.xlu0 %260
      %262 = vrot.lane.b32.xlu0 %v242, 4
      %v263 = vpop.permute.xlu0 %262
      %264 = vrot.lane.b32.xlu0 %v243, 4
      %v265 = vpop.permute.xlu0 %264
      %266 = vrot.lane.b32.xlu0 %v244, 4
      %v267 = vpop.permute.xlu0 %266
      %268 = vrot.lane.b32.xlu0 %v245, 4
      %v269 = vpop.permute.xlu0 %268
      %v270 = vrot.slane %v255, 4
      %v271 = vrot.slane %v257, 4
      %v272 = vrot.slane %v259, 4
      %v273 = vrot.slane %v261, 4
      %v274 = vrot.slane %v263, 4
      %v275 = vrot.slane %v265, 4
      %v276 = vrot.slane %v267, 4
      %v277 = vrot.slane %v269, 4
      %vm278 = vcmask 31744
      %v279 = vsel %vm278, %v255, %v270
      %v280 = vsel %vm278, %v257, %v271
      %v281 = vsel %vm278, %v259, %v272
      %v282 = vsel %vm278, %v261, %v273
      %v283 = vsel %vm278, %v263, %v274
      %v284 = vsel %vm278, %v265, %v275
      %v285 = vsel %vm278, %v267, %v276
      %v286 = vsel %vm278, %v269, %v277
      %295 = vst.msk [vmem:[#allocation2 + $0x20] sm:$0xf] %vm229, %v279
      %296 = vst.msk [vmem:[#allocation2 + $0x24] sm:$0xf] %vm229, %v280
      %297 = vst.msk [vmem:[#allocation2 + $0x28] sm:$0xf] %vm229, %v281
      %298 = vst.msk [vmem:[#allocation2 + $0x2c] sm:$0xf] %vm229, %v282
      %299 = vst.msk [vmem:[#allocation2 + $0x30] sm:$0xf] %vm229, %v283
      %300 = vst.msk [vmem:[#allocation2 + $0x34] sm:$0xf] %vm229, %v284
      %301 = vst.msk [vmem:[#allocation2 + $0x38] sm:$0xf] %vm229, %v285
      %302 = vst.msk [vmem:[#allocation2 + $0x3c] sm:$0xf] %vm229, %v286
      %v303 = vld [vmem:[%s165] sm:$0xff]
      %v304 = vld [vmem:[%s165 + $0xc] sm:$0xff]
      %v305 = vld [vmem:[%s165 + $0x18] sm:$0xff]
      %v306 = vld [vmem:[%s165 + $0x24] sm:$0xff]
      %v307 = vld [vmem:[%s165 + $0x30] sm:$0xff]
      %v308 = vld [vmem:[%s165 + $0x3c] sm:$0xff]
      %v309 = vld [vmem:[%s165 + $0x48] sm:$0xff]
      %v310 = vld [vmem:[%s165 + $0x54] sm:$0xff]
      %319 = vrot.lane.b32.xlu0 %v303, 3
      %v320 = vpop.permute.xlu0 %319
      %321 = vrot.lane.b32.xlu0 %v304, 3
      %v322 = vpop.permute.xlu0 %321
      %323 = vrot.lane.b32.xlu0 %v305, 3
      %v324 = vpop.permute.xlu0 %323
      %325 = vrot.lane.b32.xlu0 %v306, 3
      %v326 = vpop.permute.xlu0 %325
      %327 = vrot.lane.b32.xlu0 %v307, 3
      %v328 = vpop.permute.xlu0 %327
      %329 = vrot.lane.b32.xlu0 %v308, 3
      %v330 = vpop.permute.xlu0 %329
      %331 = vrot.lane.b32.xlu0 %v309, 3
      %v332 = vpop.permute.xlu0 %331
      %333 = vrot.lane.b32.xlu0 %v310, 3
      %v334 = vpop.permute.xlu0 %333
      %v335 = vrot.slane %v320, 4
      %v336 = vrot.slane %v322, 4
      %v337 = vrot.slane %v324, 4
      %v338 = vrot.slane %v326, 4
      %v339 = vrot.slane %v328, 4
      %v340 = vrot.slane %v330, 4
      %v341 = vrot.slane %v332, 4
      %v342 = vrot.slane %v334, 4
      %vm343 = vcmask 23552
      %v344 = vsel %vm343, %v320, %v335
      %v345 = vsel %vm343, %v322, %v336
      %v346 = vsel %vm343, %v324, %v337
      %v347 = vsel %vm343, %v326, %v338
      %v348 = vsel %vm343, %v328, %v339
      %v349 = vsel %vm343, %v330, %v340
      %v350 = vsel %vm343, %v332, %v341
      %v351 = vsel %vm343, %v334, %v342
      %360 = vst.msk [vmem:[#allocation2 + $0x40] sm:$0xf] %vm229, %v344
      %361 = vst.msk [vmem:[#allocation2 + $0x44] sm:$0xf] %vm229, %v345
      %362 = vst.msk [vmem:[#allocation2 + $0x48] sm:$0xf] %vm229, %v346
      %363 = vst.msk [vmem:[#allocation2 + $0x4c] sm:$0xf] %vm229, %v347
      %364 = vst.msk [vmem:[#allocation2 + $0x50] sm:$0xf] %vm229, %v348
      %365 = vst.msk [vmem:[#allocation2 + $0x54] sm:$0xf] %vm229, %v349
      %366 = vst.msk [vmem:[#allocation2 + $0x58] sm:$0xf] %vm229, %v350
      %367 = vst.msk [vmem:[#allocation2 + $0x5c] sm:$0xf] %vm229, %v351
      %v368 = vld [vmem:[%s165] sm:$0xff]
      %v369 = vld [vmem:[%s165 + $0xc] sm:$0xff]
      %v370 = vld [vmem:[%s165 + $0x18] sm:$0xff]
      %v371 = vld [vmem:[%s165 + $0x24] sm:$0xff]
      %v372 = vld [vmem:[%s165 + $0x30] sm:$0xff]
      %v373 = vld [vmem:[%s165 + $0x3c] sm:$0xff]
      %v374 = vld [vmem:[%s165 + $0x48] sm:$0xff]
      %v375 = vld [vmem:[%s165 + $0x54] sm:$0xff]
      %384 = vrot.lane.b32.xlu0 %v368, 1
      %v385 = vpop.permute.xlu0 %384
      %386 = vrot.lane.b32.xlu0 %v369, 1
      %v387 = vpop.permute.xlu0 %386
      %388 = vrot.lane.b32.xlu0 %v370, 1
      %v389 = vpop.permute.xlu0 %388
      %390 = vrot.lane.b32.xlu0 %v371, 1
      %v391 = vpop.permute.xlu0 %390
      %392 = vrot.lane.b32.xlu0 %v372, 1
      %v393 = vpop.permute.xlu0 %392
      %394 = vrot.lane.b32.xlu0 %v373, 1
      %v395 = vpop.permute.xlu0 %394
      %396 = vrot.lane.b32.xlu0 %v374, 1
      %v397 = vpop.permute.xlu0 %396
      %398 = vrot.lane.b32.xlu0 %v375, 1
      %v399 = vpop.permute.xlu0 %398
      %v400 = vrot.slane %v385, 4
      %v401 = vrot.slane %v387, 4
      %v402 = vrot.slane %v389, 4
      %v403 = vrot.slane %v391, 4
      %v404 = vrot.slane %v393, 4
      %v405 = vrot.slane %v395, 4
      %v406 = vrot.slane %v397, 4
      %v407 = vrot.slane %v399, 4
      %vm408 = vcmask 7168
      %v409 = vsel %vm408, %v385, %v400
      %v410 = vsel %vm408, %v387, %v401
      %v411 = vsel %vm408, %v389, %v402
      %v412 = vsel %vm408, %v391, %v403
      %v413 = vsel %vm408, %v393, %v404
      %v414 = vsel %vm408, %v395, %v405
      %v415 = vsel %vm408, %v397, %v406
      %v416 = vsel %vm408, %v399, %v407
      %425 = vst.msk [vmem:[#allocation2 + $0x60] sm:$0xf] %vm229, %v409
      %426 = vst.msk [vmem:[#allocation2 + $0x64] sm:$0xf] %vm229, %v410
      %427 = vst.msk [vmem:[#allocation2 + $0x68] sm:$0xf] %vm229, %v411
      %428 = vst.msk [vmem:[#allocation2 + $0x6c] sm:$0xf] %vm229, %v412
      %429 = vst.msk [vmem:[#allocation2 + $0x70] sm:$0xf] %vm229, %v413
      %430 = vst.msk [vmem:[#allocation2 + $0x74] sm:$0xf] %vm229, %v414
      %431 = vst.msk [vmem:[#allocation2 + $0x78] sm:$0xf] %vm229, %v415
      %432 = vst.msk [vmem:[#allocation2 + $0x7c] sm:$0xf] %vm229, %v416
      %v433 = vld [vmem:[%s165 + $0x4] sm:$0xf]
      %v434 = vld [vmem:[%s165 + $0x10] sm:$0xf]
      %v435 = vld [vmem:[%s165 + $0x1c] sm:$0xf]
      %v436 = vld [vmem:[%s165 + $0x28] sm:$0xf]
      %v437 = vld [vmem:[%s165 + $0x34] sm:$0xf]
      %v438 = vld [vmem:[%s165 + $0x40] sm:$0xf]
      %v439 = vld [vmem:[%s165 + $0x4c] sm:$0xf]
      %v440 = vld [vmem:[%s165 + $0x58] sm:$0xf]
      %441 = vst.msk [vmem:[#allocation2 + $0x80] sm:$0xf] %vm229, %v433
      %442 = vst.msk [vmem:[#allocation2 + $0x84] sm:$0xf] %vm229, %v434
      %443 = vst.msk [vmem:[#allocation2 + $0x88] sm:$0xf] %vm229, %v435
      %444 = vst.msk [vmem:[#allocation2 + $0x8c] sm:$0xf] %vm229, %v436
      %445 = vst.msk [vmem:[#allocation2 + $0x90] sm:$0xf] %vm229, %v437
      %446 = vst.msk [vmem:[#allocation2 + $0x94] sm:$0xf] %vm229, %v438
      %447 = vst.msk [vmem:[#allocation2 + $0x98] sm:$0xf] %vm229, %v439
      %448 = vst.msk [vmem:[#allocation2 + $0x9c] sm:$0xf] %vm229, %v440
      %v449 = vld [vmem:[%s165 + $0x4] sm:$0xf]
      %v450 = vld [vmem:[%s165 + $0x10] sm:$0xf]
      %v451 = vld [vmem:[%s165 + $0x1c] sm:$0xf]
      %v452 = vld [vmem:[%s165 + $0x28] sm:$0xf]
      %v453 = vld [vmem:[%s165 + $0x34] sm:$0xf]
      %v454 = vld [vmem:[%s165 + $0x40] sm:$0xf]
      %v455 = vld [vmem:[%s165 + $0x4c] sm:$0xf]
      %v456 = vld [vmem:[%s165 + $0x58] sm:$0xf]
      %465 = vrot.lane.b32.xlu0 %v449, 127
      %v466 = vpop.permute.xlu0 %465
      %467 = vrot.lane.b32.xlu0 %v450, 127
      %v468 = vpop.permute.xlu0 %467
      %469 = vrot.lane.b32.xlu0 %v451, 127
      %v470 = vpop.permute.xlu0 %469
      %471 = vrot.lane.b32.xlu0 %v452, 127
      %v472 = vpop.permute.xlu0 %471
      %473 = vrot.lane.b32.xlu0 %v453, 127
      %v474 = vpop.permute.xlu0 %473
      %475 = vrot.lane.b32.xlu0 %v454, 127
      %v476 = vpop.permute.xlu0 %475
      %477 = vrot.lane.b32.xlu0 %v455, 127
      %v478 = vpop.permute.xlu0 %477
      %479 = vrot.lane.b32.xlu0 %v456, 127
      %v480 = vpop.permute.xlu0 %479
      %489 = vst.msk [vmem:[#allocation2 + $0xa0] sm:$0xf] %vm229, %v466
      %490 = vst.msk [vmem:[#allocation2 + $0xa4] sm:$0xf] %vm229, %v468
      %491 = vst.msk [vmem:[#allocation2 + $0xa8] sm:$0xf] %vm229, %v470
      %492 = vst.msk [vmem:[#allocation2 + $0xac] sm:$0xf] %vm229, %v472
      %493 = vst.msk [vmem:[#allocation2 + $0xb0] sm:$0xf] %vm229, %v474
      %494 = vst.msk [vmem:[#allocation2 + $0xb4] sm:$0xf] %vm229, %v476
      %495 = vst.msk [vmem:[#allocation2 + $0xb8] sm:$0xf] %vm229, %v478
      %496 = vst.msk [vmem:[#allocation2 + $0xbc] sm:$0xf] %vm229, %v480
      %v497 = vld [vmem:[%s165 + $0x4] sm:$0xf]
      %v498 = vld [vmem:[%s165 + $0x10] sm:$0xf]
      %v499 = vld [vmem:[%s165 + $0x1c] sm:$0xf]
      %v500 = vld [vmem:[%s165 + $0x28] sm:$0xf]
      %v501 = vld [vmem:[%s165 + $0x34] sm:$0xf]
      %v502 = vld [vmem:[%s165 + $0x40] sm:$0xf]
      %v503 = vld [vmem:[%s165 + $0x4c] sm:$0xf]
      %v504 = vld [vmem:[%s165 + $0x58] sm:$0xf]
      %513 = vrot.lane.b32.xlu0 %v497, 125
      %v514 = vpop.permute.xlu0 %513
      %515 = vrot.lane.b32.xlu0 %v498, 125
      %v516 = vpop.permute.xlu0 %515
      %517 = vrot.lane.b32.xlu0 %v499, 125
      %v518 = vpop.permute.xlu0 %517
      %519 = vrot.lane.b32.xlu0 %v500, 125
      %v520 = vpop.permute.xlu0 %519
      %521 = vrot.lane.b32.xlu0 %v501, 125
      %v522 = vpop.permute.xlu0 %521
      %523 = vrot.lane.b32.xlu0 %v502, 125
      %v524 = vpop.permute.xlu0 %523
      %525 = vrot.lane.b32.xlu0 %v503, 125
      %v526 = vpop.permute.xlu0 %525
      %527 = vrot.lane.b32.xlu0 %v504, 125
      %v528 = vpop.permute.xlu0 %527
      %537 = vst.msk [vmem:[#allocation2 + $0xc0] sm:$0xf] %vm229, %v514
      %538 = vst.msk [vmem:[#allocation2 + $0xc4] sm:$0xf] %vm229, %v516
      %539 = vst.msk [vmem:[#allocation2 + $0xc8] sm:$0xf] %vm229, %v518
      %540 = vst.msk [vmem:[#allocation2 + $0xcc] sm:$0xf] %vm229, %v520
      %541 = vst.msk [vmem:[#allocation2 + $0xd0] sm:$0xf] %vm229, %v522
      %542 = vst.msk [vmem:[#allocation2 + $0xd4] sm:$0xf] %vm229, %v524
      %543 = vst.msk [vmem:[#allocation2 + $0xd8] sm:$0xf] %vm229, %v526
      %544 = vst.msk [vmem:[#allocation2 + $0xdc] sm:$0xf] %vm229, %v528
      %v545 = vld [vmem:[%s165 + $0x4] sm:$0xf]
      %v546 = vld [vmem:[%s165 + $0x10] sm:$0xf]
      %v547 = vld [vmem:[%s165 + $0x1c] sm:$0xf]
      %v548 = vld [vmem:[%s165 + $0x28] sm:$0xf]
      %v549 = vld [vmem:[%s165 + $0x34] sm:$0xf]
      %v550 = vld [vmem:[%s165 + $0x40] sm:$0xf]
      %v551 = vld [vmem:[%s165 + $0x4c] sm:$0xf]
      %v552 = vld [vmem:[%s165 + $0x58] sm:$0xf]
      %561 = vrot.lane.b32.xlu0 %v545, 124
      %v562 = vpop.permute.xlu0 %561
      %563 = vrot.lane.b32.xlu0 %v546, 124
      %v564 = vpop.permute.xlu0 %563
      %565 = vrot.lane.b32.xlu0 %v547, 124
      %v566 = vpop.permute.xlu0 %565
      %567 = vrot.lane.b32.xlu0 %v548, 124
      %v568 = vpop.permute.xlu0 %567
      %569 = vrot.lane.b32.xlu0 %v549, 124
      %v570 = vpop.permute.xlu0 %569
      %571 = vrot.lane.b32.xlu0 %v550, 124
      %v572 = vpop.permute.xlu0 %571
      %573 = vrot.lane.b32.xlu0 %v551, 124
      %v574 = vpop.permute.xlu0 %573
      %575 = vrot.lane.b32.xlu0 %v552, 124
      %v576 = vpop.permute.xlu0 %575
      %585 = vst.msk [vmem:[#allocation2 + $0xe0] sm:$0xf] %vm229, %v562
      %586 = vst.msk [vmem:[#allocation2 + $0xe4] sm:$0xf] %vm229, %v564
      %587 = vst.msk [vmem:[#allocation2 + $0xe8] sm:$0xf] %vm229, %v566
      %588 = vst.msk [vmem:[#allocation2 + $0xec] sm:$0xf] %vm229, %v568
      %589 = vst.msk [vmem:[#allocation2 + $0xf0] sm:$0xf] %vm229, %v570
      %590 = vst.msk [vmem:[#allocation2 + $0xf4] sm:$0xf] %vm229, %v572
      %591 = vst.msk [vmem:[#allocation2 + $0xf8] sm:$0xf] %vm229, %v574
      %592 = vst.msk [vmem:[#allocation2 + $0xfc] sm:$0xf] %vm229, %v576
      %v593 = vld [vmem:[%s165 + $0x4] sm:$0xf]
      %v594 = vld [vmem:[%s165 + $0x10] sm:$0xf]
      %v595 = vld [vmem:[%s165 + $0x1c] sm:$0xf]
      %v596 = vld [vmem:[%s165 + $0x28] sm:$0xf]
      %v597 = vld [vmem:[%s165 + $0x34] sm:$0xf]
      %v598 = vld [vmem:[%s165 + $0x40] sm:$0xf]
      %v599 = vld [vmem:[%s165 + $0x4c] sm:$0xf]
      %v600 = vld [vmem:[%s165 + $0x58] sm:$0xf]
      %609 = vrot.lane.b32.xlu0 %v593, 123
      %v610 = vpop.permute.xlu0 %609
      %611 = vrot.lane.b32.xlu0 %v594, 123
      %v612 = vpop.permute.xlu0 %611
      %613 = vrot.lane.b32.xlu0 %v595, 123
      %v614 = vpop.permute.xlu0 %613
      %615 = vrot.lane.b32.xlu0 %v596, 123
      %v616 = vpop.permute.xlu0 %615
      %617 = vrot.lane.b32.xlu0 %v597, 123
      %v618 = vpop.permute.xlu0 %617
      %619 = vrot.lane.b32.xlu0 %v598, 123
      %v620 = vpop.permute.xlu0 %619
      %621 = vrot.lane.b32.xlu0 %v599, 123
      %v622 = vpop.permute.xlu0 %621
      %623 = vrot.lane.b32.xlu0 %v600, 123
      %v624 = vpop.permute.xlu0 %623
      %633 = vst.msk [vmem:[#allocation2 + $0x100] sm:$0xf] %vm229, %v610
      %634 = vst.msk [vmem:[#allocation2 + $0x104] sm:$0xf] %vm229, %v612
      %635 = vst.msk [vmem:[#allocation2 + $0x108] sm:$0xf] %vm229, %v614
      %636 = vst.msk [vmem:[#allocation2 + $0x10c] sm:$0xf] %vm229, %v616
      %637 = vst.msk [vmem:[#allocation2 + $0x110] sm:$0xf] %vm229, %v618
      %638 = vst.msk [vmem:[#allocation2 + $0x114] sm:$0xf] %vm229, %v620
      %639 = vst.msk [vmem:[#allocation2 + $0x118] sm:$0xf] %vm229, %v622
      %640 = vst.msk [vmem:[#allocation2 + $0x11c] sm:$0xf] %vm229, %v624
      %v641 = vld [vmem:[%s1] sm:$0xff]
      %v642 = vld [vmem:[%s1 + $0x8] sm:$0xff]
      %v643 = vld [vmem:[%s1 + $0x10] sm:$0xf]
      %v644 = vld [vmem:[%s1 + $0x14] sm:$0xff]
      %v645 = vld [vmem:[%s1 + $0x1c] sm:$0xff]
      %v646 = vld [vmem:[%s1 + $0x24] sm:$0xf]
      %v647 = vld [vmem:[%s1 + $0x28] sm:$0xff]
      %v648 = vld [vmem:[%s1 + $0x30] sm:$0xff]
      %v649 = vld [vmem:[%s1 + $0x38] sm:$0xf]
      %v650 = vld [vmem:[%s1 + $0x3c] sm:$0xff]
      %v651 = vld [vmem:[%s1 + $0x44] sm:$0xff]
      %v652 = vld [vmem:[%s1 + $0x4c] sm:$0xf]
      %v653 = vld [vmem:[#allocation2] sm:$0xf]
      %v654 = vld [vmem:[#allocation2 + $0x4] sm:$0xf]
      %v655 = vld [vmem:[#allocation2 + $0x8] sm:$0xf]
      %v656 = vld [vmem:[#allocation2 + $0xc] sm:$0xf]
      %v657 = vld [vmem:[#allocation2 + $0x10] sm:$0xf]
      %v658 = vld [vmem:[#allocation2 + $0x14] sm:$0xf]
      %v659 = vld [vmem:[#allocation2 + $0x18] sm:$0xf]
      %v660 = vld [vmem:[#allocation2 + $0x1c] sm:$0xf]
      %v661 = vld [vmem:[#allocation2 + $0x20] sm:$0xf]
      %v662 = vld [vmem:[#allocation2 + $0x24] sm:$0xf]
      %v663 = vld [vmem:[#allocation2 + $0x28] sm:$0xf]
      %v664 = vld [vmem:[#allocation2 + $0x2c] sm:$0xf]
      %v665 = vld [vmem:[#allocation2 + $0x30] sm:$0xf]
      %v666 = vld [vmem:[#allocation2 + $0x34] sm:$0xf]
      %v667 = vld [vmem:[#allocation2 + $0x38] sm:$0xf]
      %v668 = vld [vmem:[#allocation2 + $0x3c] sm:$0xf]
      %v669 = vld [vmem:[#allocation2 + $0x40] sm:$0xf]
      %v670 = vld [vmem:[#allocation2 + $0x44] sm:$0xf]
      %v671 = vld [vmem:[#allocation2 + $0x48] sm:$0xf]
      %v672 = vld [vmem:[#allocation2 + $0x4c] sm:$0xf]
      %v673 = vld [vmem:[#allocation2 + $0x50] sm:$0xf]
      %v674 = vld [vmem:[#allocation2 + $0x54] sm:$0xf]
      %v675 = vld [vmem:[#allocation2 + $0x58] sm:$0xf]
      %v676 = vld [vmem:[#allocation2 + $0x5c] sm:$0xf]
      %v677 = vld [vmem:[#allocation2 + $0x60] sm:$0xf]
      %v678 = vld [vmem:[#allocation2 + $0x64] sm:$0xf]
      %v679 = vld [vmem:[#allocation2 + $0x68] sm:$0xf]
      %v680 = vld [vmem:[#allocation2 + $0x6c] sm:$0xf]
      %v681 = vld [vmem:[#allocation2 + $0x70] sm:$0xf]
      %v682 = vld [vmem:[#allocation2 + $0x74] sm:$0xf]
      %v683 = vld [vmem:[#allocation2 + $0x78] sm:$0xf]
      %v684 = vld [vmem:[#allocation2 + $0x7c] sm:$0xf]
      %v685 = vld [vmem:[#allocation2 + $0x80] sm:$0xf]
      %v686 = vld [vmem:[#allocation2 + $0x84] sm:$0xf]
      %v687 = vld [vmem:[#allocation2 + $0x88] sm:$0xf]
      %v688 = vld [vmem:[#allocation2 + $0x8c] sm:$0xf]
      %v689 = vld [vmem:[#allocation2 + $0x90] sm:$0xf]
      %v690 = vld [vmem:[#allocation2 + $0x94] sm:$0xf]
      %v691 = vld [vmem:[#allocation2 + $0x98] sm:$0xf]
      %v692 = vld [vmem:[#allocation2 + $0x9c] sm:$0xf]
      %v693 = vld [vmem:[#allocation2 + $0xa0] sm:$0xf]
      %v694 = vld [vmem:[#allocation2 + $0xa4] sm:$0xf]
      %v695 = vld [vmem:[#allocation2 + $0xa8] sm:$0xf]
      %v696 = vld [vmem:[#allocation2 + $0xac] sm:$0xf]
      %v697 = vld [vmem:[#allocation2 + $0xb0] sm:$0xf]
      %v698 = vld [vmem:[#allocation2 + $0xb4] sm:$0xf]
      %v699 = vld [vmem:[#allocation2 + $0xb8] sm:$0xf]
      %v700 = vld [vmem:[#allocation2 + $0xbc] sm:$0xf]
      %v701 = vld [vmem:[#allocation2 + $0xc0] sm:$0xf]
      %v702 = vld [vmem:[#allocation2 + $0xc4] sm:$0xf]
      %v703 = vld [vmem:[#allocation2 + $0xc8] sm:$0xf]
      %v704 = vld [vmem:[#allocation2 + $0xcc] sm:$0xf]
      %v705 = vld [vmem:[#allocation2 + $0xd0] sm:$0xf]
      %v706 = vld [vmem:[#allocation2 + $0xd4] sm:$0xf]
      %v707 = vld [vmem:[#allocation2 + $0xd8] sm:$0xf]
      %v708 = vld [vmem:[#allocation2 + $0xdc] sm:$0xf]
      %v709 = vld [vmem:[#allocation2 + $0xe0] sm:$0xf]
      %v710 = vld [vmem:[#allocation2 + $0xe4] sm:$0xf]
      %v711 = vld [vmem:[#allocation2 + $0xe8] sm:$0xf]
      %v712 = vld [vmem:[#allocation2 + $0xec] sm:$0xf]
      %v713 = vld [vmem:[#allocation2 + $0xf0] sm:$0xf]
      %v714 = vld [vmem:[#allocation2 + $0xf4] sm:$0xf]
      %v715 = vld [vmem:[#allocation2 + $0xf8] sm:$0xf]
      %v716 = vld [vmem:[#allocation2 + $0xfc] sm:$0xf]
      %v717 = vld [vmem:[#allocation2 + $0x100] sm:$0xf]
      %v718 = vld [vmem:[#allocation2 + $0x104] sm:$0xf]
      %v719 = vld [vmem:[#allocation2 + $0x108] sm:$0xf]
      %v720 = vld [vmem:[#allocation2 + $0x10c] sm:$0xf]
      %v721 = vld [vmem:[#allocation2 + $0x110] sm:$0xf]
      %v722 = vld [vmem:[#allocation2 + $0x114] sm:$0xf]
      %v723 = vld [vmem:[#allocation2 + $0x118] sm:$0xf]
      %v724 = vld [vmem:[#allocation2 + $0x11c] sm:$0xf]
      %v725 = vld [vmem:[%s2] sm:$0xff]
      %v726 = vld [vmem:[%s2 + $0x8] sm:$0xff]
      %v727 = vld [vmem:[%s2 + $0x10] sm:$0xff]
      %v728 = vld [vmem:[%s2 + $0x18] sm:$0xff]
      %730 = vset.pattern.permute.xlu0 0
      %731 = vperm.xlu0 %730, %v725
      %v732 = vpop.permute.xlu0 %731
      %735 = vset.pattern.permute.xlu0 0
      %736 = vperm.xlu0 %735, %v726
      %v737 = vpop.permute.xlu0 %736
      %740 = vset.pattern.permute.xlu0 0
      %741 = vperm.xlu0 %740, %v727
      %v742 = vpop.permute.xlu0 %741
      %745 = vset.pattern.permute.xlu0 0
      %746 = vperm.xlu0 %745, %v728
      %v747 = vpop.permute.xlu0 %746
      %v761 = vunpack.c.l.b16 %v641
      %v762 = vunpack.c.h.b16 %v641
      %v763 = vunpack.c.l.b16 %v642
      %v764 = vunpack.c.h.b16 %v642
      %v765 = vunpack.c.l.b16 %v643
      %v766 = vunpack.c.l.b16 %v644
      %v767 = vunpack.c.h.b16 %v644
      %v768 = vunpack.c.l.b16 %v645
      %v769 = vunpack.c.h.b16 %v645
      %v770 = vunpack.c.l.b16 %v646
      %v771 = vunpack.c.l.b16 %v647
      %v772 = vunpack.c.h.b16 %v647
      %v773 = vunpack.c.l.b16 %v648
      %v774 = vunpack.c.h.b16 %v648
      %v775 = vunpack.c.l.b16 %v649
      %v776 = vunpack.c.l.b16 %v650
      %v777 = vunpack.c.h.b16 %v650
      %v778 = vunpack.c.l.b16 %v651
      %v779 = vunpack.c.h.b16 %v651
      %v780 = vunpack.c.l.b16 %v652
      %v781 = vpack.c.b16 %v766, %v761
      %v782 = vpack.c.b16 %v767, %v762
      %v783 = vpack.c.b16 %v768, %v763
      %v784 = vpack.c.b16 %v769, %v764
      %v785 = vpack.c.b16 %v770, %v765
      %v786 = vpack.c.b16 %v776, %v771
      %v787 = vpack.c.b16 %v777, %v772
      %v788 = vpack.c.b16 %v778, %v773
      %v789 = vpack.c.b16 %v779, %v774
      %v790 = vpack.c.b16 %v780, %v775
      %v871 = vunpack.c.l.b16 %v653
      %v872 = vunpack.c.l.b16 %v654
      %v873 = vunpack.c.l.b16 %v655
      %v874 = vunpack.c.l.b16 %v656
      %v875 = vunpack.c.l.b16 %v657
      %v876 = vunpack.c.l.b16 %v658
      %v877 = vunpack.c.l.b16 %v659
      %v878 = vunpack.c.l.b16 %v660
      %v879 = vunpack.c.l.b16 %v661
      %v880 = vunpack.c.l.b16 %v662
      %v881 = vunpack.c.l.b16 %v663
      %v882 = vunpack.c.l.b16 %v664
      %v883 = vunpack.c.l.b16 %v665
      %v884 = vunpack.c.l.b16 %v666
      %v885 = vunpack.c.l.b16 %v667
      %v886 = vunpack.c.l.b16 %v668
      %v887 = vunpack.c.l.b16 %v669
      %v888 = vunpack.c.l.b16 %v670
      %v889 = vunpack.c.l.b16 %v671
      %v890 = vunpack.c.l.b16 %v672
      %v891 = vunpack.c.l.b16 %v673
      %v892 = vunpack.c.l.b16 %v674
      %v893 = vunpack.c.l.b16 %v675
      %v894 = vunpack.c.l.b16 %v676
      %v895 = vunpack.c.l.b16 %v677
      %v896 = vunpack.c.l.b16 %v678
      %v897 = vunpack.c.l.b16 %v679
      %v898 = vunpack.c.l.b16 %v680
      %v899 = vunpack.c.l.b16 %v681
      %v900 = vunpack.c.l.b16 %v682
      %v901 = vunpack.c.l.b16 %v683
      %v902 = vunpack.c.l.b16 %v684
      %v903 = vunpack.c.l.b16 %v685
      %v904 = vunpack.c.l.b16 %v686
      %v905 = vunpack.c.l.b16 %v687
      %v906 = vunpack.c.l.b16 %v688
      %v907 = vunpack.c.l.b16 %v689
      %v908 = vunpack.c.l.b16 %v690
      %v909 = vunpack.c.l.b16 %v691
      %v910 = vunpack.c.l.b16 %v692
      %v911 = vunpack.c.l.b16 %v693
      %v912 = vunpack.c.l.b16 %v694
      %v913 = vunpack.c.l.b16 %v695
      %v914 = vunpack.c.l.b16 %v696
      %v915 = vunpack.c.l.b16 %v697
      %v916 = vunpack.c.l.b16 %v698
      %v917 = vunpack.c.l.b16 %v699
      %v918 = vunpack.c.l.b16 %v700
      %v919 = vunpack.c.l.b16 %v701
      %v920 = vunpack.c.l.b16 %v702
      %v921 = vunpack.c.l.b16 %v703
      %v922 = vunpack.c.l.b16 %v704
      %v923 = vunpack.c.l.b16 %v705
      %v924 = vunpack.c.l.b16 %v706
      %v925 = vunpack.c.l.b16 %v707
      %v926 = vunpack.c.l.b16 %v708
      %v927 = vunpack.c.l.b16 %v709
      %v928 = vunpack.c.l.b16 %v710
      %v929 = vunpack.c.l.b16 %v711
      %v930 = vunpack.c.l.b16 %v712
      %v931 = vunpack.c.l.b16 %v713
      %v932 = vunpack.c.l.b16 %v714
      %v933 = vunpack.c.l.b16 %v715
      %v934 = vunpack.c.l.b16 %v716
      %v935 = vunpack.c.l.b16 %v717
      %v936 = vunpack.c.l.b16 %v718
      %v937 = vunpack.c.l.b16 %v719
      %v938 = vunpack.c.l.b16 %v720
      %v939 = vunpack.c.l.b16 %v721
      %v940 = vunpack.c.l.b16 %v722
      %v941 = vunpack.c.l.b16 %v723
      %v942 = vunpack.c.l.b16 %v724
      %v943 = vpack.c.b16 %v872, %v871
      %v944 = vpack.c.b16 %v874, %v873
      %v945 = vpack.c.b16 %v876, %v875
      %v946 = vpack.c.b16 %v878, %v877
      %v947 = vpack.c.b16 %v880, %v879
      %v948 = vpack.c.b16 %v882, %v881
      %v949 = vpack.c.b16 %v884, %v883
      %v950 = vpack.c.b16 %v886, %v885
      %v951 = vpack.c.b16 %v888, %v887
      %v952 = vpack.c.b16 %v890, %v889
      %v953 = vpack.c.b16 %v892, %v891
      %v954 = vpack.c.b16 %v894, %v893
      %v955 = vpack.c.b16 %v896, %v895
      %v956 = vpack.c.b16 %v898, %v897
      %v957 = vpack.c.b16 %v900, %v899
      %v958 = vpack.c.b16 %v902, %v901
      %v959 = vpack.c.b16 %v904, %v903
      %v960 = vpack.c.b16 %v906, %v905
      %v961 = vpack.c.b16 %v908, %v907
      %v962 = vpack.c.b16 %v910, %v909
      %v963 = vpack.c.b16 %v912, %v911
      %v964 = vpack.c.b16 %v914, %v913
      %v965 = vpack.c.b16 %v916, %v915
      %v966 = vpack.c.b16 %v918, %v917
      %v967 = vpack.c.b16 %v920, %v919
      %v968 = vpack.c.b16 %v922, %v921
      %v969 = vpack.c.b16 %v924, %v923
      %v970 = vpack.c.b16 %v926, %v925
      %v971 = vpack.c.b16 %v928, %v927
      %v972 = vpack.c.b16 %v930, %v929
      %v973 = vpack.c.b16 %v932, %v931
      %v974 = vpack.c.b16 %v934, %v933
      %v975 = vpack.c.b16 %v936, %v935
      %v976 = vpack.c.b16 %v938, %v937
      %v977 = vpack.c.b16 %v940, %v939
      %v978 = vpack.c.b16 %v942, %v941
      %vm1015 = vcmask 523264
      %v1017 = vsel %vm1015, %v785, 0
      %v1020 = vsel %vm1015, %v790, 0
      %1022 = vmatpush.bf16.msra.mxu0 %v950
      %1023 = vmatpush.bf16.msra.mxu0 %v949
      %1024 = vmatpush.bf16.msra.mxu0 %v948
      %1025 = vmatpush.bf16.msra.mxu0 %v947
      %1026 = vmatpush.bf16.msra.mxu0 %v946
      %1027 = vmatpush.bf16.msra.mxu0 %v945
      %1028 = vmatpush.bf16.msra.mxu0 %v944
      %1029 = vmatpush.bf16.msra.mxu0 %v943
      %1030 = vmatmul.bf16.gmra.mxu0 %v781
      %v1031 = vpop.f32.mrf.mxu0
      %v1032 = vadd.f32 %v732, %v1031
      %v1033 = vpop.f32.mrf.mxu0
      %v1034 = vadd.f32 %v737, %v1033
      %1035 = vmatmul.bf16.gmra.mxu0 %v786
      %v1036 = vpop.f32.mrf.mxu0
      %v1037 = vadd.f32 %v742, %v1036
      %v1038 = vpop.f32.mrf.mxu0
      %v1039 = vadd.f32 %v747, %v1038
      %1040 = vdwg.mxu0
      %1041 = vmatpush.bf16.msra.mxu0 %v958
      %1042 = vmatpush.bf16.msra.mxu0 %v957
      %1043 = vmatpush.bf16.msra.mxu0 %v956
      %1044 = vmatpush.bf16.msra.mxu0 %v955
      %1045 = vmatpush.bf16.msra.mxu0 %v954
      %1046 = vmatpush.bf16.msra.mxu0 %v953
      %1047 = vmatpush.bf16.msra.mxu0 %v952
      %1048 = vmatpush.bf16.msra.mxu0 %v951
      %1049 = vmatmul.bf16.gmra.mxu0 %v782
      %v1050 = vpop.f32.mrf.mxu0
      %v1051 = vadd.f32 %v1032, %v1050
      %v1052 = vpop.f32.mrf.mxu0
      %v1053 = vadd.f32 %v1034, %v1052
      %1054 = vmatmul.bf16.gmra.mxu0 %v787
      %v1055 = vpop.f32.mrf.mxu0
      %v1056 = vadd.f32 %v1037, %v1055
      %v1057 = vpop.f32.mrf.mxu0
      %v1058 = vadd.f32 %v1039, %v1057
      %1059 = vdwg.mxu0
      %1060 = vmatpush.bf16.msra.mxu0 %v966
      %1061 = vmatpush.bf16.msra.mxu0 %v965
      %1062 = vmatpush.bf16.msra.mxu0 %v964
      %1063 = vmatpush.bf16.msra.mxu0 %v963
      %1064 = vmatpush.bf16.msra.mxu0 %v962
      %1065 = vmatpush.bf16.msra.mxu0 %v961
      %1066 = vmatpush.bf16.msra.mxu0 %v960
      %1067 = vmatpush.bf16.msra.mxu0 %v959
      %1068 = vmatmul.bf16.gmra.mxu0 %v783
      %v1069 = vpop.f32.mrf.mxu0
      %v1070 = vadd.f32 %v1051, %v1069
      %v1071 = vpop.f32.mrf.mxu0
      %v1072 = vadd.f32 %v1053, %v1071
      %1073 = vmatmul.bf16.gmra.mxu0 %v788
      %v1074 = vpop.f32.mrf.mxu0
      %v1075 = vadd.f32 %v1056, %v1074
      %v1076 = vpop.f32.mrf.mxu0
      %v1077 = vadd.f32 %v1058, %v1076
      %1078 = vdwg.mxu0
      %1079 = vmatpush.bf16.msra.mxu0 %v974
      %1080 = vmatpush.bf16.msra.mxu0 %v973
      %1081 = vmatpush.bf16.msra.mxu0 %v972
      %1082 = vmatpush.bf16.msra.mxu0 %v971
      %1083 = vmatpush.bf16.msra.mxu0 %v970
      %1084 = vmatpush.bf16.msra.mxu0 %v969
      %1085 = vmatpush.bf16.msra.mxu0 %v968
      %1086 = vmatpush.bf16.msra.mxu0 %v967
      %1087 = vmatmul.bf16.gmra.mxu0 %v784
      %v1088 = vpop.f32.mrf.mxu0
      %v1089 = vadd.f32 %v1070, %v1088
      %v1090 = vpop.f32.mrf.mxu0
      %v1091 = vadd.f32 %v1072, %v1090
      %1092 = vmatmul.bf16.gmra.mxu0 %v789
      %v1093 = vpop.f32.mrf.mxu0
      %v1094 = vadd.f32 %v1075, %v1093
      %v1095 = vpop.f32.mrf.mxu0
      %v1096 = vadd.f32 %v1077, %v1095
      %1097 = vdwg.mxu0
      %1098 = vmatpush.bf16.msra.mxu0 0
      %1099 = vmatpush.bf16.msra.mxu0 0
      %1100 = vmatpush.bf16.msra.mxu0 0
      %1101 = vmatpush.bf16.msra.mxu0 0
      %1102 = vmatpush.bf16.msra.mxu0 %v978
      %1103 = vmatpush.bf16.msra.mxu0 %v977
      %1104 = vmatpush.bf16.msra.mxu0 %v976
      %1105 = vmatpush.bf16.msra.mxu0 %v975
      %1106 = vmatmul.bf16.gmra.mxu0 %v1017
      %v1107 = vpop.f32.mrf.mxu0
      %v1108 = vadd.f32 %v1089, %v1107
      %v1109 = vpop.f32.mrf.mxu0
      %v1110 = vadd.f32 %v1091, %v1109
      %1111 = vmatmul.bf16.gmra.mxu0 %v1020
      %v1112 = vpop.f32.mrf.mxu0
      %v1113 = vadd.f32 %v1094, %v1112
      %v1114 = vpop.f32.mrf.mxu0
      %v1115 = vadd.f32 %v1096, %v1114
      %1116 = vdwg.mxu0
      %v1117 = vmax.f32 %v1108, 0.0
      %v1118 = vmax.f32 %v1110, 0.0
      %v1119 = vmax.f32 %v1113, 0.0
      %v1120 = vmax.f32 %v1115, 0.0
      %vm1121 = vcmask 130048
      %1122 = vst.msk [vmem:[%s170] sm:$0xff] %vm1121, %v1117
      %1123 = vst.msk [vmem:[%s170 + $0x8] sm:$0xff] %vm1121, %v1118
      %1124 = vst.msk [vmem:[%s170 + $0x10] sm:$0xff] %vm1121, %v1119
      %1125 = vst.msk [vmem:[%s170 + $0x18] sm:$0xff] %vm1121, %v1120
      %p1126 = scmp.lt.s32.totalorder %s14, 1
      %s1127 = scalar_select %p1126, %s14, 1
      %s1128 = smul.addr %s1127, 4
      %s1129 = smul.addr %s1128, 8
      %s1130 = scalar_lea.vmem %s3, %s1129
      // Predicated region
      $region33: #{context_conditioning_stack.15} parent=31 // pred_check
        %p1131 = pneg %p100
      $region34: #{context_conditioning_stack.15} parent=31 // pred_check_branch
        %1133 = sbr.rel (%p1131) target = $region36
      $region35: #{context_conditioning_stack.15} parent=31 // pred_region
        _
      $region36: #{context_conditioning_stack.15} parent=31 // pred_fallthru
        _
    $region32: #{context_conditioning_stack.15} parent=5 // pred_fallthru
      _
    %p1134 = scmp.le.s32.totalorder 2, %s9
    // Predicated region
    $region37: #{context_conditioning_stack.15} parent=5 // pred_check
      %p1135 = pneg %p1134
    $region38: #{context_conditioning_stack.15} parent=5 // pred_check_branch
      %1137 = sbr.rel (%p1135) target = $region40
    $region39: #{context_conditioning_stack.15} parent=5 // pred_region
      %s1138 = ssub.s32 %s9, 2
      // Predicated region
      $region41: #{context_conditioning_stack.15} parent=39 // pred_check
        %p1139 = pneg %p106
      $region42: #{context_conditioning_stack.15} parent=39 // pred_check_branch
        %1141 = sbr.rel (%p1139) target = $region44
      $region43: #{context_conditioning_stack.15} parent=39 // pred_region
        %p1142 = scmp.lt.s32.totalorder %s15, 1
        %s1143 = scalar_select %p1142, %s15, 1
        %s1144 = smul.addr %s1143, 4
        %s1145 = smul.addr %s1144, 8
        %s1146 = scalar_lea.vmem %s3, %s1145
      $region44: #{context_conditioning_stack.15} parent=39 // pred_fallthru
        _
    $region40: #{context_conditioning_stack.15} parent=5 // pred_fallthru
      _
  $region6: #{context_conditioning_stack.15} parent=0 // loop_footer
    %s13 = sadd.s32 1, %s9
  $region7: #{context_conditioning_stack.15} parent=0 // loop_footer_branch
    %8 = sbr.rel target = $region3
  $region8: #{context_conditioning_stack.15} parent=0 // loop_exit
    _

// kernel: context_conditioning_stack.14
$region0: #{context_conditioning_stack.14}
  #allocation0 [shape = 'u32[]', space=smem, size = 0x4, offset = 0x4, fixed_abs, tag = 'smem constant byte address 0x4 - core index']
  #allocation1 [shape = 'u32[72,128]{1,0:T(1,128)}', space=vmem, size = 0x9000, scoped, tag = 'internal scratch']
  #allocation2 [shape = 'bf16[288,36]{1,0:T(8,128)(2,1)}', space=vmem, size = 0x12000, scoped, tag = 'scratch operand']
  %s0 = inlined_call_operand.vmem [shape: bf16[2,32,292], index: 0, kind: input, shape index: {}]
  %s1 = inlined_call_operand.vmem [shape: bf16[16,288], index: 1, kind: input, shape index: {}]
  %s2 = inlined_call_operand.vmem [shape: f32[16,1], index: 2, kind: input, shape index: {}]
  %s3 = inlined_call_operand.vmem [shape: f32[2,16,36], index: 3, kind: output, shape index: {}]
  %s4 = sld [smem:[#allocation0]]
  $region45: #{context_conditioning_stack.14} parent=0
    _
  %s6 = ssub.s32 1, %s4
  %s7 = scalar_select 0, %s6, %s4
  loop: start=0, step=1, limit=4
  $region2: #{context_conditioning_stack.14} parent=0 // loop_pre_header
    _
  $region3: #{context_conditioning_stack.14} parent=0 // loop_header
    %s9 = sphi 0, %s13
    %p10 = scmp.ge.s32.totalorder %s9, 4
    %s19 = sphi 0, %s21
    %s22 = sphi 0, %s19
    %s23 = sphi 0, %s22
    %s39 = sphi 0, %s23
    %s43 = sphi 0, %s43
    %s45 = sphi 0, %s43
    %s46 = sphi 0, %s45
    %s60 = sphi 0, %s46
    %s64 = sphi 0, %s64
    %s66 = sphi 0, %s64
    %s67 = sphi 0, %s66
    %s81 = sphi 0, %s67
    %s87 = sphi 0, %s89
    %s90 = sphi 0, %s87
    %s91 = sphi 0, %s90
    %s107 = sphi 0, %s91
  $region4: #{context_conditioning_stack.14} parent=0 // loop_header_branch
    %12 = sbr.rel (%p10) target = $region8
  $region5: #{context_conditioning_stack.14} parent=0 // loop_body
    %s14 = ssub.s32 %s9, 1
    %s15 = ssub.s32 %s9, 2
    %s16 = sadd.s32 %s9, 1
    %s17 = ssub.s32 %s9, %s16
    %p18 = scmp.eq.s32.totalorder %s17, 0
    %s20 = sadd.s32 %s19, 1
    %s21 = scalar_select %p18, %s19, %s20
    %p24 = pneg %p18
    %p25 = scmp.eq.s32.totalorder %s9, 1
    %p26 = por %p24, %p25
    %p27 = scmp.ne.s32.totalorder %s19, %s22
    %p28 = scmp.eq.s32.totalorder %s9, 0
    %p29 = por %p27, %p28
    %p30 = scmp.ne.s32.totalorder %s19, %s22
    %p31 = scmp.eq.s32.totalorder %s14, 1
    %p32 = por %p30, %p31
    %p33 = scmp.ne.s32.totalorder %s22, %s23
    %p34 = scmp.eq.s32.totalorder %s14, 0
    %p35 = por %p33, %p34
    %p36 = scmp.ne.s32.totalorder %s22, %s23
    %p37 = scmp.eq.s32.totalorder %s15, 1
    %p38 = por %p36, %p37
    %p40 = scmp.ne.s32.totalorder %s23, %s39
    %p41 = scmp.eq.s32.totalorder %s15, 0
    %p42 = por %p40, %p41
    %s44 = sadd.s32 %s43, 1
    %p47 = scmp.eq.s32.totalorder %s9, 1
    %p48 = scmp.ne.s32.totalorder %s43, %s45
    %p49 = scmp.eq.s32.totalorder %s9, 0
    %p50 = por %p48, %p49
    %p51 = scmp.ne.s32.totalorder %s43, %s45
    %p52 = scmp.eq.s32.totalorder %s14, 1
    %p53 = por %p51, %p52
    %p54 = scmp.ne.s32.totalorder %s45, %s46
    %p55 = scmp.eq.s32.totalorder %s14, 0
    %p56 = por %p54, %p55
    %p57 = scmp.ne.s32.totalorder %s45, %s46
    %p58 = scmp.eq.s32.totalorder %s15, 1
    %p59 = por %p57, %p58
    %p61 = scmp.ne.s32.totalorder %s46, %s60
    %p62 = scmp.eq.s32.totalorder %s15, 0
    %p63 = por %p61, %p62
    %s65 = sadd.s32 %s64, 1
    %p68 = scmp.eq.s32.totalorder %s9, 1
    %p69 = scmp.ne.s32.totalorder %s64, %s66
    %p70 = scmp.eq.s32.totalorder %s9, 0
    %p71 = por %p69, %p70
    %p72 = scmp.ne.s32.totalorder %s64, %s66
    %p73 = scmp.eq.s32.totalorder %s14, 1
    %p74 = por %p72, %p73
    %p75 = scmp.ne.s32.totalorder %s66, %s67
    %p76 = scmp.eq.s32.totalorder %s14, 0
    %p77 = por %p75, %p76
    %p78 = scmp.ne.s32.totalorder %s66, %s67
    %p79 = scmp.eq.s32.totalorder %s15, 1
    %p80 = por %p78, %p79
    %p82 = scmp.ne.s32.totalorder %s67, %s81
    %p83 = scmp.eq.s32.totalorder %s15, 0
    %p84 = por %p82, %p83
    %s85 = ssub.s32 %s9, %s16
    %p86 = scmp.eq.s32.totalorder %s85, 0
    %s88 = sadd.s32 %s87, 1
    %s89 = scalar_select %p86, %s87, %s88
    %p92 = pneg %p86
    %p93 = scmp.eq.s32.totalorder %s9, 1
    %p94 = por %p92, %p93
    %p95 = scmp.ne.s32.totalorder %s87, %s90
    %p96 = scmp.eq.s32.totalorder %s9, 0
    %p97 = por %p95, %p96
    %p98 = scmp.ne.s32.totalorder %s87, %s90
    %p99 = scmp.eq.s32.totalorder %s14, 1
    %p100 = por %p98, %p99
    %p101 = scmp.ne.s32.totalorder %s90, %s91
    %p102 = scmp.eq.s32.totalorder %s14, 0
    %p103 = por %p101, %p102
    %p104 = scmp.ne.s32.totalorder %s90, %s91
    %p105 = scmp.eq.s32.totalorder %s15, 1
    %p106 = por %p104, %p105
    %p108 = scmp.ne.s32.totalorder %s91, %s107
    %p109 = scmp.eq.s32.totalorder %s15, 0
    %p110 = por %p108, %p109
    %p111 = scmp.le.s32.totalorder 1, %s9
    %p112 = scmp.lt.s32.totalorder %s9, 3
    %p113 = pnand %p111, %p112
    %p114 = pneg %p113
    // Predicated region
    $region9: #{context_conditioning_stack.14} parent=5 // pred_check
      _
    $region10: #{context_conditioning_stack.14} parent=5 // pred_check_branch
      %116 = sbr.rel (%p113) target = $region12
    $region11: #{context_conditioning_stack.14} parent=5 // pred_region
      %s117 = ssub.s32 %s9, 1
      // Predicated region
      $region13: #{context_conditioning_stack.14} parent=11 // pred_check
        %p118 = pneg %p56
      $region14: #{context_conditioning_stack.14} parent=11 // pred_check_branch
        %120 = sbr.rel (%p118) target = $region16
      $region15: #{context_conditioning_stack.14} parent=11 // pred_region
        _
      $region16: #{context_conditioning_stack.14} parent=11 // pred_fallthru
        _
      // Predicated region
      $region17: #{context_conditioning_stack.14} parent=11 // pred_check
        %p121 = pneg %p77
      $region18: #{context_conditioning_stack.14} parent=11 // pred_check_branch
        %123 = sbr.rel (%p121) target = $region20
      $region19: #{context_conditioning_stack.14} parent=11 // pred_region
        _
      $region20: #{context_conditioning_stack.14} parent=11 // pred_fallthru
        _
    $region12: #{context_conditioning_stack.14} parent=5 // pred_fallthru
      _
    %p124 = scmp.lt.s32.totalorder %s9, 2
    // Predicated region
    $region21: #{context_conditioning_stack.14} parent=5 // pred_check
      %p125 = pneg %p124
    $region22: #{context_conditioning_stack.14} parent=5 // pred_check_branch
      %127 = sbr.rel (%p125) target = $region24
    $region23: #{context_conditioning_stack.14} parent=5 // pred_region
      // Predicated region
      $region25: #{context_conditioning_stack.14} parent=23 // pred_check
        %p128 = pneg %p29
      $region26: #{context_conditioning_stack.14} parent=23 // pred_check_branch
        %130 = sbr.rel (%p128) target = $region28
      $region27: #{context_conditioning_stack.14} parent=23 // pred_region
        %p131 = scmp.lt.s32.totalorder %s9, 1
        %s132 = scalar_select %p131, %s9, 1
        %s133 = smul.addr %s132, 12
        %s134 = smul.addr %s133, 4
        %s135 = scalar_lea.vmem %s0, %s134
      $region28: #{context_conditioning_stack.14} parent=23 // pred_fallthru
        _
    $region24: #{context_conditioning_stack.14} parent=5 // pred_fallthru
      _
    %p136 = scmp.le.s32.totalorder 1, %s9
    %p137 = scmp.lt.s32.totalorder %s9, 3
    %p138 = pnand %p136, %p137
    %p139 = pneg %p138
    // Predicated region
    $region29: #{context_conditioning_stack.14} parent=5 // pred_check
      _
    $region30: #{context_conditioning_stack.14} parent=5 // pred_check_branch
      %141 = sbr.rel (%p138) target = $region32
    $region31: #{context_conditioning_stack.14} parent=5 // pred_region
      %s142 = ssub.s32 %s9, 1
      %p143 = scmp.lt.s32.totalorder %s14, 1
      %s144 = scalar_select %p143, %s14, 1
      %s145 = smul.addr %s144, 12
      %s146 = smul.addr %s145, 4
      %s147 = scalar_lea.vmem %s0, %s146
      %p148 = pneg %p35
      %p149 = pneg %p32
      %p150 = pneg %p56
      %p151 = pneg %p53
      %p152 = pneg %p77
      %p153 = pneg %p74
      %p154 = pneg %p103
      %p155 = pneg %p100
      %p156 = scmp.lt.s32.totalorder %s14, 1
      %s157 = scalar_select %p156, %s14, 1
      %s158 = smul.addr %s157, 2
      %s159 = smul.addr %s158, 8
      %s160 = scalar_lea.vmem %s3, %s159
      %p161 = scmp.lt.s32.totalorder %s14, 1
      %s162 = scalar_select %p161, %s14, 1
      %s163 = smul.addr %s162, 12
      %s164 = smul.addr %s163, 4
      %s165 = scalar_lea.vmem %s0, %s164
      %p166 = scmp.lt.s32.totalorder %s14, 1
      %s167 = scalar_select %p166, %s14, 1
      %s168 = smul.addr %s167, 2
      %s169 = smul.addr %s168, 8
      %s170 = scalar_lea.vmem %s3, %s169
      %v172 = vld [vmem:[%s165] sm:$0xff]
      %v173 = vld [vmem:[%s165 + $0xc] sm:$0xff]
      %v174 = vld [vmem:[%s165 + $0x18] sm:$0xff]
      %v175 = vld [vmem:[%s165 + $0x24] sm:$0xff]
      %180 = vrot.lane.b32.xlu0 %v172, 7
      %v181 = vpop.permute.xlu0 %180
      %182 = vrot.lane.b32.xlu0 %v173, 7
      %v183 = vpop.permute.xlu0 %182
      %184 = vrot.lane.b32.xlu0 %v174, 7
      %v185 = vpop.permute.xlu0 %184
      %186 = vrot.lane.b32.xlu0 %v175, 7
      %v187 = vpop.permute.xlu0 %186
      %v188 = vrot.slane %v181, 4
      %v189 = vrot.slane %v183, 4
      %v190 = vrot.slane %v185, 4
      %v191 = vrot.slane %v187, 4
      %vm192 = vcmask 56320
      %v193 = vsel %vm192, %v181, %v188
      %v194 = vsel %vm192, %v183, %v189
      %v195 = vsel %vm192, %v185, %v190
      %v196 = vsel %vm192, %v187, %v191
      %vm201 = vcmask 289792
      %202 = vst.msk [vmem:[#allocation2] sm:$0xf] %vm201, %v193
      %203 = vst.msk [vmem:[#allocation2 + $0x4] sm:$0xf] %vm201, %v194
      %204 = vst.msk [vmem:[#allocation2 + $0x8] sm:$0xf] %vm201, %v195
      %205 = vst.msk [vmem:[#allocation2 + $0xc] sm:$0xf] %vm201, %v196
      %v206 = vld [vmem:[%s165] sm:$0xff]
      %v207 = vld [vmem:[%s165 + $0xc] sm:$0xff]
      %v208 = vld [vmem:[%s165 + $0x18] sm:$0xff]
      %v209 = vld [vmem:[%s165 + $0x24] sm:$0xff]
      %214 = vrot.lane.b32.xlu0 %v206, 6
      %v215 = vpop.permute.xlu0 %214
      %216 = vrot.lane.b32.xlu0 %v207, 6
      %v217 = vpop.permute.xlu0 %216
      %218 = vrot.lane.b32.xlu0 %v208, 6
      %v219 = vpop.permute.xlu0 %218
      %220 = vrot.lane.b32.xlu0 %v209, 6
      %v221 = vpop.permute.xlu0 %220
      %v222 = vrot.slane %v215, 4
      %v223 = vrot.slane %v217, 4
      %v224 = vrot.slane %v219, 4
      %v225 = vrot.slane %v221, 4
      %vm226 = vcmask 48128
      %v227 = vsel %vm226, %v215, %v222
      %v228 = vsel %vm226, %v217, %v223
      %v229 = vsel %vm226, %v219, %v224
      %v230 = vsel %vm226, %v221, %v225
      %235 = vst.msk [vmem:[#allocation2 + $0x10] sm:$0xf] %vm201, %v227
      %236 = vst.msk [vmem:[#allocation2 + $0x14] sm:$0xf] %vm201, %v228
      %237 = vst.msk [vmem:[#allocation2 + $0x18] sm:$0xf] %vm201, %v229
      %238 = vst.msk [vmem:[#allocation2 + $0x1c] sm:$0xf] %vm201, %v230
      %v239 = vld [vmem:[%s165] sm:$0xff]
      %v240 = vld [vmem:[%s165 + $0xc] sm:$0xff]
      %v241 = vld [vmem:[%s165 + $0x18] sm:$0xff]
      %v242 = vld [vmem:[%s165 + $0x24] sm:$0xff]
      %247 = vrot.lane.b32.xlu0 %v239, 5
      %v248 = vpop.permute.xlu0 %247
      %249 = vrot.lane.b32.xlu0 %v240, 5
      %v250 = vpop.permute.xlu0 %249
      %251 = vrot.lane.b32.xlu0 %v241, 5
      %v252 = vpop.permute.xlu0 %251
      %253 = vrot.lane.b32.xlu0 %v242, 5
      %v254 = vpop.permute.xlu0 %253
      %v255 = vrot.slane %v248, 4
      %v256 = vrot.slane %v250, 4
      %v257 = vrot.slane %v252, 4
      %v258 = vrot.slane %v254, 4
      %vm259 = vcmask 39936
      %v260 = vsel %vm259, %v248, %v255
      %v261 = vsel %vm259, %v250, %v256
      %v262 = vsel %vm259, %v252, %v257
      %v263 = vsel %vm259, %v254, %v258
      %268 = vst.msk [vmem:[#allocation2 + $0x20] sm:$0xf] %vm201, %v260
      %269 = vst.msk [vmem:[#allocation2 + $0x24] sm:$0xf] %vm201, %v261
      %270 = vst.msk [vmem:[#allocation2 + $0x28] sm:$0xf] %vm201, %v262
      %271 = vst.msk [vmem:[#allocation2 + $0x2c] sm:$0xf] %vm201, %v263
      %v272 = vld [vmem:[%s165] sm:$0xff]
      %v273 = vld [vmem:[%s165 + $0xc] sm:$0xff]
      %v274 = vld [vmem:[%s165 + $0x18] sm:$0xff]
      %v275 = vld [vmem:[%s165 + $0x24] sm:$0xff]
      %280 = vrot.lane.b32.xlu0 %v272, 1
      %v281 = vpop.permute.xlu0 %280
      %282 = vrot.lane.b32.xlu0 %v273, 1
      %v283 = vpop.permute.xlu0 %282
      %284 = vrot.lane.b32.xlu0 %v274, 1
      %v285 = vpop.permute.xlu0 %284
      %286 = vrot.lane.b32.xlu0 %v275, 1
      %v287 = vpop.permute.xlu0 %286
      %v288 = vrot.slane %v281, 4
      %v289 = vrot.slane %v283, 4
      %v290 = vrot.slane %v285, 4
      %v291 = vrot.slane %v287, 4
      %vm292 = vcmask 7168
      %v293 = vsel %vm292, %v281, %v288
      %v294 = vsel %vm292, %v283, %v289
      %v295 = vsel %vm292, %v285, %v290
      %v296 = vsel %vm292, %v287, %v291
      %301 = vst.msk [vmem:[#allocation2 + $0x30] sm:$0xf] %vm201, %v293
      %302 = vst.msk [vmem:[#allocation2 + $0x34] sm:$0xf] %vm201, %v294
      %303 = vst.msk [vmem:[#allocation2 + $0x38] sm:$0xf] %vm201, %v295
      %304 = vst.msk [vmem:[#allocation2 + $0x3c] sm:$0xf] %vm201, %v296
      %v305 = vld [vmem:[%s165 + $0x4] sm:$0xf]
      %v306 = vld [vmem:[%s165 + $0x10] sm:$0xf]
      %v307 = vld [vmem:[%s165 + $0x1c] sm:$0xf]
      %v308 = vld [vmem:[%s165 + $0x28] sm:$0xf]
      %309 = vst.msk [vmem:[#allocation2 + $0x40] sm:$0xf] %vm201, %v305
      %310 = vst.msk [vmem:[#allocation2 + $0x44] sm:$0xf] %vm201, %v306
      %311 = vst.msk [vmem:[#allocation2 + $0x48] sm:$0xf] %vm201, %v307
      %312 = vst.msk [vmem:[#allocation2 + $0x4c] sm:$0xf] %vm201, %v308
      %v313 = vld [vmem:[%s165 + $0x4] sm:$0xf]
      %v314 = vld [vmem:[%s165 + $0x10] sm:$0xf]
      %v315 = vld [vmem:[%s165 + $0x1c] sm:$0xf]
      %v316 = vld [vmem:[%s165 + $0x28] sm:$0xf]
      %321 = vrot.lane.b32.xlu0 %v313, 127
      %v322 = vpop.permute.xlu0 %321
      %323 = vrot.lane.b32.xlu0 %v314, 127
      %v324 = vpop.permute.xlu0 %323
      %325 = vrot.lane.b32.xlu0 %v315, 127
      %v326 = vpop.permute.xlu0 %325
      %327 = vrot.lane.b32.xlu0 %v316, 127
      %v328 = vpop.permute.xlu0 %327
      %333 = vst.msk [vmem:[#allocation2 + $0x50] sm:$0xf] %vm201, %v322
      %334 = vst.msk [vmem:[#allocation2 + $0x54] sm:$0xf] %vm201, %v324
      %335 = vst.msk [vmem:[#allocation2 + $0x58] sm:$0xf] %vm201, %v326
      %336 = vst.msk [vmem:[#allocation2 + $0x5c] sm:$0xf] %vm201, %v328
      %v337 = vld [vmem:[%s165 + $0x4] sm:$0xf]
      %v338 = vld [vmem:[%s165 + $0x10] sm:$0xf]
      %v339 = vld [vmem:[%s165 + $0x1c] sm:$0xf]
      %v340 = vld [vmem:[%s165 + $0x28] sm:$0xf]
      %345 = vrot.lane.b32.xlu0 %v337, 123
      %v346 = vpop.permute.xlu0 %345
      %347 = vrot.lane.b32.xlu0 %v338, 123
      %v348 = vpop.permute.xlu0 %347
      %349 = vrot.lane.b32.xlu0 %v339, 123
      %v350 = vpop.permute.xlu0 %349
      %351 = vrot.lane.b32.xlu0 %v340, 123
      %v352 = vpop.permute.xlu0 %351
      %357 = vst.msk [vmem:[#allocation2 + $0x60] sm:$0xf] %vm201, %v346
      %358 = vst.msk [vmem:[#allocation2 + $0x64] sm:$0xf] %vm201, %v348
      %359 = vst.msk [vmem:[#allocation2 + $0x68] sm:$0xf] %vm201, %v350
      %360 = vst.msk [vmem:[#allocation2 + $0x6c] sm:$0xf] %vm201, %v352
      %v361 = vld [vmem:[%s165 + $0x4] sm:$0xf]
      %v362 = vld [vmem:[%s165 + $0x10] sm:$0xf]
      %v363 = vld [vmem:[%s165 + $0x1c] sm:$0xf]
      %v364 = vld [vmem:[%s165 + $0x28] sm:$0xf]
      %369 = vrot.lane.b32.xlu0 %v361, 122
      %v370 = vpop.permute.xlu0 %369
      %371 = vrot.lane.b32.xlu0 %v362, 122
      %v372 = vpop.permute.xlu0 %371
      %373 = vrot.lane.b32.xlu0 %v363, 122
      %v374 = vpop.permute.xlu0 %373
      %375 = vrot.lane.b32.xlu0 %v364, 122
      %v376 = vpop.permute.xlu0 %375
      %381 = vst.msk [vmem:[#allocation2 + $0x70] sm:$0xf] %vm201, %v370
      %382 = vst.msk [vmem:[#allocation2 + $0x74] sm:$0xf] %vm201, %v372
      %383 = vst.msk [vmem:[#allocation2 + $0x78] sm:$0xf] %vm201, %v374
      %384 = vst.msk [vmem:[#allocation2 + $0x7c] sm:$0xf] %vm201, %v376
      %v385 = vld [vmem:[%s165 + $0x4] sm:$0xf]
      %v386 = vld [vmem:[%s165 + $0x10] sm:$0xf]
      %v387 = vld [vmem:[%s165 + $0x1c] sm:$0xf]
      %v388 = vld [vmem:[%s165 + $0x28] sm:$0xf]
      %393 = vrot.lane.b32.xlu0 %v385, 121
      %v394 = vpop.permute.xlu0 %393
      %395 = vrot.lane.b32.xlu0 %v386, 121
      %v396 = vpop.permute.xlu0 %395
      %397 = vrot.lane.b32.xlu0 %v387, 121
      %v398 = vpop.permute.xlu0 %397
      %399 = vrot.lane.b32.xlu0 %v388, 121
      %v400 = vpop.permute.xlu0 %399
      %405 = vst.msk [vmem:[#allocation2 + $0x80] sm:$0xf] %vm201, %v394
      %406 = vst.msk [vmem:[#allocation2 + $0x84] sm:$0xf] %vm201, %v396
      %407 = vst.msk [vmem:[#allocation2 + $0x88] sm:$0xf] %vm201, %v398
      %408 = vst.msk [vmem:[#allocation2 + $0x8c] sm:$0xf] %vm201, %v400
      %v409 = vld [vmem:[%s1] sm:$0xff]
      %v410 = vld [vmem:[%s1 + $0x8] sm:$0xf]
      %v411 = vld [vmem:[%s1 + $0xc] sm:$0xff]
      %v412 = vld [vmem:[%s1 + $0x14] sm:$0xf]
      %v413 = vld [vmem:[#allocation2] sm:$0xf]
      %v414 = vld [vmem:[#allocation2 + $0x4] sm:$0xf]
      %v415 = vld [vmem:[#allocation2 + $0x8] sm:$0xf]
      %v416 = vld [vmem:[#allocation2 + $0xc] sm:$0xf]
      %v417 = vld [vmem:[#allocation2 + $0x10] sm:$0xf]
      %v418 = vld [vmem:[#allocation2 + $0x14] sm:$0xf]
      %v419 = vld [vmem:[#allocation2 + $0x18] sm:$0xf]
      %v420 = vld [vmem:[#allocation2 + $0x1c] sm:$0xf]
      %v421 = vld [vmem:[#allocation2 + $0x20] sm:$0xf]
      %v422 = vld [vmem:[#allocation2 + $0x24] sm:$0xf]
      %v423 = vld [vmem:[#allocation2 + $0x28] sm:$0xf]
      %v424 = vld [vmem:[#allocation2 + $0x2c] sm:$0xf]
      %v425 = vld [vmem:[#allocation2 + $0x30] sm:$0xf]
      %v426 = vld [vmem:[#allocation2 + $0x34] sm:$0xf]
      %v427 = vld [vmem:[#allocation2 + $0x38] sm:$0xf]
      %v428 = vld [vmem:[#allocation2 + $0x3c] sm:$0xf]
      %v429 = vld [vmem:[#allocation2 + $0x40] sm:$0xf]
      %v430 = vld [vmem:[#allocation2 + $0x44] sm:$0xf]
      %v431 = vld [vmem:[#allocation2 + $0x48] sm:$0xf]
      %v432 = vld [vmem:[#allocation2 + $0x4c] sm:$0xf]
      %v433 = vld [vmem:[#allocation2 + $0x50] sm:$0xf]
      %v434 = vld [vmem:[#allocation2 + $0x54] sm:$0xf]
      %v435 = vld [vmem:[#allocation2 + $0x58] sm:$0xf]
      %v436 = vld [vmem:[#allocation2 + $0x5c] sm:$0xf]
      %v437 = vld [vmem:[#allocation2 + $0x60] sm:$0xf]
      %v438 = vld [vmem:[#allocation2 + $0x64] sm:$0xf]
      %v439 = vld [vmem:[#allocation2 + $0x68] sm:$0xf]
      %v440 = vld [vmem:[#allocation2 + $0x6c] sm:$0xf]
      %v441 = vld [vmem:[#allocation2 + $0x70] sm:$0xf]
      %v442 = vld [vmem:[#allocation2 + $0x74] sm:$0xf]
      %v443 = vld [vmem:[#allocation2 + $0x78] sm:$0xf]
      %v444 = vld [vmem:[#allocation2 + $0x7c] sm:$0xf]
      %v445 = vld [vmem:[#allocation2 + $0x80] sm:$0xf]
      %v446 = vld [vmem:[#allocation2 + $0x84] sm:$0xf]
      %v447 = vld [vmem:[#allocation2 + $0x88] sm:$0xf]
      %v448 = vld [vmem:[#allocation2 + $0x8c] sm:$0xf]
      %v449 = vld [vmem:[%s2] sm:$0xff]
      %v450 = vld [vmem:[%s2 + $0x8] sm:$0xff]
      %452 = vset.pattern.permute.xlu0 0
      %453 = vperm.xlu0 %452, %v449
      %v454 = vpop.permute.xlu0 %453
      %457 = vset.pattern.permute.xlu0 0
      %458 = vperm.xlu0 %457, %v450
      %v459 = vpop.permute.xlu0 %458
      %v465 = vunpack.c.l.b16 %v409
      %v466 = vunpack.c.h.b16 %v409
      %v467 = vunpack.c.l.b16 %v410
      %v468 = vunpack.c.l.b16 %v411
      %v469 = vunpack.c.h.b16 %v411
      %v470 = vunpack.c.l.b16 %v412
      %v471 = vpack.c.b16 %v468, %v465
      %v472 = vpack.c.b16 %v469, %v466
      %v473 = vpack.c.b16 %v470, %v467
      %v512 = vunpack.c.l.b16 %v413
      %v513 = vunpack.c.l.b16 %v414
      %v514 = vunpack.c.l.b16 %v415
      %v515 = vunpack.c.l.b16 %v416
      %v516 = vunpack.c.l.b16 %v417
      %v517 = vunpack.c.l.b16 %v418
      %v518 = vunpack.c.l.b16 %v419
      %v519 = vunpack.c.l.b16 %v420
      %v520 = vunpack.c.l.b16 %v421
      %v521 = vunpack.c.l.b16 %v422
      %v522 = vunpack.c.l.b16 %v423
      %v523 = vunpack.c.l.b16 %v424
      %v524 = vunpack.c.l.b16 %v425
      %v525 = vunpack.c.l.b16 %v426
      %v526 = vunpack.c.l.b16 %v427
      %v527 = vunpack.c.l.b16 %v428
      %v528 = vunpack.c.l.b16 %v429
      %v529 = vunpack.c.l.b16 %v430
      %v530 = vunpack.c.l.b16 %v431
      %v531 = vunpack.c.l.b16 %v432
      %v532 = vunpack.c.l.b16 %v433
      %v533 = vunpack.c.l.b16 %v434
      %v534 = vunpack.c.l.b16 %v435
      %v535 = vunpack.c.l.b16 %v436
      %v536 = vunpack.c.l.b16 %v437
      %v537 = vunpack.c.l.b16 %v438
      %v538 = vunpack.c.l.b16 %v439
      %v539 = vunpack.c.l.b16 %v440
      %v540 = vunpack.c.l.b16 %v441
      %v541 = vunpack.c.l.b16 %v442
      %v542 = vunpack.c.l.b16 %v443
      %v543 = vunpack.c.l.b16 %v444
      %v544 = vunpack.c.l.b16 %v445
      %v545 = vunpack.c.l.b16 %v446
      %v546 = vunpack.c.l.b16 %v447
      %v547 = vunpack.c.l.b16 %v448
      %v548 = vpack.c.b16 %v513, %v512
      %v549 = vpack.c.b16 %v515, %v514
      %v550 = vpack.c.b16 %v517, %v516
      %v551 = vpack.c.b16 %v519, %v518
      %v552 = vpack.c.b16 %v521, %v520
      %v553 = vpack.c.b16 %v523, %v522
      %v554 = vpack.c.b16 %v525, %v524
      %v555 = vpack.c.b16 %v527, %v526
      %v556 = vpack.c.b16 %v529, %v528
      %v557 = vpack.c.b16 %v531, %v530
      %v558 = vpack.c.b16 %v533, %v532
      %v559 = vpack.c.b16 %v535, %v534
      %v560 = vpack.c.b16 %v537, %v536
      %v561 = vpack.c.b16 %v539, %v538
      %v562 = vpack.c.b16 %v541, %v540
      %v563 = vpack.c.b16 %v543, %v542
      %v564 = vpack.c.b16 %v545, %v544
      %v565 = vpack.c.b16 %v547, %v546
      %vm584 = vcmask 261120
      %v586 = vsel %vm584, %v473, 0
      %588 = vmatpush.bf16.msra.mxu0 %v555
      %589 = vmatpush.bf16.msra.mxu0 %v554
      %590 = vmatpush.bf16.msra.mxu0 %v553
      %591 = vmatpush.bf16.msra.mxu0 %v552
      %592 = vmatpush.bf16.msra.mxu0 %v551
      %593 = vmatpush.bf16.msra.mxu0 %v550
      %594 = vmatpush.bf16.msra.mxu0 %v549
      %595 = vmatpush.bf16.msra.mxu0 %v548
      %596 = vmatmul.bf16.gmra.mxu0 %v471
      %v597 = vpop.f32.mrf.mxu0
      %v598 = vadd.f32 %v454, %v597
      %v599 = vpop.f32.mrf.mxu0
      %v600 = vadd.f32 %v459, %v599
      %601 = vdwg.mxu0
      %602 = vmatpush.bf16.msra.mxu0 %v563
      %603 = vmatpush.bf16.msra.mxu0 %v562
      %604 = vmatpush.bf16.msra.mxu0 %v561
      %605 = vmatpush.bf16.msra.mxu0 %v560
      %606 = vmatpush.bf16.msra.mxu0 %v559
      %607 = vmatpush.bf16.msra.mxu0 %v558
      %608 = vmatpush.bf16.msra.mxu0 %v557
      %609 = vmatpush.bf16.msra.mxu0 %v556
      %610 = vmatmul.bf16.gmra.mxu0 %v472
      %v611 = vpop.f32.mrf.mxu0
      %v612 = vadd.f32 %v598, %v611
      %v613 = vpop.f32.mrf.mxu0
      %v614 = vadd.f32 %v600, %v613
      %615 = vdwg.mxu0
      %616 = vmatpush.bf16.msra.mxu0 0
      %617 = vmatpush.bf16.msra.mxu0 0
      %618 = vmatpush.bf16.msra.mxu0 0
      %619 = vmatpush.bf16.msra.mxu0 0
      %620 = vmatpush.bf16.msra.mxu0 0
      %621 = vmatpush.bf16.msra.mxu0 0
      %622 = vmatpush.bf16.msra.mxu0 %v565
      %623 = vmatpush.bf16.msra.mxu0 %v564
      %624 = vmatmul.bf16.gmra.mxu0 %v586
      %v625 = vpop.f32.mrf.mxu0
      %v626 = vadd.f32 %v612, %v625
      %v627 = vpop.f32.mrf.mxu0
      %v628 = vadd.f32 %v614, %v627
      %629 = vdwg.mxu0
      %v630 = vmax.f32 %v626, 0.0
      %v631 = vmax.f32 %v628, 0.0
      %vm632 = vcmask 293888
      %633 = vst.msk [vmem:[%s170] sm:$0xff] %vm632, %v630
      %634 = vst.msk [vmem:[%s170 + $0x8] sm:$0xff] %vm632, %v631
      %p635 = scmp.lt.s32.totalorder %s14, 1
      %s636 = scalar_select %p635, %s14, 1
      %s637 = smul.addr %s636, 2
      %s638 = smul.addr %s637, 8
      %s639 = scalar_lea.vmem %s3, %s638
      // Predicated region
      $region33: #{context_conditioning_stack.14} parent=31 // pred_check
        %p640 = pneg %p100
      $region34: #{context_conditioning_stack.14} parent=31 // pred_check_branch
        %642 = sbr.rel (%p640) target = $region36
      $region35: #{context_conditioning_stack.14} parent=31 // pred_region
        _
      $region36: #{context_conditioning_stack.14} parent=31 // pred_fallthru
        _
    $region32: #{context_conditioning_stack.14} parent=5 // pred_fallthru
      _
    %p643 = scmp.le.s32.totalorder 2, %s9
    // Predicated region
    $region37: #{context_conditioning_stack.14} parent=5 // pred_check
      %p644 = pneg %p643
    $region38: #{context_conditioning_stack.14} parent=5 // pred_check_branch
      %646 = sbr.rel (%p644) target = $region40
    $region39: #{context_conditioning_stack.14} parent=5 // pred_region
      %s647 = ssub.s32 %s9, 2
      // Predicated region
      $region41: #{context_conditioning_stack.14} parent=39 // pred_check
        %p648 = pneg %p106
      $region42: #{context_conditioning_stack.14} parent=39 // pred_check_branch
        %650 = sbr.rel (%p648) target = $region44
      $region43: #{context_conditioning_stack.14} parent=39 // pred_region
        %p651 = scmp.lt.s32.totalorder %s15, 1
        %s652 = scalar_select %p651, %s15, 1
        %s653 = smul.addr %s652, 2
        %s654 = smul.addr %s653, 8
        %s655 = scalar_lea.vmem %s3, %s654
      $region44: #{context_conditioning_stack.14} parent=39 // pred_fallthru
        _
    $region40: #{context_conditioning_stack.14} parent=5 // pred_fallthru
      _
  $region6: #{context_conditioning_stack.14} parent=0 // loop_footer
    %s13 = sadd.s32 1, %s9
  $region7: #{context_conditioning_stack.14} parent=0 // loop_footer_branch
    %8 = sbr.rel target = $region3
  $region8: #{context_conditioning_stack.14} parent=0 // loop_exit
    _

// kernel: context_conditioning_stack.13
$region0: #{context_conditioning_stack.13}
  #allocation0 [shape = 'u32[]', space=smem, size = 0x4, offset = 0x4, fixed_abs, tag = 'smem constant byte address 0x4 - core index']
  #allocation1 [shape = 'u32[72,128]{1,0:T(1,128)}', space=vmem, size = 0x9000, scoped, tag = 'internal scratch']
  #allocation2 [shape = 'bf16[288,100]{1,0:T(8,128)(2,1)}', space=vmem, size = 0x12000, scoped, tag = 'scratch operand']
  %s0 = inlined_call_operand.vmem [shape: bf16[2,32,356], index: 0, kind: input, shape index: {}]
  %s1 = inlined_call_operand.vmem [shape: bf16[8,288], index: 1, kind: input, shape index: {}]
  %s2 = inlined_call_operand.vmem [shape: f32[8,1], index: 2, kind: input, shape index: {}]
  %s3 = inlined_call_operand.vmem [shape: f32[2,8,100], index: 3, kind: output, shape index: {}]
  %s4 = sld [smem:[#allocation0]]
  $region45: #{context_conditioning_stack.13} parent=0
    _
  %s6 = ssub.s32 1, %s4
  %s7 = scalar_select 0, %s6, %s4
  loop: start=0, step=1, limit=4
  $region2: #{context_conditioning_stack.13} parent=0 // loop_pre_header
    _
  $region3: #{context_conditioning_stack.13} parent=0 // loop_header
    %s9 = sphi 0, %s13
    %p10 = scmp.ge.s32.totalorder %s9, 4
    %s19 = sphi 0, %s21
    %s22 = sphi 0, %s19
    %s23 = sphi 0, %s22
    %s39 = sphi 0, %s23
    %s43 = sphi 0, %s43
    %s45 = sphi 0, %s43
    %s46 = sphi 0, %s45
    %s60 = sphi 0, %s46
    %s64 = sphi 0, %s64
    %s66 = sphi 0, %s64
    %s67 = sphi 0, %s66
    %s81 = sphi 0, %s67
    %s87 = sphi 0, %s89
    %s90 = sphi 0, %s87
    %s91 = sphi 0, %s90
    %s107 = sphi 0, %s91
  $region4: #{context_conditioning_stack.13} parent=0 // loop_header_branch
    %12 = sbr.rel (%p10) target = $region8
  $region5: #{context_conditioning_stack.13} parent=0 // loop_body
    %s14 = ssub.s32 %s9, 1
    %s15 = ssub.s32 %s9, 2
    %s16 = sadd.s32 %s9, 1
    %s17 = ssub.s32 %s9, %s16
    %p18 = scmp.eq.s32.totalorder %s17, 0
    %s20 = sadd.s32 %s19, 1
    %s21 = scalar_select %p18, %s19, %s20
    %p24 = pneg %p18
    %p25 = scmp.eq.s32.totalorder %s9, 1
    %p26 = por %p24, %p25
    %p27 = scmp.ne.s32.totalorder %s19, %s22
    %p28 = scmp.eq.s32.totalorder %s9, 0
    %p29 = por %p27, %p28
    %p30 = scmp.ne.s32.totalorder %s19, %s22
    %p31 = scmp.eq.s32.totalorder %s14, 1
    %p32 = por %p30, %p31
    %p33 = scmp.ne.s32.totalorder %s22, %s23
    %p34 = scmp.eq.s32.totalorder %s14, 0
    %p35 = por %p33, %p34
    %p36 = scmp.ne.s32.totalorder %s22, %s23
    %p37 = scmp.eq.s32.totalorder %s15, 1
    %p38 = por %p36, %p37
    %p40 = scmp.ne.s32.totalorder %s23, %s39
    %p41 = scmp.eq.s32.totalorder %s15, 0
    %p42 = por %p40, %p41
    %s44 = sadd.s32 %s43, 1
    %p47 = scmp.eq.s32.totalorder %s9, 1
    %p48 = scmp.ne.s32.totalorder %s43, %s45
    %p49 = scmp.eq.s32.totalorder %s9, 0
    %p50 = por %p48, %p49
    %p51 = scmp.ne.s32.totalorder %s43, %s45
    %p52 = scmp.eq.s32.totalorder %s14, 1
    %p53 = por %p51, %p52
    %p54 = scmp.ne.s32.totalorder %s45, %s46
    %p55 = scmp.eq.s32.totalorder %s14, 0
    %p56 = por %p54, %p55
    %p57 = scmp.ne.s32.totalorder %s45, %s46
    %p58 = scmp.eq.s32.totalorder %s15, 1
    %p59 = por %p57, %p58
    %p61 = scmp.ne.s32.totalorder %s46, %s60
    %p62 = scmp.eq.s32.totalorder %s15, 0
    %p63 = por %p61, %p62
    %s65 = sadd.s32 %s64, 1
    %p68 = scmp.eq.s32.totalorder %s9, 1
    %p69 = scmp.ne.s32.totalorder %s64, %s66
    %p70 = scmp.eq.s32.totalorder %s9, 0
    %p71 = por %p69, %p70
    %p72 = scmp.ne.s32.totalorder %s64, %s66
    %p73 = scmp.eq.s32.totalorder %s14, 1
    %p74 = por %p72, %p73
    %p75 = scmp.ne.s32.totalorder %s66, %s67
    %p76 = scmp.eq.s32.totalorder %s14, 0
    %p77 = por %p75, %p76
    %p78 = scmp.ne.s32.totalorder %s66, %s67
    %p79 = scmp.eq.s32.totalorder %s15, 1
    %p80 = por %p78, %p79
    %p82 = scmp.ne.s32.totalorder %s67, %s81
    %p83 = scmp.eq.s32.totalorder %s15, 0
    %p84 = por %p82, %p83
    %s85 = ssub.s32 %s9, %s16
    %p86 = scmp.eq.s32.totalorder %s85, 0
    %s88 = sadd.s32 %s87, 1
    %s89 = scalar_select %p86, %s87, %s88
    %p92 = pneg %p86
    %p93 = scmp.eq.s32.totalorder %s9, 1
    %p94 = por %p92, %p93
    %p95 = scmp.ne.s32.totalorder %s87, %s90
    %p96 = scmp.eq.s32.totalorder %s9, 0
    %p97 = por %p95, %p96
    %p98 = scmp.ne.s32.totalorder %s87, %s90
    %p99 = scmp.eq.s32.totalorder %s14, 1
    %p100 = por %p98, %p99
    %p101 = scmp.ne.s32.totalorder %s90, %s91
    %p102 = scmp.eq.s32.totalorder %s14, 0
    %p103 = por %p101, %p102
    %p104 = scmp.ne.s32.totalorder %s90, %s91
    %p105 = scmp.eq.s32.totalorder %s15, 1
    %p106 = por %p104, %p105
    %p108 = scmp.ne.s32.totalorder %s91, %s107
    %p109 = scmp.eq.s32.totalorder %s15, 0
    %p110 = por %p108, %p109
    %p111 = scmp.le.s32.totalorder 1, %s9
    %p112 = scmp.lt.s32.totalorder %s9, 3
    %p113 = pnand %p111, %p112
    %p114 = pneg %p113
    // Predicated region
    $region9: #{context_conditioning_stack.13} parent=5 // pred_check
      _
    $region10: #{context_conditioning_stack.13} parent=5 // pred_check_branch
      %116 = sbr.rel (%p113) target = $region12
    $region11: #{context_conditioning_stack.13} parent=5 // pred_region
      %s117 = ssub.s32 %s9, 1
      // Predicated region
      $region13: #{context_conditioning_stack.13} parent=11 // pred_check
        %p118 = pneg %p56
      $region14: #{context_conditioning_stack.13} parent=11 // pred_check_branch
        %120 = sbr.rel (%p118) target = $region16
      $region15: #{context_conditioning_stack.13} parent=11 // pred_region
        _
      $region16: #{context_conditioning_stack.13} parent=11 // pred_fallthru
        _
      // Predicated region
      $region17: #{context_conditioning_stack.13} parent=11 // pred_check
        %p121 = pneg %p77
      $region18: #{context_conditioning_stack.13} parent=11 // pred_check_branch
        %123 = sbr.rel (%p121) target = $region20
      $region19: #{context_conditioning_stack.13} parent=11 // pred_region
        _
      $region20: #{context_conditioning_stack.13} parent=11 // pred_fallthru
        _
    $region12: #{context_conditioning_stack.13} parent=5 // pred_fallthru
      _
    %p124 = scmp.lt.s32.totalorder %s9, 2
    // Predicated region
    $region21: #{context_conditioning_stack.13} parent=5 // pred_check
      %p125 = pneg %p124
    $region22: #{context_conditioning_stack.13} parent=5 // pred_check_branch
      %127 = sbr.rel (%p125) target = $region24
    $region23: #{context_conditioning_stack.13} parent=5 // pred_region
      // Predicated region
      $region25: #{context_conditioning_stack.13} parent=23 // pred_check
        %p128 = pneg %p29
      $region26: #{context_conditioning_stack.13} parent=23 // pred_check_branch
        %130 = sbr.rel (%p128) target = $region28
      $region27: #{context_conditioning_stack.13} parent=23 // pred_region
        %p131 = scmp.lt.s32.totalorder %s9, 1
        %s132 = scalar_select %p131, %s9, 1
        %s133 = smul.addr %s132, 12
        %s134 = smul.addr %s133, 4
        %s135 = scalar_lea.vmem %s0, %s134
      $region28: #{context_conditioning_stack.13} parent=23 // pred_fallthru
        _
    $region24: #{context_conditioning_stack.13} parent=5 // pred_fallthru
      _
    %p136 = scmp.le.s32.totalorder 1, %s9
    %p137 = scmp.lt.s32.totalorder %s9, 3
    %p138 = pnand %p136, %p137
    %p139 = pneg %p138
    // Predicated region
    $region29: #{context_conditioning_stack.13} parent=5 // pred_check
      _
    $region30: #{context_conditioning_stack.13} parent=5 // pred_check_branch
      %141 = sbr.rel (%p138) target = $region32
    $region31: #{context_conditioning_stack.13} parent=5 // pred_region
      %s142 = ssub.s32 %s9, 1
      %p143 = scmp.lt.s32.totalorder %s14, 1
      %s144 = scalar_select %p143, %s14, 1
      %s145 = smul.addr %s144, 12
      %s146 = smul.addr %s145, 4
      %s147 = scalar_lea.vmem %s0, %s146
      %p148 = pneg %p35
      %p149 = pneg %p32
      %p150 = pneg %p56
      %p151 = pneg %p53
      %p152 = pneg %p77
      %p153 = pneg %p74
      %p154 = pneg %p103
      %p155 = pneg %p100
      %p156 = scmp.lt.s32.totalorder %s14, 1
      %s157 = scalar_select %p156, %s14, 1
      %s158 = smul.addr %s157, 8
      %s159 = scalar_lea.vmem %s3, %s158
      %p160 = scmp.lt.s32.totalorder %s14, 1
      %s161 = scalar_select %p160, %s14, 1
      %s162 = smul.addr %s161, 12
      %s163 = smul.addr %s162, 4
      %s164 = scalar_lea.vmem %s0, %s163
      %p165 = scmp.lt.s32.totalorder %s14, 1
      %s166 = scalar_select %p165, %s14, 1
      %s167 = smul.addr %s166, 8
      %s168 = scalar_lea.vmem %s3, %s167
      %v170 = vld [vmem:[%s164] sm:$0xff]
      %v171 = vld [vmem:[%s164 + $0xc] sm:$0xff]
      %v172 = vld [vmem:[%s164 + $0x18] sm:$0xff]
      %v173 = vld [vmem:[%s164 + $0x24] sm:$0xff]
      %178 = vrot.lane.b32.xlu0 %v170, 11
      %v179 = vpop.permute.xlu0 %178
      %180 = vrot.lane.b32.xlu0 %v171, 11
      %v181 = vpop.permute.xlu0 %180
      %182 = vrot.lane.b32.xlu0 %v172, 11
      %v183 = vpop.permute.xlu0 %182
      %184 = vrot.lane.b32.xlu0 %v173, 11
      %v185 = vpop.permute.xlu0 %184
      %v186 = vrot.slane %v179, 4
      %v187 = vrot.slane %v181, 4
      %v188 = vrot.slane %v183, 4
      %v189 = vrot.slane %v185, 4
      %vm190 = vcmask 89088
      %v191 = vsel %vm190, %v179, %v186
      %v192 = vsel %vm190, %v181, %v187
      %v193 = vsel %vm190, %v183, %v188
      %v194 = vsel %vm190, %v185, %v189
      %vm199 = vcmask 814080
      %200 = vst.msk [vmem:[#allocation2] sm:$0xf] %vm199, %v191
      %201 = vst.msk [vmem:[#allocation2 + $0x4] sm:$0xf] %vm199, %v192
      %202 = vst.msk [vmem:[#allocation2 + $0x8] sm:$0xf] %vm199, %v193
      %203 = vst.msk [vmem:[#allocation2 + $0xc] sm:$0xf] %vm199, %v194
      %v204 = vld [vmem:[%s164] sm:$0xff]
      %v205 = vld [vmem:[%s164 + $0xc] sm:$0xff]
      %v206 = vld [vmem:[%s164 + $0x18] sm:$0xff]
      %v207 = vld [vmem:[%s164 + $0x24] sm:$0xff]
      %212 = vrot.lane.b32.xlu0 %v204, 10
      %v213 = vpop.permute.xlu0 %212
      %214 = vrot.lane.b32.xlu0 %v205, 10
      %v215 = vpop.permute.xlu0 %214
      %216 = vrot.lane.b32.xlu0 %v206, 10
      %v217 = vpop.permute.xlu0 %216
      %218 = vrot.lane.b32.xlu0 %v207, 10
      %v219 = vpop.permute.xlu0 %218
      %v220 = vrot.slane %v213, 4
      %v221 = vrot.slane %v215, 4
      %v222 = vrot.slane %v217, 4
      %v223 = vrot.slane %v219, 4
      %vm224 = vcmask 80896
      %v225 = vsel %vm224, %v213, %v220
      %v226 = vsel %vm224, %v215, %v221
      %v227 = vsel %vm224, %v217, %v222
      %v228 = vsel %vm224, %v219, %v223
      %233 = vst.msk [vmem:[#allocation2 + $0x10] sm:$0xf] %vm199, %v225
      %234 = vst.msk [vmem:[#allocation2 + $0x14] sm:$0xf] %vm199, %v226
      %235 = vst.msk [vmem:[#allocation2 + $0x18] sm:$0xf] %vm199, %v227
      %236 = vst.msk [vmem:[#allocation2 + $0x1c] sm:$0xf] %vm199, %v228
      %v237 = vld [vmem:[%s164] sm:$0xff]
      %v238 = vld [vmem:[%s164 + $0xc] sm:$0xff]
      %v239 = vld [vmem:[%s164 + $0x18] sm:$0xff]
      %v240 = vld [vmem:[%s164 + $0x24] sm:$0xff]
      %245 = vrot.lane.b32.xlu0 %v237, 9
      %v246 = vpop.permute.xlu0 %245
      %247 = vrot.lane.b32.xlu0 %v238, 9
      %v248 = vpop.permute.xlu0 %247
      %249 = vrot.lane.b32.xlu0 %v239, 9
      %v250 = vpop.permute.xlu0 %249
      %251 = vrot.lane.b32.xlu0 %v240, 9
      %v252 = vpop.permute.xlu0 %251
      %v253 = vrot.slane %v246, 4
      %v254 = vrot.slane %v248, 4
      %v255 = vrot.slane %v250, 4
      %v256 = vrot.slane %v252, 4
      %vm257 = vcmask 72704
      %v258 = vsel %vm257, %v246, %v253
      %v259 = vsel %vm257, %v248, %v254
      %v260 = vsel %vm257, %v250, %v255
      %v261 = vsel %vm257, %v252, %v256
      %266 = vst.msk [vmem:[#allocation2 + $0x20] sm:$0xf] %vm199, %v258
      %267 = vst.msk [vmem:[#allocation2 + $0x24] sm:$0xf] %vm199, %v259
      %268 = vst.msk [vmem:[#allocation2 + $0x28] sm:$0xf] %vm199, %v260
      %269 = vst.msk [vmem:[#allocation2 + $0x2c] sm:$0xf] %vm199, %v261
      %v270 = vld [vmem:[%s164] sm:$0xff]
      %v271 = vld [vmem:[%s164 + $0xc] sm:$0xff]
      %v272 = vld [vmem:[%s164 + $0x18] sm:$0xff]
      %v273 = vld [vmem:[%s164 + $0x24] sm:$0xff]
      %278 = vrot.lane.b32.xlu0 %v270, 1
      %v279 = vpop.permute.xlu0 %278
      %280 = vrot.lane.b32.xlu0 %v271, 1
      %v281 = vpop.permute.xlu0 %280
      %282 = vrot.lane.b32.xlu0 %v272, 1
      %v283 = vpop.permute.xlu0 %282
      %284 = vrot.lane.b32.xlu0 %v273, 1
      %v285 = vpop.permute.xlu0 %284
      %v286 = vrot.slane %v279, 4
      %v287 = vrot.slane %v281, 4
      %v288 = vrot.slane %v283, 4
      %v289 = vrot.slane %v285, 4
      %vm290 = vcmask 7168
      %v291 = vsel %vm290, %v279, %v286
      %v292 = vsel %vm290, %v281, %v287
      %v293 = vsel %vm290, %v283, %v288
      %v294 = vsel %vm290, %v285, %v289
      %299 = vst.msk [vmem:[#allocation2 + $0x30] sm:$0xf] %vm199, %v291
      %300 = vst.msk [vmem:[#allocation2 + $0x34] sm:$0xf] %vm199, %v292
      %301 = vst.msk [vmem:[#allocation2 + $0x38] sm:$0xf] %vm199, %v293
      %302 = vst.msk [vmem:[#allocation2 + $0x3c] sm:$0xf] %vm199, %v294
      %v303 = vld [vmem:[%s164 + $0x4] sm:$0xf]
      %v304 = vld [vmem:[%s164 + $0x10] sm:$0xf]
      %v305 = vld [vmem:[%s164 + $0x1c] sm:$0xf]
      %v306 = vld [vmem:[%s164 + $0x28] sm:$0xf]
      %307 = vst.msk [vmem:[#allocation2 + $0x40] sm:$0xf] %vm199, %v303
      %308 = vst.msk [vmem:[#allocation2 + $0x44] sm:$0xf] %vm199, %v304
      %309 = vst.msk [vmem:[#allocation2 + $0x48] sm:$0xf] %vm199, %v305
      %310 = vst.msk [vmem:[#allocation2 + $0x4c] sm:$0xf] %vm199, %v306
      %v311 = vld [vmem:[%s164 + $0x4] sm:$0xf]
      %v312 = vld [vmem:[%s164 + $0x10] sm:$0xf]
      %v313 = vld [vmem:[%s164 + $0x1c] sm:$0xf]
      %v314 = vld [vmem:[%s164 + $0x28] sm:$0xf]
      %319 = vrot.lane.b32.xlu0 %v311, 127
      %v320 = vpop.permute.xlu0 %319
      %321 = vrot.lane.b32.xlu0 %v312, 127
      %v322 = vpop.permute.xlu0 %321
      %323 = vrot.lane.b32.xlu0 %v313, 127
      %v324 = vpop.permute.xlu0 %323
      %325 = vrot.lane.b32.xlu0 %v314, 127
      %v326 = vpop.permute.xlu0 %325
      %331 = vst.msk [vmem:[#allocation2 + $0x50] sm:$0xf] %vm199, %v320
      %332 = vst.msk [vmem:[#allocation2 + $0x54] sm:$0xf] %vm199, %v322
      %333 = vst.msk [vmem:[#allocation2 + $0x58] sm:$0xf] %vm199, %v324
      %334 = vst.msk [vmem:[#allocation2 + $0x5c] sm:$0xf] %vm199, %v326
      %v335 = vld [vmem:[%s164 + $0x4] sm:$0xf]
      %v336 = vld [vmem:[%s164 + $0x10] sm:$0xf]
      %v337 = vld [vmem:[%s164 + $0x1c] sm:$0xf]
      %v338 = vld [vmem:[%s164 + $0x28] sm:$0xf]
      %343 = vrot.lane.b32.xlu0 %v335, 119
      %v344 = vpop.permute.xlu0 %343
      %345 = vrot.lane.b32.xlu0 %v336, 119
      %v346 = vpop.permute.xlu0 %345
      %347 = vrot.lane.b32.xlu0 %v337, 119
      %v348 = vpop.permute.xlu0 %347
      %349 = vrot.lane.b32.xlu0 %v338, 119
      %v350 = vpop.permute.xlu0 %349
      %355 = vst.msk [vmem:[#allocation2 + $0x60] sm:$0xf] %vm199, %v344
      %356 = vst.msk [vmem:[#allocation2 + $0x64] sm:$0xf] %vm199, %v346
      %357 = vst.msk [vmem:[#allocation2 + $0x68] sm:$0xf] %vm199, %v348
      %358 = vst.msk [vmem:[#allocation2 + $0x6c] sm:$0xf] %vm199, %v350
      %v359 = vld [vmem:[%s164 + $0x4] sm:$0xf]
      %v360 = vld [vmem:[%s164 + $0x10] sm:$0xf]
      %v361 = vld [vmem:[%s164 + $0x1c] sm:$0xf]
      %v362 = vld [vmem:[%s164 + $0x28] sm:$0xf]
      %367 = vrot.lane.b32.xlu0 %v359, 118
      %v368 = vpop.permute.xlu0 %367
      %369 = vrot.lane.b32.xlu0 %v360, 118
      %v370 = vpop.permute.xlu0 %369
      %371 = vrot.lane.b32.xlu0 %v361, 118
      %v372 = vpop.permute.xlu0 %371
      %373 = vrot.lane.b32.xlu0 %v362, 118
      %v374 = vpop.permute.xlu0 %373
      %379 = vst.msk [vmem:[#allocation2 + $0x70] sm:$0xf] %vm199, %v368
      %380 = vst.msk [vmem:[#allocation2 + $0x74] sm:$0xf] %vm199, %v370
      %381 = vst.msk [vmem:[#allocation2 + $0x78] sm:$0xf] %vm199, %v372
      %382 = vst.msk [vmem:[#allocation2 + $0x7c] sm:$0xf] %vm199, %v374
      %v383 = vld [vmem:[%s164 + $0x4] sm:$0xf]
      %v384 = vld [vmem:[%s164 + $0x10] sm:$0xf]
      %v385 = vld [vmem:[%s164 + $0x1c] sm:$0xf]
      %v386 = vld [vmem:[%s164 + $0x28] sm:$0xf]
      %391 = vrot.lane.b32.xlu0 %v383, 117
      %v392 = vpop.permute.xlu0 %391
      %393 = vrot.lane.b32.xlu0 %v384, 117
      %v394 = vpop.permute.xlu0 %393
      %395 = vrot.lane.b32.xlu0 %v385, 117
      %v396 = vpop.permute.xlu0 %395
      %397 = vrot.lane.b32.xlu0 %v386, 117
      %v398 = vpop.permute.xlu0 %397
      %403 = vst.msk [vmem:[#allocation2 + $0x80] sm:$0xf] %vm199, %v392
      %404 = vst.msk [vmem:[#allocation2 + $0x84] sm:$0xf] %vm199, %v394
      %405 = vst.msk [vmem:[#allocation2 + $0x88] sm:$0xf] %vm199, %v396
      %406 = vst.msk [vmem:[#allocation2 + $0x8c] sm:$0xf] %vm199, %v398
      %v407 = vld [vmem:[%s1] sm:$0xff]
      %v408 = vld [vmem:[%s1 + $0x8] sm:$0xf]
      %v409 = vld [vmem:[#allocation2] sm:$0xf]
      %v410 = vld [vmem:[#allocation2 + $0x4] sm:$0xf]
      %v411 = vld [vmem:[#allocation2 + $0x8] sm:$0xf]
      %v412 = vld [vmem:[#allocation2 + $0xc] sm:$0xf]
      %v413 = vld [vmem:[#allocation2 + $0x10] sm:$0xf]
      %v414 = vld [vmem:[#allocation2 + $0x14] sm:$0xf]
      %v415 = vld [vmem:[#allocation2 + $0x18] sm:$0xf]
      %v416 = vld [vmem:[#allocation2 + $0x1c] sm:$0xf]
      %v417 = vld [vmem:[#allocation2 + $0x20] sm:$0xf]
      %v418 = vld [vmem:[#allocation2 + $0x24] sm:$0xf]
      %v419 = vld [vmem:[#allocation2 + $0x28] sm:$0xf]
      %v420 = vld [vmem:[#allocation2 + $0x2c] sm:$0xf]
      %v421 = vld [vmem:[#allocation2 + $0x30] sm:$0xf]
      %v422 = vld [vmem:[#allocation2 + $0x34] sm:$0xf]
      %v423 = vld [vmem:[#allocation2 + $0x38] sm:$0xf]
      %v424 = vld [vmem:[#allocation2 + $0x3c] sm:$0xf]
      %v425 = vld [vmem:[#allocation2 + $0x40] sm:$0xf]
      %v426 = vld [vmem:[#allocation2 + $0x44] sm:$0xf]
      %v427 = vld [vmem:[#allocation2 + $0x48] sm:$0xf]
      %v428 = vld [vmem:[#allocation2 + $0x4c] sm:$0xf]
      %v429 = vld [vmem:[#allocation2 + $0x50] sm:$0xf]
      %v430 = vld [vmem:[#allocation2 + $0x54] sm:$0xf]
      %v431 = vld [vmem:[#allocation2 + $0x58] sm:$0xf]
      %v432 = vld [vmem:[#allocation2 + $0x5c] sm:$0xf]
      %v433 = vld [vmem:[#allocation2 + $0x60] sm:$0xf]
      %v434 = vld [vmem:[#allocation2 + $0x64] sm:$0xf]
      %v435 = vld [vmem:[#allocation2 + $0x68] sm:$0xf]
      %v436 = vld [vmem:[#allocation2 + $0x6c] sm:$0xf]
      %v437 = vld [vmem:[#allocation2 + $0x70] sm:$0xf]
      %v438 = vld [vmem:[#allocation2 + $0x74] sm:$0xf]
      %v439 = vld [vmem:[#allocation2 + $0x78] sm:$0xf]
      %v440 = vld [vmem:[#allocation2 + $0x7c] sm:$0xf]
      %v441 = vld [vmem:[#allocation2 + $0x80] sm:$0xf]
      %v442 = vld [vmem:[#allocation2 + $0x84] sm:$0xf]
      %v443 = vld [vmem:[#allocation2 + $0x88] sm:$0xf]
      %v444 = vld [vmem:[#allocation2 + $0x8c] sm:$0xf]
      %v445 = vld [vmem:[%s2] sm:$0xff]
      %447 = vset.pattern.permute.xlu0 0
      %448 = vperm.xlu0 %447, %v445
      %v449 = vpop.permute.xlu0 %448
      %v453 = vunpack.c.l.b16 %v407
      %v454 = vunpack.c.h.b16 %v407
      %v455 = vunpack.c.l.b16 %v408
      %v456 = vpack.c.b16 %v453, %v453
      %v457 = vpack.c.b16 %v454, %v454
      %v458 = vpack.c.b16 %v455, %v455
      %v497 = vunpack.c.l.b16 %v409
      %v498 = vunpack.c.l.b16 %v410
      %v499 = vunpack.c.l.b16 %v411
      %v500 = vunpack.c.l.b16 %v412
      %v501 = vunpack.c.l.b16 %v413
      %v502 = vunpack.c.l.b16 %v414
      %v503 = vunpack.c.l.b16 %v415
      %v504 = vunpack.c.l.b16 %v416
      %v505 = vunpack.c.l.b16 %v417
      %v506 = vunpack.c.l.b16 %v418
      %v507 = vunpack.c.l.b16 %v419
      %v508 = vunpack.c.l.b16 %v420
      %v509 = vunpack.c.l.b16 %v421
      %v510 = vunpack.c.l.b16 %v422
      %v511 = vunpack.c.l.b16 %v423
      %v512 = vunpack.c.l.b16 %v424
      %v513 = vunpack.c.l.b16 %v425
      %v514 = vunpack.c.l.b16 %v426
      %v515 = vunpack.c.l.b16 %v427
      %v516 = vunpack.c.l.b16 %v428
      %v517 = vunpack.c.l.b16 %v429
      %v518 = vunpack.c.l.b16 %v430
      %v519 = vunpack.c.l.b16 %v431
      %v520 = vunpack.c.l.b16 %v432
      %v521 = vunpack.c.l.b16 %v433
      %v522 = vunpack.c.l.b16 %v434
      %v523 = vunpack.c.l.b16 %v435
      %v524 = vunpack.c.l.b16 %v436
      %v525 = vunpack.c.l.b16 %v437
      %v526 = vunpack.c.l.b16 %v438
      %v527 = vunpack.c.l.b16 %v439
      %v528 = vunpack.c.l.b16 %v440
      %v529 = vunpack.c.l.b16 %v441
      %v530 = vunpack.c.l.b16 %v442
      %v531 = vunpack.c.l.b16 %v443
      %v532 = vunpack.c.l.b16 %v444
      %v533 = vpack.c.b16 %v498, %v497
      %v534 = vpack.c.b16 %v500, %v499
      %v535 = vpack.c.b16 %v502, %v501
      %v536 = vpack.c.b16 %v504, %v503
      %v537 = vpack.c.b16 %v506, %v505
      %v538 = vpack.c.b16 %v508, %v507
      %v539 = vpack.c.b16 %v510, %v509
      %v540 = vpack.c.b16 %v512, %v511
      %v541 = vpack.c.b16 %v514, %v513
      %v542 = vpack.c.b16 %v516, %v515
      %v543 = vpack.c.b16 %v518, %v517
      %v544 = vpack.c.b16 %v520, %v519
      %v545 = vpack.c.b16 %v522, %v521
      %v546 = vpack.c.b16 %v524, %v523
      %v547 = vpack.c.b16 %v526, %v525
      %v548 = vpack.c.b16 %v528, %v527
      %v549 = vpack.c.b16 %v530, %v529
      %v550 = vpack.c.b16 %v532, %v531
      %vm569 = vcmask 261120
      %v571 = vsel %vm569, %v458, 0
      %573 = vmatpush.bf16.msra.mxu0 %v540
      %574 = vmatpush.bf16.msra.mxu0 %v539
      %575 = vmatpush.bf16.msra.mxu0 %v538
      %576 = vmatpush.bf16.msra.mxu0 %v537
      %577 = vmatpush.bf16.msra.mxu0 %v536
      %578 = vmatpush.bf16.msra.mxu0 %v535
      %579 = vmatpush.bf16.msra.mxu0 %v534
      %580 = vmatpush.bf16.msra.mxu0 %v533
      %581 = vmatmul.bf16.gmra.mxu0 %v456
      %v582 = vpop.f32.mrf.mxu0
      %v583 = vadd.f32 %v449, %v582
      %v584 = vpop.f32.mrf.mxu0
      %585 = vdwg.mxu0
      %586 = vmatpush.bf16.msra.mxu0 %v548
      %587 = vmatpush.bf16.msra.mxu0 %v547
      %588 = vmatpush.bf16.msra.mxu0 %v546
      %589 = vmatpush.bf16.msra.mxu0 %v545
      %590 = vmatpush.bf16.msra.mxu0 %v544
      %591 = vmatpush.bf16.msra.mxu0 %v543
      %592 = vmatpush.bf16.msra.mxu0 %v542
      %593 = vmatpush.bf16.msra.mxu0 %v541
      %594 = vmatmul.bf16.gmra.mxu0 %v457
      %v595 = vpop.f32.mrf.mxu0
      %v596 = vadd.f32 %v583, %v595
      %v597 = vpop.f32.mrf.mxu0
      %598 = vdwg.mxu0
      %599 = vmatpush.bf16.msra.mxu0 0
      %600 = vmatpush.bf16.msra.mxu0 0
      %601 = vmatpush.bf16.msra.mxu0 0
      %602 = vmatpush.bf16.msra.mxu0 0
      %603 = vmatpush.bf16.msra.mxu0 0
      %604 = vmatpush.bf16.msra.mxu0 0
      %605 = vmatpush.bf16.msra.mxu0 %v550
      %606 = vmatpush.bf16.msra.mxu0 %v549
      %607 = vmatmul.bf16.gmra.mxu0 %v571
      %v608 = vpop.f32.mrf.mxu0
      %v609 = vadd.f32 %v596, %v608
      %v610 = vpop.f32.mrf.mxu0
      %611 = vdwg.mxu0
      %v612 = vmax.f32 %v609, 0.0
      %vm613 = vcmask 818176
      %614 = vst.msk [vmem:[%s168] sm:$0xff] %vm613, %v612
      %p615 = scmp.lt.s32.totalorder %s14, 1
      %s616 = scalar_select %p615, %s14, 1
      %s617 = smul.addr %s616, 8
      %s618 = scalar_lea.vmem %s3, %s617
      // Predicated region
      $region33: #{context_conditioning_stack.13} parent=31 // pred_check
        %p619 = pneg %p100
      $region34: #{context_conditioning_stack.13} parent=31 // pred_check_branch
        %621 = sbr.rel (%p619) target = $region36
      $region35: #{context_conditioning_stack.13} parent=31 // pred_region
        _
      $region36: #{context_conditioning_stack.13} parent=31 // pred_fallthru
        _
    $region32: #{context_conditioning_stack.13} parent=5 // pred_fallthru
      _
    %p622 = scmp.le.s32.totalorder 2, %s9
    // Predicated region
    $region37: #{context_conditioning_stack.13} parent=5 // pred_check
      %p623 = pneg %p622
    $region38: #{context_conditioning_stack.13} parent=5 // pred_check_branch
      %625 = sbr.rel (%p623) target = $region40
    $region39: #{context_conditioning_stack.13} parent=5 // pred_region
      %s626 = ssub.s32 %s9, 2
      // Predicated region
      $region41: #{context_conditioning_stack.13} parent=39 // pred_check
        %p627 = pneg %p106
      $region42: #{context_conditioning_stack.13} parent=39 // pred_check_branch
        %629 = sbr.rel (%p627) target = $region44
      $region43: #{context_conditioning_stack.13} parent=39 // pred_region
        %p630 = scmp.lt.s32.totalorder %s15, 1
        %s631 = scalar_select %p630, %s15, 1
        %s632 = smul.addr %s631, 8
        %s633 = scalar_lea.vmem %s3, %s632
      $region44: #{context_conditioning_stack.13} parent=39 // pred_fallthru
        _
    $region40: #{context_conditioning_stack.13} parent=5 // pred_fallthru
      _
  $region6: #{context_conditioning_stack.13} parent=0 // loop_footer
    %s13 = sadd.s32 1, %s9
  $region7: #{context_conditioning_stack.13} parent=0 // loop_footer_branch
    %8 = sbr.rel target = $region3
  $region8: #{context_conditioning_stack.13} parent=0 // loop_exit
    _

// kernel: context_conditioning_stack.12
$region0: #{context_conditioning_stack.12}
  #allocation0 [shape = 'u32[]', space=smem, size = 0x4, offset = 0x4, fixed_abs, tag = 'smem constant byte address 0x4 - core index']
  #allocation1 [shape = 'u32[72,128]{1,0:T(1,128)}', space=vmem, size = 0x9000, scoped, tag = 'internal scratch']
  #allocation2 [shape = 'bf16[288,324]{1,0:T(8,128)(2,1)}', space=vmem, size = 0x36000, scoped, tag = 'scratch operand']
  %s0 = inlined_call_operand.vmem [shape: bf16[2,32,580], index: 0, kind: input, shape index: {}]
  %s1 = inlined_call_operand.vmem [shape: bf16[4,288], index: 1, kind: input, shape index: {}]
  %s2 = inlined_call_operand.vmem [shape: f32[4,1], index: 2, kind: input, shape index: {}]
  %s3 = inlined_call_operand.vmem [shape: f32[2,4,324], index: 3, kind: output, shape index: {}]
  %s4 = sld [smem:[#allocation0]]
  $region45: #{context_conditioning_stack.12} parent=0
    _
  %s6 = ssub.s32 1, %s4
  %s7 = scalar_select 0, %s6, %s4
  loop: start=0, step=1, limit=4
  $region2: #{context_conditioning_stack.12} parent=0 // loop_pre_header
    _
  $region3: #{context_conditioning_stack.12} parent=0 // loop_header
    %s9 = sphi 0, %s13
    %p10 = scmp.ge.s32.totalorder %s9, 4
    %s19 = sphi 0, %s21
    %s22 = sphi 0, %s19
    %s23 = sphi 0, %s22
    %s39 = sphi 0, %s23
    %s43 = sphi 0, %s43
    %s45 = sphi 0, %s43
    %s46 = sphi 0, %s45
    %s60 = sphi 0, %s46
    %s64 = sphi 0, %s64
    %s66 = sphi 0, %s64
    %s67 = sphi 0, %s66
    %s81 = sphi 0, %s67
    %s87 = sphi 0, %s89
    %s90 = sphi 0, %s87
    %s91 = sphi 0, %s90
    %s107 = sphi 0, %s91
  $region4: #{context_conditioning_stack.12} parent=0 // loop_header_branch
    %12 = sbr.rel (%p10) target = $region8
  $region5: #{context_conditioning_stack.12} parent=0 // loop_body
    %s14 = ssub.s32 %s9, 1
    %s15 = ssub.s32 %s9, 2
    %s16 = sadd.s32 %s9, 1
    %s17 = ssub.s32 %s9, %s16
    %p18 = scmp.eq.s32.totalorder %s17, 0
    %s20 = sadd.s32 %s19, 1
    %s21 = scalar_select %p18, %s19, %s20
    %p24 = pneg %p18
    %p25 = scmp.eq.s32.totalorder %s9, 1
    %p26 = por %p24, %p25
    %p27 = scmp.ne.s32.totalorder %s19, %s22
    %p28 = scmp.eq.s32.totalorder %s9, 0
    %p29 = por %p27, %p28
    %p30 = scmp.ne.s32.totalorder %s19, %s22
    %p31 = scmp.eq.s32.totalorder %s14, 1
    %p32 = por %p30, %p31
    %p33 = scmp.ne.s32.totalorder %s22, %s23
    %p34 = scmp.eq.s32.totalorder %s14, 0
    %p35 = por %p33, %p34
    %p36 = scmp.ne.s32.totalorder %s22, %s23
    %p37 = scmp.eq.s32.totalorder %s15, 1
    %p38 = por %p36, %p37
    %p40 = scmp.ne.s32.totalorder %s23, %s39
    %p41 = scmp.eq.s32.totalorder %s15, 0
    %p42 = por %p40, %p41
    %s44 = sadd.s32 %s43, 1
    %p47 = scmp.eq.s32.totalorder %s9, 1
    %p48 = scmp.ne.s32.totalorder %s43, %s45
    %p49 = scmp.eq.s32.totalorder %s9, 0
    %p50 = por %p48, %p49
    %p51 = scmp.ne.s32.totalorder %s43, %s45
    %p52 = scmp.eq.s32.totalorder %s14, 1
    %p53 = por %p51, %p52
    %p54 = scmp.ne.s32.totalorder %s45, %s46
    %p55 = scmp.eq.s32.totalorder %s14, 0
    %p56 = por %p54, %p55
    %p57 = scmp.ne.s32.totalorder %s45, %s46
    %p58 = scmp.eq.s32.totalorder %s15, 1
    %p59 = por %p57, %p58
    %p61 = scmp.ne.s32.totalorder %s46, %s60
    %p62 = scmp.eq.s32.totalorder %s15, 0
    %p63 = por %p61, %p62
    %s65 = sadd.s32 %s64, 1
    %p68 = scmp.eq.s32.totalorder %s9, 1
    %p69 = scmp.ne.s32.totalorder %s64, %s66
    %p70 = scmp.eq.s32.totalorder %s9, 0
    %p71 = por %p69, %p70
    %p72 = scmp.ne.s32.totalorder %s64, %s66
    %p73 = scmp.eq.s32.totalorder %s14, 1
    %p74 = por %p72, %p73
    %p75 = scmp.ne.s32.totalorder %s66, %s67
    %p76 = scmp.eq.s32.totalorder %s14, 0
    %p77 = por %p75, %p76
    %p78 = scmp.ne.s32.totalorder %s66, %s67
    %p79 = scmp.eq.s32.totalorder %s15, 1
    %p80 = por %p78, %p79
    %p82 = scmp.ne.s32.totalorder %s67, %s81
    %p83 = scmp.eq.s32.totalorder %s15, 0
    %p84 = por %p82, %p83
    %s85 = ssub.s32 %s9, %s16
    %p86 = scmp.eq.s32.totalorder %s85, 0
    %s88 = sadd.s32 %s87, 1
    %s89 = scalar_select %p86, %s87, %s88
    %p92 = pneg %p86
    %p93 = scmp.eq.s32.totalorder %s9, 1
    %p94 = por %p92, %p93
    %p95 = scmp.ne.s32.totalorder %s87, %s90
    %p96 = scmp.eq.s32.totalorder %s9, 0
    %p97 = por %p95, %p96
    %p98 = scmp.ne.s32.totalorder %s87, %s90
    %p99 = scmp.eq.s32.totalorder %s14, 1
    %p100 = por %p98, %p99
    %p101 = scmp.ne.s32.totalorder %s90, %s91
    %p102 = scmp.eq.s32.totalorder %s14, 0
    %p103 = por %p101, %p102
    %p104 = scmp.ne.s32.totalorder %s90, %s91
    %p105 = scmp.eq.s32.totalorder %s15, 1
    %p106 = por %p104, %p105
    %p108 = scmp.ne.s32.totalorder %s91, %s107
    %p109 = scmp.eq.s32.totalorder %s15, 0
    %p110 = por %p108, %p109
    %p111 = scmp.le.s32.totalorder 1, %s9
    %p112 = scmp.lt.s32.totalorder %s9, 3
    %p113 = pnand %p111, %p112
    %p114 = pneg %p113
    // Predicated region
    $region9: #{context_conditioning_stack.12} parent=5 // pred_check
      _
    $region10: #{context_conditioning_stack.12} parent=5 // pred_check_branch
      %116 = sbr.rel (%p113) target = $region12
    $region11: #{context_conditioning_stack.12} parent=5 // pred_region
      %s117 = ssub.s32 %s9, 1
      // Predicated region
      $region13: #{context_conditioning_stack.12} parent=11 // pred_check
        %p118 = pneg %p56
      $region14: #{context_conditioning_stack.12} parent=11 // pred_check_branch
        %120 = sbr.rel (%p118) target = $region16
      $region15: #{context_conditioning_stack.12} parent=11 // pred_region
        _
      $region16: #{context_conditioning_stack.12} parent=11 // pred_fallthru
        _
      // Predicated region
      $region17: #{context_conditioning_stack.12} parent=11 // pred_check
        %p121 = pneg %p77
      $region18: #{context_conditioning_stack.12} parent=11 // pred_check_branch
        %123 = sbr.rel (%p121) target = $region20
      $region19: #{context_conditioning_stack.12} parent=11 // pred_region
        _
      $region20: #{context_conditioning_stack.12} parent=11 // pred_fallthru
        _
    $region12: #{context_conditioning_stack.12} parent=5 // pred_fallthru
      _
    %p124 = scmp.lt.s32.totalorder %s9, 2
    // Predicated region
    $region21: #{context_conditioning_stack.12} parent=5 // pred_check
      %p125 = pneg %p124
    $region22: #{context_conditioning_stack.12} parent=5 // pred_check_branch
      %127 = sbr.rel (%p125) target = $region24
    $region23: #{context_conditioning_stack.12} parent=5 // pred_region
      // Predicated region
      $region25: #{context_conditioning_stack.12} parent=23 // pred_check
        %p128 = pneg %p29
      $region26: #{context_conditioning_stack.12} parent=23 // pred_check_branch
        %130 = sbr.rel (%p128) target = $region28
      $region27: #{context_conditioning_stack.12} parent=23 // pred_region
        %p131 = scmp.lt.s32.totalorder %s9, 1
        %s132 = scalar_select %p131, %s9, 1
        %s133 = smul.addr %s132, 20
        %s134 = smul.addr %s133, 4
        %s135 = scalar_lea.vmem %s0, %s134
      $region28: #{context_conditioning_stack.12} parent=23 // pred_fallthru
        _
    $region24: #{context_conditioning_stack.12} parent=5 // pred_fallthru
      _
    %p136 = scmp.le.s32.totalorder 1, %s9
    %p137 = scmp.lt.s32.totalorder %s9, 3
    %p138 = pnand %p136, %p137
    %p139 = pneg %p138
    // Predicated region
    $region29: #{context_conditioning_stack.12} parent=5 // pred_check
      _
    $region30: #{context_conditioning_stack.12} parent=5 // pred_check_branch
      %141 = sbr.rel (%p138) target = $region32
    $region31: #{context_conditioning_stack.12} parent=5 // pred_region
      %s142 = ssub.s32 %s9, 1
      %p143 = scmp.lt.s32.totalorder %s14, 1
      %s144 = scalar_select %p143, %s14, 1
      %s145 = smul.addr %s144, 20
      %s146 = smul.addr %s145, 4
      %s147 = scalar_lea.vmem %s0, %s146
      %p148 = pneg %p35
      %p149 = pneg %p32
      %p150 = pneg %p56
      %p151 = pneg %p53
      %p152 = pneg %p77
      %p153 = pneg %p74
      %p154 = pneg %p103
      %p155 = pneg %p100
      %p156 = scmp.lt.s32.totalorder %s14, 1
      %s157 = scalar_select %p156, %s14, 1
      %s158 = smul.addr %s157, 3
      %s159 = smul.addr %s158, 4
      %s160 = scalar_lea.vmem %s3, %s159
      %p161 = scmp.lt.s32.totalorder %s14, 1
      %s162 = scalar_select %p161, %s14, 1
      %s163 = smul.addr %s162, 20
      %s164 = smul.addr %s163, 4
      %s165 = scalar_lea.vmem %s0, %s164
      %p166 = scmp.lt.s32.totalorder %s14, 1
      %s167 = scalar_select %p166, %s14, 1
      %s168 = smul.addr %s167, 3
      %s169 = smul.addr %s168, 4
      %s170 = scalar_lea.vmem %s3, %s169
      %v172 = vld [vmem:[%s165] sm:$0xff]
      %v173 = vld [vmem:[%s165 + $0x8] sm:$0xff]
      %v174 = vld [vmem:[%s165 + $0x14] sm:$0xff]
      %v175 = vld [vmem:[%s165 + $0x1c] sm:$0xff]
      %v176 = vld [vmem:[%s165 + $0x28] sm:$0xff]
      %v177 = vld [vmem:[%s165 + $0x30] sm:$0xff]
      %v178 = vld [vmem:[%s165 + $0x3c] sm:$0xff]
      %v179 = vld [vmem:[%s165 + $0x44] sm:$0xff]
      %188 = vrot.lane.b32.xlu0 %v172, 19
      %v189 = vpop.permute.xlu0 %188
      %190 = vrot.lane.b32.xlu0 %v173, 19
      %v191 = vpop.permute.xlu0 %190
      %192 = vrot.lane.b32.xlu0 %v174, 19
      %v193 = vpop.permute.xlu0 %192
      %194 = vrot.lane.b32.xlu0 %v175, 19
      %v195 = vpop.permute.xlu0 %194
      %196 = vrot.lane.b32.xlu0 %v176, 19
      %v197 = vpop.permute.xlu0 %196
      %198 = vrot.lane.b32.xlu0 %v177, 19
      %v199 = vpop.permute.xlu0 %198
      %200 = vrot.lane.b32.xlu0 %v178, 19
      %v201 = vpop.permute.xlu0 %200
      %202 = vrot.lane.b32.xlu0 %v179, 19
      %v203 = vpop.permute.xlu0 %202
      %v204 = vrot.slane %v189, 4
      %v205 = vrot.slane %v191, 4
      %v206 = vrot.slane %v193, 4
      %v207 = vrot.slane %v195, 4
      %v208 = vrot.slane %v197, 4
      %v209 = vrot.slane %v199, 4
      %v210 = vrot.slane %v201, 4
      %v211 = vrot.slane %v203, 4
      %vm212 = vcmask 1043456
      %v213 = vsel %vm212, %v204, %v205
      %vm214 = vcmask 154624
      %v215 = vsel %vm214, %v189, %v213
      %v216 = vsel %vm214, %v191, %v205
      %v217 = vsel %vm212, %v206, %v207
      %v218 = vsel %vm214, %v193, %v217
      %v219 = vsel %vm214, %v195, %v207
      %v220 = vsel %vm212, %v208, %v209
      %v221 = vsel %vm214, %v197, %v220
      %v222 = vsel %vm214, %v199, %v209
      %v223 = vsel %vm212, %v210, %v211
      %v224 = vsel %vm214, %v201, %v223
      %v225 = vsel %vm214, %v203, %v211
      %234 = vst [vmem:[#allocation2] sm:$0xff] %v215
      %vm235 = vcmask 551936
      %236 = vst.msk [vmem:[#allocation2 + $0x8] sm:$0xf] %vm235, %v216
      %237 = vst [vmem:[#allocation2 + $0xc] sm:$0xff] %v218
      %238 = vst.msk [vmem:[#allocation2 + $0x14] sm:$0xf] %vm235, %v219
      %239 = vst [vmem:[#allocation2 + $0x18] sm:$0xff] %v221
      %240 = vst.msk [vmem:[#allocation2 + $0x20] sm:$0xf] %vm235, %v222
      %241 = vst [vmem:[#allocation2 + $0x24] sm:$0xff] %v224
      %242 = vst.msk [vmem:[#allocation2 + $0x2c] sm:$0xf] %vm235, %v225
      %v243 = vld [vmem:[%s165] sm:$0xff]
      %v244 = vld [vmem:[%s165 + $0x8] sm:$0xff]
      %v245 = vld [vmem:[%s165 + $0x14] sm:$0xff]
      %v246 = vld [vmem:[%s165 + $0x1c] sm:$0xff]
      %v247 = vld [vmem:[%s165 + $0x28] sm:$0xff]
      %v248 = vld [vmem:[%s165 + $0x30] sm:$0xff]
      %v249 = vld [vmem:[%s165 + $0x3c] sm:$0xff]
      %v250 = vld [vmem:[%s165 + $0x44] sm:$0xff]
      %259 = vrot.lane.b32.xlu0 %v243, 18
      %v260 = vpop.permute.xlu0 %259
      %261 = vrot.lane.b32.xlu0 %v244, 18
      %v262 = vpop.permute.xlu0 %261
      %263 = vrot.lane.b32.xlu0 %v245, 18
      %v264 = vpop.permute.xlu0 %263
      %265 = vrot.lane.b32.xlu0 %v246, 18
      %v266 = vpop.permute.xlu0 %265
      %267 = vrot.lane.b32.xlu0 %v247, 18
      %v268 = vpop.permute.xlu0 %267
      %269 = vrot.lane.b32.xlu0 %v248, 18
      %v270 = vpop.permute.xlu0 %269
      %271 = vrot.lane.b32.xlu0 %v249, 18
      %v272 = vpop.permute.xlu0 %271
      %273 = vrot.lane.b32.xlu0 %v250, 18
      %v274 = vpop.permute.xlu0 %273
      %v275 = vrot.slane %v260, 4
      %v276 = vrot.slane %v262, 4
      %v277 = vrot.slane %v264, 4
      %v278 = vrot.slane %v266, 4
      %v279 = vrot.slane %v268, 4
      %v280 = vrot.slane %v270, 4
      %v281 = vrot.slane %v272, 4
      %v282 = vrot.slane %v274, 4
      %v283 = vsel %vm212, %v275, %v276
      %vm284 = vcmask 146432
      %v285 = vsel %vm284, %v260, %v283
      %v286 = vsel %vm284, %v262, %v276
      %v287 = vsel %vm212, %v277, %v278
      %v288 = vsel %vm284, %v264, %v287
      %v289 = vsel %vm284, %v266, %v278
      %v290 = vsel %vm212, %v279, %v280
      %v291 = vsel %vm284, %v268, %v290
      %v292 = vsel %vm284, %v270, %v280
      %v293 = vsel %vm212, %v281, %v282
      %v294 = vsel %vm284, %v272, %v293
      %v295 = vsel %vm284, %v274, %v282
      %304 = vst [vmem:[#allocation2 + $0x30] sm:$0xff] %v285
      %305 = vst.msk [vmem:[#allocation2 + $0x38] sm:$0xf] %vm235, %v286
      %306 = vst [vmem:[#allocation2 + $0x3c] sm:$0xff] %v288
      %307 = vst.msk [vmem:[#allocation2 + $0x44] sm:$0xf] %vm235, %v289
      %308 = vst [vmem:[#allocation2 + $0x48] sm:$0xff] %v291
      %309 = vst.msk [vmem:[#allocation2 + $0x50] sm:$0xf] %vm235, %v292
      %310 = vst [vmem:[#allocation2 + $0x54] sm:$0xff] %v294
      %311 = vst.msk [vmem:[#allocation2 + $0x5c] sm:$0xf] %vm235, %v295
      %v312 = vld [vmem:[%s165] sm:$0xff]
      %v313 = vld [vmem:[%s165 + $0x8] sm:$0xff]
      %v314 = vld [vmem:[%s165 + $0x14] sm:$0xff]
      %v315 = vld [vmem:[%s165 + $0x1c] sm:$0xff]
      %v316 = vld [vmem:[%s165 + $0x28] sm:$0xff]
      %v317 = vld [vmem:[%s165 + $0x30] sm:$0xff]
      %v318 = vld [vmem:[%s165 + $0x3c] sm:$0xff]
      %v319 = vld [vmem:[%s165 + $0x44] sm:$0xff]
      %328 = vrot.lane.b32.xlu0 %v312, 17
      %v329 = vpop.permute.xlu0 %328
      %330 = vrot.lane.b32.xlu0 %v313, 17
      %v331 = vpop.permute.xlu0 %330
      %332 = vrot.lane.b32.xlu0 %v314, 17
      %v333 = vpop.permute.xlu0 %332
      %334 = vrot.lane.b32.xlu0 %v315, 17
      %v335 = vpop.permute.xlu0 %334
      %336 = vrot.lane.b32.xlu0 %v316, 17
      %v337 = vpop.permute.xlu0 %336
      %338 = vrot.lane.b32.xlu0 %v317, 17
      %v339 = vpop.permute.xlu0 %338
      %340 = vrot.lane.b32.xlu0 %v318, 17
      %v341 = vpop.permute.xlu0 %340
      %342 = vrot.lane.b32.xlu0 %v319, 17
      %v343 = vpop.permute.xlu0 %342
      %v344 = vrot.slane %v329, 4
      %v345 = vrot.slane %v331, 4
      %v346 = vrot.slane %v333, 4
      %v347 = vrot.slane %v335, 4
      %v348 = vrot.slane %v337, 4
      %v349 = vrot.slane %v339, 4
      %v350 = vrot.slane %v341, 4
      %v351 = vrot.slane %v343, 4
      %v352 = vsel %vm212, %v344, %v345
      %vm353 = vcmask 138240
      %v354 = vsel %vm353, %v329, %v352
      %v355 = vsel %vm353, %v331, %v345
      %v356 = vsel %vm212, %v346, %v347
      %v357 = vsel %vm353, %v333, %v356
      %v358 = vsel %vm353, %v335, %v347
      %v359 = vsel %vm212, %v348, %v349
      %v360 = vsel %vm353, %v337, %v359
      %v361 = vsel %vm353, %v339, %v349
      %v362 = vsel %vm212, %v350, %v351
      %v363 = vsel %vm353, %v341, %v362
      %v364 = vsel %vm353, %v343, %v351
      %373 = vst [vmem:[#allocation2 + $0x60] sm:$0xff] %v354
      %374 = vst.msk [vmem:[#allocation2 + $0x68] sm:$0xf] %vm235, %v355
      %375 = vst [vmem:[#allocation2 + $0x6c] sm:$0xff] %v357
      %376 = vst.msk [vmem:[#allocation2 + $0x74] sm:$0xf] %vm235, %v358
      %377 = vst [vmem:[#allocation2 + $0x78] sm:$0xff] %v360
      %378 = vst.msk [vmem:[#allocation2 + $0x80] sm:$0xf] %vm235, %v361
      %379 = vst [vmem:[#allocation2 + $0x84] sm:$0xff] %v363
      %380 = vst.msk [vmem:[#allocation2 + $0x8c] sm:$0xf] %vm235, %v364
      %v381 = vld [vmem:[%s165] sm:$0xff]
      %v382 = vld [vmem:[%s165 + $0x8] sm:$0xff]
      %v383 = vld [vmem:[%s165 + $0x14] sm:$0xff]
      %v384 = vld [vmem:[%s165 + $0x1c] sm:$0xff]
      %v385 = vld [vmem:[%s165 + $0x28] sm:$0xff]
      %v386 = vld [vmem:[%s165 + $0x30] sm:$0xff]
      %v387 = vld [vmem:[%s165 + $0x3c] sm:$0xff]
      %v388 = vld [vmem:[%s165 + $0x44] sm:$0xff]
      %397 = vrot.lane.b32.xlu0 %v381, 1
      %v398 = vpop.permute.xlu0 %397
      %399 = vrot.lane.b32.xlu0 %v382, 1
      %v400 = vpop.permute.xlu0 %399
      %401 = vrot.lane.b32.xlu0 %v383, 1
      %v402 = vpop.permute.xlu0 %401
      %403 = vrot.lane.b32.xlu0 %v384, 1
      %v404 = vpop.permute.xlu0 %403
      %405 = vrot.lane.b32.xlu0 %v385, 1
      %v406 = vpop.permute.xlu0 %405
      %407 = vrot.lane.b32.xlu0 %v386, 1
      %v408 = vpop.permute.xlu0 %407
      %409 = vrot.lane.b32.xlu0 %v387, 1
      %v410 = vpop.permute.xlu0 %409
      %411 = vrot.lane.b32.xlu0 %v388, 1
      %v412 = vpop.permute.xlu0 %411
      %v413 = vrot.slane %v398, 4
      %v414 = vrot.slane %v400, 4
      %v415 = vrot.slane %v402, 4
      %v416 = vrot.slane %v404, 4
      %v417 = vrot.slane %v406, 4
      %v418 = vrot.slane %v408, 4
      %v419 = vrot.slane %v410, 4
      %v420 = vrot.slane %v412, 4
      %v421 = vsel %vm212, %v413, %v414
      %vm422 = vcmask 7168
      %v423 = vsel %vm422, %v398, %v421
      %v424 = vsel %vm422, %v400, %v414
      %v425 = vsel %vm212, %v415, %v416
      %v426 = vsel %vm422, %v402, %v425
      %v427 = vsel %vm422, %v404, %v416
      %v428 = vsel %vm212, %v417, %v418
      %v429 = vsel %vm422, %v406, %v428
      %v430 = vsel %vm422, %v408, %v418
      %v431 = vsel %vm212, %v419, %v420
      %v432 = vsel %vm422, %v410, %v431
      %v433 = vsel %vm422, %v412, %v420
      %442 = vst [vmem:[#allocation2 + $0x90] sm:$0xff] %v423
      %443 = vst.msk [vmem:[#allocation2 + $0x98] sm:$0xf] %vm235, %v424
      %444 = vst [vmem:[#allocation2 + $0x9c] sm:$0xff] %v426
      %445 = vst.msk [vmem:[#allocation2 + $0xa4] sm:$0xf] %vm235, %v427
      %446 = vst [vmem:[#allocation2 + $0xa8] sm:$0xff] %v429
      %447 = vst.msk [vmem:[#allocation2 + $0xb0] sm:$0xf] %vm235, %v430
      %448 = vst [vmem:[#allocation2 + $0xb4] sm:$0xff] %v432
      %449 = vst.msk [vmem:[#allocation2 + $0xbc] sm:$0xf] %vm235, %v433
      %v450 = vld [vmem:[%s165 + $0x4] sm:$0xff]
      %v451 = vld [vmem:[%s165 + $0xc] sm:$0xf]
      %v452 = vld [vmem:[%s165 + $0x18] sm:$0xff]
      %v453 = vld [vmem:[%s165 + $0x20] sm:$0xf]
      %v454 = vld [vmem:[%s165 + $0x2c] sm:$0xff]
      %v455 = vld [vmem:[%s165 + $0x34] sm:$0xf]
      %v456 = vld [vmem:[%s165 + $0x40] sm:$0xff]
      %v457 = vld [vmem:[%s165 + $0x48] sm:$0xf]
      %458 = vst [vmem:[#allocation2 + $0xc0] sm:$0xff] %v450
      %459 = vst.msk [vmem:[#allocation2 + $0xc8] sm:$0xf] %vm235, %v451
      %460 = vst [vmem:[#allocation2 + $0xcc] sm:$0xff] %v452
      %461 = vst.msk [vmem:[#allocation2 + $0xd4] sm:$0xf] %vm235, %v453
      %462 = vst [vmem:[#allocation2 + $0xd8] sm:$0xff] %v454
      %463 = vst.msk [vmem:[#allocation2 + $0xe0] sm:$0xf] %vm235, %v455
      %464 = vst [vmem:[#allocation2 + $0xe4] sm:$0xff] %v456
      %465 = vst.msk [vmem:[#allocation2 + $0xec] sm:$0xf] %vm235, %v457
      %v466 = vld [vmem:[%s165 + $0x4] sm:$0xff]
      %v467 = vld [vmem:[%s165 + $0xc] sm:$0xf]
      %v468 = vld [vmem:[%s165 + $0x18] sm:$0xff]
      %v469 = vld [vmem:[%s165 + $0x20] sm:$0xf]
      %v470 = vld [vmem:[%s165 + $0x2c] sm:$0xff]
      %v471 = vld [vmem:[%s165 + $0x34] sm:$0xf]
      %v472 = vld [vmem:[%s165 + $0x40] sm:$0xff]
      %v473 = vld [vmem:[%s165 + $0x48] sm:$0xf]
      %482 = vrot.lane.b32.xlu0 %v466, 127
      %v483 = vpop.permute.xlu0 %482
      %484 = vrot.lane.b32.xlu0 %v467, 127
      %v485 = vpop.permute.xlu0 %484
      %486 = vrot.lane.b32.xlu0 %v468, 127
      %v487 = vpop.permute.xlu0 %486
      %488 = vrot.lane.b32.xlu0 %v469, 127
      %v489 = vpop.permute.xlu0 %488
      %490 = vrot.lane.b32.xlu0 %v470, 127
      %v491 = vpop.permute.xlu0 %490
      %492 = vrot.lane.b32.xlu0 %v471, 127
      %v493 = vpop.permute.xlu0 %492
      %494 = vrot.lane.b32.xlu0 %v472, 127
      %v495 = vpop.permute.xlu0 %494
      %496 = vrot.lane.b32.xlu0 %v473, 127
      %v497 = vpop.permute.xlu0 %496
      %v498 = vrot.slane %v483, 4
      %v499 = vrot.slane %v485, 4
      %v500 = vrot.slane %v487, 4
      %v501 = vrot.slane %v489, 4
      %v502 = vrot.slane %v491, 4
      %v503 = vrot.slane %v493, 4
      %v504 = vrot.slane %v495, 4
      %v505 = vrot.slane %v497, 4
      %v506 = vsel %vm212, %v498, %v499
      %vm507 = vcmask 1039360
      %v508 = vsel %vm507, %v483, %v506
      %v509 = vsel %vm212, %v500, %v501
      %v510 = vsel %vm507, %v487, %v509
      %v511 = vsel %vm212, %v502, %v503
      %v512 = vsel %vm507, %v491, %v511
      %v513 = vsel %vm212, %v504, %v505
      %v514 = vsel %vm507, %v495, %v513
      %523 = vst [vmem:[#allocation2 + $0xf0] sm:$0xff] %v508
      %524 = vst.msk [vmem:[#allocation2 + $0xf8] sm:$0xf] %vm235, %v485
      %525 = vst [vmem:[#allocation2 + $0xfc] sm:$0xff] %v510
      %526 = vst.msk [vmem:[#allocation2 + $0x104] sm:$0xf] %vm235, %v489
      %527 = vst [vmem:[#allocation2 + $0x108] sm:$0xff] %v512
      %528 = vst.msk [vmem:[#allocation2 + $0x110] sm:$0xf] %vm235, %v493
      %529 = vst [vmem:[#allocation2 + $0x114] sm:$0xff] %v514
      %530 = vst.msk [vmem:[#allocation2 + $0x11c] sm:$0xf] %vm235, %v497
      %v531 = vld [vmem:[%s165 + $0x4] sm:$0xff]
      %v532 = vld [vmem:[%s165 + $0xc] sm:$0xf]
      %v533 = vld [vmem:[%s165 + $0x18] sm:$0xff]
      %v534 = vld [vmem:[%s165 + $0x20] sm:$0xf]
      %v535 = vld [vmem:[%s165 + $0x2c] sm:$0xff]
      %v536 = vld [vmem:[%s165 + $0x34] sm:$0xf]
      %v537 = vld [vmem:[%s165 + $0x40] sm:$0xff]
      %v538 = vld [vmem:[%s165 + $0x48] sm:$0xf]
      %547 = vrot.lane.b32.xlu0 %v531, 111
      %v548 = vpop.permute.xlu0 %547
      %549 = vrot.lane.b32.xlu0 %v532, 111
      %v550 = vpop.permute.xlu0 %549
      %551 = vrot.lane.b32.xlu0 %v533, 111
      %v552 = vpop.permute.xlu0 %551
      %553 = vrot.lane.b32.xlu0 %v534, 111
      %v554 = vpop.permute.xlu0 %553
      %555 = vrot.lane.b32.xlu0 %v535, 111
      %v556 = vpop.permute.xlu0 %555
      %557 = vrot.lane.b32.xlu0 %v536, 111
      %v558 = vpop.permute.xlu0 %557
      %559 = vrot.lane.b32.xlu0 %v537, 111
      %v560 = vpop.permute.xlu0 %559
      %561 = vrot.lane.b32.xlu0 %v538, 111
      %v562 = vpop.permute.xlu0 %561
      %v563 = vrot.slane %v548, 4
      %v564 = vrot.slane %v550, 4
      %v565 = vrot.slane %v552, 4
      %v566 = vrot.slane %v554, 4
      %v567 = vrot.slane %v556, 4
      %v568 = vrot.slane %v558, 4
      %v569 = vrot.slane %v560, 4
      %v570 = vrot.slane %v562, 4
      %v571 = vsel %vm212, %v563, %v564
      %vm572 = vcmask 908288
      %v573 = vsel %vm572, %v548, %v571
      %v574 = vsel %vm212, %v565, %v566
      %v575 = vsel %vm572, %v552, %v574
      %v576 = vsel %vm212, %v567, %v568
      %v577 = vsel %vm572, %v556, %v576
      %v578 = vsel %vm212, %v569, %v570
      %v579 = vsel %vm572, %v560, %v578
      %588 = vst [vmem:[#allocation2 + $0x120] sm:$0xff] %v573
      %589 = vst.msk [vmem:[#allocation2 + $0x128] sm:$0xf] %vm235, %v550
      %590 = vst [vmem:[#allocation2 + $0x12c] sm:$0xff] %v575
      %591 = vst.msk [vmem:[#allocation2 + $0x134] sm:$0xf] %vm235, %v554
      %592 = vst [vmem:[#allocation2 + $0x138] sm:$0xff] %v577
      %593 = vst.msk [vmem:[#allocation2 + $0x140] sm:$0xf] %vm235, %v558
      %594 = vst [vmem:[#allocation2 + $0x144] sm:$0xff] %v579
      %595 = vst.msk [vmem:[#allocation2 + $0x14c] sm:$0xf] %vm235, %v562
      %v596 = vld [vmem:[%s165 + $0x4] sm:$0xff]
      %v597 = vld [vmem:[%s165 + $0xc] sm:$0xf]
      %v598 = vld [vmem:[%s165 + $0x18] sm:$0xff]
      %v599 = vld [vmem:[%s165 + $0x20] sm:$0xf]
      %v600 = vld [vmem:[%s165 + $0x2c] sm:$0xff]
      %v601 = vld [vmem:[%s165 + $0x34] sm:$0xf]
      %v602 = vld [vmem:[%s165 + $0x40] sm:$0xff]
      %v603 = vld [vmem:[%s165 + $0x48] sm:$0xf]
      %612 = vrot.lane.b32.xlu0 %v596, 110
      %v613 = vpop.permute.xlu0 %612
      %614 = vrot.lane.b32.xlu0 %v597, 110
      %v615 = vpop.permute.xlu0 %614
      %616 = vrot.lane.b32.xlu0 %v598, 110
      %v617 = vpop.permute.xlu0 %616
      %618 = vrot.lane.b32.xlu0 %v599, 110
      %v619 = vpop.permute.xlu0 %618
      %620 = vrot.lane.b32.xlu0 %v600, 110
      %v621 = vpop.permute.xlu0 %620
      %622 = vrot.lane.b32.xlu0 %v601, 110
      %v623 = vpop.permute.xlu0 %622
      %624 = vrot.lane.b32.xlu0 %v602, 110
      %v625 = vpop.permute.xlu0 %624
      %626 = vrot.lane.b32.xlu0 %v603, 110
      %v627 = vpop.permute.xlu0 %626
      %v628 = vrot.slane %v613, 4
      %v629 = vrot.slane %v615, 4
      %v630 = vrot.slane %v617, 4
      %v631 = vrot.slane %v619, 4
      %v632 = vrot.slane %v621, 4
      %v633 = vrot.slane %v623, 4
      %v634 = vrot.slane %v625, 4
      %v635 = vrot.slane %v627, 4
      %v636 = vsel %vm212, %v628, %v629
      %vm637 = vcmask 900096
      %v638 = vsel %vm637, %v613, %v636
      %v639 = vsel %vm212, %v630, %v631
      %v640 = vsel %vm637, %v617, %v639
      %v641 = vsel %vm212, %v632, %v633
      %v642 = vsel %vm637, %v621, %v641
      %v643 = vsel %vm212, %v634, %v635
      %v644 = vsel %vm637, %v625, %v643
      %653 = vst [vmem:[#allocation2 + $0x150] sm:$0xff] %v638
      %654 = vst.msk [vmem:[#allocation2 + $0x158] sm:$0xf] %vm235, %v615
      %655 = vst [vmem:[#allocation2 + $0x15c] sm:$0xff] %v640
      %656 = vst.msk [vmem:[#allocation2 + $0x164] sm:$0xf] %vm235, %v619
      %657 = vst [vmem:[#allocation2 + $0x168] sm:$0xff] %v642
      %658 = vst.msk [vmem:[#allocation2 + $0x170] sm:$0xf] %vm235, %v623
      %659 = vst [vmem:[#allocation2 + $0x174] sm:$0xff] %v644
      %660 = vst.msk [vmem:[#allocation2 + $0x17c] sm:$0xf] %vm235, %v627
      %v661 = vld [vmem:[%s165 + $0x4] sm:$0xff]
      %v662 = vld [vmem:[%s165 + $0xc] sm:$0xf]
      %v663 = vld [vmem:[%s165 + $0x18] sm:$0xff]
      %v664 = vld [vmem:[%s165 + $0x20] sm:$0xf]
      %v665 = vld [vmem:[%s165 + $0x2c] sm:$0xff]
      %v666 = vld [vmem:[%s165 + $0x34] sm:$0xf]
      %v667 = vld [vmem:[%s165 + $0x40] sm:$0xff]
      %v668 = vld [vmem:[%s165 + $0x48] sm:$0xf]
      %677 = vrot.lane.b32.xlu0 %v661, 109
      %v678 = vpop.permute.xlu0 %677
      %679 = vrot.lane.b32.xlu0 %v662, 109
      %v680 = vpop.permute.xlu0 %679
      %681 = vrot.lane.b32.xlu0 %v663, 109
      %v682 = vpop.permute.xlu0 %681
      %683 = vrot.lane.b32.xlu0 %v664, 109
      %v684 = vpop.permute.xlu0 %683
      %685 = vrot.lane.b32.xlu0 %v665, 109
      %v686 = vpop.permute.xlu0 %685
      %687 = vrot.lane.b32.xlu0 %v666, 109
      %v688 = vpop.permute.xlu0 %687
      %689 = vrot.lane.b32.xlu0 %v667, 109
      %v690 = vpop.permute.xlu0 %689
      %691 = vrot.lane.b32.xlu0 %v668, 109
      %v692 = vpop.permute.xlu0 %691
      %v693 = vrot.slane %v678, 4
      %v694 = vrot.slane %v680, 4
      %v695 = vrot.slane %v682, 4
      %v696 = vrot.slane %v684, 4
      %v697 = vrot.slane %v686, 4
      %v698 = vrot.slane %v688, 4
      %v699 = vrot.slane %v690, 4
      %v700 = vrot.slane %v692, 4
      %v701 = vsel %vm212, %v693, %v694
      %vm702 = vcmask 891904
      %v703 = vsel %vm702, %v678, %v701
      %v704 = vsel %vm212, %v695, %v696
      %v705 = vsel %vm702, %v682, %v704
      %v706 = vsel %vm212, %v697, %v698
      %v707 = vsel %vm702, %v686, %v706
      %v708 = vsel %vm212, %v699, %v700
      %v709 = vsel %vm702, %v690, %v708
      %718 = vst [vmem:[#allocation2 + $0x180] sm:$0xff] %v703
      %719 = vst.msk [vmem:[#allocation2 + $0x188] sm:$0xf] %vm235, %v680
      %720 = vst [vmem:[#allocation2 + $0x18c] sm:$0xff] %v705
      %721 = vst.msk [vmem:[#allocation2 + $0x194] sm:$0xf] %vm235, %v684
      %722 = vst [vmem:[#allocation2 + $0x198] sm:$0xff] %v707
      %723 = vst.msk [vmem:[#allocation2 + $0x1a0] sm:$0xf] %vm235, %v688
      %724 = vst [vmem:[#allocation2 + $0x1a4] sm:$0xff] %v709
      %725 = vst.msk [vmem:[#allocation2 + $0x1ac] sm:$0xf] %vm235, %v692
      %v726 = vld [vmem:[%s1] sm:$0x3f]
      %v727 = vld [vmem:[#allocation2] sm:$0xff]
      %v728 = vld [vmem:[#allocation2 + $0x8] sm:$0xf]
      %v729 = vld [vmem:[#allocation2 + $0xc] sm:$0xff]
      %v730 = vld [vmem:[#allocation2 + $0x14] sm:$0xf]
      %v731 = vld [vmem:[#allocation2 + $0x18] sm:$0xff]
      %v732 = vld [vmem:[#allocation2 + $0x20] sm:$0xf]
      %v733 = vld [vmem:[#allocation2 + $0x24] sm:$0xff]
      %v734 = vld [vmem:[#allocation2 + $0x2c] sm:$0xf]
      %v735 = vld [vmem:[#allocation2 + $0x30] sm:$0xff]
      %v736 = vld [vmem:[#allocation2 + $0x38] sm:$0xf]
      %v737 = vld [vmem:[#allocation2 + $0x3c] sm:$0xff]
      %v738 = vld [vmem:[#allocation2 + $0x44] sm:$0xf]
      %v739 = vld [vmem:[#allocation2 + $0x48] sm:$0xff]
      %v740 = vld [vmem:[#allocation2 + $0x50] sm:$0xf]
      %v741 = vld [vmem:[#allocation2 + $0x54] sm:$0xff]
      %v742 = vld [vmem:[#allocation2 + $0x5c] sm:$0xf]
      %v743 = vld [vmem:[#allocation2 + $0x60] sm:$0xff]
      %v744 = vld [vmem:[#allocation2 + $0x68] sm:$0xf]
      %v745 = vld [vmem:[#allocation2 + $0x6c] sm:$0xff]
      %v746 = vld [vmem:[#allocation2 + $0x74] sm:$0xf]
      %v747 = vld [vmem:[#allocation2 + $0x78] sm:$0xff]
      %v748 = vld [vmem:[#allocation2 + $0x80] sm:$0xf]
      %v749 = vld [vmem:[#allocation2 + $0x84] sm:$0xff]
      %v750 = vld [vmem:[#allocation2 + $0x8c] sm:$0xf]
      %v751 = vld [vmem:[#allocation2 + $0x90] sm:$0xff]
      %v752 = vld [vmem:[#allocation2 + $0x98] sm:$0xf]
      %v753 = vld [vmem:[#allocation2 + $0x9c] sm:$0xff]
      %v754 = vld [vmem:[#allocation2 + $0xa4] sm:$0xf]
      %v755 = vld [vmem:[#allocation2 + $0xa8] sm:$0xff]
      %v756 = vld [vmem:[#allocation2 + $0xb0] sm:$0xf]
      %v757 = vld [vmem:[#allocation2 + $0xb4] sm:$0xff]
      %v758 = vld [vmem:[#allocation2 + $0xbc] sm:$0xf]
      %v759 = vld [vmem:[#allocation2 + $0xc0] sm:$0xff]
      %v760 = vld [vmem:[#allocation2 + $0xc8] sm:$0xf]
      %v761 = vld [vmem:[#allocation2 + $0xcc] sm:$0xff]
      %v762 = vld [vmem:[#allocation2 + $0xd4] sm:$0xf]
      %v763 = vld [vmem:[#allocation2 + $0xd8] sm:$0xff]
      %v764 = vld [vmem:[#allocation2 + $0xe0] sm:$0xf]
      %v765 = vld [vmem:[#allocation2 + $0xe4] sm:$0xff]
      %v766 = vld [vmem:[#allocation2 + $0xec] sm:$0xf]
      %v767 = vld [vmem:[#allocation2 + $0xf0] sm:$0xff]
      %v768 = vld [vmem:[#allocation2 + $0xf8] sm:$0xf]
      %v769 = vld [vmem:[#allocation2 + $0xfc] sm:$0xff]
      %v770 = vld [vmem:[#allocation2 + $0x104] sm:$0xf]
      %v771 = vld [vmem:[#allocation2 + $0x108] sm:$0xff]
      %v772 = vld [vmem:[#allocation2 + $0x110] sm:$0xf]
      %v773 = vld [vmem:[#allocation2 + $0x114] sm:$0xff]
      %v774 = vld [vmem:[#allocation2 + $0x11c] sm:$0xf]
      %v775 = vld [vmem:[#allocation2 + $0x120] sm:$0xff]
      %v776 = vld [vmem:[#allocation2 + $0x128] sm:$0xf]
      %v777 = vld [vmem:[#allocation2 + $0x12c] sm:$0xff]
      %v778 = vld [vmem:[#allocation2 + $0x134] sm:$0xf]
      %v779 = vld [vmem:[#allocation2 + $0x138] sm:$0xff]
      %v780 = vld [vmem:[#allocation2 + $0x140] sm:$0xf]
      %v781 = vld [vmem:[#allocation2 + $0x144] sm:$0xff]
      %v782 = vld [vmem:[#allocation2 + $0x14c] sm:$0xf]
      %v783 = vld [vmem:[#allocation2 + $0x150] sm:$0xff]
      %v784 = vld [vmem:[#allocation2 + $0x158] sm:$0xf]
      %v785 = vld [vmem:[#allocation2 + $0x15c] sm:$0xff]
      %v786 = vld [vmem:[#allocation2 + $0x164] sm:$0xf]
      %v787 = vld [vmem:[#allocation2 + $0x168] sm:$0xff]
      %v788 = vld [vmem:[#allocation2 + $0x170] sm:$0xf]
      %v789 = vld [vmem:[#allocation2 + $0x174] sm:$0xff]
      %v790 = vld [vmem:[#allocation2 + $0x17c] sm:$0xf]
      %v791 = vld [vmem:[#allocation2 + $0x180] sm:$0xff]
      %v792 = vld [vmem:[#allocation2 + $0x188] sm:$0xf]
      %v793 = vld [vmem:[#allocation2 + $0x18c] sm:$0xff]
      %v794 = vld [vmem:[#allocation2 + $0x194] sm:$0xf]
      %v795 = vld [vmem:[#allocation2 + $0x198] sm:$0xff]
      %v796 = vld [vmem:[#allocation2 + $0x1a0] sm:$0xf]
      %v797 = vld [vmem:[#allocation2 + $0x1a4] sm:$0xff]
      %v798 = vld [vmem:[#allocation2 + $0x1ac] sm:$0xf]
      %v799 = vld [vmem:[%s2] sm:$0xf]
      %801 = vset.pattern.permute.xlu0 0
      %802 = vperm.xlu0 %801, %v799
      %v803 = vpop.permute.xlu0 %802
      %806 = vst [vmem:[#allocation1] ss:$4 sm:$0xff] %v726
      %v807 = vld.sshfl [vmem:[#allocation1] sm:$0xff pattern:$0x73625140]
      %v808 = vld.sshfl [vmem:[#allocation1 + $0x8] sm:$0xff pattern:$0x73625140]
      %v809 = vld.sshfl [vmem:[#allocation1 + $0x10] sm:$0xff pattern:$0x73625140]
      %v884 = vunpack.c.l.b16 %v727
      %v885 = vunpack.c.h.b16 %v727
      %v886 = vunpack.c.l.b16 %v728
      %v887 = vunpack.c.l.b16 %v729
      %v888 = vunpack.c.h.b16 %v729
      %v889 = vunpack.c.l.b16 %v730
      %v890 = vunpack.c.l.b16 %v731
      %v891 = vunpack.c.h.b16 %v731
      %v892 = vunpack.c.l.b16 %v732
      %v893 = vunpack.c.l.b16 %v733
      %v894 = vunpack.c.h.b16 %v733
      %v895 = vunpack.c.l.b16 %v734
      %v896 = vunpack.c.l.b16 %v735
      %v897 = vunpack.c.h.b16 %v735
      %v898 = vunpack.c.l.b16 %v736
      %v899 = vunpack.c.l.b16 %v737
      %v900 = vunpack.c.h.b16 %v737
      %v901 = vunpack.c.l.b16 %v738
      %v902 = vunpack.c.l.b16 %v739
      %v903 = vunpack.c.h.b16 %v739
      %v904 = vunpack.c.l.b16 %v740
      %v905 = vunpack.c.l.b16 %v741
      %v906 = vunpack.c.h.b16 %v741
      %v907 = vunpack.c.l.b16 %v742
      %v908 = vunpack.c.l.b16 %v743
      %v909 = vunpack.c.h.b16 %v743
      %v910 = vunpack.c.l.b16 %v744
      %v911 = vunpack.c.l.b16 %v745
      %v912 = vunpack.c.h.b16 %v745
      %v913 = vunpack.c.l.b16 %v746
      %v914 = vunpack.c.l.b16 %v747
      %v915 = vunpack.c.h.b16 %v747
      %v916 = vunpack.c.l.b16 %v748
      %v917 = vunpack.c.l.b16 %v749
      %v918 = vunpack.c.h.b16 %v749
      %v919 = vunpack.c.l.b16 %v750
      %v920 = vunpack.c.l.b16 %v751
      %v921 = vunpack.c.h.b16 %v751
      %v922 = vunpack.c.l.b16 %v752
      %v923 = vunpack.c.l.b16 %v753
      %v924 = vunpack.c.h.b16 %v753
      %v925 = vunpack.c.l.b16 %v754
      %v926 = vunpack.c.l.b16 %v755
      %v927 = vunpack.c.h.b16 %v755
      %v928 = vunpack.c.l.b16 %v756
      %v929 = vunpack.c.l.b16 %v757
      %v930 = vunpack.c.h.b16 %v757
      %v931 = vunpack.c.l.b16 %v758
      %v932 = vunpack.c.l.b16 %v759
      %v933 = vunpack.c.h.b16 %v759
      %v934 = vunpack.c.l.b16 %v760
      %v935 = vunpack.c.l.b16 %v761
      %v936 = vunpack.c.h.b16 %v761
      %v937 = vunpack.c.l.b16 %v762
      %v938 = vunpack.c.l.b16 %v763
      %v939 = vunpack.c.h.b16 %v763
      %v940 = vunpack.c.l.b16 %v764
      %v941 = vunpack.c.l.b16 %v765
      %v942 = vunpack.c.h.b16 %v765
      %v943 = vunpack.c.l.b16 %v766
      %v944 = vunpack.c.l.b16 %v767
      %v945 = vunpack.c.h.b16 %v767
      %v946 = vunpack.c.l.b16 %v768
      %v947 = vunpack.c.l.b16 %v769
      %v948 = vunpack.c.h.b16 %v769
      %v949 = vunpack.c.l.b16 %v770
      %v950 = vunpack.c.l.b16 %v771
      %v951 = vunpack.c.h.b16 %v771
      %v952 = vunpack.c.l.b16 %v772
      %v953 = vunpack.c.l.b16 %v773
      %v954 = vunpack.c.h.b16 %v773
      %v955 = vunpack.c.l.b16 %v774
      %v956 = vunpack.c.l.b16 %v775
      %v957 = vunpack.c.h.b16 %v775
      %v958 = vunpack.c.l.b16 %v776
      %v959 = vunpack.c.l.b16 %v777
      %v960 = vunpack.c.h.b16 %v777
      %v961 = vunpack.c.l.b16 %v778
      %v962 = vunpack.c.l.b16 %v779
      %v963 = vunpack.c.h.b16 %v779
      %v964 = vunpack.c.l.b16 %v780
      %v965 = vunpack.c.l.b16 %v781
      %v966 = vunpack.c.h.b16 %v781
      %v967 = vunpack.c.l.b16 %v782
      %v968 = vunpack.c.l.b16 %v783
      %v969 = vunpack.c.h.b16 %v783
      %v970 = vunpack.c.l.b16 %v784
      %v971 = vunpack.c.l.b16 %v785
      %v972 = vunpack.c.h.b16 %v785
      %v973 = vunpack.c.l.b16 %v786
      %v974 = vunpack.c.l.b16 %v787
      %v975 = vunpack.c.h.b16 %v787
      %v976 = vunpack.c.l.b16 %v788
      %v977 = vunpack.c.l.b16 %v789
      %v978 = vunpack.c.h.b16 %v789
      %v979 = vunpack.c.l.b16 %v790
      %v980 = vunpack.c.l.b16 %v791
      %v981 = vunpack.c.h.b16 %v791
      %v982 = vunpack.c.l.b16 %v792
      %v983 = vunpack.c.l.b16 %v793
      %v984 = vunpack.c.h.b16 %v793
      %v985 = vunpack.c.l.b16 %v794
      %v986 = vunpack.c.l.b16 %v795
      %v987 = vunpack.c.h.b16 %v795
      %v988 = vunpack.c.l.b16 %v796
      %v989 = vunpack.c.l.b16 %v797
      %v990 = vunpack.c.h.b16 %v797
      %v991 = vunpack.c.l.b16 %v798
      %v992 = vpack.c.b16 %v887, %v884
      %v993 = vpack.c.b16 %v888, %v885
      %v994 = vpack.c.b16 %v889, %v886
      %v995 = vpack.c.b16 %v893, %v890
      %v996 = vpack.c.b16 %v894, %v891
      %v997 = vpack.c.b16 %v895, %v892
      %v998 = vpack.c.b16 %v899, %v896
      %v999 = vpack.c.b16 %v900, %v897
      %v1000 = vpack.c.b16 %v901, %v898
      %v1001 = vpack.c.b16 %v905, %v902
      %v1002 = vpack.c.b16 %v906, %v903
      %v1003 = vpack.c.b16 %v907, %v904
      %v1004 = vpack.c.b16 %v911, %v908
      %v1005 = vpack.c.b16 %v912, %v909
      %v1006 = vpack.c.b16 %v913, %v910
      %v1007 = vpack.c.b16 %v917, %v914
      %v1008 = vpack.c.b16 %v918, %v915
      %v1009 = vpack.c.b16 %v919, %v916
      %v1010 = vpack.c.b16 %v923, %v920
      %v1011 = vpack.c.b16 %v924, %v921
      %v1012 = vpack.c.b16 %v925, %v922
      %v1013 = vpack.c.b16 %v929, %v926
      %v1014 = vpack.c.b16 %v930, %v927
      %v1015 = vpack.c.b16 %v931, %v928
      %v1016 = vpack.c.b16 %v935, %v932
      %v1017 = vpack.c.b16 %v936, %v933
      %v1018 = vpack.c.b16 %v937, %v934
      %v1019 = vpack.c.b16 %v941, %v938
      %v1020 = vpack.c.b16 %v942, %v939
      %v1021 = vpack.c.b16 %v943, %v940
      %v1022 = vpack.c.b16 %v947, %v944
      %v1023 = vpack.c.b16 %v948, %v945
      %v1024 = vpack.c.b16 %v949, %v946
      %v1025 = vpack.c.b16 %v953, %v950
      %v1026 = vpack.c.b16 %v954, %v951
      %v1027 = vpack.c.b16 %v955, %v952
      %v1028 = vpack.c.b16 %v959, %v956
      %v1029 = vpack.c.b16 %v960, %v957
      %v1030 = vpack.c.b16 %v961, %v958
      %v1031 = vpack.c.b16 %v965, %v962
      %v1032 = vpack.c.b16 %v966, %v963
      %v1033 = vpack.c.b16 %v967, %v964
      %v1034 = vpack.c.b16 %v971, %v968
      %v1035 = vpack.c.b16 %v972, %v969
      %v1036 = vpack.c.b16 %v973, %v970
      %v1037 = vpack.c.b16 %v977, %v974
      %v1038 = vpack.c.b16 %v978, %v975
      %v1039 = vpack.c.b16 %v979, %v976
      %v1040 = vpack.c.b16 %v983, %v980
      %v1041 = vpack.c.b16 %v984, %v981
      %v1042 = vpack.c.b16 %v985, %v982
      %v1043 = vpack.c.b16 %v989, %v986
      %v1044 = vpack.c.b16 %v990, %v987
      %v1045 = vpack.c.b16 %v991, %v988
      %vm1100 = vcmask 261120
      %v1101 = vsel %vm1100, %v809, 0
      %1103 = vmatpush.bf16.msra.mxu0 %v1013
      %1104 = vmatpush.bf16.msra.mxu0 %v1010
      %1105 = vmatpush.bf16.msra.mxu0 %v1007
      %1106 = vmatpush.bf16.msra.mxu0 %v1004
      %1107 = vmatpush.bf16.msra.mxu0 %v1001
      %1108 = vmatpush.bf16.msra.mxu0 %v998
      %1109 = vmatpush.bf16.msra.mxu0 %v995
      %1110 = vmatpush.bf16.msra.mxu0 %v992
      %1111 = vmatmul.bf16.gmra.mxu0 %v807
      %v1112 = vpop.f32.mrf.mxu0
      %v1113 = vadd.f32 %v803, %v1112
      %v1114 = vpop.f32.mrf.mxu0
      %1115 = vdwg.mxu0
      %1116 = vmatpush.bf16.msra.mxu0 %v1037
      %1117 = vmatpush.bf16.msra.mxu0 %v1034
      %1118 = vmatpush.bf16.msra.mxu0 %v1031
      %1119 = vmatpush.bf16.msra.mxu0 %v1028
      %1120 = vmatpush.bf16.msra.mxu0 %v1025
      %1121 = vmatpush.bf16.msra.mxu0 %v1022
      %1122 = vmatpush.bf16.msra.mxu0 %v1019
      %1123 = vmatpush.bf16.msra.mxu0 %v1016
      %1124 = vmatmul.bf16.gmra.mxu0 %v808
      %v1125 = vpop.f32.mrf.mxu0
      %v1126 = vadd.f32 %v1113, %v1125
      %v1127 = vpop.f32.mrf.mxu0
      %1128 = vdwg.mxu0
      %1129 = vmatpush.bf16.msra.mxu0 0
      %1130 = vmatpush.bf16.msra.mxu0 0
      %1131 = vmatpush.bf16.msra.mxu0 0
      %1132 = vmatpush.bf16.msra.mxu0 0
      %1133 = vmatpush.bf16.msra.mxu0 0
      %1134 = vmatpush.bf16.msra.mxu0 0
      %1135 = vmatpush.bf16.msra.mxu0 %v1043
      %1136 = vmatpush.bf16.msra.mxu0 %v1040
      %1137 = vmatmul.bf16.gmra.mxu0 %v1101
      %v1138 = vpop.f32.mrf.mxu0
      %v1139 = vadd.f32 %v1126, %v1138
      %v1140 = vpop.f32.mrf.mxu0
      %1141 = vdwg.mxu0
      %1142 = vmatpush.bf16.msra.mxu0 %v1014
      %1143 = vmatpush.bf16.msra.mxu0 %v1011
      %1144 = vmatpush.bf16.msra.mxu0 %v1008
      %1145 = vmatpush.bf16.msra.mxu0 %v1005
      %1146 = vmatpush.bf16.msra.mxu0 %v1002
      %1147 = vmatpush.bf16.msra.mxu0 %v999
      %1148 = vmatpush.bf16.msra.mxu0 %v996
      %1149 = vmatpush.bf16.msra.mxu0 %v993
      %1150 = vmatmul.bf16.gmra.mxu0 %v807
      %v1151 = vpop.f32.mrf.mxu0
      %v1152 = vadd.f32 %v803, %v1151
      %v1153 = vpop.f32.mrf.mxu0
      %1154 = vdwg.mxu0
      %1155 = vmatpush.bf16.msra.mxu0 %v1038
      %1156 = vmatpush.bf16.msra.mxu0 %v1035
      %1157 = vmatpush.bf16.msra.mxu0 %v1032
      %1158 = vmatpush.bf16.msra.mxu0 %v1029
      %1159 = vmatpush.bf16.msra.mxu0 %v1026
      %1160 = vmatpush.bf16.msra.mxu0 %v1023
      %1161 = vmatpush.bf16.msra.mxu0 %v1020
      %1162 = vmatpush.bf16.msra.mxu0 %v1017
      %1163 = vmatmul.bf16.gmra.mxu0 %v808
      %v1164 = vpop.f32.mrf.mxu0
      %v1165 = vadd.f32 %v1152, %v1164
      %v1166 = vpop.f32.mrf.mxu0
      %1167 = vdwg.mxu0
      %1168 = vmatpush.bf16.msra.mxu0 0
      %1169 = vmatpush.bf16.msra.mxu0 0
      %1170 = vmatpush.bf16.msra.mxu0 0
      %1171 = vmatpush.bf16.msra.mxu0 0
      %1172 = vmatpush.bf16.msra.mxu0 0
      %1173 = vmatpush.bf16.msra.mxu0 0
      %1174 = vmatpush.bf16.msra.mxu0 %v1044
      %1175 = vmatpush.bf16.msra.mxu0 %v1041
      %1176 = vmatmul.bf16.gmra.mxu0 %v1101
      %v1177 = vpop.f32.mrf.mxu0
      %v1178 = vadd.f32 %v1165, %v1177
      %v1179 = vpop.f32.mrf.mxu0
      %1180 = vdwg.mxu0
      %1181 = vmatpush.bf16.msra.mxu0 %v1015
      %1182 = vmatpush.bf16.msra.mxu0 %v1012
      %1183 = vmatpush.bf16.msra.mxu0 %v1009
      %1184 = vmatpush.bf16.msra.mxu0 %v1006
      %1185 = vmatpush.bf16.msra.mxu0 %v1003
      %1186 = vmatpush.bf16.msra.mxu0 %v1000
      %1187 = vmatpush.bf16.msra.mxu0 %v997
      %1188 = vmatpush.bf16.msra.mxu0 %v994
      %1189 = vmatmul.bf16.gmra.mxu0 %v807
      %v1190 = vpop.f32.mrf.mxu0
      %v1191 = vadd.f32 %v803, %v1190
      %v1192 = vpop.f32.mrf.mxu0
      %1193 = vdwg.mxu0
      %1194 = vmatpush.bf16.msra.mxu0 %v1039
      %1195 = vmatpush.bf16.msra.mxu0 %v1036
      %1196 = vmatpush.bf16.msra.mxu0 %v1033
      %1197 = vmatpush.bf16.msra.mxu0 %v1030
      %1198 = vmatpush.bf16.msra.mxu0 %v1027
      %1199 = vmatpush.bf16.msra.mxu0 %v1024
      %1200 = vmatpush.bf16.msra.mxu0 %v1021
      %1201 = vmatpush.bf16.msra.mxu0 %v1018
      %1202 = vmatmul.bf16.gmra.mxu0 %v808
      %v1203 = vpop.f32.mrf.mxu0
      %v1204 = vadd.f32 %v1191, %v1203
      %v1205 = vpop.f32.mrf.mxu0
      %1206 = vdwg.mxu0
      %1207 = vmatpush.bf16.msra.mxu0 0
      %1208 = vmatpush.bf16.msra.mxu0 0
      %1209 = vmatpush.bf16.msra.mxu0 0
      %1210 = vmatpush.bf16.msra.mxu0 0
      %1211 = vmatpush.bf16.msra.mxu0 0
      %1212 = vmatpush.bf16.msra.mxu0 0
      %1213 = vmatpush.bf16.msra.mxu0 %v1045
      %1214 = vmatpush.bf16.msra.mxu0 %v1042
      %1215 = vmatmul.bf16.gmra.mxu0 %v1101
      %v1216 = vpop.f32.mrf.mxu0
      %v1217 = vadd.f32 %v1204, %v1216
      %v1218 = vpop.f32.mrf.mxu0
      %1219 = vdwg.mxu0
      %v1220 = vmax.f32 %v1139, 0.0
      %v1221 = vmax.f32 %v1178, 0.0
      %v1222 = vmax.f32 %v1217, 0.0
      %v1225 = vrot.slane %v1221, 4
      %vm1226 = vcmask 1043456
      %v1227 = vsel %vm1226, %v1220, %v1225
      %1229 = vst [vmem:[%s170] sm:$0xff] %v1227
      %1230 = vst.msk [vmem:[%s170 + $0x8] sm:$0xf] %vm235, %v1222
      %p1231 = scmp.lt.s32.totalorder %s14, 1
      %s1232 = scalar_select %p1231, %s14, 1
      %s1233 = smul.addr %s1232, 3
      %s1234 = smul.addr %s1233, 4
      %s1235 = scalar_lea.vmem %s3, %s1234
      // Predicated region
      $region33: #{context_conditioning_stack.12} parent=31 // pred_check
        %p1236 = pneg %p100
      $region34: #{context_conditioning_stack.12} parent=31 // pred_check_branch
        %1238 = sbr.rel (%p1236) target = $region36
      $region35: #{context_conditioning_stack.12} parent=31 // pred_region
        _
      $region36: #{context_conditioning_stack.12} parent=31 // pred_fallthru
        _
    $region32: #{context_conditioning_stack.12} parent=5 // pred_fallthru
      _
    %p1239 = scmp.le.s32.totalorder 2, %s9
    // Predicated region
    $region37: #{context_conditioning_stack.12} parent=5 // pred_check
      %p1240 = pneg %p1239
    $region38: #{context_conditioning_stack.12} parent=5 // pred_check_branch
      %1242 = sbr.rel (%p1240) target = $region40
    $region39: #{context_conditioning_stack.12} parent=5 // pred_region
      %s1243 = ssub.s32 %s9, 2
      // Predicated region
      $region41: #{context_conditioning_stack.12} parent=39 // pred_check
        %p1244 = pneg %p106
      $region42: #{context_conditioning_stack.12} parent=39 // pred_check_branch
        %1246 = sbr.rel (%p1244) target = $region44
      $region43: #{context_conditioning_stack.12} parent=39 // pred_region
        %p1247 = scmp.lt.s32.totalorder %s15, 1
        %s1248 = scalar_select %p1247, %s15, 1
        %s1249 = smul.addr %s1248, 3
        %s1250 = smul.addr %s1249, 4
        %s1251 = scalar_lea.vmem %s3, %s1250
      $region44: #{context_conditioning_stack.12} parent=39 // pred_fallthru
        _
    $region40: #{context_conditioning_stack.12} parent=5 // pred_fallthru
      _
  $region6: #{context_conditioning_stack.12} parent=0 // loop_footer
    %s13 = sadd.s32 1, %s9
  $region7: #{context_conditioning_stack.12} parent=0 // loop_footer_branch
    %8 = sbr.rel target = $region3
  $region8: #{context_conditioning_stack.12} parent=0 // loop_exit
    _

</llo_original>
